<compile_context>
chip_gen: v6e
topology: v6e:2x2x1
jax: 0.10.0
libtpu: 0.0.40
codegen_flags: <defaults>
</compile_context>

<pallas_src>
import functools

import jax
import jax.numpy as jnp
from jax.experimental import pallas as pl
from jax.experimental.pallas import tpu as pltpu


# --------------------------------------------------------------------------
# Tiled GEMM with fused bias (+ optional ReLU) — conv1/conv2 im2col GEMMs
# --------------------------------------------------------------------------
def _matmul_bias_kernel(x_ref, w_ref, b_ref, o_ref, *, relu):
    y = jnp.dot(x_ref[...], w_ref[...], preferred_element_type=jnp.float32)
    y = y + b_ref[...]
    if relu:
        y = jnp.maximum(y, 0.0)
    o_ref[...] = y.astype(o_ref.dtype)


def matmul_bias(x, w, b, *, relu, tm, out_dtype=None):
    """y = x @ w + b (optional ReLU).  x:(M,K), w:(K,N), b:(N,) -> (M,N)."""
    M, K = x.shape
    N = w.shape[1]
    out_dtype = out_dtype or x.dtype
    cost = pl.CostEstimate(
        flops=2 * M * K * N,
        transcendentals=0,
        bytes_accessed=(M * K * x.dtype.itemsize
                        + K * N * w.dtype.itemsize
                        + M * N * jnp.dtype(out_dtype).itemsize),
    )
    return pl.pallas_call(
        functools.partial(_matmul_bias_kernel, relu=relu),
        out_shape=jax.ShapeDtypeStruct((M, N), out_dtype),
        grid=(pl.cdiv(M, tm),),           # ragged last block; no host-side pad
        in_specs=[
            pl.BlockSpec((tm, K), lambda i: (i, 0)),
            pl.BlockSpec((K, N), lambda i: (0, 0)),
            pl.BlockSpec((1, N), lambda i: (0, 0)),
        ],
        out_specs=pl.BlockSpec((tm, N), lambda i: (i, 0)),
        compiler_params=pltpu.CompilerParams(dimension_semantics=("parallel",)),
        cost_estimate=cost,
    )(x, w, b.reshape(1, N).astype(jnp.float32))


# --------------------------------------------------------------------------
# MaxPool2d(kernel=3, stride=2): single-pass fused XLA window max
# --------------------------------------------------------------------------
def maxpool3x3s2(x):
    """MaxPool2d(3, 2), VALID padding, on an NHWC feature map.

    Implemented with lax.reduce_window so the feature map is read exactly once
    (no 9-slab HBM materialization and no extra kernel launches) — this path
    is purely memory-bound, so single-pass traffic is what matters.
    """
    return jax.lax.reduce_window(
        x, jnp.array(-jnp.inf, x.dtype), jax.lax.max,
        (1, 3, 3, 1), (1, 2, 2, 1), "VALID")


# --------------------------------------------------------------------------
# Conv as im2col + Pallas GEMM
# --------------------------------------------------------------------------
def _im2col(x, k, stride, k_pad_to=None):
    B, H, W, C = x.shape
    Ho = (H - k) // stride + 1
    Wo = (W - k) // stride + 1
    cols = []
    for dh in range(k):
        for dw in range(k):
            s = jax.lax.slice(
                x, (0, dh, dw, 0),
                (B, dh + stride * (Ho - 1) + 1, dw + stride * (Wo - 1) + 1, C),
                (1, stride, stride, 1))
            cols.append(s)
    K = k * k * C
    if k_pad_to is not None and k_pad_to > K:
        # Fold the K-padding into the concat (no extra HBM pass) so every
        # x-row load in the GEMM is lane dense.
        cols.append(jnp.zeros((B, Ho, Wo, k_pad_to - K), x.dtype))
        K = k_pad_to
    patches = jnp.concatenate(cols, axis=-1)        # (B, Ho, Wo, K)
    return patches.reshape(B * Ho * Wo, K), Ho, Wo


def conv2d_relu(x, w, b, k, stride, *, tm, k_pad_to=None):
    """x: NHWC (bf16).  w: (k*k*Cin, Cout) in (dh, dw, cin) patch ordering."""
    B = x.shape[0]
    patches, Ho, Wo = _im2col(x, k, stride, k_pad_to)
    K = patches.shape[1]
    if K != w.shape[0]:                              # zero rows match zero cols
        w = jnp.pad(w, ((0, K - w.shape[0]), (0, 0)))
    y = matmul_bias(patches, w.astype(patches.dtype), b,
                    relu=True, tm=tm, out_dtype=patches.dtype)
    return y.reshape(B, Ho, Wo, w.shape[1])


# --------------------------------------------------------------------------
# Fused tail: conv3 (+ReLU) -> feat -> both heads (Linear+BN+ReLU x2 + Linear)
# --------------------------------------------------------------------------
def _use_parallel_heads():
    """Duplicate the tiny conv3 GEMM per head only when each head can run on
    its own TensorCore (v7x); single-TC chips (v5e/v6e) run grid=(2,) as a
    sequential loop, so there we compute feat once into a scratch instead."""
    try:
        kind = jax.devices()[0].device_kind.lower()
    except Exception:
        return False
    return "v7" in kind


def _conv3_heads_kernel(p3_ref, w3_ref, b3_ref,
                        hw1_ref, hb1_ref, hg1_ref, hbe1_ref,
                        hw2_ref, hb2_ref, hg2_ref, hbe2_ref,
                        hw3_ref, hb3_ref, o_ref, feat_ref,
                        *, eps, parallel_heads):
    # conv3: 5x5 valid conv on a 5x5 map == plain GEMM; fused ReLU -> feat.
    def compute_feat():
        f = jnp.dot(p3_ref[...], w3_ref[...],
                    preferred_element_type=jnp.float32)
        f = jnp.maximum(f + b3_ref[...], 0.0)                # (B, 128) f32
        return f.astype(jnp.bfloat16)

    if parallel_heads:
        # v7x: one head per TensorCore; recompute the tiny feat GEMM locally.
        feat = compute_feat()
    else:
        # v5e/v6e: grid=(2,) is sequential -> compute feat once (head 0) into
        # a VMEM scratch and reuse it for head 1.  Head axis is 'arbitrary'.
        @pl.when(pl.program_id(0) == 0)
        def _():
            feat_ref[...] = compute_feat()
        feat = feat_ref[...]

    def lin_bn_relu(h, w, b, g, be):
        # bf16 activations x bf16 weights on the MXU, f32 accumulation.
        y = jnp.dot(h, w, preferred_element_type=jnp.float32) + b
        # BatchNorm1d train mode: batch mean / biased variance in f32.  The
        # whole batch is inside this single block, so the statistics are exact
        # and per-head (do not tile the batch dimension of this kernel).
        mean = jnp.mean(y, axis=0, keepdims=True)
        var = jnp.mean(jnp.square(y - mean), axis=0, keepdims=True)
        y = (y - mean) * jax.lax.rsqrt(var + eps) * g + be
        return jnp.maximum(y, 0.0).astype(jnp.bfloat16)

    h1 = lin_bn_relu(feat, hw1_ref[0], hb1_ref[0], hg1_ref[0], hbe1_ref[0])
    h2 = lin_bn_relu(h1, hw2_ref[0], hb2_ref[0], hg2_ref[0], hbe2_ref[0])
    o_ref[0] = (jnp.dot(h2, hw3_ref[0], preferred_element_type=jnp.float32)
                + hb3_ref[0])


def conv3_and_heads(patches3, w3, b3, cls_p, dom_p, *, eps=1e-5, npad=128):
    B, K3 = patches3.shape
    N3 = w3.shape[1]                                          # 128 (feat width)
    parallel_heads = _use_parallel_heads()

    def stack_mat(name):                                      # (2, K, N) bf16
        return jnp.stack([cls_p[name], dom_p[name]], axis=0).astype(jnp.bfloat16)

    def stack_vec(name):                                      # (2, 1, N) f32
        return jnp.stack([cls_p[name], dom_p[name]], axis=0)[:, None, :].astype(
            jnp.float32)

    def stack_pad_mat(name):                                  # (2, K, npad) bf16
        a = jnp.pad(cls_p[name], ((0, 0), (0, npad - cls_p[name].shape[-1])))
        d = jnp.pad(dom_p[name], ((0, 0), (0, npad - dom_p[name].shape[-1])))
        return jnp.stack([a, d], axis=0).astype(jnp.bfloat16)

    def stack_pad_vec(name):                                  # (2, 1, npad) f32
        a = jnp.pad(cls_p[name], (0, npad - cls_p[name].shape[-1]))
        d = jnp.pad(dom_p[name], (0, npad - dom_p[name].shape[-1]))
        return jnp.stack([a, d], axis=0)[:, None, :].astype(jnp.float32)

    hw1, hb1, hg1, hbe1 = (stack_mat("w1"), stack_vec("b1"),
                           stack_vec("g1"), stack_vec("be1"))
    hw2, hb2, hg2, hbe2 = (stack_mat("w2"), stack_vec("b2"),
                           stack_vec("g2"), stack_vec("be2"))
    hw3, hb3 = stack_pad_mat("w3"), stack_pad_vec("b3")       # lane-dense out
    n1, n2 = hw1.shape[-1], hw2.shape[-1]

    out = pl.pallas_call(
        functools.partial(_conv3_heads_kernel, eps=eps,
                          parallel_heads=parallel_heads),
        out_shape=jax.ShapeDtypeStruct((2, B, npad), jnp.float32),
        grid=(2,),                                            # one step per head
        in_specs=[
            pl.BlockSpec((B, K3), lambda h: (0, 0)),          # conv3 patches
            pl.BlockSpec((K3, N3), lambda h: (0, 0)),         # conv3 weight
            pl.BlockSpec((1, N3), lambda h: (0, 0)),          # conv3 bias
            pl.BlockSpec((1, N3, n1), lambda h: (h, 0, 0)),   # head fc1
            pl.BlockSpec((1, 1, n1), lambda h: (h, 0, 0)),
            pl.BlockSpec((1, 1, n1), lambda h: (h, 0, 0)),
            pl.BlockSpec((1, 1, n1), lambda h: (h, 0, 0)),
            pl.BlockSpec((1, n1, n2), lambda h: (h, 0, 0)),   # head fc2
            pl.BlockSpec((1, 1, n2), lambda h: (h, 0, 0)),
            pl.BlockSpec((1, 1, n2), lambda h: (h, 0, 0)),
            pl.BlockSpec((1, 1, n2), lambda h: (h, 0, 0)),
            pl.BlockSpec((1, n2, npad), lambda h: (h, 0, 0)), # head fc3 (padded)
            pl.BlockSpec((1, 1, npad), lambda h: (h, 0, 0)),
        ],
        out_specs=pl.BlockSpec((1, B, npad), lambda h: (h, 0, 0)),
        scratch_shapes=[pltpu.VMEM((B, N3), jnp.bfloat16)],   # shared feat
        compiler_params=pltpu.CompilerParams(
            dimension_semantics=(("parallel",) if parallel_heads
                                 else ("arbitrary",))),
    )(patches3, w3.astype(jnp.bfloat16), b3.reshape(1, N3).astype(jnp.float32),
      hw1, hb1, hg1, hbe1, hw2, hb2, hg2, hbe2, hw3, hb3)

    return (out[0, :, :cls_p["w3"].shape[-1]],
            out[1, :, :dom_p["w3"].shape[-1]])


# --------------------------------------------------------------------------
# Parameters (deterministic, PyTorch-default-style uniform init)
# --------------------------------------------------------------------------
def init_params(key):
    def uni(k, shape, fan_in):
        bound = 1.0 / float(fan_in) ** 0.5
        return jax.random.uniform(k, shape, jnp.float32, -bound, bound)

    ks = iter(jax.random.split(key, 18))
    params = {
        # feature extractor: Conv(3->64,5,3), Conv(64->64,5,3), Conv(64->128,5)
        "w1": uni(next(ks), (5 * 5 * 3, 64), 5 * 5 * 3),
        "b1": uni(next(ks), (64,), 5 * 5 * 3),
        "w2": uni(next(ks), (5 * 5 * 64, 64), 5 * 5 * 64),
        "b2": uni(next(ks), (64,), 5 * 5 * 64),
        "w3": uni(next(ks), (5 * 5 * 64, 128), 5 * 5 * 64),
        "b3": uni(next(ks), (128,), 5 * 5 * 64),
    }

    def head_params(out_dim):
        return {
            "w1": uni(next(ks), (128, 1024), 128),
            "b1": uni(next(ks), (1024,), 128),
            "g1": jnp.ones((1024,), jnp.float32),
            "be1": jnp.zeros((1024,), jnp.float32),
            "w2": uni(next(ks), (1024, 256), 1024),
            "b2": uni(next(ks), (256,), 1024),
            "g2": jnp.ones((256,), jnp.float32),
            "be2": jnp.zeros((256,), jnp.float32),
            "w3": uni(next(ks), (256, out_dim), 256),
            "b3": uni(next(ks), (out_dim,), 256),
        }

    params["cls"] = head_params(7)   # classifier    -> 7 classes
    params["dom"] = head_params(4)   # discriminator -> 4 domains
    return params


# --------------------------------------------------------------------------
# DANN forward
# --------------------------------------------------------------------------
@functools.partial(jax.jit, static_argnames=("reverse",))
def dann_forward(params, x_nchw, reverse=True, alpha=1.0):
    B = x_nchw.shape[0]
    # input.expand(B, 3, 228, 228); conv/pool trunk runs in bf16 (f32 accum).
    x = jnp.broadcast_to(x_nchw, (B, 3, 228, 228)).astype(jnp.bfloat16)
    x = jnp.transpose(x, (0, 2, 3, 1))                       # NCHW -> NHWC

    h = conv2d_relu(x, params["w1"], params["b1"], 5, 3,
                    tm=2048, k_pad_to=128)                   # (B, 75, 75, 64)
    h = maxpool3x3s2(h)                                      # (B, 37, 37, 64)
    h = conv2d_relu(h, params["w2"], params["b2"], 5, 3,
                    tm=256, k_pad_to=1664)                   # (B, 11, 11, 64)
    h = maxpool3x3s2(h)                                      # (B,  5,  5, 64)

    # conv3's im2col on a 5x5 map with a 5x5 kernel is just a flatten.
    patches3 = h.reshape(B, 5 * 5 * 64)                      # (B, 1600) bf16

    # TODO(synk): ReverseLayerF is a gradient-reversal autograd trick; its
    # forward is the identity, so `reverse`/`alpha` do not change the forward.
    class_output, domain_output = conv3_and_heads(
        patches3, params["w3"], params["b3"], params["cls"], params["dom"])
    return class_output, domain_output


if __name__ == "__main__":
    key = jax.random.PRNGKey(0)
    pkey, xkey = jax.random.split(key)
    params = init_params(pkey)
    # Batch of 2 single-channel 228x228 images (expanded to 3 channels inside).
    x = jax.random.normal(xkey, (2, 1, 228, 228), jnp.float32)

    class_out, domain_out = dann_forward(params, x, reverse=True, alpha=1.0)
    jax.block_until_ready((class_out, domain_out))

    assert class_out.shape == (2, 7), class_out.shape
    assert domain_out.shape == (2, 4), domain_out.shape
    assert bool(jnp.all(jnp.isfinite(class_out)))
    assert bool(jnp.all(jnp.isfinite(domain_out)))
    print("KERNEL_OK")
</pallas_src>

<mosaic_0001>
module attributes {stable_mosaic.version = 11 : i64} {
  func.func @_matmul_bias_kernel(%arg0: i32, %arg1: memref<2048x128xbf16, #tpu.memory_space<vmem>>, %arg2: memref<128x64xbf16, #tpu.memory_space<vmem>>, %arg3: memref<1x64xf32, #tpu.memory_space<vmem>>, %arg4: memref<2048x64xbf16, #tpu.memory_space<vmem>>) attributes {dimension_semantics = [#tpu.dimension_semantics<parallel>], iteration_bounds = array<i64: 6>, scalar_prefetch = 0 : i64, scratch_operands = 0 : i64, tpu.core_type = #tpu.core_type<tc>, window_params = [{transform_indices = @transform_0, window_bounds = array<i64: 2048, 128>}, {pipeline_mode = #tpu.pipeline_mode<synchronous>, transform_indices = @transform_1, window_bounds = array<i64: 128, 64>}, {pipeline_mode = #tpu.pipeline_mode<synchronous>, transform_indices = @transform_2, window_bounds = array<i64: 1, 64>}, {transform_indices = @transform_3, window_bounds = array<i64: 2048, 64>}]} {
    %c0 = arith.constant 0 : index
    %c0_0 = arith.constant 0 : index
    %0 = vector.load %arg1[%c0, %c0_0] : memref<2048x128xbf16, #tpu.memory_space<vmem>>, vector<2048x128xbf16>
    %c0_1 = arith.constant 0 : index
    %c0_2 = arith.constant 0 : index
    %1 = vector.load %arg2[%c0_1, %c0_2] : memref<128x64xbf16, #tpu.memory_space<vmem>>, vector<128x64xbf16>
    %cst = arith.constant dense<0.000000e+00> : vector<2048x64xf32>
    %2 = tpu.matmul %0, %1, %cst {dimension_numbers = #tpu.dot_dimension_numbers<[1], [0], [0], [1], [0, 0, 1, 1], [], []>} : vector<2048x128xbf16>, vector<128x64xbf16>, vector<2048x64xf32> -> vector<2048x64xf32>
    %c0_3 = arith.constant 0 : index
    %c0_4 = arith.constant 0 : index
    %3 = vector.load %arg3[%c0_3, %c0_4] : memref<1x64xf32, #tpu.memory_space<vmem>>, vector<1x64xf32>
    %4 = vector.broadcast %3 : vector<1x64xf32> to vector<2048x64xf32>
    %5 = arith.addf %2, %4 : vector<2048x64xf32>
    %cst_5 = arith.constant 0.000000e+00 : f32
    %6 = vector.broadcast %cst_5 : f32 to vector<2048x64xf32>
    %7 = arith.maximumf %5, %6 : vector<2048x64xf32>
    %8 = arith.truncf %7 : vector<2048x64xf32> to vector<2048x64xbf16>
    %c0_6 = arith.constant 0 : index
    %c0_7 = arith.constant 0 : index
    %9 = vector.load %arg4[%c0_6, %c0_7] : memref<2048x64xbf16, #tpu.memory_space<vmem>>, vector<2048x64xbf16>
    tpu.vector_store %arg4[%c0_6, %c0_7], %8 {strides = array<i32>} : memref<2048x64xbf16, #tpu.memory_space<vmem>>, vector<2048x64xbf16>,
    return
  }
  func.func @transform_0(%arg0: i32) -> (i32, i32) {
    %c0_i32 = arith.constant 0 : i32
    %c0_i32_0 = arith.constant 0 : i32
    return %arg0, %c0_i32 : i32, i32
  }
  func.func @transform_1(%arg0: i32) -> (i32, i32) {
    %c0_i32 = arith.constant 0 : i32
    %c0_i32_0 = arith.constant 0 : i32
    %c0_i32_1 = arith.constant 0 : i32
    return %c0_i32, %c0_i32_0 : i32, i32
  }
  func.func @transform_2(%arg0: i32) -> (i32, i32) {
    %c0_i32 = arith.constant 0 : i32
    %c0_i32_0 = arith.constant 0 : i32
    %c0_i32_1 = arith.constant 0 : i32
    return %c0_i32, %c0_i32_0 : i32, i32
  }
  func.func @transform_3(%arg0: i32) -> (i32, i32) {
    %c0_i32 = arith.constant 0 : i32
    %c0_i32_0 = arith.constant 0 : i32
    return %arg0, %c0_i32 : i32, i32
  }
}

module attributes {stable_mosaic.version = 11 : i64} {
  func.func @_matmul_bias_kernel(%arg0: i32, %arg1: memref<256x1664xbf16, #tpu.memory_space<vmem>>, %arg2: memref<1664x64xbf16, #tpu.memory_space<vmem>>, %arg3: memref<1x64xf32, #tpu.memory_space<vmem>>, %arg4: memref<256x64xbf16, #tpu.memory_space<vmem>>) attributes {dimension_semantics = [#tpu.dimension_semantics<parallel>], iteration_bounds = array<i64: 1>, scalar_prefetch = 0 : i64, scratch_operands = 0 : i64, tpu.core_type = #tpu.core_type<tc>, window_params = [{transform_indices = @transform_0, window_bounds = array<i64: 256, 1664>}, {pipeline_mode = #tpu.pipeline_mode<synchronous>, transform_indices = @transform_1, window_bounds = array<i64: 1664, 64>}, {pipeline_mode = #tpu.pipeline_mode<synchronous>, transform_indices = @transform_2, window_bounds = array<i64: 1, 64>}, {transform_indices = @transform_3, window_bounds = array<i64: 256, 64>}]} {
    %c0 = arith.constant 0 : index
    %c0_0 = arith.constant 0 : index
    %0 = vector.load %arg1[%c0, %c0_0] : memref<256x1664xbf16, #tpu.memory_space<vmem>>, vector<256x1664xbf16>
    %c0_1 = arith.constant 0 : index
    %c0_2 = arith.constant 0 : index
    %1 = vector.load %arg2[%c0_1, %c0_2] : memref<1664x64xbf16, #tpu.memory_space<vmem>>, vector<1664x64xbf16>
    %cst = arith.constant dense<0.000000e+00> : vector<256x64xf32>
    %2 = tpu.matmul %0, %1, %cst {dimension_numbers = #tpu.dot_dimension_numbers<[1], [0], [0], [1], [0, 0, 1, 1], [], []>} : vector<256x1664xbf16>, vector<1664x64xbf16>, vector<256x64xf32> -> vector<256x64xf32>
    %c0_3 = arith.constant 0 : index
    %c0_4 = arith.constant 0 : index
    %3 = vector.load %arg3[%c0_3, %c0_4] : memref<1x64xf32, #tpu.memory_space<vmem>>, vector<1x64xf32>
    %4 = vector.broadcast %3 : vector<1x64xf32> to vector<256x64xf32>
    %5 = arith.addf %2, %4 : vector<256x64xf32>
    %cst_5 = arith.constant 0.000000e+00 : f32
    %6 = vector.broadcast %cst_5 : f32 to vector<256x64xf32>
    %7 = arith.maximumf %5, %6 : vector<256x64xf32>
    %8 = arith.truncf %7 : vector<256x64xf32> to vector<256x64xbf16>
    %c0_6 = arith.constant 0 : index
    %c0_7 = arith.constant 0 : index
    %9 = vector.load %arg4[%c0_6, %c0_7] : memref<256x64xbf16, #tpu.memory_space<vmem>>, vector<256x64xbf16>
    tpu.vector_store %arg4[%c0_6, %c0_7], %8 {strides = array<i32>} : memref<256x64xbf16, #tpu.memory_space<vmem>>, vector<256x64xbf16>,
    return
  }
  func.func @transform_0(%arg0: i32) -> (i32, i32) {
    %c0_i32 = arith.constant 0 : i32
    %c0_i32_0 = arith.constant 0 : i32
    return %arg0, %c0_i32 : i32, i32
  }
  func.func @transform_1(%arg0: i32) -> (i32, i32) {
    %c0_i32 = arith.constant 0 : i32
    %c0_i32_0 = arith.constant 0 : i32
    %c0_i32_1 = arith.constant 0 : i32
    return %c0_i32, %c0_i32_0 : i32, i32
  }
  func.func @transform_2(%arg0: i32) -> (i32, i32) {
    %c0_i32 = arith.constant 0 : i32
    %c0_i32_0 = arith.constant 0 : i32
    %c0_i32_1 = arith.constant 0 : i32
    return %c0_i32, %c0_i32_0 : i32, i32
  }
  func.func @transform_3(%arg0: i32) -> (i32, i32) {
    %c0_i32 = arith.constant 0 : i32
    %c0_i32_0 = arith.constant 0 : i32
    return %arg0, %c0_i32 : i32, i32
  }
}

module attributes {stable_mosaic.version = 11 : i64} {
  func.func @_conv3_heads_kernel(%arg0: i32, %arg1: memref<2x1600xbf16, #tpu.memory_space<vmem>>, %arg2: memref<1600x128xbf16, #tpu.memory_space<vmem>>, %arg3: memref<1x128xf32, #tpu.memory_space<vmem>>, %arg4: memref<1x128x1024xbf16, #tpu.memory_space<vmem>>, %arg5: memref<1x1x1024xf32, #tpu.memory_space<vmem>>, %arg6: memref<1x1x1024xf32, #tpu.memory_space<vmem>>, %arg7: memref<1x1x1024xf32, #tpu.memory_space<vmem>>, %arg8: memref<1x1024x256xbf16, #tpu.memory_space<vmem>>, %arg9: memref<1x1x256xf32, #tpu.memory_space<vmem>>, %arg10: memref<1x1x256xf32, #tpu.memory_space<vmem>>, %arg11: memref<1x1x256xf32, #tpu.memory_space<vmem>>, %arg12: memref<1x256x128xbf16, #tpu.memory_space<vmem>>, %arg13: memref<1x1x128xf32, #tpu.memory_space<vmem>>, %arg14: memref<1x2x128xf32, #tpu.memory_space<vmem>>, %arg15: memref<2x128xbf16, #tpu.memory_space<vmem>>) attributes {dimension_semantics = [#tpu.dimension_semantics<arbitrary>], iteration_bounds = array<i64: 2>, scalar_prefetch = 0 : i64, scratch_operands = 1 : i64, tpu.core_type = #tpu.core_type<tc>, window_params = [{pipeline_mode = #tpu.pipeline_mode<synchronous>, transform_indices = @transform_0, window_bounds = array<i64: 2, 1600>}, {pipeline_mode = #tpu.pipeline_mode<synchronous>, transform_indices = @transform_1, window_bounds = array<i64: 1600, 128>}, {pipeline_mode = #tpu.pipeline_mode<synchronous>, transform_indices = @transform_2, window_bounds = array<i64: 1, 128>}, {transform_indices = @transform_3, window_bounds = array<i64: 1, 128, 1024>}, {transform_indices = @transform_4, window_bounds = array<i64: 1, 1, 1024>}, {transform_indices = @transform_5, window_bounds = array<i64: 1, 1, 1024>}, {transform_indices = @transform_6, window_bounds = array<i64: 1, 1, 1024>}, {transform_indices = @transform_7, window_bounds = array<i64: 1, 1024, 256>}, {transform_indices = @transform_8, window_bounds = array<i64: 1, 1, 256>}, {transform_indices = @transform_9, window_bounds = array<i64: 1, 1, 256>}, {transform_indices = @transform_10, window_bounds = array<i64: 1, 1, 256>}, {transform_indices = @transform_11, window_bounds = array<i64: 1, 256, 128>}, {transform_indices = @transform_12, window_bounds = array<i64: 1, 1, 128>}, {transform_indices = @transform_13, window_bounds = array<i64: 1, 2, 128>}]} {
    %c0_i32 = arith.constant 0 : i32
    %0 = arith.cmpi eq, %arg0, %c0_i32 : i32
    %1 = arith.extui %0 : i1 to i32
    %c0_i32_0 = arith.constant 0 : i32
    %2 = arith.cmpi ne, %1, %c0_i32_0 : i32
    scf.if %2 {
      %c0_49 = arith.constant 0 : index
      %c0_50 = arith.constant 0 : index
      %86 = vector.load %arg1[%c0_49, %c0_50] : memref<2x1600xbf16, #tpu.memory_space<vmem>>, vector<2x1600xbf16>
      %c0_51 = arith.constant 0 : index
      %c0_52 = arith.constant 0 : index
      %87 = vector.load %arg2[%c0_51, %c0_52] : memref<1600x128xbf16, #tpu.memory_space<vmem>>, vector<1600x128xbf16>
      %cst_53 = arith.constant dense<0.000000e+00> : vector<2x128xf32>
      %88 = tpu.matmul %86, %87, %cst_53 {dimension_numbers = #tpu.dot_dimension_numbers<[1], [0], [0], [1], [0, 0, 1, 1], [], []>} : vector<2x1600xbf16>, vector<1600x128xbf16>, vector<2x128xf32> -> vector<2x128xf32>
      %c0_54 = arith.constant 0 : index
      %c0_55 = arith.constant 0 : index
      %89 = vector.load %arg3[%c0_54, %c0_55] : memref<1x128xf32, #tpu.memory_space<vmem>>, vector<1x128xf32>
      %90 = vector.broadcast %89 : vector<1x128xf32> to vector<2x128xf32>
      %91 = arith.addf %88, %90 : vector<2x128xf32>
      %cst_56 = arith.constant 0.000000e+00 : f32
      %92 = vector.broadcast %cst_56 : f32 to vector<2x128xf32>
      %93 = arith.maximumf %91, %92 : vector<2x128xf32>
      %94 = arith.truncf %93 : vector<2x128xf32> to vector<2x128xbf16>
      %c0_57 = arith.constant 0 : index
      %c0_58 = arith.constant 0 : index
      %95 = vector.load %arg15[%c0_57, %c0_58] : memref<2x128xbf16, #tpu.memory_space<vmem>>, vector<2x128xbf16>
      tpu.vector_store %arg15[%c0_57, %c0_58], %94 {strides = array<i32>} : memref<2x128xbf16, #tpu.memory_space<vmem>>, vector<2x128xbf16>,
    } else {
    }
    %c0 = arith.constant 0 : index
    %c0_1 = arith.constant 0 : index
    %3 = vector.load %arg15[%c0, %c0_1] : memref<2x128xbf16, #tpu.memory_space<vmem>>, vector<2x128xbf16>
    %c0_2 = arith.constant 0 : index
    %c0_3 = arith.constant 0 : index
    %c0_4 = arith.constant 0 : index
    %4 = vector.load %arg4[%c0_2, %c0_3, %c0_4] : memref<1x128x1024xbf16, #tpu.memory_space<vmem>>, vector<1x128x1024xbf16>
    %5 = vector.shape_cast %4 : vector<1x128x1024xbf16> to vector<128x1024xbf16>
    %c0_5 = arith.constant 0 : index
    %c0_6 = arith.constant 0 : index
    %c0_7 = arith.constant 0 : index
    %6 = vector.load %arg5[%c0_5, %c0_6, %c0_7] : memref<1x1x1024xf32, #tpu.memory_space<vmem>>, vector<1x1x1024xf32>
    %7 = vector.shape_cast %6 : vector<1x1x1024xf32> to vector<1x1024xf32>
    %c0_8 = arith.constant 0 : index
    %c0_9 = arith.constant 0 : index
    %c0_10 = arith.constant 0 : index
    %8 = vector.load %arg6[%c0_8, %c0_9, %c0_10] : memref<1x1x1024xf32, #tpu.memory_space<vmem>>, vector<1x1x1024xf32>
    %9 = vector.shape_cast %8 : vector<1x1x1024xf32> to vector<1x1024xf32>
    %c0_11 = arith.constant 0 : index
    %c0_12 = arith.constant 0 : index
    %c0_13 = arith.constant 0 : index
    %10 = vector.load %arg7[%c0_11, %c0_12, %c0_13] : memref<1x1x1024xf32, #tpu.memory_space<vmem>>, vector<1x1x1024xf32>
    %11 = vector.shape_cast %10 : vector<1x1x1024xf32> to vector<1x1024xf32>
    %cst = arith.constant dense<0.000000e+00> : vector<2x1024xf32>
    %12 = tpu.matmul %3, %5, %cst {dimension_numbers = #tpu.dot_dimension_numbers<[1], [0], [0], [1], [0, 0, 1, 1], [], []>} : vector<2x128xbf16>, vector<128x1024xbf16>, vector<2x1024xf32> -> vector<2x1024xf32>
    %13 = vector.broadcast %7 : vector<1x1024xf32> to vector<2x1024xf32>
    %14 = arith.addf %12, %13 : vector<2x1024xf32>
    %cst_14 = arith.constant dense<0.000000e+00> : vector<1024xf32>
    %15 = vector.multi_reduction <add>, %14, %cst_14 [0] : vector<2x1024xf32> to vector<1024xf32>
    %16 = vector.shape_cast %15 : vector<1024xf32> to vector<1x1024xf32>
    %cst_15 = arith.constant 2.000000e+00 : f32
    %17 = vector.broadcast %cst_15 : f32 to vector<1x1024xf32>
    %18 = arith.divf %16, %17 : vector<1x1024xf32>
    %19 = vector.broadcast %18 : vector<1x1024xf32> to vector<2x1024xf32>
    %20 = arith.subf %14, %19 : vector<2x1024xf32>
    %21 = arith.mulf %20, %20 : vector<2x1024xf32>
    %cst_16 = arith.constant dense<0.000000e+00> : vector<1024xf32>
    %22 = vector.multi_reduction <add>, %21, %cst_16 [0] : vector<2x1024xf32> to vector<1024xf32>
    %23 = vector.shape_cast %22 : vector<1024xf32> to vector<1x1024xf32>
    %cst_17 = arith.constant 2.000000e+00 : f32
    %24 = vector.broadcast %cst_17 : f32 to vector<1x1024xf32>
    %25 = arith.divf %23, %24 : vector<1x1024xf32>
    %26 = vector.broadcast %18 : vector<1x1024xf32> to vector<2x1024xf32>
    %27 = arith.subf %14, %26 : vector<2x1024xf32>
    %cst_18 = arith.constant 9.99999974E-6 : f32
    %28 = vector.broadcast %cst_18 : f32 to vector<1x1024xf32>
    %29 = arith.addf %25, %28 : vector<1x1024xf32>
    %30 = math.rsqrt %29 : vector<1x1024xf32>
    %31 = vector.broadcast %30 : vector<1x1024xf32> to vector<2x1024xf32>
    %32 = arith.mulf %27, %31 : vector<2x1024xf32>
    %33 = vector.broadcast %9 : vector<1x1024xf32> to vector<2x1024xf32>
    %34 = arith.mulf %32, %33 : vector<2x1024xf32>
    %35 = vector.broadcast %11 : vector<1x1024xf32> to vector<2x1024xf32>
    %36 = arith.addf %34, %35 : vector<2x1024xf32>
    %cst_19 = arith.constant 0.000000e+00 : f32
    %37 = vector.broadcast %cst_19 : f32 to vector<2x1024xf32>
    %38 = arith.maximumf %36, %37 : vector<2x1024xf32>
    %39 = arith.truncf %38 : vector<2x1024xf32> to vector<2x1024xbf16>
    %c0_20 = arith.constant 0 : index
    %c0_21 = arith.constant 0 : index
    %c0_22 = arith.constant 0 : index
    %40 = vector.load %arg8[%c0_20, %c0_21, %c0_22] : memref<1x1024x256xbf16, #tpu.memory_space<vmem>>, vector<1x1024x256xbf16>
    %41 = vector.shape_cast %40 : vector<1x1024x256xbf16> to vector<1024x256xbf16>
    %c0_23 = arith.constant 0 : index
    %c0_24 = arith.constant 0 : index
    %c0_25 = arith.constant 0 : index
    %42 = vector.load %arg9[%c0_23, %c0_24, %c0_25] : memref<1x1x256xf32, #tpu.memory_space<vmem>>, vector<1x1x256xf32>
    %43 = vector.shape_cast %42 : vector<1x1x256xf32> to vector<1x256xf32>
    %c0_26 = arith.constant 0 : index
    %c0_27 = arith.constant 0 : index
    %c0_28 = arith.constant 0 : index
    %44 = vector.load %arg10[%c0_26, %c0_27, %c0_28] : memref<1x1x256xf32, #tpu.memory_space<vmem>>, vector<1x1x256xf32>
    %45 = vector.shape_cast %44 : vector<1x1x256xf32> to vector<1x256xf32>
    %c0_29 = arith.constant 0 : index
    %c0_30 = arith.constant 0 : index
    %c0_31 = arith.constant 0 : index
    %46 = vector.load %arg11[%c0_29, %c0_30, %c0_31] : memref<1x1x256xf32, #tpu.memory_space<vmem>>, vector<1x1x256xf32>
    %47 = vector.shape_cast %46 : vector<1x1x256xf32> to vector<1x256xf32>
    %cst_32 = arith.constant dense<0.000000e+00> : vector<2x256xf32>
    %48 = tpu.matmul %39, %41, %cst_32 {dimension_numbers = #tpu.dot_dimension_numbers<[1], [0], [0], [1], [0, 0, 1, 1], [], []>} : vector<2x1024xbf16>, vector<1024x256xbf16>, vector<2x256xf32> -> vector<2x256xf32>
    %49 = vector.broadcast %43 : vector<1x256xf32> to vector<2x256xf32>
    %50 = arith.addf %48, %49 : vector<2x256xf32>
    %cst_33 = arith.constant dense<0.000000e+00> : vector<256xf32>
    %51 = vector.multi_reduction <add>, %50, %cst_33 [0] : vector<2x256xf32> to vector<256xf32>
    %52 = vector.shape_cast %51 : vector<256xf32> to vector<1x256xf32>
    %cst_34 = arith.constant 2.000000e+00 : f32
    %53 = vector.broadcast %cst_34 : f32 to vector<1x256xf32>
    %54 = arith.divf %52, %53 : vector<1x256xf32>
    %55 = vector.broadcast %54 : vector<1x256xf32> to vector<2x256xf32>
    %56 = arith.subf %50, %55 : vector<2x256xf32>
    %57 = arith.mulf %56, %56 : vector<2x256xf32>
    %cst_35 = arith.constant dense<0.000000e+00> : vector<256xf32>
    %58 = vector.multi_reduction <add>, %57, %cst_35 [0] : vector<2x256xf32> to vector<256xf32>
    %59 = vector.shape_cast %58 : vector<256xf32> to vector<1x256xf32>
    %cst_36 = arith.constant 2.000000e+00 : f32
    %60 = vector.broadcast %cst_36 : f32 to vector<1x256xf32>
    %61 = arith.divf %59, %60 : vector<1x256xf32>
    %62 = vector.broadcast %54 : vector<1x256xf32> to vector<2x256xf32>
    %63 = arith.subf %50, %62 : vector<2x256xf32>
    %cst_37 = arith.constant 9.99999974E-6 : f32
    %64 = vector.broadcast %cst_37 : f32 to vector<1x256xf32>
    %65 = arith.addf %61, %64 : vector<1x256xf32>
    %66 = math.rsqrt %65 : vector<1x256xf32>
    %67 = vector.broadcast %66 : vector<1x256xf32> to vector<2x256xf32>
    %68 = arith.mulf %63, %67 : vector<2x256xf32>
    %69 = vector.broadcast %45 : vector<1x256xf32> to vector<2x256xf32>
    %70 = arith.mulf %68, %69 : vector<2x256xf32>
    %71 = vector.broadcast %47 : vector<1x256xf32> to vector<2x256xf32>
    %72 = arith.addf %70, %71 : vector<2x256xf32>
    %cst_38 = arith.constant 0.000000e+00 : f32
    %73 = vector.broadcast %cst_38 : f32 to vector<2x256xf32>
    %74 = arith.maximumf %72, %73 : vector<2x256xf32>
    %75 = arith.truncf %74 : vector<2x256xf32> to vector<2x256xbf16>
    %c0_39 = arith.constant 0 : index
    %c0_40 = arith.constant 0 : index
    %c0_41 = arith.constant 0 : index
    %76 = vector.load %arg12[%c0_39, %c0_40, %c0_41] : memref<1x256x128xbf16, #tpu.memory_space<vmem>>, vector<1x256x128xbf16>
    %77 = vector.shape_cast %76 : vector<1x256x128xbf16> to vector<256x128xbf16>
    %cst_42 = arith.constant dense<0.000000e+00> : vector<2x128xf32>
    %78 = tpu.matmul %75, %77, %cst_42 {dimension_numbers = #tpu.dot_dimension_numbers<[1], [0], [0], [1], [0, 0, 1, 1], [], []>} : vector<2x256xbf16>, vector<256x128xbf16>, vector<2x128xf32> -> vector<2x128xf32>
    %c0_43 = arith.constant 0 : index
    %c0_44 = arith.constant 0 : index
    %c0_45 = arith.constant 0 : index
    %79 = vector.load %arg13[%c0_43, %c0_44, %c0_45] : memref<1x1x128xf32, #tpu.memory_space<vmem>>, vector<1x1x128xf32>
    %80 = vector.shape_cast %79 : vector<1x1x128xf32> to vector<1x128xf32>
    %81 = vector.broadcast %80 : vector<1x128xf32> to vector<2x128xf32>
    %82 = arith.addf %78, %81 : vector<2x128xf32>
    %c0_46 = arith.constant 0 : index
    %c0_47 = arith.constant 0 : index
    %c0_48 = arith.constant 0 : index
    %83 = vector.load %arg14[%c0_46, %c0_47, %c0_48] : memref<1x2x128xf32, #tpu.memory_space<vmem>>, vector<1x2x128xf32>
    %84 = vector.shape_cast %83 : vector<1x2x128xf32> to vector<2x128xf32>
    %85 = vector.shape_cast %82 : vector<2x128xf32> to vector<1x2x128xf32>
    tpu.vector_store %arg14[%c0_46, %c0_47, %c0_48], %85 {strides = array<i32>} : memref<1x2x128xf32, #tpu.memory_space<vmem>>, vector<1x2x128xf32>,
    return
  }
  func.func @transform_0(%arg0: i32) -> (i32, i32) {
    %c0_i32 = arith.constant 0 : i32
    %c0_i32_0 = arith.constant 0 : i32
    %c0_i32_1 = arith.constant 0 : i32
    return %c0_i32, %c0_i32_0 : i32, i32
  }
  func.func @transform_1(%arg0: i32) -> (i32, i32) {
    %c0_i32 = arith.constant 0 : i32
    %c0_i32_0 = arith.constant 0 : i32
    %c0_i32_1 = arith.constant 0 : i32
    return %c0_i32, %c0_i32_0 : i32, i32
  }
  func.func @transform_2(%arg0: i32) -> (i32, i32) {
    %c0_i32 = arith.constant 0 : i32
    %c0_i32_0 = arith.constant 0 : i32
    %c0_i32_1 = arith.constant 0 : i32
    return %c0_i32, %c0_i32_0 : i32, i32
  }
  func.func @transform_3(%arg0: i32) -> (i32, i32, i32) {
    %c0_i32 = arith.constant 0 : i32
    %c0_i32_0 = arith.constant 0 : i32
    %c0_i32_1 = arith.constant 0 : i32
    return %arg0, %c0_i32, %c0_i32_0 : i32, i32, i32
  }
  func.func @transform_4(%arg0: i32) -> (i32, i32, i32) {
    %c0_i32 = arith.constant 0 : i32
    %c0_i32_0 = arith.constant 0 : i32
    %c0_i32_1 = arith.constant 0 : i32
    return %arg0, %c0_i32, %c0_i32_0 : i32, i32, i32
  }
  func.func @transform_5(%arg0: i32) -> (i32, i32, i32) {
    %c0_i32 = arith.constant 0 : i32
    %c0_i32_0 = arith.constant 0 : i32
    %c0_i32_1 = arith.constant 0 : i32
    return %arg0, %c0_i32, %c0_i32_0 : i32, i32, i32
  }
  func.func @transform_6(%arg0: i32) -> (i32, i32, i32) {
    %c0_i32 = arith.constant 0 : i32
    %c0_i32_0 = arith.constant 0 : i32
    %c0_i32_1 = arith.constant 0 : i32
    return %arg0, %c0_i32, %c0_i32_0 : i32, i32, i32
  }
  func.func @transform_7(%arg0: i32) -> (i32, i32, i32) {
    %c0_i32 = arith.constant 0 : i32
    %c0_i32_0 = arith.constant 0 : i32
    %c0_i32_1 = arith.constant 0 : i32
    return %arg0, %c0_i32, %c0_i32_0 : i32, i32, i32
  }
  func.func @transform_8(%arg0: i32) -> (i32, i32, i32) {
    %c0_i32 = arith.constant 0 : i32
    %c0_i32_0 = arith.constant 0 : i32
    %c0_i32_1 = arith.constant 0 : i32
    return %arg0, %c0_i32, %c0_i32_0 : i32, i32, i32
  }
  func.func @transform_9(%arg0: i32) -> (i32, i32, i32) {
    %c0_i32 = arith.constant 0 : i32
    %c0_i32_0 = arith.constant 0 : i32
    %c0_i32_1 = arith.constant 0 : i32
    return %arg0, %c0_i32, %c0_i32_0 : i32, i32, i32
  }
  func.func @transform_10(%arg0: i32) -> (i32, i32, i32) {
    %c0_i32 = arith.constant 0 : i32
    %c0_i32_0 = arith.constant 0 : i32
    %c0_i32_1 = arith.constant 0 : i32
    return %arg0, %c0_i32, %c0_i32_0 : i32, i32, i32
  }
  func.func @transform_11(%arg0: i32) -> (i32, i32, i32) {
    %c0_i32 = arith.constant 0 : i32
    %c0_i32_0 = arith.constant 0 : i32
    %c0_i32_1 = arith.constant 0 : i32
    return %arg0, %c0_i32, %c0_i32_0 : i32, i32, i32
  }
  func.func @transform_12(%arg0: i32) -> (i32, i32, i32) {
    %c0_i32 = arith.constant 0 : i32
    %c0_i32_0 = arith.constant 0 : i32
    %c0_i32_1 = arith.constant 0 : i32
    return %arg0, %c0_i32, %c0_i32_0 : i32, i32, i32
  }
  func.func @transform_13(%arg0: i32) -> (i32, i32, i32) {
    %c0_i32 = arith.constant 0 : i32
    %c0_i32_0 = arith.constant 0 : i32
    %c0_i32_1 = arith.constant 0 : i32
    return %arg0, %c0_i32, %c0_i32_0 : i32, i32, i32
  }
}

</mosaic_0001>

<llo_original>
// kernel: dann_forward.3
$region0: #{dann_forward.3}
  #allocation0 [shape = 'u32[]', space=smem, size = 0x4, offset = 0x4, fixed_abs, tag = 'smem constant byte address 0x4 - core index']
  #allocation1 [shape = 'u32[144,128]{1,0:T(1,128)}', space=vmem, size = 0x12000, scoped, tag = 'internal scratch']
  %s0 = inlined_call_operand.vmem [shape: bf16[11250,128], index: 0, kind: input, shape index: {}]
  %s1 = inlined_call_operand.vmem [shape: bf16[128,64], index: 1, kind: input, shape index: {}]
  %s2 = inlined_call_operand.vmem [shape: f32[1,64], index: 2, kind: input, shape index: {}]
  %s3 = inlined_call_operand.vmem [shape: bf16[11250,64], index: 3, kind: output, shape index: {}]
  %s4 = sld [smem:[#allocation0]]
  $region89: #{dann_forward.3} parent=0
    _
  %s6 = ssub.s32 1, %s4
  %s7 = scalar_select 0, %s6, %s4
  $region1: #{dann_forward.3} parent=0
    #allocation2 [shape = 'u8[1048576]{0}', space=vmem, size = 0x100000, scoped, tag = 'output window, operand 0']
    loop: start=0, step=1, limit=8
    $region2: #{dann_forward.3} parent=1 // loop_pre_header
      _
    $region3: #{dann_forward.3} parent=1 // loop_header
      %s9 = sphi 0, %s13
      %p10 = scmp.ge.s32.totalorder %s9, 8
      %s19 = sphi 0, %s21
      %s22 = sphi 0, %s19
      %s23 = sphi 0, %s22
      %s39 = sphi 0, %s23
      %s43 = sphi 0, %s43
      %s45 = sphi 0, %s43
      %s46 = sphi 0, %s45
      %s60 = sphi 0, %s46
      %s64 = sphi 0, %s64
      %s66 = sphi 0, %s64
      %s67 = sphi 0, %s66
      %s81 = sphi 0, %s67
      %s87 = sphi 0, %s89
      %s90 = sphi 0, %s87
      %s91 = sphi 0, %s90
      %s107 = sphi 0, %s91
    $region4: #{dann_forward.3} parent=1 // loop_header_branch
      %12 = sbr.rel (%p10) target = $region8
    $region5: #{dann_forward.3} parent=1 // loop_body
      %s14 = ssub.s32 %s9, 1
      %s15 = ssub.s32 %s9, 2
      %s16 = sadd.s32 %s9, 1
      %s17 = ssub.s32 %s9, %s16
      %p18 = scmp.eq.s32.totalorder %s17, 0
      %s20 = sadd.s32 %s19, 1
      %s21 = scalar_select %p18, %s19, %s20
      %p24 = pneg %p18
      %p25 = scmp.eq.s32.totalorder %s9, 5
      %p26 = por %p24, %p25
      %p27 = scmp.ne.s32.totalorder %s19, %s22
      %p28 = scmp.eq.s32.totalorder %s9, 0
      %p29 = por %p27, %p28
      %p30 = scmp.ne.s32.totalorder %s19, %s22
      %p31 = scmp.eq.s32.totalorder %s14, 5
      %p32 = por %p30, %p31
      %p33 = scmp.ne.s32.totalorder %s22, %s23
      %p34 = scmp.eq.s32.totalorder %s14, 0
      %p35 = por %p33, %p34
      %p36 = scmp.ne.s32.totalorder %s22, %s23
      %p37 = scmp.eq.s32.totalorder %s15, 5
      %p38 = por %p36, %p37
      %p40 = scmp.ne.s32.totalorder %s23, %s39
      %p41 = scmp.eq.s32.totalorder %s15, 0
      %p42 = por %p40, %p41
      %s44 = sadd.s32 %s43, 1
      %p47 = scmp.eq.s32.totalorder %s9, 5
      %p48 = scmp.ne.s32.totalorder %s43, %s45
      %p49 = scmp.eq.s32.totalorder %s9, 0
      %p50 = por %p48, %p49
      %p51 = scmp.ne.s32.totalorder %s43, %s45
      %p52 = scmp.eq.s32.totalorder %s14, 5
      %p53 = por %p51, %p52
      %p54 = scmp.ne.s32.totalorder %s45, %s46
      %p55 = scmp.eq.s32.totalorder %s14, 0
      %p56 = por %p54, %p55
      %p57 = scmp.ne.s32.totalorder %s45, %s46
      %p58 = scmp.eq.s32.totalorder %s15, 5
      %p59 = por %p57, %p58
      %p61 = scmp.ne.s32.totalorder %s46, %s60
      %p62 = scmp.eq.s32.totalorder %s15, 0
      %p63 = por %p61, %p62
      %s65 = sadd.s32 %s64, 1
      %p68 = scmp.eq.s32.totalorder %s9, 5
      %p69 = scmp.ne.s32.totalorder %s64, %s66
      %p70 = scmp.eq.s32.totalorder %s9, 0
      %p71 = por %p69, %p70
      %p72 = scmp.ne.s32.totalorder %s64, %s66
      %p73 = scmp.eq.s32.totalorder %s14, 5
      %p74 = por %p72, %p73
      %p75 = scmp.ne.s32.totalorder %s66, %s67
      %p76 = scmp.eq.s32.totalorder %s14, 0
      %p77 = por %p75, %p76
      %p78 = scmp.ne.s32.totalorder %s66, %s67
      %p79 = scmp.eq.s32.totalorder %s15, 5
      %p80 = por %p78, %p79
      %p82 = scmp.ne.s32.totalorder %s67, %s81
      %p83 = scmp.eq.s32.totalorder %s15, 0
      %p84 = por %p82, %p83
      %s85 = ssub.s32 %s9, %s16
      %p86 = scmp.eq.s32.totalorder %s85, 0
      %s88 = sadd.s32 %s87, 1
      %s89 = scalar_select %p86, %s87, %s88
      %p92 = pneg %p86
      %p93 = scmp.eq.s32.totalorder %s9, 5
      %p94 = por %p92, %p93
      %p95 = scmp.ne.s32.totalorder %s87, %s90
      %p96 = scmp.eq.s32.totalorder %s9, 0
      %p97 = por %p95, %p96
      %p98 = scmp.ne.s32.totalorder %s87, %s90
      %p99 = scmp.eq.s32.totalorder %s14, 5
      %p100 = por %p98, %p99
      %p101 = scmp.ne.s32.totalorder %s90, %s91
      %p102 = scmp.eq.s32.totalorder %s14, 0
      %p103 = por %p101, %p102
      %p104 = scmp.ne.s32.totalorder %s90, %s91
      %p105 = scmp.eq.s32.totalorder %s15, 5
      %p106 = por %p104, %p105
      %p108 = scmp.ne.s32.totalorder %s91, %s107
      %p109 = scmp.eq.s32.totalorder %s15, 0
      %p110 = por %p108, %p109
      %p111 = scmp.le.s32.totalorder 1, %s9
      %p112 = scmp.lt.s32.totalorder %s9, 7
      %p113 = pnand %p111, %p112
      %p114 = pneg %p113
      // Predicated region
      $region9: #{dann_forward.3} parent=5 // pred_check
        _
      $region10: #{dann_forward.3} parent=5 // pred_check_branch
        %116 = sbr.rel (%p113) target = $region12
      $region11: #{dann_forward.3} parent=5 // pred_region
        %s117 = ssub.s32 %s9, 1
        // Predicated region
        $region13: #{dann_forward.3} parent=11 // pred_check
          %p118 = pneg %p56
        $region14: #{dann_forward.3} parent=11 // pred_check_branch
          %120 = sbr.rel (%p118) target = $region16
        $region15: #{dann_forward.3} parent=11 // pred_region
          _
        $region16: #{dann_forward.3} parent=11 // pred_fallthru
          _
        // Predicated region
        $region17: #{dann_forward.3} parent=11 // pred_check
          %p121 = pneg %p77
        $region18: #{dann_forward.3} parent=11 // pred_check_branch
          %123 = sbr.rel (%p121) target = $region20
        $region19: #{dann_forward.3} parent=11 // pred_region
          _
        $region20: #{dann_forward.3} parent=11 // pred_fallthru
          _
      $region12: #{dann_forward.3} parent=5 // pred_fallthru
        _
      %p124 = scmp.lt.s32.totalorder %s9, 6
      // Predicated region
      $region21: #{dann_forward.3} parent=5 // pred_check
        %p125 = pneg %p124
      $region22: #{dann_forward.3} parent=5 // pred_check_branch
        %127 = sbr.rel (%p125) target = $region24
      $region23: #{dann_forward.3} parent=5 // pred_region
        // Predicated region
        $region25: #{dann_forward.3} parent=23 // pred_check
          %p128 = pneg %p29
        $region26: #{dann_forward.3} parent=23 // pred_check_branch
          %130 = sbr.rel (%p128) target = $region28
        $region27: #{dann_forward.3} parent=23 // pred_region
          %s131 = smul.u32 256, %s9
          %s132 = ssub.s32 1407, %s131
          %p133 = scmp.lt.s32.totalorder %s132, 256
          %s134 = scalar_select %p133, %s132, 256
          %s135 = smul.u32 64, %s134
          %p136 = scmp.lt.s32.totalorder %s131, 1406
          %s137 = scalar_select %p136, %s131, 1406
          %s138 = smul.addr %s137, 4
          %s139 = scalar_lea.vmem %s0, %s138
          %s140 = smul.u32 256, %s9
          %s141 = ssub.s32 1407, %s140
          %p142 = scmp.lt.s32.totalorder %s141, 256
          %s143 = scalar_select %p142, %s141, 256
          %s144 = smul.u32 64, %s143
        $region28: #{dann_forward.3} parent=23 // pred_fallthru
          _
      $region24: #{dann_forward.3} parent=5 // pred_fallthru
        _
      %p145 = scmp.le.s32.totalorder 1, %s9
      %p146 = scmp.lt.s32.totalorder %s9, 7
      %p147 = pnand %p145, %p146
      %p148 = pneg %p147
      // Predicated region
      $region29: #{dann_forward.3} parent=5 // pred_check
        _
      $region30: #{dann_forward.3} parent=5 // pred_check_branch
        %150 = sbr.rel (%p147) target = $region32
      $region31: #{dann_forward.3} parent=5 // pred_region
        %s151 = ssub.s32 %s9, 1
        %s152 = smul.u32 256, %s14
        %s153 = ssub.s32 1407, %s152
        %p154 = scmp.lt.s32.totalorder %s153, 256
        %s155 = scalar_select %p154, %s153, 256
        %s156 = smul.u32 64, %s155
        %p157 = scmp.lt.s32.totalorder %s152, 1406
        %s158 = scalar_select %p157, %s152, 1406
        %s159 = smul.addr %s158, 4
        %s160 = scalar_lea.vmem %s0, %s159
        %p161 = pneg %p35
        %p162 = pneg %p32
        %p163 = pneg %p56
        %p164 = pneg %p53
        %p165 = pneg %p77
        %p166 = pneg %p74
        %p167 = pneg %p103
        %p168 = pneg %p100
        %s169 = sand.u32 %s90, 1
        %s170 = sand.u32 %s90, 1
        %s171 = smul.addr %s170, 1024
        %s172 = scalar_lea.vmem [#allocation2], %s171
        %s173 = smul.u32 256, %s14
        %s174 = ssub.s32 1407, %s173
        %p175 = scmp.lt.s32.totalorder %s174, 256
        %s176 = scalar_select %p175, %s174, 256
        %s177 = smul.u32 64, %s176
        %p178 = scmp.lt.s32.totalorder %s173, 1406
        %s179 = scalar_select %p178, %s173, 1406
        %s180 = smul.addr %s179, 4
        %s181 = scalar_lea.vmem %s0, %s180
        %s182 = smul.u32 256, %s14
        %s183 = ssub.s32 1407, %s182
        %p184 = scmp.lt.s32.totalorder %s183, 256
        %s185 = scalar_select %p184, %s183, 256
        %s186 = smul.u32 64, %s185
        %s187 = smul.u32 256, %s14
        %s188 = ssub.s32 1407, %s187
        %p189 = scmp.lt.s32.totalorder %s188, 256
        %s190 = scalar_select %p189, %s188, 256
        %s191 = smul.u32 64, %s190
        %v193 = vld [vmem:[%s181] sm:$0xf]
        %v194 = vld [vmem:[%s181 + $0x4] sm:$0xf]
        %v195 = vld [vmem:[%s181 + $0x8] sm:$0xf]
        %v196 = vld [vmem:[%s181 + $0xc] sm:$0xf]
        %v197 = vld [vmem:[%s181 + $0x10] sm:$0xf]
        %v198 = vld [vmem:[%s181 + $0x14] sm:$0xf]
        %v199 = vld [vmem:[%s181 + $0x18] sm:$0xf]
        %v200 = vld [vmem:[%s181 + $0x1c] sm:$0xf]
        %v201 = vld [vmem:[%s181 + $0x20] sm:$0xf]
        %v202 = vld [vmem:[%s181 + $0x24] sm:$0xf]
        %v203 = vld [vmem:[%s181 + $0x28] sm:$0xf]
        %v204 = vld [vmem:[%s181 + $0x2c] sm:$0xf]
        %v205 = vld [vmem:[%s181 + $0x30] sm:$0xf]
        %v206 = vld [vmem:[%s181 + $0x34] sm:$0xf]
        %v207 = vld [vmem:[%s181 + $0x38] sm:$0xf]
        %v208 = vld [vmem:[%s181 + $0x3c] sm:$0xf]
        %v209 = vld [vmem:[%s181 + $0x40] sm:$0xf]
        %v210 = vld [vmem:[%s181 + $0x44] sm:$0xf]
        %v211 = vld [vmem:[%s181 + $0x48] sm:$0xf]
        %v212 = vld [vmem:[%s181 + $0x4c] sm:$0xf]
        %v213 = vld [vmem:[%s181 + $0x50] sm:$0xf]
        %v214 = vld [vmem:[%s181 + $0x54] sm:$0xf]
        %v215 = vld [vmem:[%s181 + $0x58] sm:$0xf]
        %v216 = vld [vmem:[%s181 + $0x5c] sm:$0xf]
        %v217 = vld [vmem:[%s181 + $0x60] sm:$0xf]
        %v218 = vld [vmem:[%s181 + $0x64] sm:$0xf]
        %v219 = vld [vmem:[%s181 + $0x68] sm:$0xf]
        %v220 = vld [vmem:[%s181 + $0x6c] sm:$0xf]
        %v221 = vld [vmem:[%s181 + $0x70] sm:$0xf]
        %v222 = vld [vmem:[%s181 + $0x74] sm:$0xf]
        %v223 = vld [vmem:[%s181 + $0x78] sm:$0xf]
        %v224 = vld [vmem:[%s181 + $0x7c] sm:$0xf]
        %v225 = vld [vmem:[%s181 + $0x80] sm:$0xf]
        %v226 = vld [vmem:[%s181 + $0x84] sm:$0xf]
        %v227 = vld [vmem:[%s181 + $0x88] sm:$0xf]
        %v228 = vld [vmem:[%s181 + $0x8c] sm:$0xf]
        %v229 = vld [vmem:[%s181 + $0x90] sm:$0xf]
        %v230 = vld [vmem:[%s181 + $0x94] sm:$0xf]
        %v231 = vld [vmem:[%s181 + $0x98] sm:$0xf]
        %v232 = vld [vmem:[%s181 + $0x9c] sm:$0xf]
        %v233 = vld [vmem:[%s181 + $0xa0] sm:$0xf]
        %v234 = vld [vmem:[%s181 + $0xa4] sm:$0xf]
        %v235 = vld [vmem:[%s181 + $0xa8] sm:$0xf]
        %v236 = vld [vmem:[%s181 + $0xac] sm:$0xf]
        %v237 = vld [vmem:[%s181 + $0xb0] sm:$0xf]
        %v238 = vld [vmem:[%s181 + $0xb4] sm:$0xf]
        %v239 = vld [vmem:[%s181 + $0xb8] sm:$0xf]
        %v240 = vld [vmem:[%s181 + $0xbc] sm:$0xf]
        %v241 = vld [vmem:[%s181 + $0xc0] sm:$0xf]
        %v242 = vld [vmem:[%s181 + $0xc4] sm:$0xf]
        %v243 = vld [vmem:[%s181 + $0xc8] sm:$0xf]
        %v244 = vld [vmem:[%s181 + $0xcc] sm:$0xf]
        %v245 = vld [vmem:[%s181 + $0xd0] sm:$0xf]
        %v246 = vld [vmem:[%s181 + $0xd4] sm:$0xf]
        %v247 = vld [vmem:[%s181 + $0xd8] sm:$0xf]
        %v248 = vld [vmem:[%s181 + $0xdc] sm:$0xf]
        %v249 = vld [vmem:[%s181 + $0xe0] sm:$0xf]
        %v250 = vld [vmem:[%s181 + $0xe4] sm:$0xf]
        %v251 = vld [vmem:[%s181 + $0xe8] sm:$0xf]
        %v252 = vld [vmem:[%s181 + $0xec] sm:$0xf]
        %v253 = vld [vmem:[%s181 + $0xf0] sm:$0xf]
        %v254 = vld [vmem:[%s181 + $0xf4] sm:$0xf]
        %v255 = vld [vmem:[%s181 + $0xf8] sm:$0xf]
        %v256 = vld [vmem:[%s181 + $0xfc] sm:$0xf]
        %v257 = vld [vmem:[%s181 + $0x100] sm:$0xf]
        %v258 = vld [vmem:[%s181 + $0x104] sm:$0xf]
        %v259 = vld [vmem:[%s181 + $0x108] sm:$0xf]
        %v260 = vld [vmem:[%s181 + $0x10c] sm:$0xf]
        %v261 = vld [vmem:[%s181 + $0x110] sm:$0xf]
        %v262 = vld [vmem:[%s181 + $0x114] sm:$0xf]
        %v263 = vld [vmem:[%s181 + $0x118] sm:$0xf]
        %v264 = vld [vmem:[%s181 + $0x11c] sm:$0xf]
        %v265 = vld [vmem:[%s181 + $0x120] sm:$0xf]
        %v266 = vld [vmem:[%s181 + $0x124] sm:$0xf]
        %v267 = vld [vmem:[%s181 + $0x128] sm:$0xf]
        %v268 = vld [vmem:[%s181 + $0x12c] sm:$0xf]
        %v269 = vld [vmem:[%s181 + $0x130] sm:$0xf]
        %v270 = vld [vmem:[%s181 + $0x134] sm:$0xf]
        %v271 = vld [vmem:[%s181 + $0x138] sm:$0xf]
        %v272 = vld [vmem:[%s181 + $0x13c] sm:$0xf]
        %v273 = vld [vmem:[%s181 + $0x140] sm:$0xf]
        %v274 = vld [vmem:[%s181 + $0x144] sm:$0xf]
        %v275 = vld [vmem:[%s181 + $0x148] sm:$0xf]
        %v276 = vld [vmem:[%s181 + $0x14c] sm:$0xf]
        %v277 = vld [vmem:[%s181 + $0x150] sm:$0xf]
        %v278 = vld [vmem:[%s181 + $0x154] sm:$0xf]
        %v279 = vld [vmem:[%s181 + $0x158] sm:$0xf]
        %v280 = vld [vmem:[%s181 + $0x15c] sm:$0xf]
        %v281 = vld [vmem:[%s181 + $0x160] sm:$0xf]
        %v282 = vld [vmem:[%s181 + $0x164] sm:$0xf]
        %v283 = vld [vmem:[%s181 + $0x168] sm:$0xf]
        %v284 = vld [vmem:[%s181 + $0x16c] sm:$0xf]
        %v285 = vld [vmem:[%s181 + $0x170] sm:$0xf]
        %v286 = vld [vmem:[%s181 + $0x174] sm:$0xf]
        %v287 = vld [vmem:[%s181 + $0x178] sm:$0xf]
        %v288 = vld [vmem:[%s181 + $0x17c] sm:$0xf]
        %v289 = vld [vmem:[%s181 + $0x180] sm:$0xf]
        %v290 = vld [vmem:[%s181 + $0x184] sm:$0xf]
        %v291 = vld [vmem:[%s181 + $0x188] sm:$0xf]
        %v292 = vld [vmem:[%s181 + $0x18c] sm:$0xf]
        %v293 = vld [vmem:[%s181 + $0x190] sm:$0xf]
        %v294 = vld [vmem:[%s181 + $0x194] sm:$0xf]
        %v295 = vld [vmem:[%s181 + $0x198] sm:$0xf]
        %v296 = vld [vmem:[%s181 + $0x19c] sm:$0xf]
        %v297 = vld [vmem:[%s181 + $0x1a0] sm:$0xf]
        %v298 = vld [vmem:[%s181 + $0x1a4] sm:$0xf]
        %v299 = vld [vmem:[%s181 + $0x1a8] sm:$0xf]
        %v300 = vld [vmem:[%s181 + $0x1ac] sm:$0xf]
        %v301 = vld [vmem:[%s181 + $0x1b0] sm:$0xf]
        %v302 = vld [vmem:[%s181 + $0x1b4] sm:$0xf]
        %v303 = vld [vmem:[%s181 + $0x1b8] sm:$0xf]
        %v304 = vld [vmem:[%s181 + $0x1bc] sm:$0xf]
        %v305 = vld [vmem:[%s181 + $0x1c0] sm:$0xf]
        %v306 = vld [vmem:[%s181 + $0x1c4] sm:$0xf]
        %v307 = vld [vmem:[%s181 + $0x1c8] sm:$0xf]
        %v308 = vld [vmem:[%s181 + $0x1cc] sm:$0xf]
        %v309 = vld [vmem:[%s181 + $0x1d0] sm:$0xf]
        %v310 = vld [vmem:[%s181 + $0x1d4] sm:$0xf]
        %v311 = vld [vmem:[%s181 + $0x1d8] sm:$0xf]
        %v312 = vld [vmem:[%s181 + $0x1dc] sm:$0xf]
        %v313 = vld [vmem:[%s181 + $0x1e0] sm:$0xf]
        %v314 = vld [vmem:[%s181 + $0x1e4] sm:$0xf]
        %v315 = vld [vmem:[%s181 + $0x1e8] sm:$0xf]
        %v316 = vld [vmem:[%s181 + $0x1ec] sm:$0xf]
        %v317 = vld [vmem:[%s181 + $0x1f0] sm:$0xf]
        %v318 = vld [vmem:[%s181 + $0x1f4] sm:$0xf]
        %v319 = vld [vmem:[%s181 + $0x1f8] sm:$0xf]
        %v320 = vld [vmem:[%s181 + $0x1fc] sm:$0xf]
        %v321 = vld [vmem:[%s181 + $0x200] sm:$0xf]
        %v322 = vld [vmem:[%s181 + $0x204] sm:$0xf]
        %v323 = vld [vmem:[%s181 + $0x208] sm:$0xf]
        %v324 = vld [vmem:[%s181 + $0x20c] sm:$0xf]
        %v325 = vld [vmem:[%s181 + $0x210] sm:$0xf]
        %v326 = vld [vmem:[%s181 + $0x214] sm:$0xf]
        %v327 = vld [vmem:[%s181 + $0x218] sm:$0xf]
        %v328 = vld [vmem:[%s181 + $0x21c] sm:$0xf]
        %v329 = vld [vmem:[%s181 + $0x220] sm:$0xf]
        %v330 = vld [vmem:[%s181 + $0x224] sm:$0xf]
        %v331 = vld [vmem:[%s181 + $0x228] sm:$0xf]
        %v332 = vld [vmem:[%s181 + $0x22c] sm:$0xf]
        %v333 = vld [vmem:[%s181 + $0x230] sm:$0xf]
        %v334 = vld [vmem:[%s181 + $0x234] sm:$0xf]
        %v335 = vld [vmem:[%s181 + $0x238] sm:$0xf]
        %v336 = vld [vmem:[%s181 + $0x23c] sm:$0xf]
        %v337 = vld [vmem:[%s181 + $0x240] sm:$0xf]
        %v338 = vld [vmem:[%s181 + $0x244] sm:$0xf]
        %v339 = vld [vmem:[%s181 + $0x248] sm:$0xf]
        %v340 = vld [vmem:[%s181 + $0x24c] sm:$0xf]
        %v341 = vld [vmem:[%s181 + $0x250] sm:$0xf]
        %v342 = vld [vmem:[%s181 + $0x254] sm:$0xf]
        %v343 = vld [vmem:[%s181 + $0x258] sm:$0xf]
        %v344 = vld [vmem:[%s181 + $0x25c] sm:$0xf]
        %v345 = vld [vmem:[%s181 + $0x260] sm:$0xf]
        %v346 = vld [vmem:[%s181 + $0x264] sm:$0xf]
        %v347 = vld [vmem:[%s181 + $0x268] sm:$0xf]
        %v348 = vld [vmem:[%s181 + $0x26c] sm:$0xf]
        %v349 = vld [vmem:[%s181 + $0x270] sm:$0xf]
        %v350 = vld [vmem:[%s181 + $0x274] sm:$0xf]
        %v351 = vld [vmem:[%s181 + $0x278] sm:$0xf]
        %v352 = vld [vmem:[%s181 + $0x27c] sm:$0xf]
        %v353 = vld [vmem:[%s181 + $0x280] sm:$0xf]
        %v354 = vld [vmem:[%s181 + $0x284] sm:$0xf]
        %v355 = vld [vmem:[%s181 + $0x288] sm:$0xf]
        %v356 = vld [vmem:[%s181 + $0x28c] sm:$0xf]
        %v357 = vld [vmem:[%s181 + $0x290] sm:$0xf]
        %v358 = vld [vmem:[%s181 + $0x294] sm:$0xf]
        %v359 = vld [vmem:[%s181 + $0x298] sm:$0xf]
        %v360 = vld [vmem:[%s181 + $0x29c] sm:$0xf]
        %v361 = vld [vmem:[%s181 + $0x2a0] sm:$0xf]
        %v362 = vld [vmem:[%s181 + $0x2a4] sm:$0xf]
        %v363 = vld [vmem:[%s181 + $0x2a8] sm:$0xf]
        %v364 = vld [vmem:[%s181 + $0x2ac] sm:$0xf]
        %v365 = vld [vmem:[%s181 + $0x2b0] sm:$0xf]
        %v366 = vld [vmem:[%s181 + $0x2b4] sm:$0xf]
        %v367 = vld [vmem:[%s181 + $0x2b8] sm:$0xf]
        %v368 = vld [vmem:[%s181 + $0x2bc] sm:$0xf]
        %v369 = vld [vmem:[%s181 + $0x2c0] sm:$0xf]
        %v370 = vld [vmem:[%s181 + $0x2c4] sm:$0xf]
        %v371 = vld [vmem:[%s181 + $0x2c8] sm:$0xf]
        %v372 = vld [vmem:[%s181 + $0x2cc] sm:$0xf]
        %v373 = vld [vmem:[%s181 + $0x2d0] sm:$0xf]
        %v374 = vld [vmem:[%s181 + $0x2d4] sm:$0xf]
        %v375 = vld [vmem:[%s181 + $0x2d8] sm:$0xf]
        %v376 = vld [vmem:[%s181 + $0x2dc] sm:$0xf]
        %v377 = vld [vmem:[%s181 + $0x2e0] sm:$0xf]
        %v378 = vld [vmem:[%s181 + $0x2e4] sm:$0xf]
        %v379 = vld [vmem:[%s181 + $0x2e8] sm:$0xf]
        %v380 = vld [vmem:[%s181 + $0x2ec] sm:$0xf]
        %v381 = vld [vmem:[%s181 + $0x2f0] sm:$0xf]
        %v382 = vld [vmem:[%s181 + $0x2f4] sm:$0xf]
        %v383 = vld [vmem:[%s181 + $0x2f8] sm:$0xf]
        %v384 = vld [vmem:[%s181 + $0x2fc] sm:$0xf]
        %v385 = vld [vmem:[%s181 + $0x300] sm:$0xf]
        %v386 = vld [vmem:[%s181 + $0x304] sm:$0xf]
        %v387 = vld [vmem:[%s181 + $0x308] sm:$0xf]
        %v388 = vld [vmem:[%s181 + $0x30c] sm:$0xf]
        %v389 = vld [vmem:[%s181 + $0x310] sm:$0xf]
        %v390 = vld [vmem:[%s181 + $0x314] sm:$0xf]
        %v391 = vld [vmem:[%s181 + $0x318] sm:$0xf]
        %v392 = vld [vmem:[%s181 + $0x31c] sm:$0xf]
        %v393 = vld [vmem:[%s181 + $0x320] sm:$0xf]
        %v394 = vld [vmem:[%s181 + $0x324] sm:$0xf]
        %v395 = vld [vmem:[%s181 + $0x328] sm:$0xf]
        %v396 = vld [vmem:[%s181 + $0x32c] sm:$0xf]
        %v397 = vld [vmem:[%s181 + $0x330] sm:$0xf]
        %v398 = vld [vmem:[%s181 + $0x334] sm:$0xf]
        %v399 = vld [vmem:[%s181 + $0x338] sm:$0xf]
        %v400 = vld [vmem:[%s181 + $0x33c] sm:$0xf]
        %v401 = vld [vmem:[%s181 + $0x340] sm:$0xf]
        %v402 = vld [vmem:[%s181 + $0x344] sm:$0xf]
        %v403 = vld [vmem:[%s181 + $0x348] sm:$0xf]
        %v404 = vld [vmem:[%s181 + $0x34c] sm:$0xf]
        %v405 = vld [vmem:[%s181 + $0x350] sm:$0xf]
        %v406 = vld [vmem:[%s181 + $0x354] sm:$0xf]
        %v407 = vld [vmem:[%s181 + $0x358] sm:$0xf]
        %v408 = vld [vmem:[%s181 + $0x35c] sm:$0xf]
        %v409 = vld [vmem:[%s181 + $0x360] sm:$0xf]
        %v410 = vld [vmem:[%s181 + $0x364] sm:$0xf]
        %v411 = vld [vmem:[%s181 + $0x368] sm:$0xf]
        %v412 = vld [vmem:[%s181 + $0x36c] sm:$0xf]
        %v413 = vld [vmem:[%s181 + $0x370] sm:$0xf]
        %v414 = vld [vmem:[%s181 + $0x374] sm:$0xf]
        %v415 = vld [vmem:[%s181 + $0x378] sm:$0xf]
        %v416 = vld [vmem:[%s181 + $0x37c] sm:$0xf]
        %v417 = vld [vmem:[%s181 + $0x380] sm:$0xf]
        %v418 = vld [vmem:[%s181 + $0x384] sm:$0xf]
        %v419 = vld [vmem:[%s181 + $0x388] sm:$0xf]
        %v420 = vld [vmem:[%s181 + $0x38c] sm:$0xf]
        %v421 = vld [vmem:[%s181 + $0x390] sm:$0xf]
        %v422 = vld [vmem:[%s181 + $0x394] sm:$0xf]
        %v423 = vld [vmem:[%s181 + $0x398] sm:$0xf]
        %v424 = vld [vmem:[%s181 + $0x39c] sm:$0xf]
        %v425 = vld [vmem:[%s181 + $0x3a0] sm:$0xf]
        %v426 = vld [vmem:[%s181 + $0x3a4] sm:$0xf]
        %v427 = vld [vmem:[%s181 + $0x3a8] sm:$0xf]
        %v428 = vld [vmem:[%s181 + $0x3ac] sm:$0xf]
        %v429 = vld [vmem:[%s181 + $0x3b0] sm:$0xf]
        %v430 = vld [vmem:[%s181 + $0x3b4] sm:$0xf]
        %v431 = vld [vmem:[%s181 + $0x3b8] sm:$0xf]
        %v432 = vld [vmem:[%s181 + $0x3bc] sm:$0xf]
        %v433 = vld [vmem:[%s181 + $0x3c0] sm:$0xf]
        %v434 = vld [vmem:[%s181 + $0x3c4] sm:$0xf]
        %v435 = vld [vmem:[%s181 + $0x3c8] sm:$0xf]
        %v436 = vld [vmem:[%s181 + $0x3cc] sm:$0xf]
        %v437 = vld [vmem:[%s181 + $0x3d0] sm:$0xf]
        %v438 = vld [vmem:[%s181 + $0x3d4] sm:$0xf]
        %v439 = vld [vmem:[%s181 + $0x3d8] sm:$0xf]
        %v440 = vld [vmem:[%s181 + $0x3dc] sm:$0xf]
        %v441 = vld [vmem:[%s181 + $0x3e0] sm:$0xf]
        %v442 = vld [vmem:[%s181 + $0x3e4] sm:$0xf]
        %v443 = vld [vmem:[%s181 + $0x3e8] sm:$0xf]
        %v444 = vld [vmem:[%s181 + $0x3ec] sm:$0xf]
        %v445 = vld [vmem:[%s181 + $0x3f0] sm:$0xf]
        %v446 = vld [vmem:[%s181 + $0x3f4] sm:$0xf]
        %v447 = vld [vmem:[%s181 + $0x3f8] sm:$0xf]
        %v448 = vld [vmem:[%s181 + $0x3fc] sm:$0xf]
        %v449 = vld [vmem:[%s1] sm:$0xf]
        %v450 = vld [vmem:[%s1 + $0x4] sm:$0xf]
        %v451 = vld [vmem:[%s1 + $0x8] sm:$0xf]
        %v452 = vld [vmem:[%s1 + $0xc] sm:$0xf]
        %v453 = vld [vmem:[%s1 + $0x10] sm:$0xf]
        %v454 = vld [vmem:[%s1 + $0x14] sm:$0xf]
        %v455 = vld [vmem:[%s1 + $0x18] sm:$0xf]
        %v456 = vld [vmem:[%s1 + $0x1c] sm:$0xf]
        %v457 = vld [vmem:[%s1 + $0x20] sm:$0xf]
        %v458 = vld [vmem:[%s1 + $0x24] sm:$0xf]
        %v459 = vld [vmem:[%s1 + $0x28] sm:$0xf]
        %v460 = vld [vmem:[%s1 + $0x2c] sm:$0xf]
        %v461 = vld [vmem:[%s1 + $0x30] sm:$0xf]
        %v462 = vld [vmem:[%s1 + $0x34] sm:$0xf]
        %v463 = vld [vmem:[%s1 + $0x38] sm:$0xf]
        %v464 = vld [vmem:[%s1 + $0x3c] sm:$0xf]
        %v465 = vld [vmem:[%s2] sm:$0x1]
        %v467 = vlaneseq
        %v468 = vshrl.u32 %v467, 7
        %v469 = vsub.s32 0, %v468
        %v470 = vrot.slane %v465, %v469
        %v728 = vunpack.c.l.b16 %v193
        %v729 = vunpack.c.l.b16 %v194
        %v730 = vunpack.c.l.b16 %v195
        %v731 = vunpack.c.l.b16 %v196
        %v732 = vunpack.c.l.b16 %v197
        %v733 = vunpack.c.l.b16 %v198
        %v734 = vunpack.c.l.b16 %v199
        %v735 = vunpack.c.l.b16 %v200
        %v736 = vunpack.c.l.b16 %v201
        %v737 = vunpack.c.l.b16 %v202
        %v738 = vunpack.c.l.b16 %v203
        %v739 = vunpack.c.l.b16 %v204
        %v740 = vunpack.c.l.b16 %v205
        %v741 = vunpack.c.l.b16 %v206
        %v742 = vunpack.c.l.b16 %v207
        %v743 = vunpack.c.l.b16 %v208
        %v744 = vunpack.c.l.b16 %v209
        %v745 = vunpack.c.l.b16 %v210
        %v746 = vunpack.c.l.b16 %v211
        %v747 = vunpack.c.l.b16 %v212
        %v748 = vunpack.c.l.b16 %v213
        %v749 = vunpack.c.l.b16 %v214
        %v750 = vunpack.c.l.b16 %v215
        %v751 = vunpack.c.l.b16 %v216
        %v752 = vunpack.c.l.b16 %v217
        %v753 = vunpack.c.l.b16 %v218
        %v754 = vunpack.c.l.b16 %v219
        %v755 = vunpack.c.l.b16 %v220
        %v756 = vunpack.c.l.b16 %v221
        %v757 = vunpack.c.l.b16 %v222
        %v758 = vunpack.c.l.b16 %v223
        %v759 = vunpack.c.l.b16 %v224
        %v760 = vunpack.c.l.b16 %v225
        %v761 = vunpack.c.l.b16 %v226
        %v762 = vunpack.c.l.b16 %v227
        %v763 = vunpack.c.l.b16 %v228
        %v764 = vunpack.c.l.b16 %v229
        %v765 = vunpack.c.l.b16 %v230
        %v766 = vunpack.c.l.b16 %v231
        %v767 = vunpack.c.l.b16 %v232
        %v768 = vunpack.c.l.b16 %v233
        %v769 = vunpack.c.l.b16 %v234
        %v770 = vunpack.c.l.b16 %v235
        %v771 = vunpack.c.l.b16 %v236
        %v772 = vunpack.c.l.b16 %v237
        %v773 = vunpack.c.l.b16 %v238
        %v774 = vunpack.c.l.b16 %v239
        %v775 = vunpack.c.l.b16 %v240
        %v776 = vunpack.c.l.b16 %v241
        %v777 = vunpack.c.l.b16 %v242
        %v778 = vunpack.c.l.b16 %v243
        %v779 = vunpack.c.l.b16 %v244
        %v780 = vunpack.c.l.b16 %v245
        %v781 = vunpack.c.l.b16 %v246
        %v782 = vunpack.c.l.b16 %v247
        %v783 = vunpack.c.l.b16 %v248
        %v784 = vunpack.c.l.b16 %v249
        %v785 = vunpack.c.l.b16 %v250
        %v786 = vunpack.c.l.b16 %v251
        %v787 = vunpack.c.l.b16 %v252
        %v788 = vunpack.c.l.b16 %v253
        %v789 = vunpack.c.l.b16 %v254
        %v790 = vunpack.c.l.b16 %v255
        %v791 = vunpack.c.l.b16 %v256
        %v792 = vunpack.c.l.b16 %v257
        %v793 = vunpack.c.l.b16 %v258
        %v794 = vunpack.c.l.b16 %v259
        %v795 = vunpack.c.l.b16 %v260
        %v796 = vunpack.c.l.b16 %v261
        %v797 = vunpack.c.l.b16 %v262
        %v798 = vunpack.c.l.b16 %v263
        %v799 = vunpack.c.l.b16 %v264
        %v800 = vunpack.c.l.b16 %v265
        %v801 = vunpack.c.l.b16 %v266
        %v802 = vunpack.c.l.b16 %v267
        %v803 = vunpack.c.l.b16 %v268
        %v804 = vunpack.c.l.b16 %v269
        %v805 = vunpack.c.l.b16 %v270
        %v806 = vunpack.c.l.b16 %v271
        %v807 = vunpack.c.l.b16 %v272
        %v808 = vunpack.c.l.b16 %v273
        %v809 = vunpack.c.l.b16 %v274
        %v810 = vunpack.c.l.b16 %v275
        %v811 = vunpack.c.l.b16 %v276
        %v812 = vunpack.c.l.b16 %v277
        %v813 = vunpack.c.l.b16 %v278
        %v814 = vunpack.c.l.b16 %v279
        %v815 = vunpack.c.l.b16 %v280
        %v816 = vunpack.c.l.b16 %v281
        %v817 = vunpack.c.l.b16 %v282
        %v818 = vunpack.c.l.b16 %v283
        %v819 = vunpack.c.l.b16 %v284
        %v820 = vunpack.c.l.b16 %v285
        %v821 = vunpack.c.l.b16 %v286
        %v822 = vunpack.c.l.b16 %v287
        %v823 = vunpack.c.l.b16 %v288
        %v824 = vunpack.c.l.b16 %v289
        %v825 = vunpack.c.l.b16 %v290
        %v826 = vunpack.c.l.b16 %v291
        %v827 = vunpack.c.l.b16 %v292
        %v828 = vunpack.c.l.b16 %v293
        %v829 = vunpack.c.l.b16 %v294
        %v830 = vunpack.c.l.b16 %v295
        %v831 = vunpack.c.l.b16 %v296
        %v832 = vunpack.c.l.b16 %v297
        %v833 = vunpack.c.l.b16 %v298
        %v834 = vunpack.c.l.b16 %v299
        %v835 = vunpack.c.l.b16 %v300
        %v836 = vunpack.c.l.b16 %v301
        %v837 = vunpack.c.l.b16 %v302
        %v838 = vunpack.c.l.b16 %v303
        %v839 = vunpack.c.l.b16 %v304
        %v840 = vunpack.c.l.b16 %v305
        %v841 = vunpack.c.l.b16 %v306
        %v842 = vunpack.c.l.b16 %v307
        %v843 = vunpack.c.l.b16 %v308
        %v844 = vunpack.c.l.b16 %v309
        %v845 = vunpack.c.l.b16 %v310
        %v846 = vunpack.c.l.b16 %v311
        %v847 = vunpack.c.l.b16 %v312
        %v848 = vunpack.c.l.b16 %v313
        %v849 = vunpack.c.l.b16 %v314
        %v850 = vunpack.c.l.b16 %v315
        %v851 = vunpack.c.l.b16 %v316
        %v852 = vunpack.c.l.b16 %v317
        %v853 = vunpack.c.l.b16 %v318
        %v854 = vunpack.c.l.b16 %v319
        %v855 = vunpack.c.l.b16 %v320
        %v856 = vunpack.c.l.b16 %v321
        %v857 = vunpack.c.l.b16 %v322
        %v858 = vunpack.c.l.b16 %v323
        %v859 = vunpack.c.l.b16 %v324
        %v860 = vunpack.c.l.b16 %v325
        %v861 = vunpack.c.l.b16 %v326
        %v862 = vunpack.c.l.b16 %v327
        %v863 = vunpack.c.l.b16 %v328
        %v864 = vunpack.c.l.b16 %v329
        %v865 = vunpack.c.l.b16 %v330
        %v866 = vunpack.c.l.b16 %v331
        %v867 = vunpack.c.l.b16 %v332
        %v868 = vunpack.c.l.b16 %v333
        %v869 = vunpack.c.l.b16 %v334
        %v870 = vunpack.c.l.b16 %v335
        %v871 = vunpack.c.l.b16 %v336
        %v872 = vunpack.c.l.b16 %v337
        %v873 = vunpack.c.l.b16 %v338
        %v874 = vunpack.c.l.b16 %v339
        %v875 = vunpack.c.l.b16 %v340
        %v876 = vunpack.c.l.b16 %v341
        %v877 = vunpack.c.l.b16 %v342
        %v878 = vunpack.c.l.b16 %v343
        %v879 = vunpack.c.l.b16 %v344
        %v880 = vunpack.c.l.b16 %v345
        %v881 = vunpack.c.l.b16 %v346
        %v882 = vunpack.c.l.b16 %v347
        %v883 = vunpack.c.l.b16 %v348
        %v884 = vunpack.c.l.b16 %v349
        %v885 = vunpack.c.l.b16 %v350
        %v886 = vunpack.c.l.b16 %v351
        %v887 = vunpack.c.l.b16 %v352
        %v888 = vunpack.c.l.b16 %v353
        %v889 = vunpack.c.l.b16 %v354
        %v890 = vunpack.c.l.b16 %v355
        %v891 = vunpack.c.l.b16 %v356
        %v892 = vunpack.c.l.b16 %v357
        %v893 = vunpack.c.l.b16 %v358
        %v894 = vunpack.c.l.b16 %v359
        %v895 = vunpack.c.l.b16 %v360
        %v896 = vunpack.c.l.b16 %v361
        %v897 = vunpack.c.l.b16 %v362
        %v898 = vunpack.c.l.b16 %v363
        %v899 = vunpack.c.l.b16 %v364
        %v900 = vunpack.c.l.b16 %v365
        %v901 = vunpack.c.l.b16 %v366
        %v902 = vunpack.c.l.b16 %v367
        %v903 = vunpack.c.l.b16 %v368
        %v904 = vunpack.c.l.b16 %v369
        %v905 = vunpack.c.l.b16 %v370
        %v906 = vunpack.c.l.b16 %v371
        %v907 = vunpack.c.l.b16 %v372
        %v908 = vunpack.c.l.b16 %v373
        %v909 = vunpack.c.l.b16 %v374
        %v910 = vunpack.c.l.b16 %v375
        %v911 = vunpack.c.l.b16 %v376
        %v912 = vunpack.c.l.b16 %v377
        %v913 = vunpack.c.l.b16 %v378
        %v914 = vunpack.c.l.b16 %v379
        %v915 = vunpack.c.l.b16 %v380
        %v916 = vunpack.c.l.b16 %v381
        %v917 = vunpack.c.l.b16 %v382
        %v918 = vunpack.c.l.b16 %v383
        %v919 = vunpack.c.l.b16 %v384
        %v920 = vunpack.c.l.b16 %v385
        %v921 = vunpack.c.l.b16 %v386
        %v922 = vunpack.c.l.b16 %v387
        %v923 = vunpack.c.l.b16 %v388
        %v924 = vunpack.c.l.b16 %v389
        %v925 = vunpack.c.l.b16 %v390
        %v926 = vunpack.c.l.b16 %v391
        %v927 = vunpack.c.l.b16 %v392
        %v928 = vunpack.c.l.b16 %v393
        %v929 = vunpack.c.l.b16 %v394
        %v930 = vunpack.c.l.b16 %v395
        %v931 = vunpack.c.l.b16 %v396
        %v932 = vunpack.c.l.b16 %v397
        %v933 = vunpack.c.l.b16 %v398
        %v934 = vunpack.c.l.b16 %v399
        %v935 = vunpack.c.l.b16 %v400
        %v936 = vunpack.c.l.b16 %v401
        %v937 = vunpack.c.l.b16 %v402
        %v938 = vunpack.c.l.b16 %v403
        %v939 = vunpack.c.l.b16 %v404
        %v940 = vunpack.c.l.b16 %v405
        %v941 = vunpack.c.l.b16 %v406
        %v942 = vunpack.c.l.b16 %v407
        %v943 = vunpack.c.l.b16 %v408
        %v944 = vunpack.c.l.b16 %v409
        %v945 = vunpack.c.l.b16 %v410
        %v946 = vunpack.c.l.b16 %v411
        %v947 = vunpack.c.l.b16 %v412
        %v948 = vunpack.c.l.b16 %v413
        %v949 = vunpack.c.l.b16 %v414
        %v950 = vunpack.c.l.b16 %v415
        %v951 = vunpack.c.l.b16 %v416
        %v952 = vunpack.c.l.b16 %v417
        %v953 = vunpack.c.l.b16 %v418
        %v954 = vunpack.c.l.b16 %v419
        %v955 = vunpack.c.l.b16 %v420
        %v956 = vunpack.c.l.b16 %v421
        %v957 = vunpack.c.l.b16 %v422
        %v958 = vunpack.c.l.b16 %v423
        %v959 = vunpack.c.l.b16 %v424
        %v960 = vunpack.c.l.b16 %v425
        %v961 = vunpack.c.l.b16 %v426
        %v962 = vunpack.c.l.b16 %v427
        %v963 = vunpack.c.l.b16 %v428
        %v964 = vunpack.c.l.b16 %v429
        %v965 = vunpack.c.l.b16 %v430
        %v966 = vunpack.c.l.b16 %v431
        %v967 = vunpack.c.l.b16 %v432
        %v968 = vunpack.c.l.b16 %v433
        %v969 = vunpack.c.l.b16 %v434
        %v970 = vunpack.c.l.b16 %v435
        %v971 = vunpack.c.l.b16 %v436
        %v972 = vunpack.c.l.b16 %v437
        %v973 = vunpack.c.l.b16 %v438
        %v974 = vunpack.c.l.b16 %v439
        %v975 = vunpack.c.l.b16 %v440
        %v976 = vunpack.c.l.b16 %v441
        %v977 = vunpack.c.l.b16 %v442
        %v978 = vunpack.c.l.b16 %v443
        %v979 = vunpack.c.l.b16 %v444
        %v980 = vunpack.c.l.b16 %v445
        %v981 = vunpack.c.l.b16 %v446
        %v982 = vunpack.c.l.b16 %v447
        %v983 = vunpack.c.l.b16 %v448
        %v984 = vpack.c.b16 %v729, %v728
        %v985 = vpack.c.b16 %v731, %v730
        %v986 = vpack.c.b16 %v733, %v732
        %v987 = vpack.c.b16 %v735, %v734
        %v988 = vpack.c.b16 %v737, %v736
        %v989 = vpack.c.b16 %v739, %v738
        %v990 = vpack.c.b16 %v741, %v740
        %v991 = vpack.c.b16 %v743, %v742
        %v992 = vpack.c.b16 %v745, %v744
        %v993 = vpack.c.b16 %v747, %v746
        %v994 = vpack.c.b16 %v749, %v748
        %v995 = vpack.c.b16 %v751, %v750
        %v996 = vpack.c.b16 %v753, %v752
        %v997 = vpack.c.b16 %v755, %v754
        %v998 = vpack.c.b16 %v757, %v756
        %v999 = vpack.c.b16 %v759, %v758
        %v1000 = vpack.c.b16 %v761, %v760
        %v1001 = vpack.c.b16 %v763, %v762
        %v1002 = vpack.c.b16 %v765, %v764
        %v1003 = vpack.c.b16 %v767, %v766
        %v1004 = vpack.c.b16 %v769, %v768
        %v1005 = vpack.c.b16 %v771, %v770
        %v1006 = vpack.c.b16 %v773, %v772
        %v1007 = vpack.c.b16 %v775, %v774
        %v1008 = vpack.c.b16 %v777, %v776
        %v1009 = vpack.c.b16 %v779, %v778
        %v1010 = vpack.c.b16 %v781, %v780
        %v1011 = vpack.c.b16 %v783, %v782
        %v1012 = vpack.c.b16 %v785, %v784
        %v1013 = vpack.c.b16 %v787, %v786
        %v1014 = vpack.c.b16 %v789, %v788
        %v1015 = vpack.c.b16 %v791, %v790
        %v1016 = vpack.c.b16 %v793, %v792
        %v1017 = vpack.c.b16 %v795, %v794
        %v1018 = vpack.c.b16 %v797, %v796
        %v1019 = vpack.c.b16 %v799, %v798
        %v1020 = vpack.c.b16 %v801, %v800
        %v1021 = vpack.c.b16 %v803, %v802
        %v1022 = vpack.c.b16 %v805, %v804
        %v1023 = vpack.c.b16 %v807, %v806
        %v1024 = vpack.c.b16 %v809, %v808
        %v1025 = vpack.c.b16 %v811, %v810
        %v1026 = vpack.c.b16 %v813, %v812
        %v1027 = vpack.c.b16 %v815, %v814
        %v1028 = vpack.c.b16 %v817, %v816
        %v1029 = vpack.c.b16 %v819, %v818
        %v1030 = vpack.c.b16 %v821, %v820
        %v1031 = vpack.c.b16 %v823, %v822
        %v1032 = vpack.c.b16 %v825, %v824
        %v1033 = vpack.c.b16 %v827, %v826
        %v1034 = vpack.c.b16 %v829, %v828
        %v1035 = vpack.c.b16 %v831, %v830
        %v1036 = vpack.c.b16 %v833, %v832
        %v1037 = vpack.c.b16 %v835, %v834
        %v1038 = vpack.c.b16 %v837, %v836
        %v1039 = vpack.c.b16 %v839, %v838
        %v1040 = vpack.c.b16 %v841, %v840
        %v1041 = vpack.c.b16 %v843, %v842
        %v1042 = vpack.c.b16 %v845, %v844
        %v1043 = vpack.c.b16 %v847, %v846
        %v1044 = vpack.c.b16 %v849, %v848
        %v1045 = vpack.c.b16 %v851, %v850
        %v1046 = vpack.c.b16 %v853, %v852
        %v1047 = vpack.c.b16 %v855, %v854
        %v1048 = vpack.c.b16 %v857, %v856
        %v1049 = vpack.c.b16 %v859, %v858
        %v1050 = vpack.c.b16 %v861, %v860
        %v1051 = vpack.c.b16 %v863, %v862
        %v1052 = vpack.c.b16 %v865, %v864
        %v1053 = vpack.c.b16 %v867, %v866
        %v1054 = vpack.c.b16 %v869, %v868
        %v1055 = vpack.c.b16 %v871, %v870
        %v1056 = vpack.c.b16 %v873, %v872
        %v1057 = vpack.c.b16 %v875, %v874
        %v1058 = vpack.c.b16 %v877, %v876
        %v1059 = vpack.c.b16 %v879, %v878
        %v1060 = vpack.c.b16 %v881, %v880
        %v1061 = vpack.c.b16 %v883, %v882
        %v1062 = vpack.c.b16 %v885, %v884
        %v1063 = vpack.c.b16 %v887, %v886
        %v1064 = vpack.c.b16 %v889, %v888
        %v1065 = vpack.c.b16 %v891, %v890
        %v1066 = vpack.c.b16 %v893, %v892
        %v1067 = vpack.c.b16 %v895, %v894
        %v1068 = vpack.c.b16 %v897, %v896
        %v1069 = vpack.c.b16 %v899, %v898
        %v1070 = vpack.c.b16 %v901, %v900
        %v1071 = vpack.c.b16 %v903, %v902
        %v1072 = vpack.c.b16 %v905, %v904
        %v1073 = vpack.c.b16 %v907, %v906
        %v1074 = vpack.c.b16 %v909, %v908
        %v1075 = vpack.c.b16 %v911, %v910
        %v1076 = vpack.c.b16 %v913, %v912
        %v1077 = vpack.c.b16 %v915, %v914
        %v1078 = vpack.c.b16 %v917, %v916
        %v1079 = vpack.c.b16 %v919, %v918
        %v1080 = vpack.c.b16 %v921, %v920
        %v1081 = vpack.c.b16 %v923, %v922
        %v1082 = vpack.c.b16 %v925, %v924
        %v1083 = vpack.c.b16 %v927, %v926
        %v1084 = vpack.c.b16 %v929, %v928
        %v1085 = vpack.c.b16 %v931, %v930
        %v1086 = vpack.c.b16 %v933, %v932
        %v1087 = vpack.c.b16 %v935, %v934
        %v1088 = vpack.c.b16 %v937, %v936
        %v1089 = vpack.c.b16 %v939, %v938
        %v1090 = vpack.c.b16 %v941, %v940
        %v1091 = vpack.c.b16 %v943, %v942
        %v1092 = vpack.c.b16 %v945, %v944
        %v1093 = vpack.c.b16 %v947, %v946
        %v1094 = vpack.c.b16 %v949, %v948
        %v1095 = vpack.c.b16 %v951, %v950
        %v1096 = vpack.c.b16 %v953, %v952
        %v1097 = vpack.c.b16 %v955, %v954
        %v1098 = vpack.c.b16 %v957, %v956
        %v1099 = vpack.c.b16 %v959, %v958
        %v1100 = vpack.c.b16 %v961, %v960
        %v1101 = vpack.c.b16 %v963, %v962
        %v1102 = vpack.c.b16 %v965, %v964
        %v1103 = vpack.c.b16 %v967, %v966
        %v1104 = vpack.c.b16 %v969, %v968
        %v1105 = vpack.c.b16 %v971, %v970
        %v1106 = vpack.c.b16 %v973, %v972
        %v1107 = vpack.c.b16 %v975, %v974
        %v1108 = vpack.c.b16 %v977, %v976
        %v1109 = vpack.c.b16 %v979, %v978
        %v1110 = vpack.c.b16 %v981, %v980
        %v1111 = vpack.c.b16 %v983, %v982
        %v1256 = vunpack.c.l.b16 %v449
        %v1257 = vunpack.c.l.b16 %v450
        %v1258 = vunpack.c.l.b16 %v451
        %v1259 = vunpack.c.l.b16 %v452
        %v1260 = vunpack.c.l.b16 %v453
        %v1261 = vunpack.c.l.b16 %v454
        %v1262 = vunpack.c.l.b16 %v455
        %v1263 = vunpack.c.l.b16 %v456
        %v1264 = vunpack.c.l.b16 %v457
        %v1265 = vunpack.c.l.b16 %v458
        %v1266 = vunpack.c.l.b16 %v459
        %v1267 = vunpack.c.l.b16 %v460
        %v1268 = vunpack.c.l.b16 %v461
        %v1269 = vunpack.c.l.b16 %v462
        %v1270 = vunpack.c.l.b16 %v463
        %v1271 = vunpack.c.l.b16 %v464
        %v1272 = vpack.c.b16 %v1257, %v1256
        %v1273 = vpack.c.b16 %v1259, %v1258
        %v1274 = vpack.c.b16 %v1261, %v1260
        %v1275 = vpack.c.b16 %v1263, %v1262
        %v1276 = vpack.c.b16 %v1265, %v1264
        %v1277 = vpack.c.b16 %v1267, %v1266
        %v1278 = vpack.c.b16 %v1269, %v1268
        %v1279 = vpack.c.b16 %v1271, %v1270
        %1288 = vmatprep.subr.bf16.mxu0 0
        %1289 = vmatpush1.bf16.msra.mxu0 %v1279
        %1290 = vmatprep.subr.bf16.mxu0 0
        %1291 = vmatpush1.bf16.msra.mxu0 %v1278
        %1292 = vmatprep.subr.bf16.mxu0 0
        %1293 = vmatpush1.bf16.msra.mxu0 %v1277
        %1294 = vmatprep.subr.bf16.mxu0 0
        %1295 = vmatpush1.bf16.msra.mxu0 %v1276
        %1296 = vmatprep.subr.bf16.mxu0 0
        %1297 = vmatpush1.bf16.msra.mxu0 %v1275
        %1298 = vmatprep.subr.bf16.mxu0 0
        %1299 = vmatpush1.bf16.msra.mxu0 %v1274
        %1300 = vmatprep.subr.bf16.mxu0 0
        %1301 = vmatpush1.bf16.msra.mxu0 %v1273
        %1302 = vmatprep.subr.bf16.mxu0 0
        %1303 = vmatpush1.bf16.msra.mxu0 %v1272
        %1304 = vmatprep.subr.bf16.mxu0 0
        %1305 = vmatpush2.bf16.msra.mxu0 0
        %1306 = vmatprep.subr.bf16.mxu0 0
        %1307 = vmatpush2.bf16.msra.mxu0 0
        %1308 = vmatprep.subr.bf16.mxu0 0
        %1309 = vmatpush2.bf16.msra.mxu0 0
        %1310 = vmatprep.subr.bf16.mxu0 0
        %1311 = vmatpush2.bf16.msra.mxu0 0
        %1312 = vmatprep.subr.bf16.mxu0 0
        %1313 = vmatpush2.bf16.msra.mxu0 0
        %1314 = vmatprep.subr.bf16.mxu0 0
        %1315 = vmatpush2.bf16.msra.mxu0 0
        %1316 = vmatprep.subr.bf16.mxu0 0
        %1317 = vmatpush2.bf16.msra.mxu0 0
        %1318 = vmatprep.subr.bf16.mxu0 0
        %1319 = vmatpush2.bf16.msra.mxu0 0
        %1320 = vmatprep.mubr.bf16.mxu0 0
        %1321 = vmatmul.mubr.bf16.gmra.mxu0 %v984
        %v1322 = vpop.f32.mrf.mxu0
        %v1323 = vadd.f32 %v470, %v1322
        %v1324 = vpop.f32.mrf.mxu0
        %v1325 = vpop.f32.mrf.mxu0
        %v1326 = vadd.f32 %v470, %v1325
        %v1327 = vpop.f32.mrf.mxu0
        %1328 = vmatprep.mubr.bf16.mxu0 0
        %1329 = vmatmul.mubr.bf16.gmra.mxu0 %v985
        %v1330 = vpop.f32.mrf.mxu0
        %v1331 = vadd.f32 %v470, %v1330
        %v1332 = vpop.f32.mrf.mxu0
        %v1333 = vpop.f32.mrf.mxu0
        %v1334 = vadd.f32 %v470, %v1333
        %v1335 = vpop.f32.mrf.mxu0
        %1336 = vmatprep.mubr.bf16.mxu0 0
        %1337 = vmatmul.mubr.bf16.gmra.mxu0 %v986
        %v1338 = vpop.f32.mrf.mxu0
        %v1339 = vadd.f32 %v470, %v1338
        %v1340 = vpop.f32.mrf.mxu0
        %v1341 = vpop.f32.mrf.mxu0
        %v1342 = vadd.f32 %v470, %v1341
        %v1343 = vpop.f32.mrf.mxu0
        %1344 = vmatprep.mubr.bf16.mxu0 0
        %1345 = vmatmul.mubr.bf16.gmra.mxu0 %v987
        %v1346 = vpop.f32.mrf.mxu0
        %v1347 = vadd.f32 %v470, %v1346
        %v1348 = vpop.f32.mrf.mxu0
        %v1349 = vpop.f32.mrf.mxu0
        %v1350 = vadd.f32 %v470, %v1349
        %v1351 = vpop.f32.mrf.mxu0
        %1352 = vmatprep.mubr.bf16.mxu0 0
        %1353 = vmatmul.mubr.bf16.gmra.mxu0 %v988
        %v1354 = vpop.f32.mrf.mxu0
        %v1355 = vadd.f32 %v470, %v1354
        %v1356 = vpop.f32.mrf.mxu0
        %v1357 = vpop.f32.mrf.mxu0
        %v1358 = vadd.f32 %v470, %v1357
        %v1359 = vpop.f32.mrf.mxu0
        %1360 = vmatprep.mubr.bf16.mxu0 0
        %1361 = vmatmul.mubr.bf16.gmra.mxu0 %v989
        %v1362 = vpop.f32.mrf.mxu0
        %v1363 = vadd.f32 %v470, %v1362
        %v1364 = vpop.f32.mrf.mxu0
        %v1365 = vpop.f32.mrf.mxu0
        %v1366 = vadd.f32 %v470, %v1365
        %v1367 = vpop.f32.mrf.mxu0
        %1368 = vmatprep.mubr.bf16.mxu0 0
        %1369 = vmatmul.mubr.bf16.gmra.mxu0 %v990
        %v1370 = vpop.f32.mrf.mxu0
        %v1371 = vadd.f32 %v470, %v1370
        %v1372 = vpop.f32.mrf.mxu0
        %v1373 = vpop.f32.mrf.mxu0
        %v1374 = vadd.f32 %v470, %v1373
        %v1375 = vpop.f32.mrf.mxu0
        %1376 = vmatprep.mubr.bf16.mxu0 0
        %1377 = vmatmul.mubr.bf16.gmra.mxu0 %v991
        %v1378 = vpop.f32.mrf.mxu0
        %v1379 = vadd.f32 %v470, %v1378
        %v1380 = vpop.f32.mrf.mxu0
        %v1381 = vpop.f32.mrf.mxu0
        %v1382 = vadd.f32 %v470, %v1381
        %v1383 = vpop.f32.mrf.mxu0
        %1384 = vmatprep.mubr.bf16.mxu0 0
        %1385 = vmatmul.mubr.bf16.gmra.mxu0 %v992
        %v1386 = vpop.f32.mrf.mxu0
        %v1387 = vadd.f32 %v470, %v1386
        %v1388 = vpop.f32.mrf.mxu0
        %v1389 = vpop.f32.mrf.mxu0
        %v1390 = vadd.f32 %v470, %v1389
        %v1391 = vpop.f32.mrf.mxu0
        %1392 = vmatprep.mubr.bf16.mxu0 0
        %1393 = vmatmul.mubr.bf16.gmra.mxu0 %v993
        %v1394 = vpop.f32.mrf.mxu0
        %v1395 = vadd.f32 %v470, %v1394
        %v1396 = vpop.f32.mrf.mxu0
        %v1397 = vpop.f32.mrf.mxu0
        %v1398 = vadd.f32 %v470, %v1397
        %v1399 = vpop.f32.mrf.mxu0
        %1400 = vmatprep.mubr.bf16.mxu0 0
        %1401 = vmatmul.mubr.bf16.gmra.mxu0 %v994
        %v1402 = vpop.f32.mrf.mxu0
        %v1403 = vadd.f32 %v470, %v1402
        %v1404 = vpop.f32.mrf.mxu0
        %v1405 = vpop.f32.mrf.mxu0
        %v1406 = vadd.f32 %v470, %v1405
        %v1407 = vpop.f32.mrf.mxu0
        %1408 = vmatprep.mubr.bf16.mxu0 0
        %1409 = vmatmul.mubr.bf16.gmra.mxu0 %v995
        %v1410 = vpop.f32.mrf.mxu0
        %v1411 = vadd.f32 %v470, %v1410
        %v1412 = vpop.f32.mrf.mxu0
        %v1413 = vpop.f32.mrf.mxu0
        %v1414 = vadd.f32 %v470, %v1413
        %v1415 = vpop.f32.mrf.mxu0
        %1416 = vmatprep.mubr.bf16.mxu0 0
        %1417 = vmatmul.mubr.bf16.gmra.mxu0 %v996
        %v1418 = vpop.f32.mrf.mxu0
        %v1419 = vadd.f32 %v470, %v1418
        %v1420 = vpop.f32.mrf.mxu0
        %v1421 = vpop.f32.mrf.mxu0
        %v1422 = vadd.f32 %v470, %v1421
        %v1423 = vpop.f32.mrf.mxu0
        %1424 = vmatprep.mubr.bf16.mxu0 0
        %1425 = vmatmul.mubr.bf16.gmra.mxu0 %v997
        %v1426 = vpop.f32.mrf.mxu0
        %v1427 = vadd.f32 %v470, %v1426
        %v1428 = vpop.f32.mrf.mxu0
        %v1429 = vpop.f32.mrf.mxu0
        %v1430 = vadd.f32 %v470, %v1429
        %v1431 = vpop.f32.mrf.mxu0
        %1432 = vmatprep.mubr.bf16.mxu0 0
        %1433 = vmatmul.mubr.bf16.gmra.mxu0 %v998
        %v1434 = vpop.f32.mrf.mxu0
        %v1435 = vadd.f32 %v470, %v1434
        %v1436 = vpop.f32.mrf.mxu0
        %v1437 = vpop.f32.mrf.mxu0
        %v1438 = vadd.f32 %v470, %v1437
        %v1439 = vpop.f32.mrf.mxu0
        %1440 = vmatprep.mubr.bf16.mxu0 0
        %1441 = vmatmul.mubr.bf16.gmra.mxu0 %v999
        %v1442 = vpop.f32.mrf.mxu0
        %v1443 = vadd.f32 %v470, %v1442
        %v1444 = vpop.f32.mrf.mxu0
        %v1445 = vpop.f32.mrf.mxu0
        %v1446 = vadd.f32 %v470, %v1445
        %v1447 = vpop.f32.mrf.mxu0
        %1448 = vmatprep.mubr.bf16.mxu0 0
        %1449 = vmatmul.mubr.bf16.gmra.mxu0 %v1000
        %v1450 = vpop.f32.mrf.mxu0
        %v1451 = vadd.f32 %v470, %v1450
        %v1452 = vpop.f32.mrf.mxu0
        %v1453 = vpop.f32.mrf.mxu0
        %v1454 = vadd.f32 %v470, %v1453
        %v1455 = vpop.f32.mrf.mxu0
        %1456 = vmatprep.mubr.bf16.mxu0 0
        %1457 = vmatmul.mubr.bf16.gmra.mxu0 %v1001
        %v1458 = vpop.f32.mrf.mxu0
        %v1459 = vadd.f32 %v470, %v1458
        %v1460 = vpop.f32.mrf.mxu0
        %v1461 = vpop.f32.mrf.mxu0
        %v1462 = vadd.f32 %v470, %v1461
        %v1463 = vpop.f32.mrf.mxu0
        %1464 = vmatprep.mubr.bf16.mxu0 0
        %1465 = vmatmul.mubr.bf16.gmra.mxu0 %v1002
        %v1466 = vpop.f32.mrf.mxu0
        %v1467 = vadd.f32 %v470, %v1466
        %v1468 = vpop.f32.mrf.mxu0
        %v1469 = vpop.f32.mrf.mxu0
        %v1470 = vadd.f32 %v470, %v1469
        %v1471 = vpop.f32.mrf.mxu0
        %1472 = vmatprep.mubr.bf16.mxu0 0
        %1473 = vmatmul.mubr.bf16.gmra.mxu0 %v1003
        %v1474 = vpop.f32.mrf.mxu0
        %v1475 = vadd.f32 %v470, %v1474
        %v1476 = vpop.f32.mrf.mxu0
        %v1477 = vpop.f32.mrf.mxu0
        %v1478 = vadd.f32 %v470, %v1477
        %v1479 = vpop.f32.mrf.mxu0
        %1480 = vmatprep.mubr.bf16.mxu0 0
        %1481 = vmatmul.mubr.bf16.gmra.mxu0 %v1004
        %v1482 = vpop.f32.mrf.mxu0
        %v1483 = vadd.f32 %v470, %v1482
        %v1484 = vpop.f32.mrf.mxu0
        %v1485 = vpop.f32.mrf.mxu0
        %v1486 = vadd.f32 %v470, %v1485
        %v1487 = vpop.f32.mrf.mxu0
        %1488 = vmatprep.mubr.bf16.mxu0 0
        %1489 = vmatmul.mubr.bf16.gmra.mxu0 %v1005
        %v1490 = vpop.f32.mrf.mxu0
        %v1491 = vadd.f32 %v470, %v1490
        %v1492 = vpop.f32.mrf.mxu0
        %v1493 = vpop.f32.mrf.mxu0
        %v1494 = vadd.f32 %v470, %v1493
        %v1495 = vpop.f32.mrf.mxu0
        %1496 = vmatprep.mubr.bf16.mxu0 0
        %1497 = vmatmul.mubr.bf16.gmra.mxu0 %v1006
        %v1498 = vpop.f32.mrf.mxu0
        %v1499 = vadd.f32 %v470, %v1498
        %v1500 = vpop.f32.mrf.mxu0
        %v1501 = vpop.f32.mrf.mxu0
        %v1502 = vadd.f32 %v470, %v1501
        %v1503 = vpop.f32.mrf.mxu0
        %1504 = vmatprep.mubr.bf16.mxu0 0
        %1505 = vmatmul.mubr.bf16.gmra.mxu0 %v1007
        %v1506 = vpop.f32.mrf.mxu0
        %v1507 = vadd.f32 %v470, %v1506
        %v1508 = vpop.f32.mrf.mxu0
        %v1509 = vpop.f32.mrf.mxu0
        %v1510 = vadd.f32 %v470, %v1509
        %v1511 = vpop.f32.mrf.mxu0
        %1512 = vmatprep.mubr.bf16.mxu0 0
        %1513 = vmatmul.mubr.bf16.gmra.mxu0 %v1008
        %v1514 = vpop.f32.mrf.mxu0
        %v1515 = vadd.f32 %v470, %v1514
        %v1516 = vpop.f32.mrf.mxu0
        %v1517 = vpop.f32.mrf.mxu0
        %v1518 = vadd.f32 %v470, %v1517
        %v1519 = vpop.f32.mrf.mxu0
        %1520 = vmatprep.mubr.bf16.mxu0 0
        %1521 = vmatmul.mubr.bf16.gmra.mxu0 %v1009
        %v1522 = vpop.f32.mrf.mxu0
        %v1523 = vadd.f32 %v470, %v1522
        %v1524 = vpop.f32.mrf.mxu0
        %v1525 = vpop.f32.mrf.mxu0
        %v1526 = vadd.f32 %v470, %v1525
        %v1527 = vpop.f32.mrf.mxu0
        %1528 = vmatprep.mubr.bf16.mxu0 0
        %1529 = vmatmul.mubr.bf16.gmra.mxu0 %v1010
        %v1530 = vpop.f32.mrf.mxu0
        %v1531 = vadd.f32 %v470, %v1530
        %v1532 = vpop.f32.mrf.mxu0
        %v1533 = vpop.f32.mrf.mxu0
        %v1534 = vadd.f32 %v470, %v1533
        %v1535 = vpop.f32.mrf.mxu0
        %1536 = vmatprep.mubr.bf16.mxu0 0
        %1537 = vmatmul.mubr.bf16.gmra.mxu0 %v1011
        %v1538 = vpop.f32.mrf.mxu0
        %v1539 = vadd.f32 %v470, %v1538
        %v1540 = vpop.f32.mrf.mxu0
        %v1541 = vpop.f32.mrf.mxu0
        %v1542 = vadd.f32 %v470, %v1541
        %v1543 = vpop.f32.mrf.mxu0
        %1544 = vmatprep.mubr.bf16.mxu0 0
        %1545 = vmatmul.mubr.bf16.gmra.mxu0 %v1012
        %v1546 = vpop.f32.mrf.mxu0
        %v1547 = vadd.f32 %v470, %v1546
        %v1548 = vpop.f32.mrf.mxu0
        %v1549 = vpop.f32.mrf.mxu0
        %v1550 = vadd.f32 %v470, %v1549
        %v1551 = vpop.f32.mrf.mxu0
        %1552 = vmatprep.mubr.bf16.mxu0 0
        %1553 = vmatmul.mubr.bf16.gmra.mxu0 %v1013
        %v1554 = vpop.f32.mrf.mxu0
        %v1555 = vadd.f32 %v470, %v1554
        %v1556 = vpop.f32.mrf.mxu0
        %v1557 = vpop.f32.mrf.mxu0
        %v1558 = vadd.f32 %v470, %v1557
        %v1559 = vpop.f32.mrf.mxu0
        %1560 = vmatprep.mubr.bf16.mxu0 0
        %1561 = vmatmul.mubr.bf16.gmra.mxu0 %v1014
        %v1562 = vpop.f32.mrf.mxu0
        %v1563 = vadd.f32 %v470, %v1562
        %v1564 = vpop.f32.mrf.mxu0
        %v1565 = vpop.f32.mrf.mxu0
        %v1566 = vadd.f32 %v470, %v1565
        %v1567 = vpop.f32.mrf.mxu0
        %1568 = vmatprep.mubr.bf16.mxu0 0
        %1569 = vmatmul.mubr.bf16.gmra.mxu0 %v1015
        %v1570 = vpop.f32.mrf.mxu0
        %v1571 = vadd.f32 %v470, %v1570
        %v1572 = vpop.f32.mrf.mxu0
        %v1573 = vpop.f32.mrf.mxu0
        %v1574 = vadd.f32 %v470, %v1573
        %v1575 = vpop.f32.mrf.mxu0
        %1576 = vmatprep.mubr.bf16.mxu0 0
        %1577 = vmatmul.mubr.bf16.gmra.mxu0 %v1016
        %v1578 = vpop.f32.mrf.mxu0
        %v1579 = vadd.f32 %v470, %v1578
        %v1580 = vpop.f32.mrf.mxu0
        %v1581 = vpop.f32.mrf.mxu0
        %v1582 = vadd.f32 %v470, %v1581
        %v1583 = vpop.f32.mrf.mxu0
        %1584 = vmatprep.mubr.bf16.mxu0 0
        %1585 = vmatmul.mubr.bf16.gmra.mxu0 %v1017
        %v1586 = vpop.f32.mrf.mxu0
        %v1587 = vadd.f32 %v470, %v1586
        %v1588 = vpop.f32.mrf.mxu0
        %v1589 = vpop.f32.mrf.mxu0
        %v1590 = vadd.f32 %v470, %v1589
        %v1591 = vpop.f32.mrf.mxu0
        %1592 = vmatprep.mubr.bf16.mxu0 0
        %1593 = vmatmul.mubr.bf16.gmra.mxu0 %v1018
        %v1594 = vpop.f32.mrf.mxu0
        %v1595 = vadd.f32 %v470, %v1594
        %v1596 = vpop.f32.mrf.mxu0
        %v1597 = vpop.f32.mrf.mxu0
        %v1598 = vadd.f32 %v470, %v1597
        %v1599 = vpop.f32.mrf.mxu0
        %1600 = vmatprep.mubr.bf16.mxu0 0
        %1601 = vmatmul.mubr.bf16.gmra.mxu0 %v1019
        %v1602 = vpop.f32.mrf.mxu0
        %v1603 = vadd.f32 %v470, %v1602
        %v1604 = vpop.f32.mrf.mxu0
        %v1605 = vpop.f32.mrf.mxu0
        %v1606 = vadd.f32 %v470, %v1605
        %v1607 = vpop.f32.mrf.mxu0
        %1608 = vmatprep.mubr.bf16.mxu0 0
        %1609 = vmatmul.mubr.bf16.gmra.mxu0 %v1020
        %v1610 = vpop.f32.mrf.mxu0
        %v1611 = vadd.f32 %v470, %v1610
        %v1612 = vpop.f32.mrf.mxu0
        %v1613 = vpop.f32.mrf.mxu0
        %v1614 = vadd.f32 %v470, %v1613
        %v1615 = vpop.f32.mrf.mxu0
        %1616 = vmatprep.mubr.bf16.mxu0 0
        %1617 = vmatmul.mubr.bf16.gmra.mxu0 %v1021
        %v1618 = vpop.f32.mrf.mxu0
        %v1619 = vadd.f32 %v470, %v1618
        %v1620 = vpop.f32.mrf.mxu0
        %v1621 = vpop.f32.mrf.mxu0
        %v1622 = vadd.f32 %v470, %v1621
        %v1623 = vpop.f32.mrf.mxu0
        %1624 = vmatprep.mubr.bf16.mxu0 0
        %1625 = vmatmul.mubr.bf16.gmra.mxu0 %v1022
        %v1626 = vpop.f32.mrf.mxu0
        %v1627 = vadd.f32 %v470, %v1626
        %v1628 = vpop.f32.mrf.mxu0
        %v1629 = vpop.f32.mrf.mxu0
        %v1630 = vadd.f32 %v470, %v1629
        %v1631 = vpop.f32.mrf.mxu0
        %1632 = vmatprep.mubr.bf16.mxu0 0
        %1633 = vmatmul.mubr.bf16.gmra.mxu0 %v1023
        %v1634 = vpop.f32.mrf.mxu0
        %v1635 = vadd.f32 %v470, %v1634
        %v1636 = vpop.f32.mrf.mxu0
        %v1637 = vpop.f32.mrf.mxu0
        %v1638 = vadd.f32 %v470, %v1637
        %v1639 = vpop.f32.mrf.mxu0
        %1640 = vmatprep.mubr.bf16.mxu0 0
        %1641 = vmatmul.mubr.bf16.gmra.mxu0 %v1024
        %v1642 = vpop.f32.mrf.mxu0
        %v1643 = vadd.f32 %v470, %v1642
        %v1644 = vpop.f32.mrf.mxu0
        %v1645 = vpop.f32.mrf.mxu0
        %v1646 = vadd.f32 %v470, %v1645
        %v1647 = vpop.f32.mrf.mxu0
        %1648 = vmatprep.mubr.bf16.mxu0 0
        %1649 = vmatmul.mubr.bf16.gmra.mxu0 %v1025
        %v1650 = vpop.f32.mrf.mxu0
        %v1651 = vadd.f32 %v470, %v1650
        %v1652 = vpop.f32.mrf.mxu0
        %v1653 = vpop.f32.mrf.mxu0
        %v1654 = vadd.f32 %v470, %v1653
        %v1655 = vpop.f32.mrf.mxu0
        %1656 = vmatprep.mubr.bf16.mxu0 0
        %1657 = vmatmul.mubr.bf16.gmra.mxu0 %v1026
        %v1658 = vpop.f32.mrf.mxu0
        %v1659 = vadd.f32 %v470, %v1658
        %v1660 = vpop.f32.mrf.mxu0
        %v1661 = vpop.f32.mrf.mxu0
        %v1662 = vadd.f32 %v470, %v1661
        %v1663 = vpop.f32.mrf.mxu0
        %1664 = vmatprep.mubr.bf16.mxu0 0
        %1665 = vmatmul.mubr.bf16.gmra.mxu0 %v1027
        %v1666 = vpop.f32.mrf.mxu0
        %v1667 = vadd.f32 %v470, %v1666
        %v1668 = vpop.f32.mrf.mxu0
        %v1669 = vpop.f32.mrf.mxu0
        %v1670 = vadd.f32 %v470, %v1669
        %v1671 = vpop.f32.mrf.mxu0
        %1672 = vmatprep.mubr.bf16.mxu0 0
        %1673 = vmatmul.mubr.bf16.gmra.mxu0 %v1028
        %v1674 = vpop.f32.mrf.mxu0
        %v1675 = vadd.f32 %v470, %v1674
        %v1676 = vpop.f32.mrf.mxu0
        %v1677 = vpop.f32.mrf.mxu0
        %v1678 = vadd.f32 %v470, %v1677
        %v1679 = vpop.f32.mrf.mxu0
        %1680 = vmatprep.mubr.bf16.mxu0 0
        %1681 = vmatmul.mubr.bf16.gmra.mxu0 %v1029
        %v1682 = vpop.f32.mrf.mxu0
        %v1683 = vadd.f32 %v470, %v1682
        %v1684 = vpop.f32.mrf.mxu0
        %v1685 = vpop.f32.mrf.mxu0
        %v1686 = vadd.f32 %v470, %v1685
        %v1687 = vpop.f32.mrf.mxu0
        %1688 = vmatprep.mubr.bf16.mxu0 0
        %1689 = vmatmul.mubr.bf16.gmra.mxu0 %v1030
        %v1690 = vpop.f32.mrf.mxu0
        %v1691 = vadd.f32 %v470, %v1690
        %v1692 = vpop.f32.mrf.mxu0
        %v1693 = vpop.f32.mrf.mxu0
        %v1694 = vadd.f32 %v470, %v1693
        %v1695 = vpop.f32.mrf.mxu0
        %1696 = vmatprep.mubr.bf16.mxu0 0
        %1697 = vmatmul.mubr.bf16.gmra.mxu0 %v1031
        %v1698 = vpop.f32.mrf.mxu0
        %v1699 = vadd.f32 %v470, %v1698
        %v1700 = vpop.f32.mrf.mxu0
        %v1701 = vpop.f32.mrf.mxu0
        %v1702 = vadd.f32 %v470, %v1701
        %v1703 = vpop.f32.mrf.mxu0
        %1704 = vmatprep.mubr.bf16.mxu0 0
        %1705 = vmatmul.mubr.bf16.gmra.mxu0 %v1032
        %v1706 = vpop.f32.mrf.mxu0
        %v1707 = vadd.f32 %v470, %v1706
        %v1708 = vpop.f32.mrf.mxu0
        %v1709 = vpop.f32.mrf.mxu0
        %v1710 = vadd.f32 %v470, %v1709
        %v1711 = vpop.f32.mrf.mxu0
        %1712 = vmatprep.mubr.bf16.mxu0 0
        %1713 = vmatmul.mubr.bf16.gmra.mxu0 %v1033
        %v1714 = vpop.f32.mrf.mxu0
        %v1715 = vadd.f32 %v470, %v1714
        %v1716 = vpop.f32.mrf.mxu0
        %v1717 = vpop.f32.mrf.mxu0
        %v1718 = vadd.f32 %v470, %v1717
        %v1719 = vpop.f32.mrf.mxu0
        %1720 = vmatprep.mubr.bf16.mxu0 0
        %1721 = vmatmul.mubr.bf16.gmra.mxu0 %v1034
        %v1722 = vpop.f32.mrf.mxu0
        %v1723 = vadd.f32 %v470, %v1722
        %v1724 = vpop.f32.mrf.mxu0
        %v1725 = vpop.f32.mrf.mxu0
        %v1726 = vadd.f32 %v470, %v1725
        %v1727 = vpop.f32.mrf.mxu0
        %1728 = vmatprep.mubr.bf16.mxu0 0
        %1729 = vmatmul.mubr.bf16.gmra.mxu0 %v1035
        %v1730 = vpop.f32.mrf.mxu0
        %v1731 = vadd.f32 %v470, %v1730
        %v1732 = vpop.f32.mrf.mxu0
        %v1733 = vpop.f32.mrf.mxu0
        %v1734 = vadd.f32 %v470, %v1733
        %v1735 = vpop.f32.mrf.mxu0
        %1736 = vmatprep.mubr.bf16.mxu0 0
        %1737 = vmatmul.mubr.bf16.gmra.mxu0 %v1036
        %v1738 = vpop.f32.mrf.mxu0
        %v1739 = vadd.f32 %v470, %v1738
        %v1740 = vpop.f32.mrf.mxu0
        %v1741 = vpop.f32.mrf.mxu0
        %v1742 = vadd.f32 %v470, %v1741
        %v1743 = vpop.f32.mrf.mxu0
        %1744 = vmatprep.mubr.bf16.mxu0 0
        %1745 = vmatmul.mubr.bf16.gmra.mxu0 %v1037
        %v1746 = vpop.f32.mrf.mxu0
        %v1747 = vadd.f32 %v470, %v1746
        %v1748 = vpop.f32.mrf.mxu0
        %v1749 = vpop.f32.mrf.mxu0
        %v1750 = vadd.f32 %v470, %v1749
        %v1751 = vpop.f32.mrf.mxu0
        %1752 = vmatprep.mubr.bf16.mxu0 0
        %1753 = vmatmul.mubr.bf16.gmra.mxu0 %v1038
        %v1754 = vpop.f32.mrf.mxu0
        %v1755 = vadd.f32 %v470, %v1754
        %v1756 = vpop.f32.mrf.mxu0
        %v1757 = vpop.f32.mrf.mxu0
        %v1758 = vadd.f32 %v470, %v1757
        %v1759 = vpop.f32.mrf.mxu0
        %1760 = vmatprep.mubr.bf16.mxu0 0
        %1761 = vmatmul.mubr.bf16.gmra.mxu0 %v1039
        %v1762 = vpop.f32.mrf.mxu0
        %v1763 = vadd.f32 %v470, %v1762
        %v1764 = vpop.f32.mrf.mxu0
        %v1765 = vpop.f32.mrf.mxu0
        %v1766 = vadd.f32 %v470, %v1765
        %v1767 = vpop.f32.mrf.mxu0
        %1768 = vmatprep.mubr.bf16.mxu0 0
        %1769 = vmatmul.mubr.bf16.gmra.mxu0 %v1040
        %v1770 = vpop.f32.mrf.mxu0
        %v1771 = vadd.f32 %v470, %v1770
        %v1772 = vpop.f32.mrf.mxu0
        %v1773 = vpop.f32.mrf.mxu0
        %v1774 = vadd.f32 %v470, %v1773
        %v1775 = vpop.f32.mrf.mxu0
        %1776 = vmatprep.mubr.bf16.mxu0 0
        %1777 = vmatmul.mubr.bf16.gmra.mxu0 %v1041
        %v1778 = vpop.f32.mrf.mxu0
        %v1779 = vadd.f32 %v470, %v1778
        %v1780 = vpop.f32.mrf.mxu0
        %v1781 = vpop.f32.mrf.mxu0
        %v1782 = vadd.f32 %v470, %v1781
        %v1783 = vpop.f32.mrf.mxu0
        %1784 = vmatprep.mubr.bf16.mxu0 0
        %1785 = vmatmul.mubr.bf16.gmra.mxu0 %v1042
        %v1786 = vpop.f32.mrf.mxu0
        %v1787 = vadd.f32 %v470, %v1786
        %v1788 = vpop.f32.mrf.mxu0
        %v1789 = vpop.f32.mrf.mxu0
        %v1790 = vadd.f32 %v470, %v1789
        %v1791 = vpop.f32.mrf.mxu0
        %1792 = vmatprep.mubr.bf16.mxu0 0
        %1793 = vmatmul.mubr.bf16.gmra.mxu0 %v1043
        %v1794 = vpop.f32.mrf.mxu0
        %v1795 = vadd.f32 %v470, %v1794
        %v1796 = vpop.f32.mrf.mxu0
        %v1797 = vpop.f32.mrf.mxu0
        %v1798 = vadd.f32 %v470, %v1797
        %v1799 = vpop.f32.mrf.mxu0
        %1800 = vmatprep.mubr.bf16.mxu0 0
        %1801 = vmatmul.mubr.bf16.gmra.mxu0 %v1044
        %v1802 = vpop.f32.mrf.mxu0
        %v1803 = vadd.f32 %v470, %v1802
        %v1804 = vpop.f32.mrf.mxu0
        %v1805 = vpop.f32.mrf.mxu0
        %v1806 = vadd.f32 %v470, %v1805
        %v1807 = vpop.f32.mrf.mxu0
        %1808 = vmatprep.mubr.bf16.mxu0 0
        %1809 = vmatmul.mubr.bf16.gmra.mxu0 %v1045
        %v1810 = vpop.f32.mrf.mxu0
        %v1811 = vadd.f32 %v470, %v1810
        %v1812 = vpop.f32.mrf.mxu0
        %v1813 = vpop.f32.mrf.mxu0
        %v1814 = vadd.f32 %v470, %v1813
        %v1815 = vpop.f32.mrf.mxu0
        %1816 = vmatprep.mubr.bf16.mxu0 0
        %1817 = vmatmul.mubr.bf16.gmra.mxu0 %v1046
        %v1818 = vpop.f32.mrf.mxu0
        %v1819 = vadd.f32 %v470, %v1818
        %v1820 = vpop.f32.mrf.mxu0
        %v1821 = vpop.f32.mrf.mxu0
        %v1822 = vadd.f32 %v470, %v1821
        %v1823 = vpop.f32.mrf.mxu0
        %1824 = vmatprep.mubr.bf16.mxu0 0
        %1825 = vmatmul.mubr.bf16.gmra.mxu0 %v1047
        %v1826 = vpop.f32.mrf.mxu0
        %v1827 = vadd.f32 %v470, %v1826
        %v1828 = vpop.f32.mrf.mxu0
        %v1829 = vpop.f32.mrf.mxu0
        %v1830 = vadd.f32 %v470, %v1829
        %v1831 = vpop.f32.mrf.mxu0
        %1832 = vmatprep.mubr.bf16.mxu0 0
        %1833 = vmatmul.mubr.bf16.gmra.mxu0 %v1048
        %v1834 = vpop.f32.mrf.mxu0
        %v1835 = vadd.f32 %v470, %v1834
        %v1836 = vpop.f32.mrf.mxu0
        %v1837 = vpop.f32.mrf.mxu0
        %v1838 = vadd.f32 %v470, %v1837
        %v1839 = vpop.f32.mrf.mxu0
        %1840 = vmatprep.mubr.bf16.mxu0 0
        %1841 = vmatmul.mubr.bf16.gmra.mxu0 %v1049
        %v1842 = vpop.f32.mrf.mxu0
        %v1843 = vadd.f32 %v470, %v1842
        %v1844 = vpop.f32.mrf.mxu0
        %v1845 = vpop.f32.mrf.mxu0
        %v1846 = vadd.f32 %v470, %v1845
        %v1847 = vpop.f32.mrf.mxu0
        %1848 = vmatprep.mubr.bf16.mxu0 0
        %1849 = vmatmul.mubr.bf16.gmra.mxu0 %v1050
        %v1850 = vpop.f32.mrf.mxu0
        %v1851 = vadd.f32 %v470, %v1850
        %v1852 = vpop.f32.mrf.mxu0
        %v1853 = vpop.f32.mrf.mxu0
        %v1854 = vadd.f32 %v470, %v1853
        %v1855 = vpop.f32.mrf.mxu0
        %1856 = vmatprep.mubr.bf16.mxu0 0
        %1857 = vmatmul.mubr.bf16.gmra.mxu0 %v1051
        %v1858 = vpop.f32.mrf.mxu0
        %v1859 = vadd.f32 %v470, %v1858
        %v1860 = vpop.f32.mrf.mxu0
        %v1861 = vpop.f32.mrf.mxu0
        %v1862 = vadd.f32 %v470, %v1861
        %v1863 = vpop.f32.mrf.mxu0
        %1864 = vmatprep.mubr.bf16.mxu0 0
        %1865 = vmatmul.mubr.bf16.gmra.mxu0 %v1052
        %v1866 = vpop.f32.mrf.mxu0
        %v1867 = vadd.f32 %v470, %v1866
        %v1868 = vpop.f32.mrf.mxu0
        %v1869 = vpop.f32.mrf.mxu0
        %v1870 = vadd.f32 %v470, %v1869
        %v1871 = vpop.f32.mrf.mxu0
        %1872 = vmatprep.mubr.bf16.mxu0 0
        %1873 = vmatmul.mubr.bf16.gmra.mxu0 %v1053
        %v1874 = vpop.f32.mrf.mxu0
        %v1875 = vadd.f32 %v470, %v1874
        %v1876 = vpop.f32.mrf.mxu0
        %v1877 = vpop.f32.mrf.mxu0
        %v1878 = vadd.f32 %v470, %v1877
        %v1879 = vpop.f32.mrf.mxu0
        %1880 = vmatprep.mubr.bf16.mxu0 0
        %1881 = vmatmul.mubr.bf16.gmra.mxu0 %v1054
        %v1882 = vpop.f32.mrf.mxu0
        %v1883 = vadd.f32 %v470, %v1882
        %v1884 = vpop.f32.mrf.mxu0
        %v1885 = vpop.f32.mrf.mxu0
        %v1886 = vadd.f32 %v470, %v1885
        %v1887 = vpop.f32.mrf.mxu0
        %1888 = vmatprep.mubr.bf16.mxu0 0
        %1889 = vmatmul.mubr.bf16.gmra.mxu0 %v1055
        %v1890 = vpop.f32.mrf.mxu0
        %v1891 = vadd.f32 %v470, %v1890
        %v1892 = vpop.f32.mrf.mxu0
        %v1893 = vpop.f32.mrf.mxu0
        %v1894 = vadd.f32 %v470, %v1893
        %v1895 = vpop.f32.mrf.mxu0
        %1896 = vmatprep.mubr.bf16.mxu0 0
        %1897 = vmatmul.mubr.bf16.gmra.mxu0 %v1056
        %v1898 = vpop.f32.mrf.mxu0
        %v1899 = vadd.f32 %v470, %v1898
        %v1900 = vpop.f32.mrf.mxu0
        %v1901 = vpop.f32.mrf.mxu0
        %v1902 = vadd.f32 %v470, %v1901
        %v1903 = vpop.f32.mrf.mxu0
        %1904 = vmatprep.mubr.bf16.mxu0 0
        %1905 = vmatmul.mubr.bf16.gmra.mxu0 %v1057
        %v1906 = vpop.f32.mrf.mxu0
        %v1907 = vadd.f32 %v470, %v1906
        %v1908 = vpop.f32.mrf.mxu0
        %v1909 = vpop.f32.mrf.mxu0
        %v1910 = vadd.f32 %v470, %v1909
        %v1911 = vpop.f32.mrf.mxu0
        %1912 = vmatprep.mubr.bf16.mxu0 0
        %1913 = vmatmul.mubr.bf16.gmra.mxu0 %v1058
        %v1914 = vpop.f32.mrf.mxu0
        %v1915 = vadd.f32 %v470, %v1914
        %v1916 = vpop.f32.mrf.mxu0
        %v1917 = vpop.f32.mrf.mxu0
        %v1918 = vadd.f32 %v470, %v1917
        %v1919 = vpop.f32.mrf.mxu0
        %1920 = vmatprep.mubr.bf16.mxu0 0
        %1921 = vmatmul.mubr.bf16.gmra.mxu0 %v1059
        %v1922 = vpop.f32.mrf.mxu0
        %v1923 = vadd.f32 %v470, %v1922
        %v1924 = vpop.f32.mrf.mxu0
        %v1925 = vpop.f32.mrf.mxu0
        %v1926 = vadd.f32 %v470, %v1925
        %v1927 = vpop.f32.mrf.mxu0
        %1928 = vmatprep.mubr.bf16.mxu0 0
        %1929 = vmatmul.mubr.bf16.gmra.mxu0 %v1060
        %v1930 = vpop.f32.mrf.mxu0
        %v1931 = vadd.f32 %v470, %v1930
        %v1932 = vpop.f32.mrf.mxu0
        %v1933 = vpop.f32.mrf.mxu0
        %v1934 = vadd.f32 %v470, %v1933
        %v1935 = vpop.f32.mrf.mxu0
        %1936 = vmatprep.mubr.bf16.mxu0 0
        %1937 = vmatmul.mubr.bf16.gmra.mxu0 %v1061
        %v1938 = vpop.f32.mrf.mxu0
        %v1939 = vadd.f32 %v470, %v1938
        %v1940 = vpop.f32.mrf.mxu0
        %v1941 = vpop.f32.mrf.mxu0
        %v1942 = vadd.f32 %v470, %v1941
        %v1943 = vpop.f32.mrf.mxu0
        %1944 = vmatprep.mubr.bf16.mxu0 0
        %1945 = vmatmul.mubr.bf16.gmra.mxu0 %v1062
        %v1946 = vpop.f32.mrf.mxu0
        %v1947 = vadd.f32 %v470, %v1946
        %v1948 = vpop.f32.mrf.mxu0
        %v1949 = vpop.f32.mrf.mxu0
        %v1950 = vadd.f32 %v470, %v1949
        %v1951 = vpop.f32.mrf.mxu0
        %1952 = vmatprep.mubr.bf16.mxu0 0
        %1953 = vmatmul.mubr.bf16.gmra.mxu0 %v1063
        %v1954 = vpop.f32.mrf.mxu0
        %v1955 = vadd.f32 %v470, %v1954
        %v1956 = vpop.f32.mrf.mxu0
        %v1957 = vpop.f32.mrf.mxu0
        %v1958 = vadd.f32 %v470, %v1957
        %v1959 = vpop.f32.mrf.mxu0
        %1960 = vmatprep.mubr.bf16.mxu0 0
        %1961 = vmatmul.mubr.bf16.gmra.mxu0 %v1064
        %v1962 = vpop.f32.mrf.mxu0
        %v1963 = vadd.f32 %v470, %v1962
        %v1964 = vpop.f32.mrf.mxu0
        %v1965 = vpop.f32.mrf.mxu0
        %v1966 = vadd.f32 %v470, %v1965
        %v1967 = vpop.f32.mrf.mxu0
        %1968 = vmatprep.mubr.bf16.mxu0 0
        %1969 = vmatmul.mubr.bf16.gmra.mxu0 %v1065
        %v1970 = vpop.f32.mrf.mxu0
        %v1971 = vadd.f32 %v470, %v1970
        %v1972 = vpop.f32.mrf.mxu0
        %v1973 = vpop.f32.mrf.mxu0
        %v1974 = vadd.f32 %v470, %v1973
        %v1975 = vpop.f32.mrf.mxu0
        %1976 = vmatprep.mubr.bf16.mxu0 0
        %1977 = vmatmul.mubr.bf16.gmra.mxu0 %v1066
        %v1978 = vpop.f32.mrf.mxu0
        %v1979 = vadd.f32 %v470, %v1978
        %v1980 = vpop.f32.mrf.mxu0
        %v1981 = vpop.f32.mrf.mxu0
        %v1982 = vadd.f32 %v470, %v1981
        %v1983 = vpop.f32.mrf.mxu0
        %1984 = vmatprep.mubr.bf16.mxu0 0
        %1985 = vmatmul.mubr.bf16.gmra.mxu0 %v1067
        %v1986 = vpop.f32.mrf.mxu0
        %v1987 = vadd.f32 %v470, %v1986
        %v1988 = vpop.f32.mrf.mxu0
        %v1989 = vpop.f32.mrf.mxu0
        %v1990 = vadd.f32 %v470, %v1989
        %v1991 = vpop.f32.mrf.mxu0
        %1992 = vmatprep.mubr.bf16.mxu0 0
        %1993 = vmatmul.mubr.bf16.gmra.mxu0 %v1068
        %v1994 = vpop.f32.mrf.mxu0
        %v1995 = vadd.f32 %v470, %v1994
        %v1996 = vpop.f32.mrf.mxu0
        %v1997 = vpop.f32.mrf.mxu0
        %v1998 = vadd.f32 %v470, %v1997
        %v1999 = vpop.f32.mrf.mxu0
        %2000 = vmatprep.mubr.bf16.mxu0 0
        %2001 = vmatmul.mubr.bf16.gmra.mxu0 %v1069
        %v2002 = vpop.f32.mrf.mxu0
        %v2003 = vadd.f32 %v470, %v2002
        %v2004 = vpop.f32.mrf.mxu0
        %v2005 = vpop.f32.mrf.mxu0
        %v2006 = vadd.f32 %v470, %v2005
        %v2007 = vpop.f32.mrf.mxu0
        %2008 = vmatprep.mubr.bf16.mxu0 0
        %2009 = vmatmul.mubr.bf16.gmra.mxu0 %v1070
        %v2010 = vpop.f32.mrf.mxu0
        %v2011 = vadd.f32 %v470, %v2010
        %v2012 = vpop.f32.mrf.mxu0
        %v2013 = vpop.f32.mrf.mxu0
        %v2014 = vadd.f32 %v470, %v2013
        %v2015 = vpop.f32.mrf.mxu0
        %2016 = vmatprep.mubr.bf16.mxu0 0
        %2017 = vmatmul.mubr.bf16.gmra.mxu0 %v1071
        %v2018 = vpop.f32.mrf.mxu0
        %v2019 = vadd.f32 %v470, %v2018
        %v2020 = vpop.f32.mrf.mxu0
        %v2021 = vpop.f32.mrf.mxu0
        %v2022 = vadd.f32 %v470, %v2021
        %v2023 = vpop.f32.mrf.mxu0
        %2024 = vmatprep.mubr.bf16.mxu0 0
        %2025 = vmatmul.mubr.bf16.gmra.mxu0 %v1072
        %v2026 = vpop.f32.mrf.mxu0
        %v2027 = vadd.f32 %v470, %v2026
        %v2028 = vpop.f32.mrf.mxu0
        %v2029 = vpop.f32.mrf.mxu0
        %v2030 = vadd.f32 %v470, %v2029
        %v2031 = vpop.f32.mrf.mxu0
        %2032 = vmatprep.mubr.bf16.mxu0 0
        %2033 = vmatmul.mubr.bf16.gmra.mxu0 %v1073
        %v2034 = vpop.f32.mrf.mxu0
        %v2035 = vadd.f32 %v470, %v2034
        %v2036 = vpop.f32.mrf.mxu0
        %v2037 = vpop.f32.mrf.mxu0
        %v2038 = vadd.f32 %v470, %v2037
        %v2039 = vpop.f32.mrf.mxu0
        %2040 = vmatprep.mubr.bf16.mxu0 0
        %2041 = vmatmul.mubr.bf16.gmra.mxu0 %v1074
        %v2042 = vpop.f32.mrf.mxu0
        %v2043 = vadd.f32 %v470, %v2042
        %v2044 = vpop.f32.mrf.mxu0
        %v2045 = vpop.f32.mrf.mxu0
        %v2046 = vadd.f32 %v470, %v2045
        %v2047 = vpop.f32.mrf.mxu0
        %2048 = vmatprep.mubr.bf16.mxu0 0
        %2049 = vmatmul.mubr.bf16.gmra.mxu0 %v1075
        %v2050 = vpop.f32.mrf.mxu0
        %v2051 = vadd.f32 %v470, %v2050
        %v2052 = vpop.f32.mrf.mxu0
        %v2053 = vpop.f32.mrf.mxu0
        %v2054 = vadd.f32 %v470, %v2053
        %v2055 = vpop.f32.mrf.mxu0
        %2056 = vmatprep.mubr.bf16.mxu0 0
        %2057 = vmatmul.mubr.bf16.gmra.mxu0 %v1076
        %v2058 = vpop.f32.mrf.mxu0
        %v2059 = vadd.f32 %v470, %v2058
        %v2060 = vpop.f32.mrf.mxu0
        %v2061 = vpop.f32.mrf.mxu0
        %v2062 = vadd.f32 %v470, %v2061
        %v2063 = vpop.f32.mrf.mxu0
        %2064 = vmatprep.mubr.bf16.mxu0 0
        %2065 = vmatmul.mubr.bf16.gmra.mxu0 %v1077
        %v2066 = vpop.f32.mrf.mxu0
        %v2067 = vadd.f32 %v470, %v2066
        %v2068 = vpop.f32.mrf.mxu0
        %v2069 = vpop.f32.mrf.mxu0
        %v2070 = vadd.f32 %v470, %v2069
        %v2071 = vpop.f32.mrf.mxu0
        %2072 = vmatprep.mubr.bf16.mxu0 0
        %2073 = vmatmul.mubr.bf16.gmra.mxu0 %v1078
        %v2074 = vpop.f32.mrf.mxu0
        %v2075 = vadd.f32 %v470, %v2074
        %v2076 = vpop.f32.mrf.mxu0
        %v2077 = vpop.f32.mrf.mxu0
        %v2078 = vadd.f32 %v470, %v2077
        %v2079 = vpop.f32.mrf.mxu0
        %2080 = vmatprep.mubr.bf16.mxu0 0
        %2081 = vmatmul.mubr.bf16.gmra.mxu0 %v1079
        %v2082 = vpop.f32.mrf.mxu0
        %v2083 = vadd.f32 %v470, %v2082
        %v2084 = vpop.f32.mrf.mxu0
        %v2085 = vpop.f32.mrf.mxu0
        %v2086 = vadd.f32 %v470, %v2085
        %v2087 = vpop.f32.mrf.mxu0
        %2088 = vmatprep.mubr.bf16.mxu0 0
        %2089 = vmatmul.mubr.bf16.gmra.mxu0 %v1080
        %v2090 = vpop.f32.mrf.mxu0
        %v2091 = vadd.f32 %v470, %v2090
        %v2092 = vpop.f32.mrf.mxu0
        %v2093 = vpop.f32.mrf.mxu0
        %v2094 = vadd.f32 %v470, %v2093
        %v2095 = vpop.f32.mrf.mxu0
        %2096 = vmatprep.mubr.bf16.mxu0 0
        %2097 = vmatmul.mubr.bf16.gmra.mxu0 %v1081
        %v2098 = vpop.f32.mrf.mxu0
        %v2099 = vadd.f32 %v470, %v2098
        %v2100 = vpop.f32.mrf.mxu0
        %v2101 = vpop.f32.mrf.mxu0
        %v2102 = vadd.f32 %v470, %v2101
        %v2103 = vpop.f32.mrf.mxu0
        %2104 = vmatprep.mubr.bf16.mxu0 0
        %2105 = vmatmul.mubr.bf16.gmra.mxu0 %v1082
        %v2106 = vpop.f32.mrf.mxu0
        %v2107 = vadd.f32 %v470, %v2106
        %v2108 = vpop.f32.mrf.mxu0
        %v2109 = vpop.f32.mrf.mxu0
        %v2110 = vadd.f32 %v470, %v2109
        %v2111 = vpop.f32.mrf.mxu0
        %2112 = vmatprep.mubr.bf16.mxu0 0
        %2113 = vmatmul.mubr.bf16.gmra.mxu0 %v1083
        %v2114 = vpop.f32.mrf.mxu0
        %v2115 = vadd.f32 %v470, %v2114
        %v2116 = vpop.f32.mrf.mxu0
        %v2117 = vpop.f32.mrf.mxu0
        %v2118 = vadd.f32 %v470, %v2117
        %v2119 = vpop.f32.mrf.mxu0
        %2120 = vmatprep.mubr.bf16.mxu0 0
        %2121 = vmatmul.mubr.bf16.gmra.mxu0 %v1084
        %v2122 = vpop.f32.mrf.mxu0
        %v2123 = vadd.f32 %v470, %v2122
        %v2124 = vpop.f32.mrf.mxu0
        %v2125 = vpop.f32.mrf.mxu0
        %v2126 = vadd.f32 %v470, %v2125
        %v2127 = vpop.f32.mrf.mxu0
        %2128 = vmatprep.mubr.bf16.mxu0 0
        %2129 = vmatmul.mubr.bf16.gmra.mxu0 %v1085
        %v2130 = vpop.f32.mrf.mxu0
        %v2131 = vadd.f32 %v470, %v2130
        %v2132 = vpop.f32.mrf.mxu0
        %v2133 = vpop.f32.mrf.mxu0
        %v2134 = vadd.f32 %v470, %v2133
        %v2135 = vpop.f32.mrf.mxu0
        %2136 = vmatprep.mubr.bf16.mxu0 0
        %2137 = vmatmul.mubr.bf16.gmra.mxu0 %v1086
        %v2138 = vpop.f32.mrf.mxu0
        %v2139 = vadd.f32 %v470, %v2138
        %v2140 = vpop.f32.mrf.mxu0
        %v2141 = vpop.f32.mrf.mxu0
        %v2142 = vadd.f32 %v470, %v2141
        %v2143 = vpop.f32.mrf.mxu0
        %2144 = vmatprep.mubr.bf16.mxu0 0
        %2145 = vmatmul.mubr.bf16.gmra.mxu0 %v1087
        %v2146 = vpop.f32.mrf.mxu0
        %v2147 = vadd.f32 %v470, %v2146
        %v2148 = vpop.f32.mrf.mxu0
        %v2149 = vpop.f32.mrf.mxu0
        %v2150 = vadd.f32 %v470, %v2149
        %v2151 = vpop.f32.mrf.mxu0
        %2152 = vmatprep.mubr.bf16.mxu0 0
        %2153 = vmatmul.mubr.bf16.gmra.mxu0 %v1088
        %v2154 = vpop.f32.mrf.mxu0
        %v2155 = vadd.f32 %v470, %v2154
        %v2156 = vpop.f32.mrf.mxu0
        %v2157 = vpop.f32.mrf.mxu0
        %v2158 = vadd.f32 %v470, %v2157
        %v2159 = vpop.f32.mrf.mxu0
        %2160 = vmatprep.mubr.bf16.mxu0 0
        %2161 = vmatmul.mubr.bf16.gmra.mxu0 %v1089
        %v2162 = vpop.f32.mrf.mxu0
        %v2163 = vadd.f32 %v470, %v2162
        %v2164 = vpop.f32.mrf.mxu0
        %v2165 = vpop.f32.mrf.mxu0
        %v2166 = vadd.f32 %v470, %v2165
        %v2167 = vpop.f32.mrf.mxu0
        %2168 = vmatprep.mubr.bf16.mxu0 0
        %2169 = vmatmul.mubr.bf16.gmra.mxu0 %v1090
        %v2170 = vpop.f32.mrf.mxu0
        %v2171 = vadd.f32 %v470, %v2170
        %v2172 = vpop.f32.mrf.mxu0
        %v2173 = vpop.f32.mrf.mxu0
        %v2174 = vadd.f32 %v470, %v2173
        %v2175 = vpop.f32.mrf.mxu0
        %2176 = vmatprep.mubr.bf16.mxu0 0
        %2177 = vmatmul.mubr.bf16.gmra.mxu0 %v1091
        %v2178 = vpop.f32.mrf.mxu0
        %v2179 = vadd.f32 %v470, %v2178
        %v2180 = vpop.f32.mrf.mxu0
        %v2181 = vpop.f32.mrf.mxu0
        %v2182 = vadd.f32 %v470, %v2181
        %v2183 = vpop.f32.mrf.mxu0
        %2184 = vmatprep.mubr.bf16.mxu0 0
        %2185 = vmatmul.mubr.bf16.gmra.mxu0 %v1092
        %v2186 = vpop.f32.mrf.mxu0
        %v2187 = vadd.f32 %v470, %v2186
        %v2188 = vpop.f32.mrf.mxu0
        %v2189 = vpop.f32.mrf.mxu0
        %v2190 = vadd.f32 %v470, %v2189
        %v2191 = vpop.f32.mrf.mxu0
        %2192 = vmatprep.mubr.bf16.mxu0 0
        %2193 = vmatmul.mubr.bf16.gmra.mxu0 %v1093
        %v2194 = vpop.f32.mrf.mxu0
        %v2195 = vadd.f32 %v470, %v2194
        %v2196 = vpop.f32.mrf.mxu0
        %v2197 = vpop.f32.mrf.mxu0
        %v2198 = vadd.f32 %v470, %v2197
        %v2199 = vpop.f32.mrf.mxu0
        %2200 = vmatprep.mubr.bf16.mxu0 0
        %2201 = vmatmul.mubr.bf16.gmra.mxu0 %v1094
        %v2202 = vpop.f32.mrf.mxu0
        %v2203 = vadd.f32 %v470, %v2202
        %v2204 = vpop.f32.mrf.mxu0
        %v2205 = vpop.f32.mrf.mxu0
        %v2206 = vadd.f32 %v470, %v2205
        %v2207 = vpop.f32.mrf.mxu0
        %2208 = vmatprep.mubr.bf16.mxu0 0
        %2209 = vmatmul.mubr.bf16.gmra.mxu0 %v1095
        %v2210 = vpop.f32.mrf.mxu0
        %v2211 = vadd.f32 %v470, %v2210
        %v2212 = vpop.f32.mrf.mxu0
        %v2213 = vpop.f32.mrf.mxu0
        %v2214 = vadd.f32 %v470, %v2213
        %v2215 = vpop.f32.mrf.mxu0
        %2216 = vmatprep.mubr.bf16.mxu0 0
        %2217 = vmatmul.mubr.bf16.gmra.mxu0 %v1096
        %v2218 = vpop.f32.mrf.mxu0
        %v2219 = vadd.f32 %v470, %v2218
        %v2220 = vpop.f32.mrf.mxu0
        %v2221 = vpop.f32.mrf.mxu0
        %v2222 = vadd.f32 %v470, %v2221
        %v2223 = vpop.f32.mrf.mxu0
        %2224 = vmatprep.mubr.bf16.mxu0 0
        %2225 = vmatmul.mubr.bf16.gmra.mxu0 %v1097
        %v2226 = vpop.f32.mrf.mxu0
        %v2227 = vadd.f32 %v470, %v2226
        %v2228 = vpop.f32.mrf.mxu0
        %v2229 = vpop.f32.mrf.mxu0
        %v2230 = vadd.f32 %v470, %v2229
        %v2231 = vpop.f32.mrf.mxu0
        %2232 = vmatprep.mubr.bf16.mxu0 0
        %2233 = vmatmul.mubr.bf16.gmra.mxu0 %v1098
        %v2234 = vpop.f32.mrf.mxu0
        %v2235 = vadd.f32 %v470, %v2234
        %v2236 = vpop.f32.mrf.mxu0
        %v2237 = vpop.f32.mrf.mxu0
        %v2238 = vadd.f32 %v470, %v2237
        %v2239 = vpop.f32.mrf.mxu0
        %2240 = vmatprep.mubr.bf16.mxu0 0
        %2241 = vmatmul.mubr.bf16.gmra.mxu0 %v1099
        %v2242 = vpop.f32.mrf.mxu0
        %v2243 = vadd.f32 %v470, %v2242
        %v2244 = vpop.f32.mrf.mxu0
        %v2245 = vpop.f32.mrf.mxu0
        %v2246 = vadd.f32 %v470, %v2245
        %v2247 = vpop.f32.mrf.mxu0
        %2248 = vmatprep.mubr.bf16.mxu0 0
        %2249 = vmatmul.mubr.bf16.gmra.mxu0 %v1100
        %v2250 = vpop.f32.mrf.mxu0
        %v2251 = vadd.f32 %v470, %v2250
        %v2252 = vpop.f32.mrf.mxu0
        %v2253 = vpop.f32.mrf.mxu0
        %v2254 = vadd.f32 %v470, %v2253
        %v2255 = vpop.f32.mrf.mxu0
        %2256 = vmatprep.mubr.bf16.mxu0 0
        %2257 = vmatmul.mubr.bf16.gmra.mxu0 %v1101
        %v2258 = vpop.f32.mrf.mxu0
        %v2259 = vadd.f32 %v470, %v2258
        %v2260 = vpop.f32.mrf.mxu0
        %v2261 = vpop.f32.mrf.mxu0
        %v2262 = vadd.f32 %v470, %v2261
        %v2263 = vpop.f32.mrf.mxu0
        %2264 = vmatprep.mubr.bf16.mxu0 0
        %2265 = vmatmul.mubr.bf16.gmra.mxu0 %v1102
        %v2266 = vpop.f32.mrf.mxu0
        %v2267 = vadd.f32 %v470, %v2266
        %v2268 = vpop.f32.mrf.mxu0
        %v2269 = vpop.f32.mrf.mxu0
        %v2270 = vadd.f32 %v470, %v2269
        %v2271 = vpop.f32.mrf.mxu0
        %2272 = vmatprep.mubr.bf16.mxu0 0
        %2273 = vmatmul.mubr.bf16.gmra.mxu0 %v1103
        %v2274 = vpop.f32.mrf.mxu0
        %v2275 = vadd.f32 %v470, %v2274
        %v2276 = vpop.f32.mrf.mxu0
        %v2277 = vpop.f32.mrf.mxu0
        %v2278 = vadd.f32 %v470, %v2277
        %v2279 = vpop.f32.mrf.mxu0
        %2280 = vmatprep.mubr.bf16.mxu0 0
        %2281 = vmatmul.mubr.bf16.gmra.mxu0 %v1104
        %v2282 = vpop.f32.mrf.mxu0
        %v2283 = vadd.f32 %v470, %v2282
        %v2284 = vpop.f32.mrf.mxu0
        %v2285 = vpop.f32.mrf.mxu0
        %v2286 = vadd.f32 %v470, %v2285
        %v2287 = vpop.f32.mrf.mxu0
        %2288 = vmatprep.mubr.bf16.mxu0 0
        %2289 = vmatmul.mubr.bf16.gmra.mxu0 %v1105
        %v2290 = vpop.f32.mrf.mxu0
        %v2291 = vadd.f32 %v470, %v2290
        %v2292 = vpop.f32.mrf.mxu0
        %v2293 = vpop.f32.mrf.mxu0
        %v2294 = vadd.f32 %v470, %v2293
        %v2295 = vpop.f32.mrf.mxu0
        %2296 = vmatprep.mubr.bf16.mxu0 0
        %2297 = vmatmul.mubr.bf16.gmra.mxu0 %v1106
        %v2298 = vpop.f32.mrf.mxu0
        %v2299 = vadd.f32 %v470, %v2298
        %v2300 = vpop.f32.mrf.mxu0
        %v2301 = vpop.f32.mrf.mxu0
        %v2302 = vadd.f32 %v470, %v2301
        %v2303 = vpop.f32.mrf.mxu0
        %2304 = vmatprep.mubr.bf16.mxu0 0
        %2305 = vmatmul.mubr.bf16.gmra.mxu0 %v1107
        %v2306 = vpop.f32.mrf.mxu0
        %v2307 = vadd.f32 %v470, %v2306
        %v2308 = vpop.f32.mrf.mxu0
        %v2309 = vpop.f32.mrf.mxu0
        %v2310 = vadd.f32 %v470, %v2309
        %v2311 = vpop.f32.mrf.mxu0
        %2312 = vmatprep.mubr.bf16.mxu0 0
        %2313 = vmatmul.mubr.bf16.gmra.mxu0 %v1108
        %v2314 = vpop.f32.mrf.mxu0
        %v2315 = vadd.f32 %v470, %v2314
        %v2316 = vpop.f32.mrf.mxu0
        %v2317 = vpop.f32.mrf.mxu0
        %v2318 = vadd.f32 %v470, %v2317
        %v2319 = vpop.f32.mrf.mxu0
        %2320 = vmatprep.mubr.bf16.mxu0 0
        %2321 = vmatmul.mubr.bf16.gmra.mxu0 %v1109
        %v2322 = vpop.f32.mrf.mxu0
        %v2323 = vadd.f32 %v470, %v2322
        %v2324 = vpop.f32.mrf.mxu0
        %v2325 = vpop.f32.mrf.mxu0
        %v2326 = vadd.f32 %v470, %v2325
        %v2327 = vpop.f32.mrf.mxu0
        %2328 = vmatprep.mubr.bf16.mxu0 0
        %2329 = vmatmul.mubr.bf16.gmra.mxu0 %v1110
        %v2330 = vpop.f32.mrf.mxu0
        %v2331 = vadd.f32 %v470, %v2330
        %v2332 = vpop.f32.mrf.mxu0
        %v2333 = vpop.f32.mrf.mxu0
        %v2334 = vadd.f32 %v470, %v2333
        %v2335 = vpop.f32.mrf.mxu0
        %2336 = vmatprep.mubr.bf16.mxu0 0
        %2337 = vmatmul.mubr.bf16.gmra.mxu0 %v1111
        %v2338 = vpop.f32.mrf.mxu0
        %v2339 = vadd.f32 %v470, %v2338
        %v2340 = vpop.f32.mrf.mxu0
        %v2341 = vpop.f32.mrf.mxu0
        %v2342 = vadd.f32 %v470, %v2341
        %v2343 = vpop.f32.mrf.mxu0
        %2344 = vdwg.mxu0
        %v2345 = vmax.f32 %v1323, 0.0
        %v2346 = vmax.f32 %v1326, 0.0
        %v2347 = vmax.f32 %v1331, 0.0
        %v2348 = vmax.f32 %v1334, 0.0
        %v2349 = vmax.f32 %v1339, 0.0
        %v2350 = vmax.f32 %v1342, 0.0
        %v2351 = vmax.f32 %v1347, 0.0
        %v2352 = vmax.f32 %v1350, 0.0
        %v2353 = vmax.f32 %v1355, 0.0
        %v2354 = vmax.f32 %v1358, 0.0
        %v2355 = vmax.f32 %v1363, 0.0
        %v2356 = vmax.f32 %v1366, 0.0
        %v2357 = vmax.f32 %v1371, 0.0
        %v2358 = vmax.f32 %v1374, 0.0
        %v2359 = vmax.f32 %v1379, 0.0
        %v2360 = vmax.f32 %v1382, 0.0
        %v2361 = vmax.f32 %v1387, 0.0
        %v2362 = vmax.f32 %v1390, 0.0
        %v2363 = vmax.f32 %v1395, 0.0
        %v2364 = vmax.f32 %v1398, 0.0
        %v2365 = vmax.f32 %v1403, 0.0
        %v2366 = vmax.f32 %v1406, 0.0
        %v2367 = vmax.f32 %v1411, 0.0
        %v2368 = vmax.f32 %v1414, 0.0
        %v2369 = vmax.f32 %v1419, 0.0
        %v2370 = vmax.f32 %v1422, 0.0
        %v2371 = vmax.f32 %v1427, 0.0
        %v2372 = vmax.f32 %v1430, 0.0
        %v2373 = vmax.f32 %v1435, 0.0
        %v2374 = vmax.f32 %v1438, 0.0
        %v2375 = vmax.f32 %v1443, 0.0
        %v2376 = vmax.f32 %v1446, 0.0
        %v2377 = vmax.f32 %v1451, 0.0
        %v2378 = vmax.f32 %v1454, 0.0
        %v2379 = vmax.f32 %v1459, 0.0
        %v2380 = vmax.f32 %v1462, 0.0
        %v2381 = vmax.f32 %v1467, 0.0
        %v2382 = vmax.f32 %v1470, 0.0
        %v2383 = vmax.f32 %v1475, 0.0
        %v2384 = vmax.f32 %v1478, 0.0
        %v2385 = vmax.f32 %v1483, 0.0
        %v2386 = vmax.f32 %v1486, 0.0
        %v2387 = vmax.f32 %v1491, 0.0
        %v2388 = vmax.f32 %v1494, 0.0
        %v2389 = vmax.f32 %v1499, 0.0
        %v2390 = vmax.f32 %v1502, 0.0
        %v2391 = vmax.f32 %v1507, 0.0
        %v2392 = vmax.f32 %v1510, 0.0
        %v2393 = vmax.f32 %v1515, 0.0
        %v2394 = vmax.f32 %v1518, 0.0
        %v2395 = vmax.f32 %v1523, 0.0
        %v2396 = vmax.f32 %v1526, 0.0
        %v2397 = vmax.f32 %v1531, 0.0
        %v2398 = vmax.f32 %v1534, 0.0
        %v2399 = vmax.f32 %v1539, 0.0
        %v2400 = vmax.f32 %v1542, 0.0
        %v2401 = vmax.f32 %v1547, 0.0
        %v2402 = vmax.f32 %v1550, 0.0
        %v2403 = vmax.f32 %v1555, 0.0
        %v2404 = vmax.f32 %v1558, 0.0
        %v2405 = vmax.f32 %v1563, 0.0
        %v2406 = vmax.f32 %v1566, 0.0
        %v2407 = vmax.f32 %v1571, 0.0
        %v2408 = vmax.f32 %v1574, 0.0
        %v2409 = vmax.f32 %v1579, 0.0
        %v2410 = vmax.f32 %v1582, 0.0
        %v2411 = vmax.f32 %v1587, 0.0
        %v2412 = vmax.f32 %v1590, 0.0
        %v2413 = vmax.f32 %v1595, 0.0
        %v2414 = vmax.f32 %v1598, 0.0
        %v2415 = vmax.f32 %v1603, 0.0
        %v2416 = vmax.f32 %v1606, 0.0
        %v2417 = vmax.f32 %v1611, 0.0
        %v2418 = vmax.f32 %v1614, 0.0
        %v2419 = vmax.f32 %v1619, 0.0
        %v2420 = vmax.f32 %v1622, 0.0
        %v2421 = vmax.f32 %v1627, 0.0
        %v2422 = vmax.f32 %v1630, 0.0
        %v2423 = vmax.f32 %v1635, 0.0
        %v2424 = vmax.f32 %v1638, 0.0
        %v2425 = vmax.f32 %v1643, 0.0
        %v2426 = vmax.f32 %v1646, 0.0
        %v2427 = vmax.f32 %v1651, 0.0
        %v2428 = vmax.f32 %v1654, 0.0
        %v2429 = vmax.f32 %v1659, 0.0
        %v2430 = vmax.f32 %v1662, 0.0
        %v2431 = vmax.f32 %v1667, 0.0
        %v2432 = vmax.f32 %v1670, 0.0
        %v2433 = vmax.f32 %v1675, 0.0
        %v2434 = vmax.f32 %v1678, 0.0
        %v2435 = vmax.f32 %v1683, 0.0
        %v2436 = vmax.f32 %v1686, 0.0
        %v2437 = vmax.f32 %v1691, 0.0
        %v2438 = vmax.f32 %v1694, 0.0
        %v2439 = vmax.f32 %v1699, 0.0
        %v2440 = vmax.f32 %v1702, 0.0
        %v2441 = vmax.f32 %v1707, 0.0
        %v2442 = vmax.f32 %v1710, 0.0
        %v2443 = vmax.f32 %v1715, 0.0
        %v2444 = vmax.f32 %v1718, 0.0
        %v2445 = vmax.f32 %v1723, 0.0
        %v2446 = vmax.f32 %v1726, 0.0
        %v2447 = vmax.f32 %v1731, 0.0
        %v2448 = vmax.f32 %v1734, 0.0
        %v2449 = vmax.f32 %v1739, 0.0
        %v2450 = vmax.f32 %v1742, 0.0
        %v2451 = vmax.f32 %v1747, 0.0
        %v2452 = vmax.f32 %v1750, 0.0
        %v2453 = vmax.f32 %v1755, 0.0
        %v2454 = vmax.f32 %v1758, 0.0
        %v2455 = vmax.f32 %v1763, 0.0
        %v2456 = vmax.f32 %v1766, 0.0
        %v2457 = vmax.f32 %v1771, 0.0
        %v2458 = vmax.f32 %v1774, 0.0
        %v2459 = vmax.f32 %v1779, 0.0
        %v2460 = vmax.f32 %v1782, 0.0
        %v2461 = vmax.f32 %v1787, 0.0
        %v2462 = vmax.f32 %v1790, 0.0
        %v2463 = vmax.f32 %v1795, 0.0
        %v2464 = vmax.f32 %v1798, 0.0
        %v2465 = vmax.f32 %v1803, 0.0
        %v2466 = vmax.f32 %v1806, 0.0
        %v2467 = vmax.f32 %v1811, 0.0
        %v2468 = vmax.f32 %v1814, 0.0
        %v2469 = vmax.f32 %v1819, 0.0
        %v2470 = vmax.f32 %v1822, 0.0
        %v2471 = vmax.f32 %v1827, 0.0
        %v2472 = vmax.f32 %v1830, 0.0
        %v2473 = vmax.f32 %v1835, 0.0
        %v2474 = vmax.f32 %v1838, 0.0
        %v2475 = vmax.f32 %v1843, 0.0
        %v2476 = vmax.f32 %v1846, 0.0
        %v2477 = vmax.f32 %v1851, 0.0
        %v2478 = vmax.f32 %v1854, 0.0
        %v2479 = vmax.f32 %v1859, 0.0
        %v2480 = vmax.f32 %v1862, 0.0
        %v2481 = vmax.f32 %v1867, 0.0
        %v2482 = vmax.f32 %v1870, 0.0
        %v2483 = vmax.f32 %v1875, 0.0
        %v2484 = vmax.f32 %v1878, 0.0
        %v2485 = vmax.f32 %v1883, 0.0
        %v2486 = vmax.f32 %v1886, 0.0
        %v2487 = vmax.f32 %v1891, 0.0
        %v2488 = vmax.f32 %v1894, 0.0
        %v2489 = vmax.f32 %v1899, 0.0
        %v2490 = vmax.f32 %v1902, 0.0
        %v2491 = vmax.f32 %v1907, 0.0
        %v2492 = vmax.f32 %v1910, 0.0
        %v2493 = vmax.f32 %v1915, 0.0
        %v2494 = vmax.f32 %v1918, 0.0
        %v2495 = vmax.f32 %v1923, 0.0
        %v2496 = vmax.f32 %v1926, 0.0
        %v2497 = vmax.f32 %v1931, 0.0
        %v2498 = vmax.f32 %v1934, 0.0
        %v2499 = vmax.f32 %v1939, 0.0
        %v2500 = vmax.f32 %v1942, 0.0
        %v2501 = vmax.f32 %v1947, 0.0
        %v2502 = vmax.f32 %v1950, 0.0
        %v2503 = vmax.f32 %v1955, 0.0
        %v2504 = vmax.f32 %v1958, 0.0
        %v2505 = vmax.f32 %v1963, 0.0
        %v2506 = vmax.f32 %v1966, 0.0
        %v2507 = vmax.f32 %v1971, 0.0
        %v2508 = vmax.f32 %v1974, 0.0
        %v2509 = vmax.f32 %v1979, 0.0
        %v2510 = vmax.f32 %v1982, 0.0
        %v2511 = vmax.f32 %v1987, 0.0
        %v2512 = vmax.f32 %v1990, 0.0
        %v2513 = vmax.f32 %v1995, 0.0
        %v2514 = vmax.f32 %v1998, 0.0
        %v2515 = vmax.f32 %v2003, 0.0
        %v2516 = vmax.f32 %v2006, 0.0
        %v2517 = vmax.f32 %v2011, 0.0
        %v2518 = vmax.f32 %v2014, 0.0
        %v2519 = vmax.f32 %v2019, 0.0
        %v2520 = vmax.f32 %v2022, 0.0
        %v2521 = vmax.f32 %v2027, 0.0
        %v2522 = vmax.f32 %v2030, 0.0
        %v2523 = vmax.f32 %v2035, 0.0
        %v2524 = vmax.f32 %v2038, 0.0
        %v2525 = vmax.f32 %v2043, 0.0
        %v2526 = vmax.f32 %v2046, 0.0
        %v2527 = vmax.f32 %v2051, 0.0
        %v2528 = vmax.f32 %v2054, 0.0
        %v2529 = vmax.f32 %v2059, 0.0
        %v2530 = vmax.f32 %v2062, 0.0
        %v2531 = vmax.f32 %v2067, 0.0
        %v2532 = vmax.f32 %v2070, 0.0
        %v2533 = vmax.f32 %v2075, 0.0
        %v2534 = vmax.f32 %v2078, 0.0
        %v2535 = vmax.f32 %v2083, 0.0
        %v2536 = vmax.f32 %v2086, 0.0
        %v2537 = vmax.f32 %v2091, 0.0
        %v2538 = vmax.f32 %v2094, 0.0
        %v2539 = vmax.f32 %v2099, 0.0
        %v2540 = vmax.f32 %v2102, 0.0
        %v2541 = vmax.f32 %v2107, 0.0
        %v2542 = vmax.f32 %v2110, 0.0
        %v2543 = vmax.f32 %v2115, 0.0
        %v2544 = vmax.f32 %v2118, 0.0
        %v2545 = vmax.f32 %v2123, 0.0
        %v2546 = vmax.f32 %v2126, 0.0
        %v2547 = vmax.f32 %v2131, 0.0
        %v2548 = vmax.f32 %v2134, 0.0
        %v2549 = vmax.f32 %v2139, 0.0
        %v2550 = vmax.f32 %v2142, 0.0
        %v2551 = vmax.f32 %v2147, 0.0
        %v2552 = vmax.f32 %v2150, 0.0
        %v2553 = vmax.f32 %v2155, 0.0
        %v2554 = vmax.f32 %v2158, 0.0
        %v2555 = vmax.f32 %v2163, 0.0
        %v2556 = vmax.f32 %v2166, 0.0
        %v2557 = vmax.f32 %v2171, 0.0
        %v2558 = vmax.f32 %v2174, 0.0
        %v2559 = vmax.f32 %v2179, 0.0
        %v2560 = vmax.f32 %v2182, 0.0
        %v2561 = vmax.f32 %v2187, 0.0
        %v2562 = vmax.f32 %v2190, 0.0
        %v2563 = vmax.f32 %v2195, 0.0
        %v2564 = vmax.f32 %v2198, 0.0
        %v2565 = vmax.f32 %v2203, 0.0
        %v2566 = vmax.f32 %v2206, 0.0
        %v2567 = vmax.f32 %v2211, 0.0
        %v2568 = vmax.f32 %v2214, 0.0
        %v2569 = vmax.f32 %v2219, 0.0
        %v2570 = vmax.f32 %v2222, 0.0
        %v2571 = vmax.f32 %v2227, 0.0
        %v2572 = vmax.f32 %v2230, 0.0
        %v2573 = vmax.f32 %v2235, 0.0
        %v2574 = vmax.f32 %v2238, 0.0
        %v2575 = vmax.f32 %v2243, 0.0
        %v2576 = vmax.f32 %v2246, 0.0
        %v2577 = vmax.f32 %v2251, 0.0
        %v2578 = vmax.f32 %v2254, 0.0
        %v2579 = vmax.f32 %v2259, 0.0
        %v2580 = vmax.f32 %v2262, 0.0
        %v2581 = vmax.f32 %v2267, 0.0
        %v2582 = vmax.f32 %v2270, 0.0
        %v2583 = vmax.f32 %v2275, 0.0
        %v2584 = vmax.f32 %v2278, 0.0
        %v2585 = vmax.f32 %v2283, 0.0
        %v2586 = vmax.f32 %v2286, 0.0
        %v2587 = vmax.f32 %v2291, 0.0
        %v2588 = vmax.f32 %v2294, 0.0
        %v2589 = vmax.f32 %v2299, 0.0
        %v2590 = vmax.f32 %v2302, 0.0
        %v2591 = vmax.f32 %v2307, 0.0
        %v2592 = vmax.f32 %v2310, 0.0
        %v2593 = vmax.f32 %v2315, 0.0
        %v2594 = vmax.f32 %v2318, 0.0
        %v2595 = vmax.f32 %v2323, 0.0
        %v2596 = vmax.f32 %v2326, 0.0
        %v2597 = vmax.f32 %v2331, 0.0
        %v2598 = vmax.f32 %v2334, 0.0
        %v2599 = vmax.f32 %v2339, 0.0
        %v2600 = vmax.f32 %v2342, 0.0
        %v2601 = vpack.c.bf16 %v2346, %v2345
        %v2602 = vpack.c.bf16 %v2348, %v2347
        %v2603 = vpack.c.bf16 %v2350, %v2349
        %v2604 = vpack.c.bf16 %v2352, %v2351
        %v2605 = vpack.c.bf16 %v2354, %v2353
        %v2606 = vpack.c.bf16 %v2356, %v2355
        %v2607 = vpack.c.bf16 %v2358, %v2357
        %v2608 = vpack.c.bf16 %v2360, %v2359
        %v2609 = vpack.c.bf16 %v2362, %v2361
        %v2610 = vpack.c.bf16 %v2364, %v2363
        %v2611 = vpack.c.bf16 %v2366, %v2365
        %v2612 = vpack.c.bf16 %v2368, %v2367
        %v2613 = vpack.c.bf16 %v2370, %v2369
        %v2614 = vpack.c.bf16 %v2372, %v2371
        %v2615 = vpack.c.bf16 %v2374, %v2373
        %v2616 = vpack.c.bf16 %v2376, %v2375
        %v2617 = vpack.c.bf16 %v2378, %v2377
        %v2618 = vpack.c.bf16 %v2380, %v2379
        %v2619 = vpack.c.bf16 %v2382, %v2381
        %v2620 = vpack.c.bf16 %v2384, %v2383
        %v2621 = vpack.c.bf16 %v2386, %v2385
        %v2622 = vpack.c.bf16 %v2388, %v2387
        %v2623 = vpack.c.bf16 %v2390, %v2389
        %v2624 = vpack.c.bf16 %v2392, %v2391
        %v2625 = vpack.c.bf16 %v2394, %v2393
        %v2626 = vpack.c.bf16 %v2396, %v2395
        %v2627 = vpack.c.bf16 %v2398, %v2397
        %v2628 = vpack.c.bf16 %v2400, %v2399
        %v2629 = vpack.c.bf16 %v2402, %v2401
        %v2630 = vpack.c.bf16 %v2404, %v2403
        %v2631 = vpack.c.bf16 %v2406, %v2405
        %v2632 = vpack.c.bf16 %v2408, %v2407
        %v2633 = vpack.c.bf16 %v2410, %v2409
        %v2634 = vpack.c.bf16 %v2412, %v2411
        %v2635 = vpack.c.bf16 %v2414, %v2413
        %v2636 = vpack.c.bf16 %v2416, %v2415
        %v2637 = vpack.c.bf16 %v2418, %v2417
        %v2638 = vpack.c.bf16 %v2420, %v2419
        %v2639 = vpack.c.bf16 %v2422, %v2421
        %v2640 = vpack.c.bf16 %v2424, %v2423
        %v2641 = vpack.c.bf16 %v2426, %v2425
        %v2642 = vpack.c.bf16 %v2428, %v2427
        %v2643 = vpack.c.bf16 %v2430, %v2429
        %v2644 = vpack.c.bf16 %v2432, %v2431
        %v2645 = vpack.c.bf16 %v2434, %v2433
        %v2646 = vpack.c.bf16 %v2436, %v2435
        %v2647 = vpack.c.bf16 %v2438, %v2437
        %v2648 = vpack.c.bf16 %v2440, %v2439
        %v2649 = vpack.c.bf16 %v2442, %v2441
        %v2650 = vpack.c.bf16 %v2444, %v2443
        %v2651 = vpack.c.bf16 %v2446, %v2445
        %v2652 = vpack.c.bf16 %v2448, %v2447
        %v2653 = vpack.c.bf16 %v2450, %v2449
        %v2654 = vpack.c.bf16 %v2452, %v2451
        %v2655 = vpack.c.bf16 %v2454, %v2453
        %v2656 = vpack.c.bf16 %v2456, %v2455
        %v2657 = vpack.c.bf16 %v2458, %v2457
        %v2658 = vpack.c.bf16 %v2460, %v2459
        %v2659 = vpack.c.bf16 %v2462, %v2461
        %v2660 = vpack.c.bf16 %v2464, %v2463
        %v2661 = vpack.c.bf16 %v2466, %v2465
        %v2662 = vpack.c.bf16 %v2468, %v2467
        %v2663 = vpack.c.bf16 %v2470, %v2469
        %v2664 = vpack.c.bf16 %v2472, %v2471
        %v2665 = vpack.c.bf16 %v2474, %v2473
        %v2666 = vpack.c.bf16 %v2476, %v2475
        %v2667 = vpack.c.bf16 %v2478, %v2477
        %v2668 = vpack.c.bf16 %v2480, %v2479
        %v2669 = vpack.c.bf16 %v2482, %v2481
        %v2670 = vpack.c.bf16 %v2484, %v2483
        %v2671 = vpack.c.bf16 %v2486, %v2485
        %v2672 = vpack.c.bf16 %v2488, %v2487
        %v2673 = vpack.c.bf16 %v2490, %v2489
        %v2674 = vpack.c.bf16 %v2492, %v2491
        %v2675 = vpack.c.bf16 %v2494, %v2493
        %v2676 = vpack.c.bf16 %v2496, %v2495
        %v2677 = vpack.c.bf16 %v2498, %v2497
        %v2678 = vpack.c.bf16 %v2500, %v2499
        %v2679 = vpack.c.bf16 %v2502, %v2501
        %v2680 = vpack.c.bf16 %v2504, %v2503
        %v2681 = vpack.c.bf16 %v2506, %v2505
        %v2682 = vpack.c.bf16 %v2508, %v2507
        %v2683 = vpack.c.bf16 %v2510, %v2509
        %v2684 = vpack.c.bf16 %v2512, %v2511
        %v2685 = vpack.c.bf16 %v2514, %v2513
        %v2686 = vpack.c.bf16 %v2516, %v2515
        %v2687 = vpack.c.bf16 %v2518, %v2517
        %v2688 = vpack.c.bf16 %v2520, %v2519
        %v2689 = vpack.c.bf16 %v2522, %v2521
        %v2690 = vpack.c.bf16 %v2524, %v2523
        %v2691 = vpack.c.bf16 %v2526, %v2525
        %v2692 = vpack.c.bf16 %v2528, %v2527
        %v2693 = vpack.c.bf16 %v2530, %v2529
        %v2694 = vpack.c.bf16 %v2532, %v2531
        %v2695 = vpack.c.bf16 %v2534, %v2533
        %v2696 = vpack.c.bf16 %v2536, %v2535
        %v2697 = vpack.c.bf16 %v2538, %v2537
        %v2698 = vpack.c.bf16 %v2540, %v2539
        %v2699 = vpack.c.bf16 %v2542, %v2541
        %v2700 = vpack.c.bf16 %v2544, %v2543
        %v2701 = vpack.c.bf16 %v2546, %v2545
        %v2702 = vpack.c.bf16 %v2548, %v2547
        %v2703 = vpack.c.bf16 %v2550, %v2549
        %v2704 = vpack.c.bf16 %v2552, %v2551
        %v2705 = vpack.c.bf16 %v2554, %v2553
        %v2706 = vpack.c.bf16 %v2556, %v2555
        %v2707 = vpack.c.bf16 %v2558, %v2557
        %v2708 = vpack.c.bf16 %v2560, %v2559
        %v2709 = vpack.c.bf16 %v2562, %v2561
        %v2710 = vpack.c.bf16 %v2564, %v2563
        %v2711 = vpack.c.bf16 %v2566, %v2565
        %v2712 = vpack.c.bf16 %v2568, %v2567
        %v2713 = vpack.c.bf16 %v2570, %v2569
        %v2714 = vpack.c.bf16 %v2572, %v2571
        %v2715 = vpack.c.bf16 %v2574, %v2573
        %v2716 = vpack.c.bf16 %v2576, %v2575
        %v2717 = vpack.c.bf16 %v2578, %v2577
        %v2718 = vpack.c.bf16 %v2580, %v2579
        %v2719 = vpack.c.bf16 %v2582, %v2581
        %v2720 = vpack.c.bf16 %v2584, %v2583
        %v2721 = vpack.c.bf16 %v2586, %v2585
        %v2722 = vpack.c.bf16 %v2588, %v2587
        %v2723 = vpack.c.bf16 %v2590, %v2589
        %v2724 = vpack.c.bf16 %v2592, %v2591
        %v2725 = vpack.c.bf16 %v2594, %v2593
        %v2726 = vpack.c.bf16 %v2596, %v2595
        %v2727 = vpack.c.bf16 %v2598, %v2597
        %v2728 = vpack.c.bf16 %v2600, %v2599
        %v2857 = vunpack.c.l.b16 %v2601
        %v2858 = vunpack.c.h.b16 %v2601
        %v2859 = vunpack.c.l.b16 %v2602
        %v2860 = vunpack.c.h.b16 %v2602
        %v2861 = vunpack.c.l.b16 %v2603
        %v2862 = vunpack.c.h.b16 %v2603
        %v2863 = vunpack.c.l.b16 %v2604
        %v2864 = vunpack.c.h.b16 %v2604
        %v2865 = vunpack.c.l.b16 %v2605
        %v2866 = vunpack.c.h.b16 %v2605
        %v2867 = vunpack.c.l.b16 %v2606
        %v2868 = vunpack.c.h.b16 %v2606
        %v2869 = vunpack.c.l.b16 %v2607
        %v2870 = vunpack.c.h.b16 %v2607
        %v2871 = vunpack.c.l.b16 %v2608
        %v2872 = vunpack.c.h.b16 %v2608
        %v2873 = vunpack.c.l.b16 %v2609
        %v2874 = vunpack.c.h.b16 %v2609
        %v2875 = vunpack.c.l.b16 %v2610
        %v2876 = vunpack.c.h.b16 %v2610
        %v2877 = vunpack.c.l.b16 %v2611
        %v2878 = vunpack.c.h.b16 %v2611
        %v2879 = vunpack.c.l.b16 %v2612
        %v2880 = vunpack.c.h.b16 %v2612
        %v2881 = vunpack.c.l.b16 %v2613
        %v2882 = vunpack.c.h.b16 %v2613
        %v2883 = vunpack.c.l.b16 %v2614
        %v2884 = vunpack.c.h.b16 %v2614
        %v2885 = vunpack.c.l.b16 %v2615
        %v2886 = vunpack.c.h.b16 %v2615
        %v2887 = vunpack.c.l.b16 %v2616
        %v2888 = vunpack.c.h.b16 %v2616
        %v2889 = vunpack.c.l.b16 %v2617
        %v2890 = vunpack.c.h.b16 %v2617
        %v2891 = vunpack.c.l.b16 %v2618
        %v2892 = vunpack.c.h.b16 %v2618
        %v2893 = vunpack.c.l.b16 %v2619
        %v2894 = vunpack.c.h.b16 %v2619
        %v2895 = vunpack.c.l.b16 %v2620
        %v2896 = vunpack.c.h.b16 %v2620
        %v2897 = vunpack.c.l.b16 %v2621
        %v2898 = vunpack.c.h.b16 %v2621
        %v2899 = vunpack.c.l.b16 %v2622
        %v2900 = vunpack.c.h.b16 %v2622
        %v2901 = vunpack.c.l.b16 %v2623
        %v2902 = vunpack.c.h.b16 %v2623
        %v2903 = vunpack.c.l.b16 %v2624
        %v2904 = vunpack.c.h.b16 %v2624
        %v2905 = vunpack.c.l.b16 %v2625
        %v2906 = vunpack.c.h.b16 %v2625
        %v2907 = vunpack.c.l.b16 %v2626
        %v2908 = vunpack.c.h.b16 %v2626
        %v2909 = vunpack.c.l.b16 %v2627
        %v2910 = vunpack.c.h.b16 %v2627
        %v2911 = vunpack.c.l.b16 %v2628
        %v2912 = vunpack.c.h.b16 %v2628
        %v2913 = vunpack.c.l.b16 %v2629
        %v2914 = vunpack.c.h.b16 %v2629
        %v2915 = vunpack.c.l.b16 %v2630
        %v2916 = vunpack.c.h.b16 %v2630
        %v2917 = vunpack.c.l.b16 %v2631
        %v2918 = vunpack.c.h.b16 %v2631
        %v2919 = vunpack.c.l.b16 %v2632
        %v2920 = vunpack.c.h.b16 %v2632
        %v2921 = vunpack.c.l.b16 %v2633
        %v2922 = vunpack.c.h.b16 %v2633
        %v2923 = vunpack.c.l.b16 %v2634
        %v2924 = vunpack.c.h.b16 %v2634
        %v2925 = vunpack.c.l.b16 %v2635
        %v2926 = vunpack.c.h.b16 %v2635
        %v2927 = vunpack.c.l.b16 %v2636
        %v2928 = vunpack.c.h.b16 %v2636
        %v2929 = vunpack.c.l.b16 %v2637
        %v2930 = vunpack.c.h.b16 %v2637
        %v2931 = vunpack.c.l.b16 %v2638
        %v2932 = vunpack.c.h.b16 %v2638
        %v2933 = vunpack.c.l.b16 %v2639
        %v2934 = vunpack.c.h.b16 %v2639
        %v2935 = vunpack.c.l.b16 %v2640
        %v2936 = vunpack.c.h.b16 %v2640
        %v2937 = vunpack.c.l.b16 %v2641
        %v2938 = vunpack.c.h.b16 %v2641
        %v2939 = vunpack.c.l.b16 %v2642
        %v2940 = vunpack.c.h.b16 %v2642
        %v2941 = vunpack.c.l.b16 %v2643
        %v2942 = vunpack.c.h.b16 %v2643
        %v2943 = vunpack.c.l.b16 %v2644
        %v2944 = vunpack.c.h.b16 %v2644
        %v2945 = vunpack.c.l.b16 %v2645
        %v2946 = vunpack.c.h.b16 %v2645
        %v2947 = vunpack.c.l.b16 %v2646
        %v2948 = vunpack.c.h.b16 %v2646
        %v2949 = vunpack.c.l.b16 %v2647
        %v2950 = vunpack.c.h.b16 %v2647
        %v2951 = vunpack.c.l.b16 %v2648
        %v2952 = vunpack.c.h.b16 %v2648
        %v2953 = vunpack.c.l.b16 %v2649
        %v2954 = vunpack.c.h.b16 %v2649
        %v2955 = vunpack.c.l.b16 %v2650
        %v2956 = vunpack.c.h.b16 %v2650
        %v2957 = vunpack.c.l.b16 %v2651
        %v2958 = vunpack.c.h.b16 %v2651
        %v2959 = vunpack.c.l.b16 %v2652
        %v2960 = vunpack.c.h.b16 %v2652
        %v2961 = vunpack.c.l.b16 %v2653
        %v2962 = vunpack.c.h.b16 %v2653
        %v2963 = vunpack.c.l.b16 %v2654
        %v2964 = vunpack.c.h.b16 %v2654
        %v2965 = vunpack.c.l.b16 %v2655
        %v2966 = vunpack.c.h.b16 %v2655
        %v2967 = vunpack.c.l.b16 %v2656
        %v2968 = vunpack.c.h.b16 %v2656
        %v2969 = vunpack.c.l.b16 %v2657
        %v2970 = vunpack.c.h.b16 %v2657
        %v2971 = vunpack.c.l.b16 %v2658
        %v2972 = vunpack.c.h.b16 %v2658
        %v2973 = vunpack.c.l.b16 %v2659
        %v2974 = vunpack.c.h.b16 %v2659
        %v2975 = vunpack.c.l.b16 %v2660
        %v2976 = vunpack.c.h.b16 %v2660
        %v2977 = vunpack.c.l.b16 %v2661
        %v2978 = vunpack.c.h.b16 %v2661
        %v2979 = vunpack.c.l.b16 %v2662
        %v2980 = vunpack.c.h.b16 %v2662
        %v2981 = vunpack.c.l.b16 %v2663
        %v2982 = vunpack.c.h.b16 %v2663
        %v2983 = vunpack.c.l.b16 %v2664
        %v2984 = vunpack.c.h.b16 %v2664
        %v2985 = vunpack.c.l.b16 %v2665
        %v2986 = vunpack.c.h.b16 %v2665
        %v2987 = vunpack.c.l.b16 %v2666
        %v2988 = vunpack.c.h.b16 %v2666
        %v2989 = vunpack.c.l.b16 %v2667
        %v2990 = vunpack.c.h.b16 %v2667
        %v2991 = vunpack.c.l.b16 %v2668
        %v2992 = vunpack.c.h.b16 %v2668
        %v2993 = vunpack.c.l.b16 %v2669
        %v2994 = vunpack.c.h.b16 %v2669
        %v2995 = vunpack.c.l.b16 %v2670
        %v2996 = vunpack.c.h.b16 %v2670
        %v2997 = vunpack.c.l.b16 %v2671
        %v2998 = vunpack.c.h.b16 %v2671
        %v2999 = vunpack.c.l.b16 %v2672
        %v3000 = vunpack.c.h.b16 %v2672
        %v3001 = vunpack.c.l.b16 %v2673
        %v3002 = vunpack.c.h.b16 %v2673
        %v3003 = vunpack.c.l.b16 %v2674
        %v3004 = vunpack.c.h.b16 %v2674
        %v3005 = vunpack.c.l.b16 %v2675
        %v3006 = vunpack.c.h.b16 %v2675
        %v3007 = vunpack.c.l.b16 %v2676
        %v3008 = vunpack.c.h.b16 %v2676
        %v3009 = vunpack.c.l.b16 %v2677
        %v3010 = vunpack.c.h.b16 %v2677
        %v3011 = vunpack.c.l.b16 %v2678
        %v3012 = vunpack.c.h.b16 %v2678
        %v3013 = vunpack.c.l.b16 %v2679
        %v3014 = vunpack.c.h.b16 %v2679
        %v3015 = vunpack.c.l.b16 %v2680
        %v3016 = vunpack.c.h.b16 %v2680
        %v3017 = vunpack.c.l.b16 %v2681
        %v3018 = vunpack.c.h.b16 %v2681
        %v3019 = vunpack.c.l.b16 %v2682
        %v3020 = vunpack.c.h.b16 %v2682
        %v3021 = vunpack.c.l.b16 %v2683
        %v3022 = vunpack.c.h.b16 %v2683
        %v3023 = vunpack.c.l.b16 %v2684
        %v3024 = vunpack.c.h.b16 %v2684
        %v3025 = vunpack.c.l.b16 %v2685
        %v3026 = vunpack.c.h.b16 %v2685
        %v3027 = vunpack.c.l.b16 %v2686
        %v3028 = vunpack.c.h.b16 %v2686
        %v3029 = vunpack.c.l.b16 %v2687
        %v3030 = vunpack.c.h.b16 %v2687
        %v3031 = vunpack.c.l.b16 %v2688
        %v3032 = vunpack.c.h.b16 %v2688
        %v3033 = vunpack.c.l.b16 %v2689
        %v3034 = vunpack.c.h.b16 %v2689
        %v3035 = vunpack.c.l.b16 %v2690
        %v3036 = vunpack.c.h.b16 %v2690
        %v3037 = vunpack.c.l.b16 %v2691
        %v3038 = vunpack.c.h.b16 %v2691
        %v3039 = vunpack.c.l.b16 %v2692
        %v3040 = vunpack.c.h.b16 %v2692
        %v3041 = vunpack.c.l.b16 %v2693
        %v3042 = vunpack.c.h.b16 %v2693
        %v3043 = vunpack.c.l.b16 %v2694
        %v3044 = vunpack.c.h.b16 %v2694
        %v3045 = vunpack.c.l.b16 %v2695
        %v3046 = vunpack.c.h.b16 %v2695
        %v3047 = vunpack.c.l.b16 %v2696
        %v3048 = vunpack.c.h.b16 %v2696
        %v3049 = vunpack.c.l.b16 %v2697
        %v3050 = vunpack.c.h.b16 %v2697
        %v3051 = vunpack.c.l.b16 %v2698
        %v3052 = vunpack.c.h.b16 %v2698
        %v3053 = vunpack.c.l.b16 %v2699
        %v3054 = vunpack.c.h.b16 %v2699
        %v3055 = vunpack.c.l.b16 %v2700
        %v3056 = vunpack.c.h.b16 %v2700
        %v3057 = vunpack.c.l.b16 %v2701
        %v3058 = vunpack.c.h.b16 %v2701
        %v3059 = vunpack.c.l.b16 %v2702
        %v3060 = vunpack.c.h.b16 %v2702
        %v3061 = vunpack.c.l.b16 %v2703
        %v3062 = vunpack.c.h.b16 %v2703
        %v3063 = vunpack.c.l.b16 %v2704
        %v3064 = vunpack.c.h.b16 %v2704
        %v3065 = vunpack.c.l.b16 %v2705
        %v3066 = vunpack.c.h.b16 %v2705
        %v3067 = vunpack.c.l.b16 %v2706
        %v3068 = vunpack.c.h.b16 %v2706
        %v3069 = vunpack.c.l.b16 %v2707
        %v3070 = vunpack.c.h.b16 %v2707
        %v3071 = vunpack.c.l.b16 %v2708
        %v3072 = vunpack.c.h.b16 %v2708
        %v3073 = vunpack.c.l.b16 %v2709
        %v3074 = vunpack.c.h.b16 %v2709
        %v3075 = vunpack.c.l.b16 %v2710
        %v3076 = vunpack.c.h.b16 %v2710
        %v3077 = vunpack.c.l.b16 %v2711
        %v3078 = vunpack.c.h.b16 %v2711
        %v3079 = vunpack.c.l.b16 %v2712
        %v3080 = vunpack.c.h.b16 %v2712
        %v3081 = vunpack.c.l.b16 %v2713
        %v3082 = vunpack.c.h.b16 %v2713
        %v3083 = vunpack.c.l.b16 %v2714
        %v3084 = vunpack.c.h.b16 %v2714
        %v3085 = vunpack.c.l.b16 %v2715
        %v3086 = vunpack.c.h.b16 %v2715
        %v3087 = vunpack.c.l.b16 %v2716
        %v3088 = vunpack.c.h.b16 %v2716
        %v3089 = vunpack.c.l.b16 %v2717
        %v3090 = vunpack.c.h.b16 %v2717
        %v3091 = vunpack.c.l.b16 %v2718
        %v3092 = vunpack.c.h.b16 %v2718
        %v3093 = vunpack.c.l.b16 %v2719
        %v3094 = vunpack.c.h.b16 %v2719
        %v3095 = vunpack.c.l.b16 %v2720
        %v3096 = vunpack.c.h.b16 %v2720
        %v3097 = vunpack.c.l.b16 %v2721
        %v3098 = vunpack.c.h.b16 %v2721
        %v3099 = vunpack.c.l.b16 %v2722
        %v3100 = vunpack.c.h.b16 %v2722
        %v3101 = vunpack.c.l.b16 %v2723
        %v3102 = vunpack.c.h.b16 %v2723
        %v3103 = vunpack.c.l.b16 %v2724
        %v3104 = vunpack.c.h.b16 %v2724
        %v3105 = vunpack.c.l.b16 %v2725
        %v3106 = vunpack.c.h.b16 %v2725
        %v3107 = vunpack.c.l.b16 %v2726
        %v3108 = vunpack.c.h.b16 %v2726
        %v3109 = vunpack.c.l.b16 %v2727
        %v3110 = vunpack.c.h.b16 %v2727
        %v3111 = vunpack.c.l.b16 %v2728
        %v3112 = vunpack.c.h.b16 %v2728
        %v3113 = vpack.c.b16 %v2857, %v2857
        %v3114 = vpack.c.b16 %v2858, %v2858
        %v3115 = vpack.c.b16 %v2859, %v2859
        %v3116 = vpack.c.b16 %v2860, %v2860
        %v3117 = vpack.c.b16 %v2861, %v2861
        %v3118 = vpack.c.b16 %v2862, %v2862
        %v3119 = vpack.c.b16 %v2863, %v2863
        %v3120 = vpack.c.b16 %v2864, %v2864
        %v3121 = vpack.c.b16 %v2865, %v2865
        %v3122 = vpack.c.b16 %v2866, %v2866
        %v3123 = vpack.c.b16 %v2867, %v2867
        %v3124 = vpack.c.b16 %v2868, %v2868
        %v3125 = vpack.c.b16 %v2869, %v2869
        %v3126 = vpack.c.b16 %v2870, %v2870
        %v3127 = vpack.c.b16 %v2871, %v2871
        %v3128 = vpack.c.b16 %v2872, %v2872
        %v3129 = vpack.c.b16 %v2873, %v2873
        %v3130 = vpack.c.b16 %v2874, %v2874
        %v3131 = vpack.c.b16 %v2875, %v2875
        %v3132 = vpack.c.b16 %v2876, %v2876
        %v3133 = vpack.c.b16 %v2877, %v2877
        %v3134 = vpack.c.b16 %v2878, %v2878
        %v3135 = vpack.c.b16 %v2879, %v2879
        %v3136 = vpack.c.b16 %v2880, %v2880
        %v3137 = vpack.c.b16 %v2881, %v2881
        %v3138 = vpack.c.b16 %v2882, %v2882
        %v3139 = vpack.c.b16 %v2883, %v2883
        %v3140 = vpack.c.b16 %v2884, %v2884
        %v3141 = vpack.c.b16 %v2885, %v2885
        %v3142 = vpack.c.b16 %v2886, %v2886
        %v3143 = vpack.c.b16 %v2887, %v2887
        %v3144 = vpack.c.b16 %v2888, %v2888
        %v3145 = vpack.c.b16 %v2889, %v2889
        %v3146 = vpack.c.b16 %v2890, %v2890
        %v3147 = vpack.c.b16 %v2891, %v2891
        %v3148 = vpack.c.b16 %v2892, %v2892
        %v3149 = vpack.c.b16 %v2893, %v2893
        %v3150 = vpack.c.b16 %v2894, %v2894
        %v3151 = vpack.c.b16 %v2895, %v2895
        %v3152 = vpack.c.b16 %v2896, %v2896
        %v3153 = vpack.c.b16 %v2897, %v2897
        %v3154 = vpack.c.b16 %v2898, %v2898
        %v3155 = vpack.c.b16 %v2899, %v2899
        %v3156 = vpack.c.b16 %v2900, %v2900
        %v3157 = vpack.c.b16 %v2901, %v2901
        %v3158 = vpack.c.b16 %v2902, %v2902
        %v3159 = vpack.c.b16 %v2903, %v2903
        %v3160 = vpack.c.b16 %v2904, %v2904
        %v3161 = vpack.c.b16 %v2905, %v2905
        %v3162 = vpack.c.b16 %v2906, %v2906
        %v3163 = vpack.c.b16 %v2907, %v2907
        %v3164 = vpack.c.b16 %v2908, %v2908
        %v3165 = vpack.c.b16 %v2909, %v2909
        %v3166 = vpack.c.b16 %v2910, %v2910
        %v3167 = vpack.c.b16 %v2911, %v2911
        %v3168 = vpack.c.b16 %v2912, %v2912
        %v3169 = vpack.c.b16 %v2913, %v2913
        %v3170 = vpack.c.b16 %v2914, %v2914
        %v3171 = vpack.c.b16 %v2915, %v2915
        %v3172 = vpack.c.b16 %v2916, %v2916
        %v3173 = vpack.c.b16 %v2917, %v2917
        %v3174 = vpack.c.b16 %v2918, %v2918
        %v3175 = vpack.c.b16 %v2919, %v2919
        %v3176 = vpack.c.b16 %v2920, %v2920
        %v3177 = vpack.c.b16 %v2921, %v2921
        %v3178 = vpack.c.b16 %v2922, %v2922
        %v3179 = vpack.c.b16 %v2923, %v2923
        %v3180 = vpack.c.b16 %v2924, %v2924
        %v3181 = vpack.c.b16 %v2925, %v2925
        %v3182 = vpack.c.b16 %v2926, %v2926
        %v3183 = vpack.c.b16 %v2927, %v2927
        %v3184 = vpack.c.b16 %v2928, %v2928
        %v3185 = vpack.c.b16 %v2929, %v2929
        %v3186 = vpack.c.b16 %v2930, %v2930
        %v3187 = vpack.c.b16 %v2931, %v2931
        %v3188 = vpack.c.b16 %v2932, %v2932
        %v3189 = vpack.c.b16 %v2933, %v2933
        %v3190 = vpack.c.b16 %v2934, %v2934
        %v3191 = vpack.c.b16 %v2935, %v2935
        %v3192 = vpack.c.b16 %v2936, %v2936
        %v3193 = vpack.c.b16 %v2937, %v2937
        %v3194 = vpack.c.b16 %v2938, %v2938
        %v3195 = vpack.c.b16 %v2939, %v2939
        %v3196 = vpack.c.b16 %v2940, %v2940
        %v3197 = vpack.c.b16 %v2941, %v2941
        %v3198 = vpack.c.b16 %v2942, %v2942
        %v3199 = vpack.c.b16 %v2943, %v2943
        %v3200 = vpack.c.b16 %v2944, %v2944
        %v3201 = vpack.c.b16 %v2945, %v2945
        %v3202 = vpack.c.b16 %v2946, %v2946
        %v3203 = vpack.c.b16 %v2947, %v2947
        %v3204 = vpack.c.b16 %v2948, %v2948
        %v3205 = vpack.c.b16 %v2949, %v2949
        %v3206 = vpack.c.b16 %v2950, %v2950
        %v3207 = vpack.c.b16 %v2951, %v2951
        %v3208 = vpack.c.b16 %v2952, %v2952
        %v3209 = vpack.c.b16 %v2953, %v2953
        %v3210 = vpack.c.b16 %v2954, %v2954
        %v3211 = vpack.c.b16 %v2955, %v2955
        %v3212 = vpack.c.b16 %v2956, %v2956
        %v3213 = vpack.c.b16 %v2957, %v2957
        %v3214 = vpack.c.b16 %v2958, %v2958
        %v3215 = vpack.c.b16 %v2959, %v2959
        %v3216 = vpack.c.b16 %v2960, %v2960
        %v3217 = vpack.c.b16 %v2961, %v2961
        %v3218 = vpack.c.b16 %v2962, %v2962
        %v3219 = vpack.c.b16 %v2963, %v2963
        %v3220 = vpack.c.b16 %v2964, %v2964
        %v3221 = vpack.c.b16 %v2965, %v2965
        %v3222 = vpack.c.b16 %v2966, %v2966
        %v3223 = vpack.c.b16 %v2967, %v2967
        %v3224 = vpack.c.b16 %v2968, %v2968
        %v3225 = vpack.c.b16 %v2969, %v2969
        %v3226 = vpack.c.b16 %v2970, %v2970
        %v3227 = vpack.c.b16 %v2971, %v2971
        %v3228 = vpack.c.b16 %v2972, %v2972
        %v3229 = vpack.c.b16 %v2973, %v2973
        %v3230 = vpack.c.b16 %v2974, %v2974
        %v3231 = vpack.c.b16 %v2975, %v2975
        %v3232 = vpack.c.b16 %v2976, %v2976
        %v3233 = vpack.c.b16 %v2977, %v2977
        %v3234 = vpack.c.b16 %v2978, %v2978
        %v3235 = vpack.c.b16 %v2979, %v2979
        %v3236 = vpack.c.b16 %v2980, %v2980
        %v3237 = vpack.c.b16 %v2981, %v2981
        %v3238 = vpack.c.b16 %v2982, %v2982
        %v3239 = vpack.c.b16 %v2983, %v2983
        %v3240 = vpack.c.b16 %v2984, %v2984
        %v3241 = vpack.c.b16 %v2985, %v2985
        %v3242 = vpack.c.b16 %v2986, %v2986
        %v3243 = vpack.c.b16 %v2987, %v2987
        %v3244 = vpack.c.b16 %v2988, %v2988
        %v3245 = vpack.c.b16 %v2989, %v2989
        %v3246 = vpack.c.b16 %v2990, %v2990
        %v3247 = vpack.c.b16 %v2991, %v2991
        %v3248 = vpack.c.b16 %v2992, %v2992
        %v3249 = vpack.c.b16 %v2993, %v2993
        %v3250 = vpack.c.b16 %v2994, %v2994
        %v3251 = vpack.c.b16 %v2995, %v2995
        %v3252 = vpack.c.b16 %v2996, %v2996
        %v3253 = vpack.c.b16 %v2997, %v2997
        %v3254 = vpack.c.b16 %v2998, %v2998
        %v3255 = vpack.c.b16 %v2999, %v2999
        %v3256 = vpack.c.b16 %v3000, %v3000
        %v3257 = vpack.c.b16 %v3001, %v3001
        %v3258 = vpack.c.b16 %v3002, %v3002
        %v3259 = vpack.c.b16 %v3003, %v3003
        %v3260 = vpack.c.b16 %v3004, %v3004
        %v3261 = vpack.c.b16 %v3005, %v3005
        %v3262 = vpack.c.b16 %v3006, %v3006
        %v3263 = vpack.c.b16 %v3007, %v3007
        %v3264 = vpack.c.b16 %v3008, %v3008
        %v3265 = vpack.c.b16 %v3009, %v3009
        %v3266 = vpack.c.b16 %v3010, %v3010
        %v3267 = vpack.c.b16 %v3011, %v3011
        %v3268 = vpack.c.b16 %v3012, %v3012
        %v3269 = vpack.c.b16 %v3013, %v3013
        %v3270 = vpack.c.b16 %v3014, %v3014
        %v3271 = vpack.c.b16 %v3015, %v3015
        %v3272 = vpack.c.b16 %v3016, %v3016
        %v3273 = vpack.c.b16 %v3017, %v3017
        %v3274 = vpack.c.b16 %v3018, %v3018
        %v3275 = vpack.c.b16 %v3019, %v3019
        %v3276 = vpack.c.b16 %v3020, %v3020
        %v3277 = vpack.c.b16 %v3021, %v3021
        %v3278 = vpack.c.b16 %v3022, %v3022
        %v3279 = vpack.c.b16 %v3023, %v3023
        %v3280 = vpack.c.b16 %v3024, %v3024
        %v3281 = vpack.c.b16 %v3025, %v3025
        %v3282 = vpack.c.b16 %v3026, %v3026
        %v3283 = vpack.c.b16 %v3027, %v3027
        %v3284 = vpack.c.b16 %v3028, %v3028
        %v3285 = vpack.c.b16 %v3029, %v3029
        %v3286 = vpack.c.b16 %v3030, %v3030
        %v3287 = vpack.c.b16 %v3031, %v3031
        %v3288 = vpack.c.b16 %v3032, %v3032
        %v3289 = vpack.c.b16 %v3033, %v3033
        %v3290 = vpack.c.b16 %v3034, %v3034
        %v3291 = vpack.c.b16 %v3035, %v3035
        %v3292 = vpack.c.b16 %v3036, %v3036
        %v3293 = vpack.c.b16 %v3037, %v3037
        %v3294 = vpack.c.b16 %v3038, %v3038
        %v3295 = vpack.c.b16 %v3039, %v3039
        %v3296 = vpack.c.b16 %v3040, %v3040
        %v3297 = vpack.c.b16 %v3041, %v3041
        %v3298 = vpack.c.b16 %v3042, %v3042
        %v3299 = vpack.c.b16 %v3043, %v3043
        %v3300 = vpack.c.b16 %v3044, %v3044
        %v3301 = vpack.c.b16 %v3045, %v3045
        %v3302 = vpack.c.b16 %v3046, %v3046
        %v3303 = vpack.c.b16 %v3047, %v3047
        %v3304 = vpack.c.b16 %v3048, %v3048
        %v3305 = vpack.c.b16 %v3049, %v3049
        %v3306 = vpack.c.b16 %v3050, %v3050
        %v3307 = vpack.c.b16 %v3051, %v3051
        %v3308 = vpack.c.b16 %v3052, %v3052
        %v3309 = vpack.c.b16 %v3053, %v3053
        %v3310 = vpack.c.b16 %v3054, %v3054
        %v3311 = vpack.c.b16 %v3055, %v3055
        %v3312 = vpack.c.b16 %v3056, %v3056
        %v3313 = vpack.c.b16 %v3057, %v3057
        %v3314 = vpack.c.b16 %v3058, %v3058
        %v3315 = vpack.c.b16 %v3059, %v3059
        %v3316 = vpack.c.b16 %v3060, %v3060
        %v3317 = vpack.c.b16 %v3061, %v3061
        %v3318 = vpack.c.b16 %v3062, %v3062
        %v3319 = vpack.c.b16 %v3063, %v3063
        %v3320 = vpack.c.b16 %v3064, %v3064
        %v3321 = vpack.c.b16 %v3065, %v3065
        %v3322 = vpack.c.b16 %v3066, %v3066
        %v3323 = vpack.c.b16 %v3067, %v3067
        %v3324 = vpack.c.b16 %v3068, %v3068
        %v3325 = vpack.c.b16 %v3069, %v3069
        %v3326 = vpack.c.b16 %v3070, %v3070
        %v3327 = vpack.c.b16 %v3071, %v3071
        %v3328 = vpack.c.b16 %v3072, %v3072
        %v3329 = vpack.c.b16 %v3073, %v3073
        %v3330 = vpack.c.b16 %v3074, %v3074
        %v3331 = vpack.c.b16 %v3075, %v3075
        %v3332 = vpack.c.b16 %v3076, %v3076
        %v3333 = vpack.c.b16 %v3077, %v3077
        %v3334 = vpack.c.b16 %v3078, %v3078
        %v3335 = vpack.c.b16 %v3079, %v3079
        %v3336 = vpack.c.b16 %v3080, %v3080
        %v3337 = vpack.c.b16 %v3081, %v3081
        %v3338 = vpack.c.b16 %v3082, %v3082
        %v3339 = vpack.c.b16 %v3083, %v3083
        %v3340 = vpack.c.b16 %v3084, %v3084
        %v3341 = vpack.c.b16 %v3085, %v3085
        %v3342 = vpack.c.b16 %v3086, %v3086
        %v3343 = vpack.c.b16 %v3087, %v3087
        %v3344 = vpack.c.b16 %v3088, %v3088
        %v3345 = vpack.c.b16 %v3089, %v3089
        %v3346 = vpack.c.b16 %v3090, %v3090
        %v3347 = vpack.c.b16 %v3091, %v3091
        %v3348 = vpack.c.b16 %v3092, %v3092
        %v3349 = vpack.c.b16 %v3093, %v3093
        %v3350 = vpack.c.b16 %v3094, %v3094
        %v3351 = vpack.c.b16 %v3095, %v3095
        %v3352 = vpack.c.b16 %v3096, %v3096
        %v3353 = vpack.c.b16 %v3097, %v3097
        %v3354 = vpack.c.b16 %v3098, %v3098
        %v3355 = vpack.c.b16 %v3099, %v3099
        %v3356 = vpack.c.b16 %v3100, %v3100
        %v3357 = vpack.c.b16 %v3101, %v3101
        %v3358 = vpack.c.b16 %v3102, %v3102
        %v3359 = vpack.c.b16 %v3103, %v3103
        %v3360 = vpack.c.b16 %v3104, %v3104
        %v3361 = vpack.c.b16 %v3105, %v3105
        %v3362 = vpack.c.b16 %v3106, %v3106
        %v3363 = vpack.c.b16 %v3107, %v3107
        %v3364 = vpack.c.b16 %v3108, %v3108
        %v3365 = vpack.c.b16 %v3109, %v3109
        %v3366 = vpack.c.b16 %v3110, %v3110
        %v3367 = vpack.c.b16 %v3111, %v3111
        %v3368 = vpack.c.b16 %v3112, %v3112
        %vm3625 = vcmask 519168
        %3626 = vst.msk [vmem:[%s172] sm:$0xf] %vm3625, %v3113
        %3627 = vst.msk [vmem:[%s172 + $0x4] sm:$0xf] %vm3625, %v3114
        %3628 = vst.msk [vmem:[%s172 + $0x8] sm:$0xf] %vm3625, %v3115
        %3629 = vst.msk [vmem:[%s172 + $0xc] sm:$0xf] %vm3625, %v3116
        %3630 = vst.msk [vmem:[%s172 + $0x10] sm:$0xf] %vm3625, %v3117
        %3631 = vst.msk [vmem:[%s172 + $0x14] sm:$0xf] %vm3625, %v3118
        %3632 = vst.msk [vmem:[%s172 + $0x18] sm:$0xf] %vm3625, %v3119
        %3633 = vst.msk [vmem:[%s172 + $0x1c] sm:$0xf] %vm3625, %v3120
        %3634 = vst.msk [vmem:[%s172 + $0x20] sm:$0xf] %vm3625, %v3121
        %3635 = vst.msk [vmem:[%s172 + $0x24] sm:$0xf] %vm3625, %v3122
        %3636 = vst.msk [vmem:[%s172 + $0x28] sm:$0xf] %vm3625, %v3123
        %3637 = vst.msk [vmem:[%s172 + $0x2c] sm:$0xf] %vm3625, %v3124
        %3638 = vst.msk [vmem:[%s172 + $0x30] sm:$0xf] %vm3625, %v3125
        %3639 = vst.msk [vmem:[%s172 + $0x34] sm:$0xf] %vm3625, %v3126
        %3640 = vst.msk [vmem:[%s172 + $0x38] sm:$0xf] %vm3625, %v3127
        %3641 = vst.msk [vmem:[%s172 + $0x3c] sm:$0xf] %vm3625, %v3128
        %3642 = vst.msk [vmem:[%s172 + $0x40] sm:$0xf] %vm3625, %v3129
        %3643 = vst.msk [vmem:[%s172 + $0x44] sm:$0xf] %vm3625, %v3130
        %3644 = vst.msk [vmem:[%s172 + $0x48] sm:$0xf] %vm3625, %v3131
        %3645 = vst.msk [vmem:[%s172 + $0x4c] sm:$0xf] %vm3625, %v3132
        %3646 = vst.msk [vmem:[%s172 + $0x50] sm:$0xf] %vm3625, %v3133
        %3647 = vst.msk [vmem:[%s172 + $0x54] sm:$0xf] %vm3625, %v3134
        %3648 = vst.msk [vmem:[%s172 + $0x58] sm:$0xf] %vm3625, %v3135
        %3649 = vst.msk [vmem:[%s172 + $0x5c] sm:$0xf] %vm3625, %v3136
        %3650 = vst.msk [vmem:[%s172 + $0x60] sm:$0xf] %vm3625, %v3137
        %3651 = vst.msk [vmem:[%s172 + $0x64] sm:$0xf] %vm3625, %v3138
        %3652 = vst.msk [vmem:[%s172 + $0x68] sm:$0xf] %vm3625, %v3139
        %3653 = vst.msk [vmem:[%s172 + $0x6c] sm:$0xf] %vm3625, %v3140
        %3654 = vst.msk [vmem:[%s172 + $0x70] sm:$0xf] %vm3625, %v3141
        %3655 = vst.msk [vmem:[%s172 + $0x74] sm:$0xf] %vm3625, %v3142
        %3656 = vst.msk [vmem:[%s172 + $0x78] sm:$0xf] %vm3625, %v3143
        %3657 = vst.msk [vmem:[%s172 + $0x7c] sm:$0xf] %vm3625, %v3144
        %3658 = vst.msk [vmem:[%s172 + $0x80] sm:$0xf] %vm3625, %v3145
        %3659 = vst.msk [vmem:[%s172 + $0x84] sm:$0xf] %vm3625, %v3146
        %3660 = vst.msk [vmem:[%s172 + $0x88] sm:$0xf] %vm3625, %v3147
        %3661 = vst.msk [vmem:[%s172 + $0x8c] sm:$0xf] %vm3625, %v3148
        %3662 = vst.msk [vmem:[%s172 + $0x90] sm:$0xf] %vm3625, %v3149
        %3663 = vst.msk [vmem:[%s172 + $0x94] sm:$0xf] %vm3625, %v3150
        %3664 = vst.msk [vmem:[%s172 + $0x98] sm:$0xf] %vm3625, %v3151
        %3665 = vst.msk [vmem:[%s172 + $0x9c] sm:$0xf] %vm3625, %v3152
        %3666 = vst.msk [vmem:[%s172 + $0xa0] sm:$0xf] %vm3625, %v3153
        %3667 = vst.msk [vmem:[%s172 + $0xa4] sm:$0xf] %vm3625, %v3154
        %3668 = vst.msk [vmem:[%s172 + $0xa8] sm:$0xf] %vm3625, %v3155
        %3669 = vst.msk [vmem:[%s172 + $0xac] sm:$0xf] %vm3625, %v3156
        %3670 = vst.msk [vmem:[%s172 + $0xb0] sm:$0xf] %vm3625, %v3157
        %3671 = vst.msk [vmem:[%s172 + $0xb4] sm:$0xf] %vm3625, %v3158
        %3672 = vst.msk [vmem:[%s172 + $0xb8] sm:$0xf] %vm3625, %v3159
        %3673 = vst.msk [vmem:[%s172 + $0xbc] sm:$0xf] %vm3625, %v3160
        %3674 = vst.msk [vmem:[%s172 + $0xc0] sm:$0xf] %vm3625, %v3161
        %3675 = vst.msk [vmem:[%s172 + $0xc4] sm:$0xf] %vm3625, %v3162
        %3676 = vst.msk [vmem:[%s172 + $0xc8] sm:$0xf] %vm3625, %v3163
        %3677 = vst.msk [vmem:[%s172 + $0xcc] sm:$0xf] %vm3625, %v3164
        %3678 = vst.msk [vmem:[%s172 + $0xd0] sm:$0xf] %vm3625, %v3165
        %3679 = vst.msk [vmem:[%s172 + $0xd4] sm:$0xf] %vm3625, %v3166
        %3680 = vst.msk [vmem:[%s172 + $0xd8] sm:$0xf] %vm3625, %v3167
        %3681 = vst.msk [vmem:[%s172 + $0xdc] sm:$0xf] %vm3625, %v3168
        %3682 = vst.msk [vmem:[%s172 + $0xe0] sm:$0xf] %vm3625, %v3169
        %3683 = vst.msk [vmem:[%s172 + $0xe4] sm:$0xf] %vm3625, %v3170
        %3684 = vst.msk [vmem:[%s172 + $0xe8] sm:$0xf] %vm3625, %v3171
        %3685 = vst.msk [vmem:[%s172 + $0xec] sm:$0xf] %vm3625, %v3172
        %3686 = vst.msk [vmem:[%s172 + $0xf0] sm:$0xf] %vm3625, %v3173
        %3687 = vst.msk [vmem:[%s172 + $0xf4] sm:$0xf] %vm3625, %v3174
        %3688 = vst.msk [vmem:[%s172 + $0xf8] sm:$0xf] %vm3625, %v3175
        %3689 = vst.msk [vmem:[%s172 + $0xfc] sm:$0xf] %vm3625, %v3176
        %3690 = vst.msk [vmem:[%s172 + $0x100] sm:$0xf] %vm3625, %v3177
        %3691 = vst.msk [vmem:[%s172 + $0x104] sm:$0xf] %vm3625, %v3178
        %3692 = vst.msk [vmem:[%s172 + $0x108] sm:$0xf] %vm3625, %v3179
        %3693 = vst.msk [vmem:[%s172 + $0x10c] sm:$0xf] %vm3625, %v3180
        %3694 = vst.msk [vmem:[%s172 + $0x110] sm:$0xf] %vm3625, %v3181
        %3695 = vst.msk [vmem:[%s172 + $0x114] sm:$0xf] %vm3625, %v3182
        %3696 = vst.msk [vmem:[%s172 + $0x118] sm:$0xf] %vm3625, %v3183
        %3697 = vst.msk [vmem:[%s172 + $0x11c] sm:$0xf] %vm3625, %v3184
        %3698 = vst.msk [vmem:[%s172 + $0x120] sm:$0xf] %vm3625, %v3185
        %3699 = vst.msk [vmem:[%s172 + $0x124] sm:$0xf] %vm3625, %v3186
        %3700 = vst.msk [vmem:[%s172 + $0x128] sm:$0xf] %vm3625, %v3187
        %3701 = vst.msk [vmem:[%s172 + $0x12c] sm:$0xf] %vm3625, %v3188
        %3702 = vst.msk [vmem:[%s172 + $0x130] sm:$0xf] %vm3625, %v3189
        %3703 = vst.msk [vmem:[%s172 + $0x134] sm:$0xf] %vm3625, %v3190
        %3704 = vst.msk [vmem:[%s172 + $0x138] sm:$0xf] %vm3625, %v3191
        %3705 = vst.msk [vmem:[%s172 + $0x13c] sm:$0xf] %vm3625, %v3192
        %3706 = vst.msk [vmem:[%s172 + $0x140] sm:$0xf] %vm3625, %v3193
        %3707 = vst.msk [vmem:[%s172 + $0x144] sm:$0xf] %vm3625, %v3194
        %3708 = vst.msk [vmem:[%s172 + $0x148] sm:$0xf] %vm3625, %v3195
        %3709 = vst.msk [vmem:[%s172 + $0x14c] sm:$0xf] %vm3625, %v3196
        %3710 = vst.msk [vmem:[%s172 + $0x150] sm:$0xf] %vm3625, %v3197
        %3711 = vst.msk [vmem:[%s172 + $0x154] sm:$0xf] %vm3625, %v3198
        %3712 = vst.msk [vmem:[%s172 + $0x158] sm:$0xf] %vm3625, %v3199
        %3713 = vst.msk [vmem:[%s172 + $0x15c] sm:$0xf] %vm3625, %v3200
        %3714 = vst.msk [vmem:[%s172 + $0x160] sm:$0xf] %vm3625, %v3201
        %3715 = vst.msk [vmem:[%s172 + $0x164] sm:$0xf] %vm3625, %v3202
        %3716 = vst.msk [vmem:[%s172 + $0x168] sm:$0xf] %vm3625, %v3203
        %3717 = vst.msk [vmem:[%s172 + $0x16c] sm:$0xf] %vm3625, %v3204
        %3718 = vst.msk [vmem:[%s172 + $0x170] sm:$0xf] %vm3625, %v3205
        %3719 = vst.msk [vmem:[%s172 + $0x174] sm:$0xf] %vm3625, %v3206
        %3720 = vst.msk [vmem:[%s172 + $0x178] sm:$0xf] %vm3625, %v3207
        %3721 = vst.msk [vmem:[%s172 + $0x17c] sm:$0xf] %vm3625, %v3208
        %3722 = vst.msk [vmem:[%s172 + $0x180] sm:$0xf] %vm3625, %v3209
        %3723 = vst.msk [vmem:[%s172 + $0x184] sm:$0xf] %vm3625, %v3210
        %3724 = vst.msk [vmem:[%s172 + $0x188] sm:$0xf] %vm3625, %v3211
        %3725 = vst.msk [vmem:[%s172 + $0x18c] sm:$0xf] %vm3625, %v3212
        %3726 = vst.msk [vmem:[%s172 + $0x190] sm:$0xf] %vm3625, %v3213
        %3727 = vst.msk [vmem:[%s172 + $0x194] sm:$0xf] %vm3625, %v3214
        %3728 = vst.msk [vmem:[%s172 + $0x198] sm:$0xf] %vm3625, %v3215
        %3729 = vst.msk [vmem:[%s172 + $0x19c] sm:$0xf] %vm3625, %v3216
        %3730 = vst.msk [vmem:[%s172 + $0x1a0] sm:$0xf] %vm3625, %v3217
        %3731 = vst.msk [vmem:[%s172 + $0x1a4] sm:$0xf] %vm3625, %v3218
        %3732 = vst.msk [vmem:[%s172 + $0x1a8] sm:$0xf] %vm3625, %v3219
        %3733 = vst.msk [vmem:[%s172 + $0x1ac] sm:$0xf] %vm3625, %v3220
        %3734 = vst.msk [vmem:[%s172 + $0x1b0] sm:$0xf] %vm3625, %v3221
        %3735 = vst.msk [vmem:[%s172 + $0x1b4] sm:$0xf] %vm3625, %v3222
        %3736 = vst.msk [vmem:[%s172 + $0x1b8] sm:$0xf] %vm3625, %v3223
        %3737 = vst.msk [vmem:[%s172 + $0x1bc] sm:$0xf] %vm3625, %v3224
        %3738 = vst.msk [vmem:[%s172 + $0x1c0] sm:$0xf] %vm3625, %v3225
        %3739 = vst.msk [vmem:[%s172 + $0x1c4] sm:$0xf] %vm3625, %v3226
        %3740 = vst.msk [vmem:[%s172 + $0x1c8] sm:$0xf] %vm3625, %v3227
        %3741 = vst.msk [vmem:[%s172 + $0x1cc] sm:$0xf] %vm3625, %v3228
        %3742 = vst.msk [vmem:[%s172 + $0x1d0] sm:$0xf] %vm3625, %v3229
        %3743 = vst.msk [vmem:[%s172 + $0x1d4] sm:$0xf] %vm3625, %v3230
        %3744 = vst.msk [vmem:[%s172 + $0x1d8] sm:$0xf] %vm3625, %v3231
        %3745 = vst.msk [vmem:[%s172 + $0x1dc] sm:$0xf] %vm3625, %v3232
        %3746 = vst.msk [vmem:[%s172 + $0x1e0] sm:$0xf] %vm3625, %v3233
        %3747 = vst.msk [vmem:[%s172 + $0x1e4] sm:$0xf] %vm3625, %v3234
        %3748 = vst.msk [vmem:[%s172 + $0x1e8] sm:$0xf] %vm3625, %v3235
        %3749 = vst.msk [vmem:[%s172 + $0x1ec] sm:$0xf] %vm3625, %v3236
        %3750 = vst.msk [vmem:[%s172 + $0x1f0] sm:$0xf] %vm3625, %v3237
        %3751 = vst.msk [vmem:[%s172 + $0x1f4] sm:$0xf] %vm3625, %v3238
        %3752 = vst.msk [vmem:[%s172 + $0x1f8] sm:$0xf] %vm3625, %v3239
        %3753 = vst.msk [vmem:[%s172 + $0x1fc] sm:$0xf] %vm3625, %v3240
        %3754 = vst.msk [vmem:[%s172 + $0x200] sm:$0xf] %vm3625, %v3241
        %3755 = vst.msk [vmem:[%s172 + $0x204] sm:$0xf] %vm3625, %v3242
        %3756 = vst.msk [vmem:[%s172 + $0x208] sm:$0xf] %vm3625, %v3243
        %3757 = vst.msk [vmem:[%s172 + $0x20c] sm:$0xf] %vm3625, %v3244
        %3758 = vst.msk [vmem:[%s172 + $0x210] sm:$0xf] %vm3625, %v3245
        %3759 = vst.msk [vmem:[%s172 + $0x214] sm:$0xf] %vm3625, %v3246
        %3760 = vst.msk [vmem:[%s172 + $0x218] sm:$0xf] %vm3625, %v3247
        %3761 = vst.msk [vmem:[%s172 + $0x21c] sm:$0xf] %vm3625, %v3248
        %3762 = vst.msk [vmem:[%s172 + $0x220] sm:$0xf] %vm3625, %v3249
        %3763 = vst.msk [vmem:[%s172 + $0x224] sm:$0xf] %vm3625, %v3250
        %3764 = vst.msk [vmem:[%s172 + $0x228] sm:$0xf] %vm3625, %v3251
        %3765 = vst.msk [vmem:[%s172 + $0x22c] sm:$0xf] %vm3625, %v3252
        %3766 = vst.msk [vmem:[%s172 + $0x230] sm:$0xf] %vm3625, %v3253
        %3767 = vst.msk [vmem:[%s172 + $0x234] sm:$0xf] %vm3625, %v3254
        %3768 = vst.msk [vmem:[%s172 + $0x238] sm:$0xf] %vm3625, %v3255
        %3769 = vst.msk [vmem:[%s172 + $0x23c] sm:$0xf] %vm3625, %v3256
        %3770 = vst.msk [vmem:[%s172 + $0x240] sm:$0xf] %vm3625, %v3257
        %3771 = vst.msk [vmem:[%s172 + $0x244] sm:$0xf] %vm3625, %v3258
        %3772 = vst.msk [vmem:[%s172 + $0x248] sm:$0xf] %vm3625, %v3259
        %3773 = vst.msk [vmem:[%s172 + $0x24c] sm:$0xf] %vm3625, %v3260
        %3774 = vst.msk [vmem:[%s172 + $0x250] sm:$0xf] %vm3625, %v3261
        %3775 = vst.msk [vmem:[%s172 + $0x254] sm:$0xf] %vm3625, %v3262
        %3776 = vst.msk [vmem:[%s172 + $0x258] sm:$0xf] %vm3625, %v3263
        %3777 = vst.msk [vmem:[%s172 + $0x25c] sm:$0xf] %vm3625, %v3264
        %3778 = vst.msk [vmem:[%s172 + $0x260] sm:$0xf] %vm3625, %v3265
        %3779 = vst.msk [vmem:[%s172 + $0x264] sm:$0xf] %vm3625, %v3266
        %3780 = vst.msk [vmem:[%s172 + $0x268] sm:$0xf] %vm3625, %v3267
        %3781 = vst.msk [vmem:[%s172 + $0x26c] sm:$0xf] %vm3625, %v3268
        %3782 = vst.msk [vmem:[%s172 + $0x270] sm:$0xf] %vm3625, %v3269
        %3783 = vst.msk [vmem:[%s172 + $0x274] sm:$0xf] %vm3625, %v3270
        %3784 = vst.msk [vmem:[%s172 + $0x278] sm:$0xf] %vm3625, %v3271
        %3785 = vst.msk [vmem:[%s172 + $0x27c] sm:$0xf] %vm3625, %v3272
        %3786 = vst.msk [vmem:[%s172 + $0x280] sm:$0xf] %vm3625, %v3273
        %3787 = vst.msk [vmem:[%s172 + $0x284] sm:$0xf] %vm3625, %v3274
        %3788 = vst.msk [vmem:[%s172 + $0x288] sm:$0xf] %vm3625, %v3275
        %3789 = vst.msk [vmem:[%s172 + $0x28c] sm:$0xf] %vm3625, %v3276
        %3790 = vst.msk [vmem:[%s172 + $0x290] sm:$0xf] %vm3625, %v3277
        %3791 = vst.msk [vmem:[%s172 + $0x294] sm:$0xf] %vm3625, %v3278
        %3792 = vst.msk [vmem:[%s172 + $0x298] sm:$0xf] %vm3625, %v3279
        %3793 = vst.msk [vmem:[%s172 + $0x29c] sm:$0xf] %vm3625, %v3280
        %3794 = vst.msk [vmem:[%s172 + $0x2a0] sm:$0xf] %vm3625, %v3281
        %3795 = vst.msk [vmem:[%s172 + $0x2a4] sm:$0xf] %vm3625, %v3282
        %3796 = vst.msk [vmem:[%s172 + $0x2a8] sm:$0xf] %vm3625, %v3283
        %3797 = vst.msk [vmem:[%s172 + $0x2ac] sm:$0xf] %vm3625, %v3284
        %3798 = vst.msk [vmem:[%s172 + $0x2b0] sm:$0xf] %vm3625, %v3285
        %3799 = vst.msk [vmem:[%s172 + $0x2b4] sm:$0xf] %vm3625, %v3286
        %3800 = vst.msk [vmem:[%s172 + $0x2b8] sm:$0xf] %vm3625, %v3287
        %3801 = vst.msk [vmem:[%s172 + $0x2bc] sm:$0xf] %vm3625, %v3288
        %3802 = vst.msk [vmem:[%s172 + $0x2c0] sm:$0xf] %vm3625, %v3289
        %3803 = vst.msk [vmem:[%s172 + $0x2c4] sm:$0xf] %vm3625, %v3290
        %3804 = vst.msk [vmem:[%s172 + $0x2c8] sm:$0xf] %vm3625, %v3291
        %3805 = vst.msk [vmem:[%s172 + $0x2cc] sm:$0xf] %vm3625, %v3292
        %3806 = vst.msk [vmem:[%s172 + $0x2d0] sm:$0xf] %vm3625, %v3293
        %3807 = vst.msk [vmem:[%s172 + $0x2d4] sm:$0xf] %vm3625, %v3294
        %3808 = vst.msk [vmem:[%s172 + $0x2d8] sm:$0xf] %vm3625, %v3295
        %3809 = vst.msk [vmem:[%s172 + $0x2dc] sm:$0xf] %vm3625, %v3296
        %3810 = vst.msk [vmem:[%s172 + $0x2e0] sm:$0xf] %vm3625, %v3297
        %3811 = vst.msk [vmem:[%s172 + $0x2e4] sm:$0xf] %vm3625, %v3298
        %3812 = vst.msk [vmem:[%s172 + $0x2e8] sm:$0xf] %vm3625, %v3299
        %3813 = vst.msk [vmem:[%s172 + $0x2ec] sm:$0xf] %vm3625, %v3300
        %3814 = vst.msk [vmem:[%s172 + $0x2f0] sm:$0xf] %vm3625, %v3301
        %3815 = vst.msk [vmem:[%s172 + $0x2f4] sm:$0xf] %vm3625, %v3302
        %3816 = vst.msk [vmem:[%s172 + $0x2f8] sm:$0xf] %vm3625, %v3303
        %3817 = vst.msk [vmem:[%s172 + $0x2fc] sm:$0xf] %vm3625, %v3304
        %3818 = vst.msk [vmem:[%s172 + $0x300] sm:$0xf] %vm3625, %v3305
        %3819 = vst.msk [vmem:[%s172 + $0x304] sm:$0xf] %vm3625, %v3306
        %3820 = vst.msk [vmem:[%s172 + $0x308] sm:$0xf] %vm3625, %v3307
        %3821 = vst.msk [vmem:[%s172 + $0x30c] sm:$0xf] %vm3625, %v3308
        %3822 = vst.msk [vmem:[%s172 + $0x310] sm:$0xf] %vm3625, %v3309
        %3823 = vst.msk [vmem:[%s172 + $0x314] sm:$0xf] %vm3625, %v3310
        %3824 = vst.msk [vmem:[%s172 + $0x318] sm:$0xf] %vm3625, %v3311
        %3825 = vst.msk [vmem:[%s172 + $0x31c] sm:$0xf] %vm3625, %v3312
        %3826 = vst.msk [vmem:[%s172 + $0x320] sm:$0xf] %vm3625, %v3313
        %3827 = vst.msk [vmem:[%s172 + $0x324] sm:$0xf] %vm3625, %v3314
        %3828 = vst.msk [vmem:[%s172 + $0x328] sm:$0xf] %vm3625, %v3315
        %3829 = vst.msk [vmem:[%s172 + $0x32c] sm:$0xf] %vm3625, %v3316
        %3830 = vst.msk [vmem:[%s172 + $0x330] sm:$0xf] %vm3625, %v3317
        %3831 = vst.msk [vmem:[%s172 + $0x334] sm:$0xf] %vm3625, %v3318
        %3832 = vst.msk [vmem:[%s172 + $0x338] sm:$0xf] %vm3625, %v3319
        %3833 = vst.msk [vmem:[%s172 + $0x33c] sm:$0xf] %vm3625, %v3320
        %3834 = vst.msk [vmem:[%s172 + $0x340] sm:$0xf] %vm3625, %v3321
        %3835 = vst.msk [vmem:[%s172 + $0x344] sm:$0xf] %vm3625, %v3322
        %3836 = vst.msk [vmem:[%s172 + $0x348] sm:$0xf] %vm3625, %v3323
        %3837 = vst.msk [vmem:[%s172 + $0x34c] sm:$0xf] %vm3625, %v3324
        %3838 = vst.msk [vmem:[%s172 + $0x350] sm:$0xf] %vm3625, %v3325
        %3839 = vst.msk [vmem:[%s172 + $0x354] sm:$0xf] %vm3625, %v3326
        %3840 = vst.msk [vmem:[%s172 + $0x358] sm:$0xf] %vm3625, %v3327
        %3841 = vst.msk [vmem:[%s172 + $0x35c] sm:$0xf] %vm3625, %v3328
        %3842 = vst.msk [vmem:[%s172 + $0x360] sm:$0xf] %vm3625, %v3329
        %3843 = vst.msk [vmem:[%s172 + $0x364] sm:$0xf] %vm3625, %v3330
        %3844 = vst.msk [vmem:[%s172 + $0x368] sm:$0xf] %vm3625, %v3331
        %3845 = vst.msk [vmem:[%s172 + $0x36c] sm:$0xf] %vm3625, %v3332
        %3846 = vst.msk [vmem:[%s172 + $0x370] sm:$0xf] %vm3625, %v3333
        %3847 = vst.msk [vmem:[%s172 + $0x374] sm:$0xf] %vm3625, %v3334
        %3848 = vst.msk [vmem:[%s172 + $0x378] sm:$0xf] %vm3625, %v3335
        %3849 = vst.msk [vmem:[%s172 + $0x37c] sm:$0xf] %vm3625, %v3336
        %3850 = vst.msk [vmem:[%s172 + $0x380] sm:$0xf] %vm3625, %v3337
        %3851 = vst.msk [vmem:[%s172 + $0x384] sm:$0xf] %vm3625, %v3338
        %3852 = vst.msk [vmem:[%s172 + $0x388] sm:$0xf] %vm3625, %v3339
        %3853 = vst.msk [vmem:[%s172 + $0x38c] sm:$0xf] %vm3625, %v3340
        %3854 = vst.msk [vmem:[%s172 + $0x390] sm:$0xf] %vm3625, %v3341
        %3855 = vst.msk [vmem:[%s172 + $0x394] sm:$0xf] %vm3625, %v3342
        %3856 = vst.msk [vmem:[%s172 + $0x398] sm:$0xf] %vm3625, %v3343
        %3857 = vst.msk [vmem:[%s172 + $0x39c] sm:$0xf] %vm3625, %v3344
        %3858 = vst.msk [vmem:[%s172 + $0x3a0] sm:$0xf] %vm3625, %v3345
        %3859 = vst.msk [vmem:[%s172 + $0x3a4] sm:$0xf] %vm3625, %v3346
        %3860 = vst.msk [vmem:[%s172 + $0x3a8] sm:$0xf] %vm3625, %v3347
        %3861 = vst.msk [vmem:[%s172 + $0x3ac] sm:$0xf] %vm3625, %v3348
        %3862 = vst.msk [vmem:[%s172 + $0x3b0] sm:$0xf] %vm3625, %v3349
        %3863 = vst.msk [vmem:[%s172 + $0x3b4] sm:$0xf] %vm3625, %v3350
        %3864 = vst.msk [vmem:[%s172 + $0x3b8] sm:$0xf] %vm3625, %v3351
        %3865 = vst.msk [vmem:[%s172 + $0x3bc] sm:$0xf] %vm3625, %v3352
        %3866 = vst.msk [vmem:[%s172 + $0x3c0] sm:$0xf] %vm3625, %v3353
        %3867 = vst.msk [vmem:[%s172 + $0x3c4] sm:$0xf] %vm3625, %v3354
        %3868 = vst.msk [vmem:[%s172 + $0x3c8] sm:$0xf] %vm3625, %v3355
        %3869 = vst.msk [vmem:[%s172 + $0x3cc] sm:$0xf] %vm3625, %v3356
        %3870 = vst.msk [vmem:[%s172 + $0x3d0] sm:$0xf] %vm3625, %v3357
        %3871 = vst.msk [vmem:[%s172 + $0x3d4] sm:$0xf] %vm3625, %v3358
        %3872 = vst.msk [vmem:[%s172 + $0x3d8] sm:$0xf] %vm3625, %v3359
        %3873 = vst.msk [vmem:[%s172 + $0x3dc] sm:$0xf] %vm3625, %v3360
        %3874 = vst.msk [vmem:[%s172 + $0x3e0] sm:$0xf] %vm3625, %v3361
        %3875 = vst.msk [vmem:[%s172 + $0x3e4] sm:$0xf] %vm3625, %v3362
        %3876 = vst.msk [vmem:[%s172 + $0x3e8] sm:$0xf] %vm3625, %v3363
        %3877 = vst.msk [vmem:[%s172 + $0x3ec] sm:$0xf] %vm3625, %v3364
        %3878 = vst.msk [vmem:[%s172 + $0x3f0] sm:$0xf] %vm3625, %v3365
        %3879 = vst.msk [vmem:[%s172 + $0x3f4] sm:$0xf] %vm3625, %v3366
        %3880 = vst.msk [vmem:[%s172 + $0x3f8] sm:$0xf] %vm3625, %v3367
        %3881 = vst.msk [vmem:[%s172 + $0x3fc] sm:$0xf] %vm3625, %v3368
        %s3882 = sand.u32 %s90, 1
        %s3883 = sand.u32 %s90, 1
        %s3884 = smul.addr %s3883, 1024
        %s3885 = scalar_lea.vmem [#allocation2], %s3884
        // Predicated region
        $region33: #{dann_forward.3} parent=31 // pred_check
          %p3886 = pneg %p100
        $region34: #{dann_forward.3} parent=31 // pred_check_branch
          %3888 = sbr.rel (%p3886) target = $region36
        $region35: #{dann_forward.3} parent=31 // pred_region
          %s3889 = smul.u32 256, %s14
          %s3890 = ssub.s32 1407, %s3889
          %p3891 = scmp.lt.s32.totalorder %s3890, 256
          %s3892 = scalar_select %p3891, %s3890, 256
          %s3893 = smul.u32 64, %s3892
          %p3894 = scmp.ne.s32.totalorder 0, %s3893
          %s3895 = smul.addr %s3889, 4
          %s3896 = scalar_lea.vmem %s3, %s3895
          // Predicated region
          $region37: #{dann_forward.3} parent=35 // pred_check
            %p3897 = pneg %p3894
          $region38: #{dann_forward.3} parent=35 // pred_check_branch
            %3899 = sbr.rel (%p3897) target = $region40
          $region39: #{dann_forward.3} parent=35 // pred_region
            // Predicated region
            $region41: #{dann_forward.3} parent=39 // pred_check
              _
            $region42: #{dann_forward.3} parent=39 // pred_check_branch
              %3901 = sbr.rel target = $region44
            $region43: #{dann_forward.3} parent=39 // pred_region
              // Predicated region
              $region63: #{dann_forward.3} parent=43 // pred_check
                _
              $region64: #{dann_forward.3} parent=43 // pred_check_branch
                %4077 = sbr.rel (0) target = $region66
              $region65: #{dann_forward.3} parent=43 // pred_region
                %s4079 = ssub.s32 16, 1
                %s4080 = sshrl.u32 %s3892, 6
                // While loop
                $region67: #{dann_forward.3} parent=65 // loop_pre_header
                  _
                $region68: #{dann_forward.3} parent=65 // loop_header
                  %s4082 = sphi 0, %s4084
                  %p4083 = scmp.ge.s32.totalorder %s4082, %s4080
                  %s4087 = sphi 0, %s4220
                  %s4088 = sphi %s3885, %s4223
                  %s4089 = sphi %s3896, %s4224
                $region69: #{dann_forward.3} parent=65 // loop_header_branch
                  %4086 = sbr.rel (%p4083) target = $region73
                $region70: #{dann_forward.3} parent=65 // loop_body
                  %v4090 = vld [vmem:[%s4088] sm:%s4079]
                  %4091 = vst [vmem:[%s4089] sm:%s4079] %v4090
                  %v4092 = vld [vmem:[%s4088 + $0x4] sm:%s4079]
                  %4093 = vst [vmem:[%s4089 + $0x4] sm:%s4079] %v4092
                  %v4094 = vld [vmem:[%s4088 + $0x8] sm:%s4079]
                  %4095 = vst [vmem:[%s4089 + $0x8] sm:%s4079] %v4094
                  %v4096 = vld [vmem:[%s4088 + $0xc] sm:%s4079]
                  %4097 = vst [vmem:[%s4089 + $0xc] sm:%s4079] %v4096
                  %v4098 = vld [vmem:[%s4088 + $0x10] sm:%s4079]
                  %4099 = vst [vmem:[%s4089 + $0x10] sm:%s4079] %v4098
                  %v4100 = vld [vmem:[%s4088 + $0x14] sm:%s4079]
                  %4101 = vst [vmem:[%s4089 + $0x14] sm:%s4079] %v4100
                  %v4102 = vld [vmem:[%s4088 + $0x18] sm:%s4079]
                  %4103 = vst [vmem:[%s4089 + $0x18] sm:%s4079] %v4102
                  %v4104 = vld [vmem:[%s4088 + $0x1c] sm:%s4079]
                  %4105 = vst [vmem:[%s4089 + $0x1c] sm:%s4079] %v4104
                  %v4106 = vld [vmem:[%s4088 + $0x20] sm:%s4079]
                  %4107 = vst [vmem:[%s4089 + $0x20] sm:%s4079] %v4106
                  %v4108 = vld [vmem:[%s4088 + $0x24] sm:%s4079]
                  %4109 = vst [vmem:[%s4089 + $0x24] sm:%s4079] %v4108
                  %v4110 = vld [vmem:[%s4088 + $0x28] sm:%s4079]
                  %4111 = vst [vmem:[%s4089 + $0x28] sm:%s4079] %v4110
                  %v4112 = vld [vmem:[%s4088 + $0x2c] sm:%s4079]
                  %4113 = vst [vmem:[%s4089 + $0x2c] sm:%s4079] %v4112
                  %v4114 = vld [vmem:[%s4088 + $0x30] sm:%s4079]
                  %4115 = vst [vmem:[%s4089 + $0x30] sm:%s4079] %v4114
                  %v4116 = vld [vmem:[%s4088 + $0x34] sm:%s4079]
                  %4117 = vst [vmem:[%s4089 + $0x34] sm:%s4079] %v4116
                  %v4118 = vld [vmem:[%s4088 + $0x38] sm:%s4079]
                  %4119 = vst [vmem:[%s4089 + $0x38] sm:%s4079] %v4118
                  %v4120 = vld [vmem:[%s4088 + $0x3c] sm:%s4079]
                  %4121 = vst [vmem:[%s4089 + $0x3c] sm:%s4079] %v4120
                  %v4122 = vld [vmem:[%s4088 + $0x40] sm:%s4079]
                  %4123 = vst [vmem:[%s4089 + $0x40] sm:%s4079] %v4122
                  %v4124 = vld [vmem:[%s4088 + $0x44] sm:%s4079]
                  %4125 = vst [vmem:[%s4089 + $0x44] sm:%s4079] %v4124
                  %v4126 = vld [vmem:[%s4088 + $0x48] sm:%s4079]
                  %4127 = vst [vmem:[%s4089 + $0x48] sm:%s4079] %v4126
                  %v4128 = vld [vmem:[%s4088 + $0x4c] sm:%s4079]
                  %4129 = vst [vmem:[%s4089 + $0x4c] sm:%s4079] %v4128
                  %v4130 = vld [vmem:[%s4088 + $0x50] sm:%s4079]
                  %4131 = vst [vmem:[%s4089 + $0x50] sm:%s4079] %v4130
                  %v4132 = vld [vmem:[%s4088 + $0x54] sm:%s4079]
                  %4133 = vst [vmem:[%s4089 + $0x54] sm:%s4079] %v4132
                  %v4134 = vld [vmem:[%s4088 + $0x58] sm:%s4079]
                  %4135 = vst [vmem:[%s4089 + $0x58] sm:%s4079] %v4134
                  %v4136 = vld [vmem:[%s4088 + $0x5c] sm:%s4079]
                  %4137 = vst [vmem:[%s4089 + $0x5c] sm:%s4079] %v4136
                  %v4138 = vld [vmem:[%s4088 + $0x60] sm:%s4079]
                  %4139 = vst [vmem:[%s4089 + $0x60] sm:%s4079] %v4138
                  %v4140 = vld [vmem:[%s4088 + $0x64] sm:%s4079]
                  %4141 = vst [vmem:[%s4089 + $0x64] sm:%s4079] %v4140
                  %v4142 = vld [vmem:[%s4088 + $0x68] sm:%s4079]
                  %4143 = vst [vmem:[%s4089 + $0x68] sm:%s4079] %v4142
                  %v4144 = vld [vmem:[%s4088 + $0x6c] sm:%s4079]
                  %4145 = vst [vmem:[%s4089 + $0x6c] sm:%s4079] %v4144
                  %v4146 = vld [vmem:[%s4088 + $0x70] sm:%s4079]
                  %4147 = vst [vmem:[%s4089 + $0x70] sm:%s4079] %v4146
                  %v4148 = vld [vmem:[%s4088 + $0x74] sm:%s4079]
                  %4149 = vst [vmem:[%s4089 + $0x74] sm:%s4079] %v4148
                  %v4150 = vld [vmem:[%s4088 + $0x78] sm:%s4079]
                  %4151 = vst [vmem:[%s4089 + $0x78] sm:%s4079] %v4150
                  %v4152 = vld [vmem:[%s4088 + $0x7c] sm:%s4079]
                  %4153 = vst [vmem:[%s4089 + $0x7c] sm:%s4079] %v4152
                  %v4154 = vld [vmem:[%s4088 + $0x80] sm:%s4079]
                  %4155 = vst [vmem:[%s4089 + $0x80] sm:%s4079] %v4154
                  %v4156 = vld [vmem:[%s4088 + $0x84] sm:%s4079]
                  %4157 = vst [vmem:[%s4089 + $0x84] sm:%s4079] %v4156
                  %v4158 = vld [vmem:[%s4088 + $0x88] sm:%s4079]
                  %4159 = vst [vmem:[%s4089 + $0x88] sm:%s4079] %v4158
                  %v4160 = vld [vmem:[%s4088 + $0x8c] sm:%s4079]
                  %4161 = vst [vmem:[%s4089 + $0x8c] sm:%s4079] %v4160
                  %v4162 = vld [vmem:[%s4088 + $0x90] sm:%s4079]
                  %4163 = vst [vmem:[%s4089 + $0x90] sm:%s4079] %v4162
                  %v4164 = vld [vmem:[%s4088 + $0x94] sm:%s4079]
                  %4165 = vst [vmem:[%s4089 + $0x94] sm:%s4079] %v4164
                  %v4166 = vld [vmem:[%s4088 + $0x98] sm:%s4079]
                  %4167 = vst [vmem:[%s4089 + $0x98] sm:%s4079] %v4166
                  %v4168 = vld [vmem:[%s4088 + $0x9c] sm:%s4079]
                  %4169 = vst [vmem:[%s4089 + $0x9c] sm:%s4079] %v4168
                  %v4170 = vld [vmem:[%s4088 + $0xa0] sm:%s4079]
                  %4171 = vst [vmem:[%s4089 + $0xa0] sm:%s4079] %v4170
                  %v4172 = vld [vmem:[%s4088 + $0xa4] sm:%s4079]
                  %4173 = vst [vmem:[%s4089 + $0xa4] sm:%s4079] %v4172
                  %v4174 = vld [vmem:[%s4088 + $0xa8] sm:%s4079]
                  %4175 = vst [vmem:[%s4089 + $0xa8] sm:%s4079] %v4174
                  %v4176 = vld [vmem:[%s4088 + $0xac] sm:%s4079]
                  %4177 = vst [vmem:[%s4089 + $0xac] sm:%s4079] %v4176
                  %v4178 = vld [vmem:[%s4088 + $0xb0] sm:%s4079]
                  %4179 = vst [vmem:[%s4089 + $0xb0] sm:%s4079] %v4178
                  %v4180 = vld [vmem:[%s4088 + $0xb4] sm:%s4079]
                  %4181 = vst [vmem:[%s4089 + $0xb4] sm:%s4079] %v4180
                  %v4182 = vld [vmem:[%s4088 + $0xb8] sm:%s4079]
                  %4183 = vst [vmem:[%s4089 + $0xb8] sm:%s4079] %v4182
                  %v4184 = vld [vmem:[%s4088 + $0xbc] sm:%s4079]
                  %4185 = vst [vmem:[%s4089 + $0xbc] sm:%s4079] %v4184
                  %v4186 = vld [vmem:[%s4088 + $0xc0] sm:%s4079]
                  %4187 = vst [vmem:[%s4089 + $0xc0] sm:%s4079] %v4186
                  %v4188 = vld [vmem:[%s4088 + $0xc4] sm:%s4079]
                  %4189 = vst [vmem:[%s4089 + $0xc4] sm:%s4079] %v4188
                  %v4190 = vld [vmem:[%s4088 + $0xc8] sm:%s4079]
                  %4191 = vst [vmem:[%s4089 + $0xc8] sm:%s4079] %v4190
                  %v4192 = vld [vmem:[%s4088 + $0xcc] sm:%s4079]
                  %4193 = vst [vmem:[%s4089 + $0xcc] sm:%s4079] %v4192
                  %v4194 = vld [vmem:[%s4088 + $0xd0] sm:%s4079]
                  %4195 = vst [vmem:[%s4089 + $0xd0] sm:%s4079] %v4194
                  %v4196 = vld [vmem:[%s4088 + $0xd4] sm:%s4079]
                  %4197 = vst [vmem:[%s4089 + $0xd4] sm:%s4079] %v4196
                  %v4198 = vld [vmem:[%s4088 + $0xd8] sm:%s4079]
                  %4199 = vst [vmem:[%s4089 + $0xd8] sm:%s4079] %v4198
                  %v4200 = vld [vmem:[%s4088 + $0xdc] sm:%s4079]
                  %4201 = vst [vmem:[%s4089 + $0xdc] sm:%s4079] %v4200
                  %v4202 = vld [vmem:[%s4088 + $0xe0] sm:%s4079]
                  %4203 = vst [vmem:[%s4089 + $0xe0] sm:%s4079] %v4202
                  %v4204 = vld [vmem:[%s4088 + $0xe4] sm:%s4079]
                  %4205 = vst [vmem:[%s4089 + $0xe4] sm:%s4079] %v4204
                  %v4206 = vld [vmem:[%s4088 + $0xe8] sm:%s4079]
                  %4207 = vst [vmem:[%s4089 + $0xe8] sm:%s4079] %v4206
                  %v4208 = vld [vmem:[%s4088 + $0xec] sm:%s4079]
                  %4209 = vst [vmem:[%s4089 + $0xec] sm:%s4079] %v4208
                  %v4210 = vld [vmem:[%s4088 + $0xf0] sm:%s4079]
                  %4211 = vst [vmem:[%s4089 + $0xf0] sm:%s4079] %v4210
                  %v4212 = vld [vmem:[%s4088 + $0xf4] sm:%s4079]
                  %4213 = vst [vmem:[%s4089 + $0xf4] sm:%s4079] %v4212
                  %v4214 = vld [vmem:[%s4088 + $0xf8] sm:%s4079]
                  %4215 = vst [vmem:[%s4089 + $0xf8] sm:%s4079] %v4214
                  %v4216 = vld [vmem:[%s4088 + $0xfc] sm:%s4079]
                  %4217 = vst [vmem:[%s4089 + $0xfc] sm:%s4079] %v4216
                  %s4218 = sadd.s32 1, %s4087
                  %p4219 = scmp.ge.s32.totalorder %s4218, %s4080
                  %s4220 = scalar_select %p4219, 0, %s4218
                  %s4221 = smul.u32 %s4220, 256
                  %s4222 = smul.u32 %s4220, 256
                  %s4223 = scalar_lea.vmem %s3885, %s4221 [#allocation2]
                  %s4224 = scalar_lea.vmem %s3896, %s4222
                $region71: #{dann_forward.3} parent=65 // loop_footer
                  %s4084 = sadd.s32 %s4082, 1
                $region72: #{dann_forward.3} parent=65 // loop_footer_branch
                  %4081 = sbr.rel target = $region68
                $region73: #{dann_forward.3} parent=65 // loop_exit
                  _
                %s4225 = sshrl.u32 %s3892, 6
                %s4226 = sand.u32 %s3892, 63
                %s4227 = smul.u32 %s4225, 64
                %s4228 = smul.u32 4, %s4227
                %s4229 = scalar_lea.vmem %s3885, %s4228 [#allocation2]
                %s4230 = smul.u32 4, %s4227
                %s4231 = scalar_lea.vmem %s3896, %s4230
                // While loop
                $region74: #{dann_forward.3} parent=65 // loop_pre_header
                  _
                $region75: #{dann_forward.3} parent=65 // loop_header
                  %s4233 = sphi 0, %s4235
                  %p4234 = scmp.ge.s32.totalorder %s4233, %s4226
                  %s4238 = sphi 0, %s4245
                  %s4239 = sphi %s4229, %s4248
                  %s4240 = sphi %s4231, %s4249
                $region76: #{dann_forward.3} parent=65 // loop_header_branch
                  %4237 = sbr.rel (%p4234) target = $region80
                $region77: #{dann_forward.3} parent=65 // loop_body
                  %v4241 = vld [vmem:[%s4239] sm:%s4079]
                  %4242 = vst [vmem:[%s4240] sm:%s4079] %v4241
                  %s4243 = sadd.s32 1, %s4238
                  %p4244 = scmp.ge.s32.totalorder %s4243, %s4226
                  %s4245 = scalar_select %p4244, 0, %s4243
                  %s4246 = smul.u32 %s4245, 4
                  %s4247 = smul.u32 %s4245, 4
                  %s4248 = scalar_lea.vmem %s4229, %s4246 [#allocation2]
                  %s4249 = scalar_lea.vmem %s4231, %s4247
                $region78: #{dann_forward.3} parent=65 // loop_footer
                  %s4235 = sadd.s32 %s4233, 1
                $region79: #{dann_forward.3} parent=65 // loop_footer_branch
                  %4232 = sbr.rel target = $region75
                $region80: #{dann_forward.3} parent=65 // loop_exit
                  _
              $region66: #{dann_forward.3} parent=43 // pred_fallthru
                _
            $region44: #{dann_forward.3} parent=39 // pred_fallthru
              _
            // Predicated region
            $region45: #{dann_forward.3} parent=39 // pred_check
              _
            $region46: #{dann_forward.3} parent=39 // pred_check_branch
              %3903 = sbr.rel (0) target = $region48
            $region47: #{dann_forward.3} parent=39 // pred_region
              %s3905 = ssub.s32 16, 1
              %s3906 = sshrl.u32 %s3892, 6
              // While loop
              $region49: #{dann_forward.3} parent=47 // loop_pre_header
                _
              $region50: #{dann_forward.3} parent=47 // loop_header
                %s3908 = sphi 0, %s3910
                %p3909 = scmp.ge.s32.totalorder %s3908, %s3906
                %s3913 = sphi 0, %s4046
                %s3914 = sphi %s3885, %s4049
                %s3915 = sphi %s3896, %s4050
              $region51: #{dann_forward.3} parent=47 // loop_header_branch
                %3912 = sbr.rel (%p3909) target = $region55
              $region52: #{dann_forward.3} parent=47 // loop_body
                %v3916 = vld [vmem:[%s3914] sm:%s3905]
                %3917 = vst [vmem:[%s3915] sm:%s3905] %v3916
                %v3918 = vld [vmem:[%s3914 + $0x4] sm:%s3905]
                %3919 = vst [vmem:[%s3915 + $0x4] sm:%s3905] %v3918
                %v3920 = vld [vmem:[%s3914 + $0x8] sm:%s3905]
                %3921 = vst [vmem:[%s3915 + $0x8] sm:%s3905] %v3920
                %v3922 = vld [vmem:[%s3914 + $0xc] sm:%s3905]
                %3923 = vst [vmem:[%s3915 + $0xc] sm:%s3905] %v3922
                %v3924 = vld [vmem:[%s3914 + $0x10] sm:%s3905]
                %3925 = vst [vmem:[%s3915 + $0x10] sm:%s3905] %v3924
                %v3926 = vld [vmem:[%s3914 + $0x14] sm:%s3905]
                %3927 = vst [vmem:[%s3915 + $0x14] sm:%s3905] %v3926
                %v3928 = vld [vmem:[%s3914 + $0x18] sm:%s3905]
                %3929 = vst [vmem:[%s3915 + $0x18] sm:%s3905] %v3928
                %v3930 = vld [vmem:[%s3914 + $0x1c] sm:%s3905]
                %3931 = vst [vmem:[%s3915 + $0x1c] sm:%s3905] %v3930
                %v3932 = vld [vmem:[%s3914 + $0x20] sm:%s3905]
                %3933 = vst [vmem:[%s3915 + $0x20] sm:%s3905] %v3932
                %v3934 = vld [vmem:[%s3914 + $0x24] sm:%s3905]
                %3935 = vst [vmem:[%s3915 + $0x24] sm:%s3905] %v3934
                %v3936 = vld [vmem:[%s3914 + $0x28] sm:%s3905]
                %3937 = vst [vmem:[%s3915 + $0x28] sm:%s3905] %v3936
                %v3938 = vld [vmem:[%s3914 + $0x2c] sm:%s3905]
                %3939 = vst [vmem:[%s3915 + $0x2c] sm:%s3905] %v3938
                %v3940 = vld [vmem:[%s3914 + $0x30] sm:%s3905]
                %3941 = vst [vmem:[%s3915 + $0x30] sm:%s3905] %v3940
                %v3942 = vld [vmem:[%s3914 + $0x34] sm:%s3905]
                %3943 = vst [vmem:[%s3915 + $0x34] sm:%s3905] %v3942
                %v3944 = vld [vmem:[%s3914 + $0x38] sm:%s3905]
                %3945 = vst [vmem:[%s3915 + $0x38] sm:%s3905] %v3944
                %v3946 = vld [vmem:[%s3914 + $0x3c] sm:%s3905]
                %3947 = vst [vmem:[%s3915 + $0x3c] sm:%s3905] %v3946
                %v3948 = vld [vmem:[%s3914 + $0x40] sm:%s3905]
                %3949 = vst [vmem:[%s3915 + $0x40] sm:%s3905] %v3948
                %v3950 = vld [vmem:[%s3914 + $0x44] sm:%s3905]
                %3951 = vst [vmem:[%s3915 + $0x44] sm:%s3905] %v3950
                %v3952 = vld [vmem:[%s3914 + $0x48] sm:%s3905]
                %3953 = vst [vmem:[%s3915 + $0x48] sm:%s3905] %v3952
                %v3954 = vld [vmem:[%s3914 + $0x4c] sm:%s3905]
                %3955 = vst [vmem:[%s3915 + $0x4c] sm:%s3905] %v3954
                %v3956 = vld [vmem:[%s3914 + $0x50] sm:%s3905]
                %3957 = vst [vmem:[%s3915 + $0x50] sm:%s3905] %v3956
                %v3958 = vld [vmem:[%s3914 + $0x54] sm:%s3905]
                %3959 = vst [vmem:[%s3915 + $0x54] sm:%s3905] %v3958
                %v3960 = vld [vmem:[%s3914 + $0x58] sm:%s3905]
                %3961 = vst [vmem:[%s3915 + $0x58] sm:%s3905] %v3960
                %v3962 = vld [vmem:[%s3914 + $0x5c] sm:%s3905]
                %3963 = vst [vmem:[%s3915 + $0x5c] sm:%s3905] %v3962
                %v3964 = vld [vmem:[%s3914 + $0x60] sm:%s3905]
                %3965 = vst [vmem:[%s3915 + $0x60] sm:%s3905] %v3964
                %v3966 = vld [vmem:[%s3914 + $0x64] sm:%s3905]
                %3967 = vst [vmem:[%s3915 + $0x64] sm:%s3905] %v3966
                %v3968 = vld [vmem:[%s3914 + $0x68] sm:%s3905]
                %3969 = vst [vmem:[%s3915 + $0x68] sm:%s3905] %v3968
                %v3970 = vld [vmem:[%s3914 + $0x6c] sm:%s3905]
                %3971 = vst [vmem:[%s3915 + $0x6c] sm:%s3905] %v3970
                %v3972 = vld [vmem:[%s3914 + $0x70] sm:%s3905]
                %3973 = vst [vmem:[%s3915 + $0x70] sm:%s3905] %v3972
                %v3974 = vld [vmem:[%s3914 + $0x74] sm:%s3905]
                %3975 = vst [vmem:[%s3915 + $0x74] sm:%s3905] %v3974
                %v3976 = vld [vmem:[%s3914 + $0x78] sm:%s3905]
                %3977 = vst [vmem:[%s3915 + $0x78] sm:%s3905] %v3976
                %v3978 = vld [vmem:[%s3914 + $0x7c] sm:%s3905]
                %3979 = vst [vmem:[%s3915 + $0x7c] sm:%s3905] %v3978
                %v3980 = vld [vmem:[%s3914 + $0x80] sm:%s3905]
                %3981 = vst [vmem:[%s3915 + $0x80] sm:%s3905] %v3980
                %v3982 = vld [vmem:[%s3914 + $0x84] sm:%s3905]
                %3983 = vst [vmem:[%s3915 + $0x84] sm:%s3905] %v3982
                %v3984 = vld [vmem:[%s3914 + $0x88] sm:%s3905]
                %3985 = vst [vmem:[%s3915 + $0x88] sm:%s3905] %v3984
                %v3986 = vld [vmem:[%s3914 + $0x8c] sm:%s3905]
                %3987 = vst [vmem:[%s3915 + $0x8c] sm:%s3905] %v3986
                %v3988 = vld [vmem:[%s3914 + $0x90] sm:%s3905]
                %3989 = vst [vmem:[%s3915 + $0x90] sm:%s3905] %v3988
                %v3990 = vld [vmem:[%s3914 + $0x94] sm:%s3905]
                %3991 = vst [vmem:[%s3915 + $0x94] sm:%s3905] %v3990
                %v3992 = vld [vmem:[%s3914 + $0x98] sm:%s3905]
                %3993 = vst [vmem:[%s3915 + $0x98] sm:%s3905] %v3992
                %v3994 = vld [vmem:[%s3914 + $0x9c] sm:%s3905]
                %3995 = vst [vmem:[%s3915 + $0x9c] sm:%s3905] %v3994
                %v3996 = vld [vmem:[%s3914 + $0xa0] sm:%s3905]
                %3997 = vst [vmem:[%s3915 + $0xa0] sm:%s3905] %v3996
                %v3998 = vld [vmem:[%s3914 + $0xa4] sm:%s3905]
                %3999 = vst [vmem:[%s3915 + $0xa4] sm:%s3905] %v3998
                %v4000 = vld [vmem:[%s3914 + $0xa8] sm:%s3905]
                %4001 = vst [vmem:[%s3915 + $0xa8] sm:%s3905] %v4000
                %v4002 = vld [vmem:[%s3914 + $0xac] sm:%s3905]
                %4003 = vst [vmem:[%s3915 + $0xac] sm:%s3905] %v4002
                %v4004 = vld [vmem:[%s3914 + $0xb0] sm:%s3905]
                %4005 = vst [vmem:[%s3915 + $0xb0] sm:%s3905] %v4004
                %v4006 = vld [vmem:[%s3914 + $0xb4] sm:%s3905]
                %4007 = vst [vmem:[%s3915 + $0xb4] sm:%s3905] %v4006
                %v4008 = vld [vmem:[%s3914 + $0xb8] sm:%s3905]
                %4009 = vst [vmem:[%s3915 + $0xb8] sm:%s3905] %v4008
                %v4010 = vld [vmem:[%s3914 + $0xbc] sm:%s3905]
                %4011 = vst [vmem:[%s3915 + $0xbc] sm:%s3905] %v4010
                %v4012 = vld [vmem:[%s3914 + $0xc0] sm:%s3905]
                %4013 = vst [vmem:[%s3915 + $0xc0] sm:%s3905] %v4012
                %v4014 = vld [vmem:[%s3914 + $0xc4] sm:%s3905]
                %4015 = vst [vmem:[%s3915 + $0xc4] sm:%s3905] %v4014
                %v4016 = vld [vmem:[%s3914 + $0xc8] sm:%s3905]
                %4017 = vst [vmem:[%s3915 + $0xc8] sm:%s3905] %v4016
                %v4018 = vld [vmem:[%s3914 + $0xcc] sm:%s3905]
                %4019 = vst [vmem:[%s3915 + $0xcc] sm:%s3905] %v4018
                %v4020 = vld [vmem:[%s3914 + $0xd0] sm:%s3905]
                %4021 = vst [vmem:[%s3915 + $0xd0] sm:%s3905] %v4020
                %v4022 = vld [vmem:[%s3914 + $0xd4] sm:%s3905]
                %4023 = vst [vmem:[%s3915 + $0xd4] sm:%s3905] %v4022
                %v4024 = vld [vmem:[%s3914 + $0xd8] sm:%s3905]
                %4025 = vst [vmem:[%s3915 + $0xd8] sm:%s3905] %v4024
                %v4026 = vld [vmem:[%s3914 + $0xdc] sm:%s3905]
                %4027 = vst [vmem:[%s3915 + $0xdc] sm:%s3905] %v4026
                %v4028 = vld [vmem:[%s3914 + $0xe0] sm:%s3905]
                %4029 = vst [vmem:[%s3915 + $0xe0] sm:%s3905] %v4028
                %v4030 = vld [vmem:[%s3914 + $0xe4] sm:%s3905]
                %4031 = vst [vmem:[%s3915 + $0xe4] sm:%s3905] %v4030
                %v4032 = vld [vmem:[%s3914 + $0xe8] sm:%s3905]
                %4033 = vst [vmem:[%s3915 + $0xe8] sm:%s3905] %v4032
                %v4034 = vld [vmem:[%s3914 + $0xec] sm:%s3905]
                %4035 = vst [vmem:[%s3915 + $0xec] sm:%s3905] %v4034
                %v4036 = vld [vmem:[%s3914 + $0xf0] sm:%s3905]
                %4037 = vst [vmem:[%s3915 + $0xf0] sm:%s3905] %v4036
                %v4038 = vld [vmem:[%s3914 + $0xf4] sm:%s3905]
                %4039 = vst [vmem:[%s3915 + $0xf4] sm:%s3905] %v4038
                %v4040 = vld [vmem:[%s3914 + $0xf8] sm:%s3905]
                %4041 = vst [vmem:[%s3915 + $0xf8] sm:%s3905] %v4040
                %v4042 = vld [vmem:[%s3914 + $0xfc] sm:%s3905]
                %4043 = vst [vmem:[%s3915 + $0xfc] sm:%s3905] %v4042
                %s4044 = sadd.s32 1, %s3913
                %p4045 = scmp.ge.s32.totalorder %s4044, %s3906
                %s4046 = scalar_select %p4045, 0, %s4044
                %s4047 = smul.u32 %s4046, 256
                %s4048 = smul.u32 %s4046, 256
                %s4049 = scalar_lea.vmem %s3885, %s4047 [#allocation2]
                %s4050 = scalar_lea.vmem %s3896, %s4048
              $region53: #{dann_forward.3} parent=47 // loop_footer
                %s3910 = sadd.s32 %s3908, 1
              $region54: #{dann_forward.3} parent=47 // loop_footer_branch
                %3907 = sbr.rel target = $region50
              $region55: #{dann_forward.3} parent=47 // loop_exit
                _
              %s4051 = sshrl.u32 %s3892, 6
              %s4052 = sand.u32 %s3892, 63
              %s4053 = smul.u32 %s4051, 64
              %s4054 = smul.u32 4, %s4053
              %s4055 = scalar_lea.vmem %s3885, %s4054 [#allocation2]
              %s4056 = smul.u32 4, %s4053
              %s4057 = scalar_lea.vmem %s3896, %s4056
              // While loop
              $region56: #{dann_forward.3} parent=47 // loop_pre_header
                _
              $region57: #{dann_forward.3} parent=47 // loop_header
                %s4059 = sphi 0, %s4061
                %p4060 = scmp.ge.s32.totalorder %s4059, %s4052
                %s4064 = sphi 0, %s4071
                %s4065 = sphi %s4055, %s4074
                %s4066 = sphi %s4057, %s4075
              $region58: #{dann_forward.3} parent=47 // loop_header_branch
                %4063 = sbr.rel (%p4060) target = $region62
              $region59: #{dann_forward.3} parent=47 // loop_body
                %v4067 = vld [vmem:[%s4065] sm:%s3905]
                %4068 = vst [vmem:[%s4066] sm:%s3905] %v4067
                %s4069 = sadd.s32 1, %s4064
                %p4070 = scmp.ge.s32.totalorder %s4069, %s4052
                %s4071 = scalar_select %p4070, 0, %s4069
                %s4072 = smul.u32 %s4071, 4
                %s4073 = smul.u32 %s4071, 4
                %s4074 = scalar_lea.vmem %s4055, %s4072 [#allocation2]
                %s4075 = scalar_lea.vmem %s4057, %s4073
              $region60: #{dann_forward.3} parent=47 // loop_footer
                %s4061 = sadd.s32 %s4059, 1
              $region61: #{dann_forward.3} parent=47 // loop_footer_branch
                %4058 = sbr.rel target = $region57
              $region62: #{dann_forward.3} parent=47 // loop_exit
                _
            $region48: #{dann_forward.3} parent=39 // pred_fallthru
              _
          $region40: #{dann_forward.3} parent=35 // pred_fallthru
            _
          %4250 = vnop
        $region36: #{dann_forward.3} parent=31 // pred_fallthru
          _
      $region32: #{dann_forward.3} parent=5 // pred_fallthru
        _
      %p4251 = scmp.le.s32.totalorder 2, %s9
      // Predicated region
      $region81: #{dann_forward.3} parent=5 // pred_check
        %p4252 = pneg %p4251
      $region82: #{dann_forward.3} parent=5 // pred_check_branch
        %4254 = sbr.rel (%p4252) target = $region84
      $region83: #{dann_forward.3} parent=5 // pred_region
        %s4255 = ssub.s32 %s9, 2
        // Predicated region
        $region85: #{dann_forward.3} parent=83 // pred_check
          %p4256 = pneg %p106
        $region86: #{dann_forward.3} parent=83 // pred_check_branch
          %4258 = sbr.rel (%p4256) target = $region88
        $region87: #{dann_forward.3} parent=83 // pred_region
          %s4259 = sand.u32 %s91, 1
          %s4260 = sand.u32 %s91, 1
          %s4261 = smul.addr %s4260, 1024
          %s4262 = scalar_lea.vmem [#allocation2], %s4261
        $region88: #{dann_forward.3} parent=83 // pred_fallthru
          _
      $region84: #{dann_forward.3} parent=5 // pred_fallthru
        _
    $region6: #{dann_forward.3} parent=1 // loop_footer
      %s13 = sadd.s32 1, %s9
    $region7: #{dann_forward.3} parent=1 // loop_footer_branch
      %8 = sbr.rel target = $region3
    $region8: #{dann_forward.3} parent=1 // loop_exit
      _

// kernel: dann_forward.4
$region0: #{dann_forward.4}
  #allocation0 [shape = 'u32[]', space=smem, size = 0x4, offset = 0x4, fixed_abs, tag = 'smem constant byte address 0x4 - core index']
  #allocation1 [shape = 'u32[144,128]{1,0:T(1,128)}', space=vmem, size = 0x12000, scoped, tag = 'internal scratch']
  %s0 = inlined_call_operand.vmem [shape: bf16[242,1664], index: 0, kind: input, shape index: {}]
  %s1 = inlined_call_operand.vmem [shape: bf16[1664,64], index: 1, kind: input, shape index: {}]
  %s2 = inlined_call_operand.vmem [shape: f32[1,64], index: 2, kind: input, shape index: {}]
  %s3 = inlined_call_operand.vmem [shape: bf16[242,64], index: 3, kind: output, shape index: {}]
  %s4 = sld [smem:[#allocation0]]
  $region59: #{dann_forward.4} parent=0
    _
  %s6 = ssub.s32 1, %s4
  %s7 = scalar_select 0, %s6, %s4
  $region1: #{dann_forward.4} parent=0
    #allocation2 [shape = 'u8[65536]{0}', space=vmem, size = 0x10000, scoped, tag = 'output window, operand 0, single buffered']
    // Predicated region
    $region2: #{dann_forward.4} parent=1 // pred_check
      _
    $region3: #{dann_forward.4} parent=1 // pred_check_branch
      %9 = sbr.rel (0) target = $region5
    $region4: #{dann_forward.4} parent=1 // pred_region
      _
    $region5: #{dann_forward.4} parent=1 // pred_fallthru
      _
    // Predicated region
    $region6: #{dann_forward.4} parent=1 // pred_check
      _
    $region7: #{dann_forward.4} parent=1 // pred_check_branch
      %11 = sbr.rel (0) target = $region9
    $region8: #{dann_forward.4} parent=1 // pred_region
      _
    $region9: #{dann_forward.4} parent=1 // pred_fallthru
      _
    // Predicated region
    $region10: #{dann_forward.4} parent=1 // pred_check
      _
    $region11: #{dann_forward.4} parent=1 // pred_check_branch
      %13 = sbr.rel (0) target = $region13
    $region12: #{dann_forward.4} parent=1 // pred_region
      _
    $region13: #{dann_forward.4} parent=1 // pred_fallthru
      _
    %v15 = vld [vmem:[%s0] sm:$0xff]
    %v16 = vld [vmem:[%s0 + $0x8] sm:$0xff]
    %v17 = vld [vmem:[%s0 + $0x10] sm:$0xff]
    %v18 = vld [vmem:[%s0 + $0x18] sm:$0xff]
    %v19 = vld [vmem:[%s0 + $0x20] sm:$0xff]
    %v20 = vld [vmem:[%s0 + $0x28] sm:$0xff]
    %v21 = vld [vmem:[%s0 + $0x30] sm:$0xf]
    %v22 = vld [vmem:[%s0 + $0x34] sm:$0xff]
    %v23 = vld [vmem:[%s0 + $0x3c] sm:$0xff]
    %v24 = vld [vmem:[%s0 + $0x44] sm:$0xff]
    %v25 = vld [vmem:[%s0 + $0x4c] sm:$0xff]
    %v26 = vld [vmem:[%s0 + $0x54] sm:$0xff]
    %v27 = vld [vmem:[%s0 + $0x5c] sm:$0xff]
    %v28 = vld [vmem:[%s0 + $0x64] sm:$0xf]
    %v29 = vld [vmem:[%s0 + $0x68] sm:$0xff]
    %v30 = vld [vmem:[%s0 + $0x70] sm:$0xff]
    %v31 = vld [vmem:[%s0 + $0x78] sm:$0xff]
    %v32 = vld [vmem:[%s0 + $0x80] sm:$0xff]
    %v33 = vld [vmem:[%s0 + $0x88] sm:$0xff]
    %v34 = vld [vmem:[%s0 + $0x90] sm:$0xff]
    %v35 = vld [vmem:[%s0 + $0x98] sm:$0xf]
    %v36 = vld [vmem:[%s0 + $0x9c] sm:$0xff]
    %v37 = vld [vmem:[%s0 + $0xa4] sm:$0xff]
    %v38 = vld [vmem:[%s0 + $0xac] sm:$0xff]
    %v39 = vld [vmem:[%s0 + $0xb4] sm:$0xff]
    %v40 = vld [vmem:[%s0 + $0xbc] sm:$0xff]
    %v41 = vld [vmem:[%s0 + $0xc4] sm:$0xff]
    %v42 = vld [vmem:[%s0 + $0xcc] sm:$0xf]
    %v43 = vld [vmem:[%s0 + $0xd0] sm:$0xff]
    %v44 = vld [vmem:[%s0 + $0xd8] sm:$0xff]
    %v45 = vld [vmem:[%s0 + $0xe0] sm:$0xff]
    %v46 = vld [vmem:[%s0 + $0xe8] sm:$0xff]
    %v47 = vld [vmem:[%s0 + $0xf0] sm:$0xff]
    %v48 = vld [vmem:[%s0 + $0xf8] sm:$0xff]
    %v49 = vld [vmem:[%s0 + $0x100] sm:$0xf]
    %v50 = vld [vmem:[%s0 + $0x104] sm:$0xff]
    %v51 = vld [vmem:[%s0 + $0x10c] sm:$0xff]
    %v52 = vld [vmem:[%s0 + $0x114] sm:$0xff]
    %v53 = vld [vmem:[%s0 + $0x11c] sm:$0xff]
    %v54 = vld [vmem:[%s0 + $0x124] sm:$0xff]
    %v55 = vld [vmem:[%s0 + $0x12c] sm:$0xff]
    %v56 = vld [vmem:[%s0 + $0x134] sm:$0xf]
    %v57 = vld [vmem:[%s0 + $0x138] sm:$0xff]
    %v58 = vld [vmem:[%s0 + $0x140] sm:$0xff]
    %v59 = vld [vmem:[%s0 + $0x148] sm:$0xff]
    %v60 = vld [vmem:[%s0 + $0x150] sm:$0xff]
    %v61 = vld [vmem:[%s0 + $0x158] sm:$0xff]
    %v62 = vld [vmem:[%s0 + $0x160] sm:$0xff]
    %v63 = vld [vmem:[%s0 + $0x168] sm:$0xf]
    %v64 = vld [vmem:[%s0 + $0x16c] sm:$0xff]
    %v65 = vld [vmem:[%s0 + $0x174] sm:$0xff]
    %v66 = vld [vmem:[%s0 + $0x17c] sm:$0xff]
    %v67 = vld [vmem:[%s0 + $0x184] sm:$0xff]
    %v68 = vld [vmem:[%s0 + $0x18c] sm:$0xff]
    %v69 = vld [vmem:[%s0 + $0x194] sm:$0xff]
    %v70 = vld [vmem:[%s0 + $0x19c] sm:$0xf]
    %v71 = vld [vmem:[%s0 + $0x1a0] sm:$0xff]
    %v72 = vld [vmem:[%s0 + $0x1a8] sm:$0xff]
    %v73 = vld [vmem:[%s0 + $0x1b0] sm:$0xff]
    %v74 = vld [vmem:[%s0 + $0x1b8] sm:$0xff]
    %v75 = vld [vmem:[%s0 + $0x1c0] sm:$0xff]
    %v76 = vld [vmem:[%s0 + $0x1c8] sm:$0xff]
    %v77 = vld [vmem:[%s0 + $0x1d0] sm:$0xf]
    %v78 = vld [vmem:[%s0 + $0x1d4] sm:$0xff]
    %v79 = vld [vmem:[%s0 + $0x1dc] sm:$0xff]
    %v80 = vld [vmem:[%s0 + $0x1e4] sm:$0xff]
    %v81 = vld [vmem:[%s0 + $0x1ec] sm:$0xff]
    %v82 = vld [vmem:[%s0 + $0x1f4] sm:$0xff]
    %v83 = vld [vmem:[%s0 + $0x1fc] sm:$0xff]
    %v84 = vld [vmem:[%s0 + $0x204] sm:$0xf]
    %v85 = vld [vmem:[%s0 + $0x208] sm:$0xff]
    %v86 = vld [vmem:[%s0 + $0x210] sm:$0xff]
    %v87 = vld [vmem:[%s0 + $0x218] sm:$0xff]
    %v88 = vld [vmem:[%s0 + $0x220] sm:$0xff]
    %v89 = vld [vmem:[%s0 + $0x228] sm:$0xff]
    %v90 = vld [vmem:[%s0 + $0x230] sm:$0xff]
    %v91 = vld [vmem:[%s0 + $0x238] sm:$0xf]
    %v92 = vld [vmem:[%s0 + $0x23c] sm:$0xff]
    %v93 = vld [vmem:[%s0 + $0x244] sm:$0xff]
    %v94 = vld [vmem:[%s0 + $0x24c] sm:$0xff]
    %v95 = vld [vmem:[%s0 + $0x254] sm:$0xff]
    %v96 = vld [vmem:[%s0 + $0x25c] sm:$0xff]
    %v97 = vld [vmem:[%s0 + $0x264] sm:$0xff]
    %v98 = vld [vmem:[%s0 + $0x26c] sm:$0xf]
    %v99 = vld [vmem:[%s0 + $0x270] sm:$0xff]
    %v100 = vld [vmem:[%s0 + $0x278] sm:$0xff]
    %v101 = vld [vmem:[%s0 + $0x280] sm:$0xff]
    %v102 = vld [vmem:[%s0 + $0x288] sm:$0xff]
    %v103 = vld [vmem:[%s0 + $0x290] sm:$0xff]
    %v104 = vld [vmem:[%s0 + $0x298] sm:$0xff]
    %v105 = vld [vmem:[%s0 + $0x2a0] sm:$0xf]
    %v106 = vld [vmem:[%s0 + $0x2a4] sm:$0xff]
    %v107 = vld [vmem:[%s0 + $0x2ac] sm:$0xff]
    %v108 = vld [vmem:[%s0 + $0x2b4] sm:$0xff]
    %v109 = vld [vmem:[%s0 + $0x2bc] sm:$0xff]
    %v110 = vld [vmem:[%s0 + $0x2c4] sm:$0xff]
    %v111 = vld [vmem:[%s0 + $0x2cc] sm:$0xff]
    %v112 = vld [vmem:[%s0 + $0x2d4] sm:$0xf]
    %v113 = vld [vmem:[%s0 + $0x2d8] sm:$0xff]
    %v114 = vld [vmem:[%s0 + $0x2e0] sm:$0xff]
    %v115 = vld [vmem:[%s0 + $0x2e8] sm:$0xff]
    %v116 = vld [vmem:[%s0 + $0x2f0] sm:$0xff]
    %v117 = vld [vmem:[%s0 + $0x2f8] sm:$0xff]
    %v118 = vld [vmem:[%s0 + $0x300] sm:$0xff]
    %v119 = vld [vmem:[%s0 + $0x308] sm:$0xf]
    %v120 = vld [vmem:[%s0 + $0x30c] sm:$0xff]
    %v121 = vld [vmem:[%s0 + $0x314] sm:$0xff]
    %v122 = vld [vmem:[%s0 + $0x31c] sm:$0xff]
    %v123 = vld [vmem:[%s0 + $0x324] sm:$0xff]
    %v124 = vld [vmem:[%s0 + $0x32c] sm:$0xff]
    %v125 = vld [vmem:[%s0 + $0x334] sm:$0xff]
    %v126 = vld [vmem:[%s0 + $0x33c] sm:$0xf]
    %v127 = vld [vmem:[%s0 + $0x340] sm:$0xff]
    %v128 = vld [vmem:[%s0 + $0x348] sm:$0xff]
    %v129 = vld [vmem:[%s0 + $0x350] sm:$0xff]
    %v130 = vld [vmem:[%s0 + $0x358] sm:$0xff]
    %v131 = vld [vmem:[%s0 + $0x360] sm:$0xff]
    %v132 = vld [vmem:[%s0 + $0x368] sm:$0xff]
    %v133 = vld [vmem:[%s0 + $0x370] sm:$0xf]
    %v134 = vld [vmem:[%s0 + $0x374] sm:$0xff]
    %v135 = vld [vmem:[%s0 + $0x37c] sm:$0xff]
    %v136 = vld [vmem:[%s0 + $0x384] sm:$0xff]
    %v137 = vld [vmem:[%s0 + $0x38c] sm:$0xff]
    %v138 = vld [vmem:[%s0 + $0x394] sm:$0xff]
    %v139 = vld [vmem:[%s0 + $0x39c] sm:$0xff]
    %v140 = vld [vmem:[%s0 + $0x3a4] sm:$0xf]
    %v141 = vld [vmem:[%s0 + $0x3a8] sm:$0xff]
    %v142 = vld [vmem:[%s0 + $0x3b0] sm:$0xff]
    %v143 = vld [vmem:[%s0 + $0x3b8] sm:$0xff]
    %v144 = vld [vmem:[%s0 + $0x3c0] sm:$0xff]
    %v145 = vld [vmem:[%s0 + $0x3c8] sm:$0xff]
    %v146 = vld [vmem:[%s0 + $0x3d0] sm:$0xff]
    %v147 = vld [vmem:[%s0 + $0x3d8] sm:$0xf]
    %v148 = vld [vmem:[%s0 + $0x3dc] sm:$0xff]
    %v149 = vld [vmem:[%s0 + $0x3e4] sm:$0xff]
    %v150 = vld [vmem:[%s0 + $0x3ec] sm:$0xff]
    %v151 = vld [vmem:[%s0 + $0x3f4] sm:$0xff]
    %v152 = vld [vmem:[%s0 + $0x3fc] sm:$0xff]
    %v153 = vld [vmem:[%s0 + $0x404] sm:$0xff]
    %v154 = vld [vmem:[%s0 + $0x40c] sm:$0xf]
    %v155 = vld [vmem:[%s0 + $0x410] sm:$0xff]
    %v156 = vld [vmem:[%s0 + $0x418] sm:$0xff]
    %v157 = vld [vmem:[%s0 + $0x420] sm:$0xff]
    %v158 = vld [vmem:[%s0 + $0x428] sm:$0xff]
    %v159 = vld [vmem:[%s0 + $0x430] sm:$0xff]
    %v160 = vld [vmem:[%s0 + $0x438] sm:$0xff]
    %v161 = vld [vmem:[%s0 + $0x440] sm:$0xf]
    %v162 = vld [vmem:[%s0 + $0x444] sm:$0xff]
    %v163 = vld [vmem:[%s0 + $0x44c] sm:$0xff]
    %v164 = vld [vmem:[%s0 + $0x454] sm:$0xff]
    %v165 = vld [vmem:[%s0 + $0x45c] sm:$0xff]
    %v166 = vld [vmem:[%s0 + $0x464] sm:$0xff]
    %v167 = vld [vmem:[%s0 + $0x46c] sm:$0xff]
    %v168 = vld [vmem:[%s0 + $0x474] sm:$0xf]
    %v169 = vld [vmem:[%s0 + $0x478] sm:$0xff]
    %v170 = vld [vmem:[%s0 + $0x480] sm:$0xff]
    %v171 = vld [vmem:[%s0 + $0x488] sm:$0xff]
    %v172 = vld [vmem:[%s0 + $0x490] sm:$0xff]
    %v173 = vld [vmem:[%s0 + $0x498] sm:$0xff]
    %v174 = vld [vmem:[%s0 + $0x4a0] sm:$0xff]
    %v175 = vld [vmem:[%s0 + $0x4a8] sm:$0xf]
    %v176 = vld [vmem:[%s0 + $0x4ac] sm:$0xff]
    %v177 = vld [vmem:[%s0 + $0x4b4] sm:$0xff]
    %v178 = vld [vmem:[%s0 + $0x4bc] sm:$0xff]
    %v179 = vld [vmem:[%s0 + $0x4c4] sm:$0xff]
    %v180 = vld [vmem:[%s0 + $0x4cc] sm:$0xff]
    %v181 = vld [vmem:[%s0 + $0x4d4] sm:$0xff]
    %v182 = vld [vmem:[%s0 + $0x4dc] sm:$0xf]
    %v183 = vld [vmem:[%s0 + $0x4e0] sm:$0xff]
    %v184 = vld [vmem:[%s0 + $0x4e8] sm:$0xff]
    %v185 = vld [vmem:[%s0 + $0x4f0] sm:$0xff]
    %v186 = vld [vmem:[%s0 + $0x4f8] sm:$0xff]
    %v187 = vld [vmem:[%s0 + $0x500] sm:$0xff]
    %v188 = vld [vmem:[%s0 + $0x508] sm:$0xff]
    %v189 = vld [vmem:[%s0 + $0x510] sm:$0xf]
    %v190 = vld [vmem:[%s0 + $0x514] sm:$0xff]
    %v191 = vld [vmem:[%s0 + $0x51c] sm:$0xff]
    %v192 = vld [vmem:[%s0 + $0x524] sm:$0xff]
    %v193 = vld [vmem:[%s0 + $0x52c] sm:$0xff]
    %v194 = vld [vmem:[%s0 + $0x534] sm:$0xff]
    %v195 = vld [vmem:[%s0 + $0x53c] sm:$0xff]
    %v196 = vld [vmem:[%s0 + $0x544] sm:$0xf]
    %v197 = vld [vmem:[%s0 + $0x548] sm:$0xff]
    %v198 = vld [vmem:[%s0 + $0x550] sm:$0xff]
    %v199 = vld [vmem:[%s0 + $0x558] sm:$0xff]
    %v200 = vld [vmem:[%s0 + $0x560] sm:$0xff]
    %v201 = vld [vmem:[%s0 + $0x568] sm:$0xff]
    %v202 = vld [vmem:[%s0 + $0x570] sm:$0xff]
    %v203 = vld [vmem:[%s0 + $0x578] sm:$0xf]
    %v204 = vld [vmem:[%s0 + $0x57c] sm:$0xff]
    %v205 = vld [vmem:[%s0 + $0x584] sm:$0xff]
    %v206 = vld [vmem:[%s0 + $0x58c] sm:$0xff]
    %v207 = vld [vmem:[%s0 + $0x594] sm:$0xff]
    %v208 = vld [vmem:[%s0 + $0x59c] sm:$0xff]
    %v209 = vld [vmem:[%s0 + $0x5a4] sm:$0xff]
    %v210 = vld [vmem:[%s0 + $0x5ac] sm:$0xf]
    %v211 = vld [vmem:[%s0 + $0x5b0] sm:$0xff]
    %v212 = vld [vmem:[%s0 + $0x5b8] sm:$0xff]
    %v213 = vld [vmem:[%s0 + $0x5c0] sm:$0xff]
    %v214 = vld [vmem:[%s0 + $0x5c8] sm:$0xff]
    %v215 = vld [vmem:[%s0 + $0x5d0] sm:$0xff]
    %v216 = vld [vmem:[%s0 + $0x5d8] sm:$0xff]
    %v217 = vld [vmem:[%s0 + $0x5e0] sm:$0xf]
    %v218 = vld [vmem:[%s0 + $0x5e4] sm:$0xff]
    %v219 = vld [vmem:[%s0 + $0x5ec] sm:$0xff]
    %v220 = vld [vmem:[%s0 + $0x5f4] sm:$0xff]
    %v221 = vld [vmem:[%s0 + $0x5fc] sm:$0xff]
    %v222 = vld [vmem:[%s0 + $0x604] sm:$0xff]
    %v223 = vld [vmem:[%s0 + $0x60c] sm:$0xff]
    %v224 = vld [vmem:[%s0 + $0x614] sm:$0xf]
    %v225 = vld [vmem:[%s0 + $0x618] sm:$0xff]
    %v226 = vld [vmem:[%s0 + $0x620] sm:$0xff]
    %v227 = vld [vmem:[%s0 + $0x628] sm:$0xff]
    %v228 = vld [vmem:[%s0 + $0x630] sm:$0xff]
    %v229 = vld [vmem:[%s0 + $0x638] sm:$0xff]
    %v230 = vld [vmem:[%s0 + $0x640] sm:$0xff]
    %v231 = vld [vmem:[%s0 + $0x648] sm:$0xf]
    %v232 = vld [vmem:[%s0 + $0x64c] sm:$0xff]
    %v233 = vld [vmem:[%s0 + $0x654] sm:$0xff]
    %v234 = vld [vmem:[%s0 + $0x65c] sm:$0xff]
    %v235 = vld [vmem:[%s0 + $0x664] sm:$0xff]
    %v236 = vld [vmem:[%s0 + $0x66c] sm:$0xff]
    %v237 = vld [vmem:[%s0 + $0x674] sm:$0xff]
    %v238 = vld [vmem:[%s0 + $0x67c] sm:$0xf]
    %v239 = vld [vmem:[%s1] sm:$0xf]
    %v240 = vld [vmem:[%s1 + $0x4] sm:$0xf]
    %v241 = vld [vmem:[%s1 + $0x8] sm:$0xf]
    %v242 = vld [vmem:[%s1 + $0xc] sm:$0xf]
    %v243 = vld [vmem:[%s1 + $0x10] sm:$0xf]
    %v244 = vld [vmem:[%s1 + $0x14] sm:$0xf]
    %v245 = vld [vmem:[%s1 + $0x18] sm:$0xf]
    %v246 = vld [vmem:[%s1 + $0x1c] sm:$0xf]
    %v247 = vld [vmem:[%s1 + $0x20] sm:$0xf]
    %v248 = vld [vmem:[%s1 + $0x24] sm:$0xf]
    %v249 = vld [vmem:[%s1 + $0x28] sm:$0xf]
    %v250 = vld [vmem:[%s1 + $0x2c] sm:$0xf]
    %v251 = vld [vmem:[%s1 + $0x30] sm:$0xf]
    %v252 = vld [vmem:[%s1 + $0x34] sm:$0xf]
    %v253 = vld [vmem:[%s1 + $0x38] sm:$0xf]
    %v254 = vld [vmem:[%s1 + $0x3c] sm:$0xf]
    %v255 = vld [vmem:[%s1 + $0x40] sm:$0xf]
    %v256 = vld [vmem:[%s1 + $0x44] sm:$0xf]
    %v257 = vld [vmem:[%s1 + $0x48] sm:$0xf]
    %v258 = vld [vmem:[%s1 + $0x4c] sm:$0xf]
    %v259 = vld [vmem:[%s1 + $0x50] sm:$0xf]
    %v260 = vld [vmem:[%s1 + $0x54] sm:$0xf]
    %v261 = vld [vmem:[%s1 + $0x58] sm:$0xf]
    %v262 = vld [vmem:[%s1 + $0x5c] sm:$0xf]
    %v263 = vld [vmem:[%s1 + $0x60] sm:$0xf]
    %v264 = vld [vmem:[%s1 + $0x64] sm:$0xf]
    %v265 = vld [vmem:[%s1 + $0x68] sm:$0xf]
    %v266 = vld [vmem:[%s1 + $0x6c] sm:$0xf]
    %v267 = vld [vmem:[%s1 + $0x70] sm:$0xf]
    %v268 = vld [vmem:[%s1 + $0x74] sm:$0xf]
    %v269 = vld [vmem:[%s1 + $0x78] sm:$0xf]
    %v270 = vld [vmem:[%s1 + $0x7c] sm:$0xf]
    %v271 = vld [vmem:[%s1 + $0x80] sm:$0xf]
    %v272 = vld [vmem:[%s1 + $0x84] sm:$0xf]
    %v273 = vld [vmem:[%s1 + $0x88] sm:$0xf]
    %v274 = vld [vmem:[%s1 + $0x8c] sm:$0xf]
    %v275 = vld [vmem:[%s1 + $0x90] sm:$0xf]
    %v276 = vld [vmem:[%s1 + $0x94] sm:$0xf]
    %v277 = vld [vmem:[%s1 + $0x98] sm:$0xf]
    %v278 = vld [vmem:[%s1 + $0x9c] sm:$0xf]
    %v279 = vld [vmem:[%s1 + $0xa0] sm:$0xf]
    %v280 = vld [vmem:[%s1 + $0xa4] sm:$0xf]
    %v281 = vld [vmem:[%s1 + $0xa8] sm:$0xf]
    %v282 = vld [vmem:[%s1 + $0xac] sm:$0xf]
    %v283 = vld [vmem:[%s1 + $0xb0] sm:$0xf]
    %v284 = vld [vmem:[%s1 + $0xb4] sm:$0xf]
    %v285 = vld [vmem:[%s1 + $0xb8] sm:$0xf]
    %v286 = vld [vmem:[%s1 + $0xbc] sm:$0xf]
    %v287 = vld [vmem:[%s1 + $0xc0] sm:$0xf]
    %v288 = vld [vmem:[%s1 + $0xc4] sm:$0xf]
    %v289 = vld [vmem:[%s1 + $0xc8] sm:$0xf]
    %v290 = vld [vmem:[%s1 + $0xcc] sm:$0xf]
    %v291 = vld [vmem:[%s1 + $0xd0] sm:$0xf]
    %v292 = vld [vmem:[%s1 + $0xd4] sm:$0xf]
    %v293 = vld [vmem:[%s1 + $0xd8] sm:$0xf]
    %v294 = vld [vmem:[%s1 + $0xdc] sm:$0xf]
    %v295 = vld [vmem:[%s1 + $0xe0] sm:$0xf]
    %v296 = vld [vmem:[%s1 + $0xe4] sm:$0xf]
    %v297 = vld [vmem:[%s1 + $0xe8] sm:$0xf]
    %v298 = vld [vmem:[%s1 + $0xec] sm:$0xf]
    %v299 = vld [vmem:[%s1 + $0xf0] sm:$0xf]
    %v300 = vld [vmem:[%s1 + $0xf4] sm:$0xf]
    %v301 = vld [vmem:[%s1 + $0xf8] sm:$0xf]
    %v302 = vld [vmem:[%s1 + $0xfc] sm:$0xf]
    %v303 = vld [vmem:[%s1 + $0x100] sm:$0xf]
    %v304 = vld [vmem:[%s1 + $0x104] sm:$0xf]
    %v305 = vld [vmem:[%s1 + $0x108] sm:$0xf]
    %v306 = vld [vmem:[%s1 + $0x10c] sm:$0xf]
    %v307 = vld [vmem:[%s1 + $0x110] sm:$0xf]
    %v308 = vld [vmem:[%s1 + $0x114] sm:$0xf]
    %v309 = vld [vmem:[%s1 + $0x118] sm:$0xf]
    %v310 = vld [vmem:[%s1 + $0x11c] sm:$0xf]
    %v311 = vld [vmem:[%s1 + $0x120] sm:$0xf]
    %v312 = vld [vmem:[%s1 + $0x124] sm:$0xf]
    %v313 = vld [vmem:[%s1 + $0x128] sm:$0xf]
    %v314 = vld [vmem:[%s1 + $0x12c] sm:$0xf]
    %v315 = vld [vmem:[%s1 + $0x130] sm:$0xf]
    %v316 = vld [vmem:[%s1 + $0x134] sm:$0xf]
    %v317 = vld [vmem:[%s1 + $0x138] sm:$0xf]
    %v318 = vld [vmem:[%s1 + $0x13c] sm:$0xf]
    %v319 = vld [vmem:[%s1 + $0x140] sm:$0xf]
    %v320 = vld [vmem:[%s1 + $0x144] sm:$0xf]
    %v321 = vld [vmem:[%s1 + $0x148] sm:$0xf]
    %v322 = vld [vmem:[%s1 + $0x14c] sm:$0xf]
    %v323 = vld [vmem:[%s1 + $0x150] sm:$0xf]
    %v324 = vld [vmem:[%s1 + $0x154] sm:$0xf]
    %v325 = vld [vmem:[%s1 + $0x158] sm:$0xf]
    %v326 = vld [vmem:[%s1 + $0x15c] sm:$0xf]
    %v327 = vld [vmem:[%s1 + $0x160] sm:$0xf]
    %v328 = vld [vmem:[%s1 + $0x164] sm:$0xf]
    %v329 = vld [vmem:[%s1 + $0x168] sm:$0xf]
    %v330 = vld [vmem:[%s1 + $0x16c] sm:$0xf]
    %v331 = vld [vmem:[%s1 + $0x170] sm:$0xf]
    %v332 = vld [vmem:[%s1 + $0x174] sm:$0xf]
    %v333 = vld [vmem:[%s1 + $0x178] sm:$0xf]
    %v334 = vld [vmem:[%s1 + $0x17c] sm:$0xf]
    %v335 = vld [vmem:[%s1 + $0x180] sm:$0xf]
    %v336 = vld [vmem:[%s1 + $0x184] sm:$0xf]
    %v337 = vld [vmem:[%s1 + $0x188] sm:$0xf]
    %v338 = vld [vmem:[%s1 + $0x18c] sm:$0xf]
    %v339 = vld [vmem:[%s1 + $0x190] sm:$0xf]
    %v340 = vld [vmem:[%s1 + $0x194] sm:$0xf]
    %v341 = vld [vmem:[%s1 + $0x198] sm:$0xf]
    %v342 = vld [vmem:[%s1 + $0x19c] sm:$0xf]
    %v343 = vld [vmem:[%s1 + $0x1a0] sm:$0xf]
    %v344 = vld [vmem:[%s1 + $0x1a4] sm:$0xf]
    %v345 = vld [vmem:[%s1 + $0x1a8] sm:$0xf]
    %v346 = vld [vmem:[%s1 + $0x1ac] sm:$0xf]
    %v347 = vld [vmem:[%s1 + $0x1b0] sm:$0xf]
    %v348 = vld [vmem:[%s1 + $0x1b4] sm:$0xf]
    %v349 = vld [vmem:[%s1 + $0x1b8] sm:$0xf]
    %v350 = vld [vmem:[%s1 + $0x1bc] sm:$0xf]
    %v351 = vld [vmem:[%s1 + $0x1c0] sm:$0xf]
    %v352 = vld [vmem:[%s1 + $0x1c4] sm:$0xf]
    %v353 = vld [vmem:[%s1 + $0x1c8] sm:$0xf]
    %v354 = vld [vmem:[%s1 + $0x1cc] sm:$0xf]
    %v355 = vld [vmem:[%s1 + $0x1d0] sm:$0xf]
    %v356 = vld [vmem:[%s1 + $0x1d4] sm:$0xf]
    %v357 = vld [vmem:[%s1 + $0x1d8] sm:$0xf]
    %v358 = vld [vmem:[%s1 + $0x1dc] sm:$0xf]
    %v359 = vld [vmem:[%s1 + $0x1e0] sm:$0xf]
    %v360 = vld [vmem:[%s1 + $0x1e4] sm:$0xf]
    %v361 = vld [vmem:[%s1 + $0x1e8] sm:$0xf]
    %v362 = vld [vmem:[%s1 + $0x1ec] sm:$0xf]
    %v363 = vld [vmem:[%s1 + $0x1f0] sm:$0xf]
    %v364 = vld [vmem:[%s1 + $0x1f4] sm:$0xf]
    %v365 = vld [vmem:[%s1 + $0x1f8] sm:$0xf]
    %v366 = vld [vmem:[%s1 + $0x1fc] sm:$0xf]
    %v367 = vld [vmem:[%s1 + $0x200] sm:$0xf]
    %v368 = vld [vmem:[%s1 + $0x204] sm:$0xf]
    %v369 = vld [vmem:[%s1 + $0x208] sm:$0xf]
    %v370 = vld [vmem:[%s1 + $0x20c] sm:$0xf]
    %v371 = vld [vmem:[%s1 + $0x210] sm:$0xf]
    %v372 = vld [vmem:[%s1 + $0x214] sm:$0xf]
    %v373 = vld [vmem:[%s1 + $0x218] sm:$0xf]
    %v374 = vld [vmem:[%s1 + $0x21c] sm:$0xf]
    %v375 = vld [vmem:[%s1 + $0x220] sm:$0xf]
    %v376 = vld [vmem:[%s1 + $0x224] sm:$0xf]
    %v377 = vld [vmem:[%s1 + $0x228] sm:$0xf]
    %v378 = vld [vmem:[%s1 + $0x22c] sm:$0xf]
    %v379 = vld [vmem:[%s1 + $0x230] sm:$0xf]
    %v380 = vld [vmem:[%s1 + $0x234] sm:$0xf]
    %v381 = vld [vmem:[%s1 + $0x238] sm:$0xf]
    %v382 = vld [vmem:[%s1 + $0x23c] sm:$0xf]
    %v383 = vld [vmem:[%s1 + $0x240] sm:$0xf]
    %v384 = vld [vmem:[%s1 + $0x244] sm:$0xf]
    %v385 = vld [vmem:[%s1 + $0x248] sm:$0xf]
    %v386 = vld [vmem:[%s1 + $0x24c] sm:$0xf]
    %v387 = vld [vmem:[%s1 + $0x250] sm:$0xf]
    %v388 = vld [vmem:[%s1 + $0x254] sm:$0xf]
    %v389 = vld [vmem:[%s1 + $0x258] sm:$0xf]
    %v390 = vld [vmem:[%s1 + $0x25c] sm:$0xf]
    %v391 = vld [vmem:[%s1 + $0x260] sm:$0xf]
    %v392 = vld [vmem:[%s1 + $0x264] sm:$0xf]
    %v393 = vld [vmem:[%s1 + $0x268] sm:$0xf]
    %v394 = vld [vmem:[%s1 + $0x26c] sm:$0xf]
    %v395 = vld [vmem:[%s1 + $0x270] sm:$0xf]
    %v396 = vld [vmem:[%s1 + $0x274] sm:$0xf]
    %v397 = vld [vmem:[%s1 + $0x278] sm:$0xf]
    %v398 = vld [vmem:[%s1 + $0x27c] sm:$0xf]
    %v399 = vld [vmem:[%s1 + $0x280] sm:$0xf]
    %v400 = vld [vmem:[%s1 + $0x284] sm:$0xf]
    %v401 = vld [vmem:[%s1 + $0x288] sm:$0xf]
    %v402 = vld [vmem:[%s1 + $0x28c] sm:$0xf]
    %v403 = vld [vmem:[%s1 + $0x290] sm:$0xf]
    %v404 = vld [vmem:[%s1 + $0x294] sm:$0xf]
    %v405 = vld [vmem:[%s1 + $0x298] sm:$0xf]
    %v406 = vld [vmem:[%s1 + $0x29c] sm:$0xf]
    %v407 = vld [vmem:[%s1 + $0x2a0] sm:$0xf]
    %v408 = vld [vmem:[%s1 + $0x2a4] sm:$0xf]
    %v409 = vld [vmem:[%s1 + $0x2a8] sm:$0xf]
    %v410 = vld [vmem:[%s1 + $0x2ac] sm:$0xf]
    %v411 = vld [vmem:[%s1 + $0x2b0] sm:$0xf]
    %v412 = vld [vmem:[%s1 + $0x2b4] sm:$0xf]
    %v413 = vld [vmem:[%s1 + $0x2b8] sm:$0xf]
    %v414 = vld [vmem:[%s1 + $0x2bc] sm:$0xf]
    %v415 = vld [vmem:[%s1 + $0x2c0] sm:$0xf]
    %v416 = vld [vmem:[%s1 + $0x2c4] sm:$0xf]
    %v417 = vld [vmem:[%s1 + $0x2c8] sm:$0xf]
    %v418 = vld [vmem:[%s1 + $0x2cc] sm:$0xf]
    %v419 = vld [vmem:[%s1 + $0x2d0] sm:$0xf]
    %v420 = vld [vmem:[%s1 + $0x2d4] sm:$0xf]
    %v421 = vld [vmem:[%s1 + $0x2d8] sm:$0xf]
    %v422 = vld [vmem:[%s1 + $0x2dc] sm:$0xf]
    %v423 = vld [vmem:[%s1 + $0x2e0] sm:$0xf]
    %v424 = vld [vmem:[%s1 + $0x2e4] sm:$0xf]
    %v425 = vld [vmem:[%s1 + $0x2e8] sm:$0xf]
    %v426 = vld [vmem:[%s1 + $0x2ec] sm:$0xf]
    %v427 = vld [vmem:[%s1 + $0x2f0] sm:$0xf]
    %v428 = vld [vmem:[%s1 + $0x2f4] sm:$0xf]
    %v429 = vld [vmem:[%s1 + $0x2f8] sm:$0xf]
    %v430 = vld [vmem:[%s1 + $0x2fc] sm:$0xf]
    %v431 = vld [vmem:[%s1 + $0x300] sm:$0xf]
    %v432 = vld [vmem:[%s1 + $0x304] sm:$0xf]
    %v433 = vld [vmem:[%s1 + $0x308] sm:$0xf]
    %v434 = vld [vmem:[%s1 + $0x30c] sm:$0xf]
    %v435 = vld [vmem:[%s1 + $0x310] sm:$0xf]
    %v436 = vld [vmem:[%s1 + $0x314] sm:$0xf]
    %v437 = vld [vmem:[%s1 + $0x318] sm:$0xf]
    %v438 = vld [vmem:[%s1 + $0x31c] sm:$0xf]
    %v439 = vld [vmem:[%s1 + $0x320] sm:$0xf]
    %v440 = vld [vmem:[%s1 + $0x324] sm:$0xf]
    %v441 = vld [vmem:[%s1 + $0x328] sm:$0xf]
    %v442 = vld [vmem:[%s1 + $0x32c] sm:$0xf]
    %v443 = vld [vmem:[%s1 + $0x330] sm:$0xf]
    %v444 = vld [vmem:[%s1 + $0x334] sm:$0xf]
    %v445 = vld [vmem:[%s1 + $0x338] sm:$0xf]
    %v446 = vld [vmem:[%s1 + $0x33c] sm:$0xf]
    %v447 = vld [vmem:[%s2] sm:$0x1]
    %v449 = vlaneseq
    %v450 = vshrl.u32 %v449, 7
    %v451 = vsub.s32 0, %v450
    %v452 = vrot.slane %v447, %v451
    %v678 = vunpack.c.l.b16 %v15
    %v679 = vunpack.c.h.b16 %v15
    %v680 = vunpack.c.l.b16 %v16
    %v681 = vunpack.c.h.b16 %v16
    %v682 = vunpack.c.l.b16 %v17
    %v683 = vunpack.c.h.b16 %v17
    %v684 = vunpack.c.l.b16 %v18
    %v685 = vunpack.c.h.b16 %v18
    %v686 = vunpack.c.l.b16 %v19
    %v687 = vunpack.c.h.b16 %v19
    %v688 = vunpack.c.l.b16 %v20
    %v689 = vunpack.c.h.b16 %v20
    %v690 = vunpack.c.l.b16 %v21
    %v691 = vunpack.c.l.b16 %v22
    %v692 = vunpack.c.h.b16 %v22
    %v693 = vunpack.c.l.b16 %v23
    %v694 = vunpack.c.h.b16 %v23
    %v695 = vunpack.c.l.b16 %v24
    %v696 = vunpack.c.h.b16 %v24
    %v697 = vunpack.c.l.b16 %v25
    %v698 = vunpack.c.h.b16 %v25
    %v699 = vunpack.c.l.b16 %v26
    %v700 = vunpack.c.h.b16 %v26
    %v701 = vunpack.c.l.b16 %v27
    %v702 = vunpack.c.h.b16 %v27
    %v703 = vunpack.c.l.b16 %v28
    %v704 = vunpack.c.l.b16 %v29
    %v705 = vunpack.c.h.b16 %v29
    %v706 = vunpack.c.l.b16 %v30
    %v707 = vunpack.c.h.b16 %v30
    %v708 = vunpack.c.l.b16 %v31
    %v709 = vunpack.c.h.b16 %v31
    %v710 = vunpack.c.l.b16 %v32
    %v711 = vunpack.c.h.b16 %v32
    %v712 = vunpack.c.l.b16 %v33
    %v713 = vunpack.c.h.b16 %v33
    %v714 = vunpack.c.l.b16 %v34
    %v715 = vunpack.c.h.b16 %v34
    %v716 = vunpack.c.l.b16 %v35
    %v717 = vunpack.c.l.b16 %v36
    %v718 = vunpack.c.h.b16 %v36
    %v719 = vunpack.c.l.b16 %v37
    %v720 = vunpack.c.h.b16 %v37
    %v721 = vunpack.c.l.b16 %v38
    %v722 = vunpack.c.h.b16 %v38
    %v723 = vunpack.c.l.b16 %v39
    %v724 = vunpack.c.h.b16 %v39
    %v725 = vunpack.c.l.b16 %v40
    %v726 = vunpack.c.h.b16 %v40
    %v727 = vunpack.c.l.b16 %v41
    %v728 = vunpack.c.h.b16 %v41
    %v729 = vunpack.c.l.b16 %v42
    %v730 = vunpack.c.l.b16 %v43
    %v731 = vunpack.c.h.b16 %v43
    %v732 = vunpack.c.l.b16 %v44
    %v733 = vunpack.c.h.b16 %v44
    %v734 = vunpack.c.l.b16 %v45
    %v735 = vunpack.c.h.b16 %v45
    %v736 = vunpack.c.l.b16 %v46
    %v737 = vunpack.c.h.b16 %v46
    %v738 = vunpack.c.l.b16 %v47
    %v739 = vunpack.c.h.b16 %v47
    %v740 = vunpack.c.l.b16 %v48
    %v741 = vunpack.c.h.b16 %v48
    %v742 = vunpack.c.l.b16 %v49
    %v743 = vunpack.c.l.b16 %v50
    %v744 = vunpack.c.h.b16 %v50
    %v745 = vunpack.c.l.b16 %v51
    %v746 = vunpack.c.h.b16 %v51
    %v747 = vunpack.c.l.b16 %v52
    %v748 = vunpack.c.h.b16 %v52
    %v749 = vunpack.c.l.b16 %v53
    %v750 = vunpack.c.h.b16 %v53
    %v751 = vunpack.c.l.b16 %v54
    %v752 = vunpack.c.h.b16 %v54
    %v753 = vunpack.c.l.b16 %v55
    %v754 = vunpack.c.h.b16 %v55
    %v755 = vunpack.c.l.b16 %v56
    %v756 = vunpack.c.l.b16 %v57
    %v757 = vunpack.c.h.b16 %v57
    %v758 = vunpack.c.l.b16 %v58
    %v759 = vunpack.c.h.b16 %v58
    %v760 = vunpack.c.l.b16 %v59
    %v761 = vunpack.c.h.b16 %v59
    %v762 = vunpack.c.l.b16 %v60
    %v763 = vunpack.c.h.b16 %v60
    %v764 = vunpack.c.l.b16 %v61
    %v765 = vunpack.c.h.b16 %v61
    %v766 = vunpack.c.l.b16 %v62
    %v767 = vunpack.c.h.b16 %v62
    %v768 = vunpack.c.l.b16 %v63
    %v769 = vunpack.c.l.b16 %v64
    %v770 = vunpack.c.h.b16 %v64
    %v771 = vunpack.c.l.b16 %v65
    %v772 = vunpack.c.h.b16 %v65
    %v773 = vunpack.c.l.b16 %v66
    %v774 = vunpack.c.h.b16 %v66
    %v775 = vunpack.c.l.b16 %v67
    %v776 = vunpack.c.h.b16 %v67
    %v777 = vunpack.c.l.b16 %v68
    %v778 = vunpack.c.h.b16 %v68
    %v779 = vunpack.c.l.b16 %v69
    %v780 = vunpack.c.h.b16 %v69
    %v781 = vunpack.c.l.b16 %v70
    %v782 = vunpack.c.l.b16 %v71
    %v783 = vunpack.c.h.b16 %v71
    %v784 = vunpack.c.l.b16 %v72
    %v785 = vunpack.c.h.b16 %v72
    %v786 = vunpack.c.l.b16 %v73
    %v787 = vunpack.c.h.b16 %v73
    %v788 = vunpack.c.l.b16 %v74
    %v789 = vunpack.c.h.b16 %v74
    %v790 = vunpack.c.l.b16 %v75
    %v791 = vunpack.c.h.b16 %v75
    %v792 = vunpack.c.l.b16 %v76
    %v793 = vunpack.c.h.b16 %v76
    %v794 = vunpack.c.l.b16 %v77
    %v795 = vunpack.c.l.b16 %v78
    %v796 = vunpack.c.h.b16 %v78
    %v797 = vunpack.c.l.b16 %v79
    %v798 = vunpack.c.h.b16 %v79
    %v799 = vunpack.c.l.b16 %v80
    %v800 = vunpack.c.h.b16 %v80
    %v801 = vunpack.c.l.b16 %v81
    %v802 = vunpack.c.h.b16 %v81
    %v803 = vunpack.c.l.b16 %v82
    %v804 = vunpack.c.h.b16 %v82
    %v805 = vunpack.c.l.b16 %v83
    %v806 = vunpack.c.h.b16 %v83
    %v807 = vunpack.c.l.b16 %v84
    %v808 = vunpack.c.l.b16 %v85
    %v809 = vunpack.c.h.b16 %v85
    %v810 = vunpack.c.l.b16 %v86
    %v811 = vunpack.c.h.b16 %v86
    %v812 = vunpack.c.l.b16 %v87
    %v813 = vunpack.c.h.b16 %v87
    %v814 = vunpack.c.l.b16 %v88
    %v815 = vunpack.c.h.b16 %v88
    %v816 = vunpack.c.l.b16 %v89
    %v817 = vunpack.c.h.b16 %v89
    %v818 = vunpack.c.l.b16 %v90
    %v819 = vunpack.c.h.b16 %v90
    %v820 = vunpack.c.l.b16 %v91
    %v821 = vunpack.c.l.b16 %v92
    %v822 = vunpack.c.h.b16 %v92
    %v823 = vunpack.c.l.b16 %v93
    %v824 = vunpack.c.h.b16 %v93
    %v825 = vunpack.c.l.b16 %v94
    %v826 = vunpack.c.h.b16 %v94
    %v827 = vunpack.c.l.b16 %v95
    %v828 = vunpack.c.h.b16 %v95
    %v829 = vunpack.c.l.b16 %v96
    %v830 = vunpack.c.h.b16 %v96
    %v831 = vunpack.c.l.b16 %v97
    %v832 = vunpack.c.h.b16 %v97
    %v833 = vunpack.c.l.b16 %v98
    %v834 = vunpack.c.l.b16 %v99
    %v835 = vunpack.c.h.b16 %v99
    %v836 = vunpack.c.l.b16 %v100
    %v837 = vunpack.c.h.b16 %v100
    %v838 = vunpack.c.l.b16 %v101
    %v839 = vunpack.c.h.b16 %v101
    %v840 = vunpack.c.l.b16 %v102
    %v841 = vunpack.c.h.b16 %v102
    %v842 = vunpack.c.l.b16 %v103
    %v843 = vunpack.c.h.b16 %v103
    %v844 = vunpack.c.l.b16 %v104
    %v845 = vunpack.c.h.b16 %v104
    %v846 = vunpack.c.l.b16 %v105
    %v847 = vunpack.c.l.b16 %v106
    %v848 = vunpack.c.h.b16 %v106
    %v849 = vunpack.c.l.b16 %v107
    %v850 = vunpack.c.h.b16 %v107
    %v851 = vunpack.c.l.b16 %v108
    %v852 = vunpack.c.h.b16 %v108
    %v853 = vunpack.c.l.b16 %v109
    %v854 = vunpack.c.h.b16 %v109
    %v855 = vunpack.c.l.b16 %v110
    %v856 = vunpack.c.h.b16 %v110
    %v857 = vunpack.c.l.b16 %v111
    %v858 = vunpack.c.h.b16 %v111
    %v859 = vunpack.c.l.b16 %v112
    %v860 = vunpack.c.l.b16 %v113
    %v861 = vunpack.c.h.b16 %v113
    %v862 = vunpack.c.l.b16 %v114
    %v863 = vunpack.c.h.b16 %v114
    %v864 = vunpack.c.l.b16 %v115
    %v865 = vunpack.c.h.b16 %v115
    %v866 = vunpack.c.l.b16 %v116
    %v867 = vunpack.c.h.b16 %v116
    %v868 = vunpack.c.l.b16 %v117
    %v869 = vunpack.c.h.b16 %v117
    %v870 = vunpack.c.l.b16 %v118
    %v871 = vunpack.c.h.b16 %v118
    %v872 = vunpack.c.l.b16 %v119
    %v873 = vunpack.c.l.b16 %v120
    %v874 = vunpack.c.h.b16 %v120
    %v875 = vunpack.c.l.b16 %v121
    %v876 = vunpack.c.h.b16 %v121
    %v877 = vunpack.c.l.b16 %v122
    %v878 = vunpack.c.h.b16 %v122
    %v879 = vunpack.c.l.b16 %v123
    %v880 = vunpack.c.h.b16 %v123
    %v881 = vunpack.c.l.b16 %v124
    %v882 = vunpack.c.h.b16 %v124
    %v883 = vunpack.c.l.b16 %v125
    %v884 = vunpack.c.h.b16 %v125
    %v885 = vunpack.c.l.b16 %v126
    %v886 = vunpack.c.l.b16 %v127
    %v887 = vunpack.c.h.b16 %v127
    %v888 = vunpack.c.l.b16 %v128
    %v889 = vunpack.c.h.b16 %v128
    %v890 = vunpack.c.l.b16 %v129
    %v891 = vunpack.c.h.b16 %v129
    %v892 = vunpack.c.l.b16 %v130
    %v893 = vunpack.c.h.b16 %v130
    %v894 = vunpack.c.l.b16 %v131
    %v895 = vunpack.c.h.b16 %v131
    %v896 = vunpack.c.l.b16 %v132
    %v897 = vunpack.c.h.b16 %v132
    %v898 = vunpack.c.l.b16 %v133
    %v899 = vunpack.c.l.b16 %v134
    %v900 = vunpack.c.h.b16 %v134
    %v901 = vunpack.c.l.b16 %v135
    %v902 = vunpack.c.h.b16 %v135
    %v903 = vunpack.c.l.b16 %v136
    %v904 = vunpack.c.h.b16 %v136
    %v905 = vunpack.c.l.b16 %v137
    %v906 = vunpack.c.h.b16 %v137
    %v907 = vunpack.c.l.b16 %v138
    %v908 = vunpack.c.h.b16 %v138
    %v909 = vunpack.c.l.b16 %v139
    %v910 = vunpack.c.h.b16 %v139
    %v911 = vunpack.c.l.b16 %v140
    %v912 = vunpack.c.l.b16 %v141
    %v913 = vunpack.c.h.b16 %v141
    %v914 = vunpack.c.l.b16 %v142
    %v915 = vunpack.c.h.b16 %v142
    %v916 = vunpack.c.l.b16 %v143
    %v917 = vunpack.c.h.b16 %v143
    %v918 = vunpack.c.l.b16 %v144
    %v919 = vunpack.c.h.b16 %v144
    %v920 = vunpack.c.l.b16 %v145
    %v921 = vunpack.c.h.b16 %v145
    %v922 = vunpack.c.l.b16 %v146
    %v923 = vunpack.c.h.b16 %v146
    %v924 = vunpack.c.l.b16 %v147
    %v925 = vunpack.c.l.b16 %v148
    %v926 = vunpack.c.h.b16 %v148
    %v927 = vunpack.c.l.b16 %v149
    %v928 = vunpack.c.h.b16 %v149
    %v929 = vunpack.c.l.b16 %v150
    %v930 = vunpack.c.h.b16 %v150
    %v931 = vunpack.c.l.b16 %v151
    %v932 = vunpack.c.h.b16 %v151
    %v933 = vunpack.c.l.b16 %v152
    %v934 = vunpack.c.h.b16 %v152
    %v935 = vunpack.c.l.b16 %v153
    %v936 = vunpack.c.h.b16 %v153
    %v937 = vunpack.c.l.b16 %v154
    %v938 = vunpack.c.l.b16 %v155
    %v939 = vunpack.c.h.b16 %v155
    %v940 = vunpack.c.l.b16 %v156
    %v941 = vunpack.c.h.b16 %v156
    %v942 = vunpack.c.l.b16 %v157
    %v943 = vunpack.c.h.b16 %v157
    %v944 = vunpack.c.l.b16 %v158
    %v945 = vunpack.c.h.b16 %v158
    %v946 = vunpack.c.l.b16 %v159
    %v947 = vunpack.c.h.b16 %v159
    %v948 = vunpack.c.l.b16 %v160
    %v949 = vunpack.c.h.b16 %v160
    %v950 = vunpack.c.l.b16 %v161
    %v951 = vunpack.c.l.b16 %v162
    %v952 = vunpack.c.h.b16 %v162
    %v953 = vunpack.c.l.b16 %v163
    %v954 = vunpack.c.h.b16 %v163
    %v955 = vunpack.c.l.b16 %v164
    %v956 = vunpack.c.h.b16 %v164
    %v957 = vunpack.c.l.b16 %v165
    %v958 = vunpack.c.h.b16 %v165
    %v959 = vunpack.c.l.b16 %v166
    %v960 = vunpack.c.h.b16 %v166
    %v961 = vunpack.c.l.b16 %v167
    %v962 = vunpack.c.h.b16 %v167
    %v963 = vunpack.c.l.b16 %v168
    %v964 = vunpack.c.l.b16 %v169
    %v965 = vunpack.c.h.b16 %v169
    %v966 = vunpack.c.l.b16 %v170
    %v967 = vunpack.c.h.b16 %v170
    %v968 = vunpack.c.l.b16 %v171
    %v969 = vunpack.c.h.b16 %v171
    %v970 = vunpack.c.l.b16 %v172
    %v971 = vunpack.c.h.b16 %v172
    %v972 = vunpack.c.l.b16 %v173
    %v973 = vunpack.c.h.b16 %v173
    %v974 = vunpack.c.l.b16 %v174
    %v975 = vunpack.c.h.b16 %v174
    %v976 = vunpack.c.l.b16 %v175
    %v977 = vunpack.c.l.b16 %v176
    %v978 = vunpack.c.h.b16 %v176
    %v979 = vunpack.c.l.b16 %v177
    %v980 = vunpack.c.h.b16 %v177
    %v981 = vunpack.c.l.b16 %v178
    %v982 = vunpack.c.h.b16 %v178
    %v983 = vunpack.c.l.b16 %v179
    %v984 = vunpack.c.h.b16 %v179
    %v985 = vunpack.c.l.b16 %v180
    %v986 = vunpack.c.h.b16 %v180
    %v987 = vunpack.c.l.b16 %v181
    %v988 = vunpack.c.h.b16 %v181
    %v989 = vunpack.c.l.b16 %v182
    %v990 = vunpack.c.l.b16 %v183
    %v991 = vunpack.c.h.b16 %v183
    %v992 = vunpack.c.l.b16 %v184
    %v993 = vunpack.c.h.b16 %v184
    %v994 = vunpack.c.l.b16 %v185
    %v995 = vunpack.c.h.b16 %v185
    %v996 = vunpack.c.l.b16 %v186
    %v997 = vunpack.c.h.b16 %v186
    %v998 = vunpack.c.l.b16 %v187
    %v999 = vunpack.c.h.b16 %v187
    %v1000 = vunpack.c.l.b16 %v188
    %v1001 = vunpack.c.h.b16 %v188
    %v1002 = vunpack.c.l.b16 %v189
    %v1003 = vunpack.c.l.b16 %v190
    %v1004 = vunpack.c.h.b16 %v190
    %v1005 = vunpack.c.l.b16 %v191
    %v1006 = vunpack.c.h.b16 %v191
    %v1007 = vunpack.c.l.b16 %v192
    %v1008 = vunpack.c.h.b16 %v192
    %v1009 = vunpack.c.l.b16 %v193
    %v1010 = vunpack.c.h.b16 %v193
    %v1011 = vunpack.c.l.b16 %v194
    %v1012 = vunpack.c.h.b16 %v194
    %v1013 = vunpack.c.l.b16 %v195
    %v1014 = vunpack.c.h.b16 %v195
    %v1015 = vunpack.c.l.b16 %v196
    %v1016 = vunpack.c.l.b16 %v197
    %v1017 = vunpack.c.h.b16 %v197
    %v1018 = vunpack.c.l.b16 %v198
    %v1019 = vunpack.c.h.b16 %v198
    %v1020 = vunpack.c.l.b16 %v199
    %v1021 = vunpack.c.h.b16 %v199
    %v1022 = vunpack.c.l.b16 %v200
    %v1023 = vunpack.c.h.b16 %v200
    %v1024 = vunpack.c.l.b16 %v201
    %v1025 = vunpack.c.h.b16 %v201
    %v1026 = vunpack.c.l.b16 %v202
    %v1027 = vunpack.c.h.b16 %v202
    %v1028 = vunpack.c.l.b16 %v203
    %v1029 = vunpack.c.l.b16 %v204
    %v1030 = vunpack.c.h.b16 %v204
    %v1031 = vunpack.c.l.b16 %v205
    %v1032 = vunpack.c.h.b16 %v205
    %v1033 = vunpack.c.l.b16 %v206
    %v1034 = vunpack.c.h.b16 %v206
    %v1035 = vunpack.c.l.b16 %v207
    %v1036 = vunpack.c.h.b16 %v207
    %v1037 = vunpack.c.l.b16 %v208
    %v1038 = vunpack.c.h.b16 %v208
    %v1039 = vunpack.c.l.b16 %v209
    %v1040 = vunpack.c.h.b16 %v209
    %v1041 = vunpack.c.l.b16 %v210
    %v1042 = vunpack.c.l.b16 %v211
    %v1043 = vunpack.c.h.b16 %v211
    %v1044 = vunpack.c.l.b16 %v212
    %v1045 = vunpack.c.h.b16 %v212
    %v1046 = vunpack.c.l.b16 %v213
    %v1047 = vunpack.c.h.b16 %v213
    %v1048 = vunpack.c.l.b16 %v214
    %v1049 = vunpack.c.h.b16 %v214
    %v1050 = vunpack.c.l.b16 %v215
    %v1051 = vunpack.c.h.b16 %v215
    %v1052 = vunpack.c.l.b16 %v216
    %v1053 = vunpack.c.h.b16 %v216
    %v1054 = vunpack.c.l.b16 %v217
    %v1055 = vunpack.c.l.b16 %v218
    %v1056 = vunpack.c.h.b16 %v218
    %v1057 = vunpack.c.l.b16 %v219
    %v1058 = vunpack.c.h.b16 %v219
    %v1059 = vunpack.c.l.b16 %v220
    %v1060 = vunpack.c.h.b16 %v220
    %v1061 = vunpack.c.l.b16 %v221
    %v1062 = vunpack.c.h.b16 %v221
    %v1063 = vunpack.c.l.b16 %v222
    %v1064 = vunpack.c.h.b16 %v222
    %v1065 = vunpack.c.l.b16 %v223
    %v1066 = vunpack.c.h.b16 %v223
    %v1067 = vunpack.c.l.b16 %v224
    %v1068 = vunpack.c.l.b16 %v225
    %v1069 = vunpack.c.h.b16 %v225
    %v1070 = vunpack.c.l.b16 %v226
    %v1071 = vunpack.c.h.b16 %v226
    %v1072 = vunpack.c.l.b16 %v227
    %v1073 = vunpack.c.h.b16 %v227
    %v1074 = vunpack.c.l.b16 %v228
    %v1075 = vunpack.c.h.b16 %v228
    %v1076 = vunpack.c.l.b16 %v229
    %v1077 = vunpack.c.h.b16 %v229
    %v1078 = vunpack.c.l.b16 %v230
    %v1079 = vunpack.c.h.b16 %v230
    %v1080 = vunpack.c.l.b16 %v231
    %v1081 = vunpack.c.l.b16 %v232
    %v1082 = vunpack.c.h.b16 %v232
    %v1083 = vunpack.c.l.b16 %v233
    %v1084 = vunpack.c.h.b16 %v233
    %v1085 = vunpack.c.l.b16 %v234
    %v1086 = vunpack.c.h.b16 %v234
    %v1087 = vunpack.c.l.b16 %v235
    %v1088 = vunpack.c.h.b16 %v235
    %v1089 = vunpack.c.l.b16 %v236
    %v1090 = vunpack.c.h.b16 %v236
    %v1091 = vunpack.c.l.b16 %v237
    %v1092 = vunpack.c.h.b16 %v237
    %v1093 = vunpack.c.l.b16 %v238
    %v1094 = vpack.c.b16 %v691, %v678
    %v1095 = vpack.c.b16 %v692, %v679
    %v1096 = vpack.c.b16 %v693, %v680
    %v1097 = vpack.c.b16 %v694, %v681
    %v1098 = vpack.c.b16 %v695, %v682
    %v1099 = vpack.c.b16 %v696, %v683
    %v1100 = vpack.c.b16 %v697, %v684
    %v1101 = vpack.c.b16 %v698, %v685
    %v1102 = vpack.c.b16 %v699, %v686
    %v1103 = vpack.c.b16 %v700, %v687
    %v1104 = vpack.c.b16 %v701, %v688
    %v1105 = vpack.c.b16 %v702, %v689
    %v1106 = vpack.c.b16 %v703, %v690
    %v1107 = vpack.c.b16 %v717, %v704
    %v1108 = vpack.c.b16 %v718, %v705
    %v1109 = vpack.c.b16 %v719, %v706
    %v1110 = vpack.c.b16 %v720, %v707
    %v1111 = vpack.c.b16 %v721, %v708
    %v1112 = vpack.c.b16 %v722, %v709
    %v1113 = vpack.c.b16 %v723, %v710
    %v1114 = vpack.c.b16 %v724, %v711
    %v1115 = vpack.c.b16 %v725, %v712
    %v1116 = vpack.c.b16 %v726, %v713
    %v1117 = vpack.c.b16 %v727, %v714
    %v1118 = vpack.c.b16 %v728, %v715
    %v1119 = vpack.c.b16 %v729, %v716
    %v1120 = vpack.c.b16 %v743, %v730
    %v1121 = vpack.c.b16 %v744, %v731
    %v1122 = vpack.c.b16 %v745, %v732
    %v1123 = vpack.c.b16 %v746, %v733
    %v1124 = vpack.c.b16 %v747, %v734
    %v1125 = vpack.c.b16 %v748, %v735
    %v1126 = vpack.c.b16 %v749, %v736
    %v1127 = vpack.c.b16 %v750, %v737
    %v1128 = vpack.c.b16 %v751, %v738
    %v1129 = vpack.c.b16 %v752, %v739
    %v1130 = vpack.c.b16 %v753, %v740
    %v1131 = vpack.c.b16 %v754, %v741
    %v1132 = vpack.c.b16 %v755, %v742
    %v1133 = vpack.c.b16 %v769, %v756
    %v1134 = vpack.c.b16 %v770, %v757
    %v1135 = vpack.c.b16 %v771, %v758
    %v1136 = vpack.c.b16 %v772, %v759
    %v1137 = vpack.c.b16 %v773, %v760
    %v1138 = vpack.c.b16 %v774, %v761
    %v1139 = vpack.c.b16 %v775, %v762
    %v1140 = vpack.c.b16 %v776, %v763
    %v1141 = vpack.c.b16 %v777, %v764
    %v1142 = vpack.c.b16 %v778, %v765
    %v1143 = vpack.c.b16 %v779, %v766
    %v1144 = vpack.c.b16 %v780, %v767
    %v1145 = vpack.c.b16 %v781, %v768
    %v1146 = vpack.c.b16 %v795, %v782
    %v1147 = vpack.c.b16 %v796, %v783
    %v1148 = vpack.c.b16 %v797, %v784
    %v1149 = vpack.c.b16 %v798, %v785
    %v1150 = vpack.c.b16 %v799, %v786
    %v1151 = vpack.c.b16 %v800, %v787
    %v1152 = vpack.c.b16 %v801, %v788
    %v1153 = vpack.c.b16 %v802, %v789
    %v1154 = vpack.c.b16 %v803, %v790
    %v1155 = vpack.c.b16 %v804, %v791
    %v1156 = vpack.c.b16 %v805, %v792
    %v1157 = vpack.c.b16 %v806, %v793
    %v1158 = vpack.c.b16 %v807, %v794
    %v1159 = vpack.c.b16 %v821, %v808
    %v1160 = vpack.c.b16 %v822, %v809
    %v1161 = vpack.c.b16 %v823, %v810
    %v1162 = vpack.c.b16 %v824, %v811
    %v1163 = vpack.c.b16 %v825, %v812
    %v1164 = vpack.c.b16 %v826, %v813
    %v1165 = vpack.c.b16 %v827, %v814
    %v1166 = vpack.c.b16 %v828, %v815
    %v1167 = vpack.c.b16 %v829, %v816
    %v1168 = vpack.c.b16 %v830, %v817
    %v1169 = vpack.c.b16 %v831, %v818
    %v1170 = vpack.c.b16 %v832, %v819
    %v1171 = vpack.c.b16 %v833, %v820
    %v1172 = vpack.c.b16 %v847, %v834
    %v1173 = vpack.c.b16 %v848, %v835
    %v1174 = vpack.c.b16 %v849, %v836
    %v1175 = vpack.c.b16 %v850, %v837
    %v1176 = vpack.c.b16 %v851, %v838
    %v1177 = vpack.c.b16 %v852, %v839
    %v1178 = vpack.c.b16 %v853, %v840
    %v1179 = vpack.c.b16 %v854, %v841
    %v1180 = vpack.c.b16 %v855, %v842
    %v1181 = vpack.c.b16 %v856, %v843
    %v1182 = vpack.c.b16 %v857, %v844
    %v1183 = vpack.c.b16 %v858, %v845
    %v1184 = vpack.c.b16 %v859, %v846
    %v1185 = vpack.c.b16 %v873, %v860
    %v1186 = vpack.c.b16 %v874, %v861
    %v1187 = vpack.c.b16 %v875, %v862
    %v1188 = vpack.c.b16 %v876, %v863
    %v1189 = vpack.c.b16 %v877, %v864
    %v1190 = vpack.c.b16 %v878, %v865
    %v1191 = vpack.c.b16 %v879, %v866
    %v1192 = vpack.c.b16 %v880, %v867
    %v1193 = vpack.c.b16 %v881, %v868
    %v1194 = vpack.c.b16 %v882, %v869
    %v1195 = vpack.c.b16 %v883, %v870
    %v1196 = vpack.c.b16 %v884, %v871
    %v1197 = vpack.c.b16 %v885, %v872
    %v1198 = vpack.c.b16 %v899, %v886
    %v1199 = vpack.c.b16 %v900, %v887
    %v1200 = vpack.c.b16 %v901, %v888
    %v1201 = vpack.c.b16 %v902, %v889
    %v1202 = vpack.c.b16 %v903, %v890
    %v1203 = vpack.c.b16 %v904, %v891
    %v1204 = vpack.c.b16 %v905, %v892
    %v1205 = vpack.c.b16 %v906, %v893
    %v1206 = vpack.c.b16 %v907, %v894
    %v1207 = vpack.c.b16 %v908, %v895
    %v1208 = vpack.c.b16 %v909, %v896
    %v1209 = vpack.c.b16 %v910, %v897
    %v1210 = vpack.c.b16 %v911, %v898
    %v1211 = vpack.c.b16 %v925, %v912
    %v1212 = vpack.c.b16 %v926, %v913
    %v1213 = vpack.c.b16 %v927, %v914
    %v1214 = vpack.c.b16 %v928, %v915
    %v1215 = vpack.c.b16 %v929, %v916
    %v1216 = vpack.c.b16 %v930, %v917
    %v1217 = vpack.c.b16 %v931, %v918
    %v1218 = vpack.c.b16 %v932, %v919
    %v1219 = vpack.c.b16 %v933, %v920
    %v1220 = vpack.c.b16 %v934, %v921
    %v1221 = vpack.c.b16 %v935, %v922
    %v1222 = vpack.c.b16 %v936, %v923
    %v1223 = vpack.c.b16 %v937, %v924
    %v1224 = vpack.c.b16 %v951, %v938
    %v1225 = vpack.c.b16 %v952, %v939
    %v1226 = vpack.c.b16 %v953, %v940
    %v1227 = vpack.c.b16 %v954, %v941
    %v1228 = vpack.c.b16 %v955, %v942
    %v1229 = vpack.c.b16 %v956, %v943
    %v1230 = vpack.c.b16 %v957, %v944
    %v1231 = vpack.c.b16 %v958, %v945
    %v1232 = vpack.c.b16 %v959, %v946
    %v1233 = vpack.c.b16 %v960, %v947
    %v1234 = vpack.c.b16 %v961, %v948
    %v1235 = vpack.c.b16 %v962, %v949
    %v1236 = vpack.c.b16 %v963, %v950
    %v1237 = vpack.c.b16 %v977, %v964
    %v1238 = vpack.c.b16 %v978, %v965
    %v1239 = vpack.c.b16 %v979, %v966
    %v1240 = vpack.c.b16 %v980, %v967
    %v1241 = vpack.c.b16 %v981, %v968
    %v1242 = vpack.c.b16 %v982, %v969
    %v1243 = vpack.c.b16 %v983, %v970
    %v1244 = vpack.c.b16 %v984, %v971
    %v1245 = vpack.c.b16 %v985, %v972
    %v1246 = vpack.c.b16 %v986, %v973
    %v1247 = vpack.c.b16 %v987, %v974
    %v1248 = vpack.c.b16 %v988, %v975
    %v1249 = vpack.c.b16 %v989, %v976
    %v1250 = vpack.c.b16 %v1003, %v990
    %v1251 = vpack.c.b16 %v1004, %v991
    %v1252 = vpack.c.b16 %v1005, %v992
    %v1253 = vpack.c.b16 %v1006, %v993
    %v1254 = vpack.c.b16 %v1007, %v994
    %v1255 = vpack.c.b16 %v1008, %v995
    %v1256 = vpack.c.b16 %v1009, %v996
    %v1257 = vpack.c.b16 %v1010, %v997
    %v1258 = vpack.c.b16 %v1011, %v998
    %v1259 = vpack.c.b16 %v1012, %v999
    %v1260 = vpack.c.b16 %v1013, %v1000
    %v1261 = vpack.c.b16 %v1014, %v1001
    %v1262 = vpack.c.b16 %v1015, %v1002
    %v1263 = vpack.c.b16 %v1029, %v1016
    %v1264 = vpack.c.b16 %v1030, %v1017
    %v1265 = vpack.c.b16 %v1031, %v1018
    %v1266 = vpack.c.b16 %v1032, %v1019
    %v1267 = vpack.c.b16 %v1033, %v1020
    %v1268 = vpack.c.b16 %v1034, %v1021
    %v1269 = vpack.c.b16 %v1035, %v1022
    %v1270 = vpack.c.b16 %v1036, %v1023
    %v1271 = vpack.c.b16 %v1037, %v1024
    %v1272 = vpack.c.b16 %v1038, %v1025
    %v1273 = vpack.c.b16 %v1039, %v1026
    %v1274 = vpack.c.b16 %v1040, %v1027
    %v1275 = vpack.c.b16 %v1041, %v1028
    %v1276 = vpack.c.b16 %v1055, %v1042
    %v1277 = vpack.c.b16 %v1056, %v1043
    %v1278 = vpack.c.b16 %v1057, %v1044
    %v1279 = vpack.c.b16 %v1058, %v1045
    %v1280 = vpack.c.b16 %v1059, %v1046
    %v1281 = vpack.c.b16 %v1060, %v1047
    %v1282 = vpack.c.b16 %v1061, %v1048
    %v1283 = vpack.c.b16 %v1062, %v1049
    %v1284 = vpack.c.b16 %v1063, %v1050
    %v1285 = vpack.c.b16 %v1064, %v1051
    %v1286 = vpack.c.b16 %v1065, %v1052
    %v1287 = vpack.c.b16 %v1066, %v1053
    %v1288 = vpack.c.b16 %v1067, %v1054
    %v1289 = vpack.c.b16 %v1081, %v1068
    %v1290 = vpack.c.b16 %v1082, %v1069
    %v1291 = vpack.c.b16 %v1083, %v1070
    %v1292 = vpack.c.b16 %v1084, %v1071
    %v1293 = vpack.c.b16 %v1085, %v1072
    %v1294 = vpack.c.b16 %v1086, %v1073
    %v1295 = vpack.c.b16 %v1087, %v1074
    %v1296 = vpack.c.b16 %v1088, %v1075
    %v1297 = vpack.c.b16 %v1089, %v1076
    %v1298 = vpack.c.b16 %v1090, %v1077
    %v1299 = vpack.c.b16 %v1091, %v1078
    %v1300 = vpack.c.b16 %v1092, %v1079
    %v1301 = vpack.c.b16 %v1093, %v1080
    %v1718 = vunpack.c.l.b16 %v239
    %v1719 = vunpack.c.l.b16 %v240
    %v1720 = vunpack.c.l.b16 %v241
    %v1721 = vunpack.c.l.b16 %v242
    %v1722 = vunpack.c.l.b16 %v243
    %v1723 = vunpack.c.l.b16 %v244
    %v1724 = vunpack.c.l.b16 %v245
    %v1725 = vunpack.c.l.b16 %v246
    %v1726 = vunpack.c.l.b16 %v247
    %v1727 = vunpack.c.l.b16 %v248
    %v1728 = vunpack.c.l.b16 %v249
    %v1729 = vunpack.c.l.b16 %v250
    %v1730 = vunpack.c.l.b16 %v251
    %v1731 = vunpack.c.l.b16 %v252
    %v1732 = vunpack.c.l.b16 %v253
    %v1733 = vunpack.c.l.b16 %v254
    %v1734 = vunpack.c.l.b16 %v255
    %v1735 = vunpack.c.l.b16 %v256
    %v1736 = vunpack.c.l.b16 %v257
    %v1737 = vunpack.c.l.b16 %v258
    %v1738 = vunpack.c.l.b16 %v259
    %v1739 = vunpack.c.l.b16 %v260
    %v1740 = vunpack.c.l.b16 %v261
    %v1741 = vunpack.c.l.b16 %v262
    %v1742 = vunpack.c.l.b16 %v263
    %v1743 = vunpack.c.l.b16 %v264
    %v1744 = vunpack.c.l.b16 %v265
    %v1745 = vunpack.c.l.b16 %v266
    %v1746 = vunpack.c.l.b16 %v267
    %v1747 = vunpack.c.l.b16 %v268
    %v1748 = vunpack.c.l.b16 %v269
    %v1749 = vunpack.c.l.b16 %v270
    %v1750 = vunpack.c.l.b16 %v271
    %v1751 = vunpack.c.l.b16 %v272
    %v1752 = vunpack.c.l.b16 %v273
    %v1753 = vunpack.c.l.b16 %v274
    %v1754 = vunpack.c.l.b16 %v275
    %v1755 = vunpack.c.l.b16 %v276
    %v1756 = vunpack.c.l.b16 %v277
    %v1757 = vunpack.c.l.b16 %v278
    %v1758 = vunpack.c.l.b16 %v279
    %v1759 = vunpack.c.l.b16 %v280
    %v1760 = vunpack.c.l.b16 %v281
    %v1761 = vunpack.c.l.b16 %v282
    %v1762 = vunpack.c.l.b16 %v283
    %v1763 = vunpack.c.l.b16 %v284
    %v1764 = vunpack.c.l.b16 %v285
    %v1765 = vunpack.c.l.b16 %v286
    %v1766 = vunpack.c.l.b16 %v287
    %v1767 = vunpack.c.l.b16 %v288
    %v1768 = vunpack.c.l.b16 %v289
    %v1769 = vunpack.c.l.b16 %v290
    %v1770 = vunpack.c.l.b16 %v291
    %v1771 = vunpack.c.l.b16 %v292
    %v1772 = vunpack.c.l.b16 %v293
    %v1773 = vunpack.c.l.b16 %v294
    %v1774 = vunpack.c.l.b16 %v295
    %v1775 = vunpack.c.l.b16 %v296
    %v1776 = vunpack.c.l.b16 %v297
    %v1777 = vunpack.c.l.b16 %v298
    %v1778 = vunpack.c.l.b16 %v299
    %v1779 = vunpack.c.l.b16 %v300
    %v1780 = vunpack.c.l.b16 %v301
    %v1781 = vunpack.c.l.b16 %v302
    %v1782 = vunpack.c.l.b16 %v303
    %v1783 = vunpack.c.l.b16 %v304
    %v1784 = vunpack.c.l.b16 %v305
    %v1785 = vunpack.c.l.b16 %v306
    %v1786 = vunpack.c.l.b16 %v307
    %v1787 = vunpack.c.l.b16 %v308
    %v1788 = vunpack.c.l.b16 %v309
    %v1789 = vunpack.c.l.b16 %v310
    %v1790 = vunpack.c.l.b16 %v311
    %v1791 = vunpack.c.l.b16 %v312
    %v1792 = vunpack.c.l.b16 %v313
    %v1793 = vunpack.c.l.b16 %v314
    %v1794 = vunpack.c.l.b16 %v315
    %v1795 = vunpack.c.l.b16 %v316
    %v1796 = vunpack.c.l.b16 %v317
    %v1797 = vunpack.c.l.b16 %v318
    %v1798 = vunpack.c.l.b16 %v319
    %v1799 = vunpack.c.l.b16 %v320
    %v1800 = vunpack.c.l.b16 %v321
    %v1801 = vunpack.c.l.b16 %v322
    %v1802 = vunpack.c.l.b16 %v323
    %v1803 = vunpack.c.l.b16 %v324
    %v1804 = vunpack.c.l.b16 %v325
    %v1805 = vunpack.c.l.b16 %v326
    %v1806 = vunpack.c.l.b16 %v327
    %v1807 = vunpack.c.l.b16 %v328
    %v1808 = vunpack.c.l.b16 %v329
    %v1809 = vunpack.c.l.b16 %v330
    %v1810 = vunpack.c.l.b16 %v331
    %v1811 = vunpack.c.l.b16 %v332
    %v1812 = vunpack.c.l.b16 %v333
    %v1813 = vunpack.c.l.b16 %v334
    %v1814 = vunpack.c.l.b16 %v335
    %v1815 = vunpack.c.l.b16 %v336
    %v1816 = vunpack.c.l.b16 %v337
    %v1817 = vunpack.c.l.b16 %v338
    %v1818 = vunpack.c.l.b16 %v339
    %v1819 = vunpack.c.l.b16 %v340
    %v1820 = vunpack.c.l.b16 %v341
    %v1821 = vunpack.c.l.b16 %v342
    %v1822 = vunpack.c.l.b16 %v343
    %v1823 = vunpack.c.l.b16 %v344
    %v1824 = vunpack.c.l.b16 %v345
    %v1825 = vunpack.c.l.b16 %v346
    %v1826 = vunpack.c.l.b16 %v347
    %v1827 = vunpack.c.l.b16 %v348
    %v1828 = vunpack.c.l.b16 %v349
    %v1829 = vunpack.c.l.b16 %v350
    %v1830 = vunpack.c.l.b16 %v351
    %v1831 = vunpack.c.l.b16 %v352
    %v1832 = vunpack.c.l.b16 %v353
    %v1833 = vunpack.c.l.b16 %v354
    %v1834 = vunpack.c.l.b16 %v355
    %v1835 = vunpack.c.l.b16 %v356
    %v1836 = vunpack.c.l.b16 %v357
    %v1837 = vunpack.c.l.b16 %v358
    %v1838 = vunpack.c.l.b16 %v359
    %v1839 = vunpack.c.l.b16 %v360
    %v1840 = vunpack.c.l.b16 %v361
    %v1841 = vunpack.c.l.b16 %v362
    %v1842 = vunpack.c.l.b16 %v363
    %v1843 = vunpack.c.l.b16 %v364
    %v1844 = vunpack.c.l.b16 %v365
    %v1845 = vunpack.c.l.b16 %v366
    %v1846 = vunpack.c.l.b16 %v367
    %v1847 = vunpack.c.l.b16 %v368
    %v1848 = vunpack.c.l.b16 %v369
    %v1849 = vunpack.c.l.b16 %v370
    %v1850 = vunpack.c.l.b16 %v371
    %v1851 = vunpack.c.l.b16 %v372
    %v1852 = vunpack.c.l.b16 %v373
    %v1853 = vunpack.c.l.b16 %v374
    %v1854 = vunpack.c.l.b16 %v375
    %v1855 = vunpack.c.l.b16 %v376
    %v1856 = vunpack.c.l.b16 %v377
    %v1857 = vunpack.c.l.b16 %v378
    %v1858 = vunpack.c.l.b16 %v379
    %v1859 = vunpack.c.l.b16 %v380
    %v1860 = vunpack.c.l.b16 %v381
    %v1861 = vunpack.c.l.b16 %v382
    %v1862 = vunpack.c.l.b16 %v383
    %v1863 = vunpack.c.l.b16 %v384
    %v1864 = vunpack.c.l.b16 %v385
    %v1865 = vunpack.c.l.b16 %v386
    %v1866 = vunpack.c.l.b16 %v387
    %v1867 = vunpack.c.l.b16 %v388
    %v1868 = vunpack.c.l.b16 %v389
    %v1869 = vunpack.c.l.b16 %v390
    %v1870 = vunpack.c.l.b16 %v391
    %v1871 = vunpack.c.l.b16 %v392
    %v1872 = vunpack.c.l.b16 %v393
    %v1873 = vunpack.c.l.b16 %v394
    %v1874 = vunpack.c.l.b16 %v395
    %v1875 = vunpack.c.l.b16 %v396
    %v1876 = vunpack.c.l.b16 %v397
    %v1877 = vunpack.c.l.b16 %v398
    %v1878 = vunpack.c.l.b16 %v399
    %v1879 = vunpack.c.l.b16 %v400
    %v1880 = vunpack.c.l.b16 %v401
    %v1881 = vunpack.c.l.b16 %v402
    %v1882 = vunpack.c.l.b16 %v403
    %v1883 = vunpack.c.l.b16 %v404
    %v1884 = vunpack.c.l.b16 %v405
    %v1885 = vunpack.c.l.b16 %v406
    %v1886 = vunpack.c.l.b16 %v407
    %v1887 = vunpack.c.l.b16 %v408
    %v1888 = vunpack.c.l.b16 %v409
    %v1889 = vunpack.c.l.b16 %v410
    %v1890 = vunpack.c.l.b16 %v411
    %v1891 = vunpack.c.l.b16 %v412
    %v1892 = vunpack.c.l.b16 %v413
    %v1893 = vunpack.c.l.b16 %v414
    %v1894 = vunpack.c.l.b16 %v415
    %v1895 = vunpack.c.l.b16 %v416
    %v1896 = vunpack.c.l.b16 %v417
    %v1897 = vunpack.c.l.b16 %v418
    %v1898 = vunpack.c.l.b16 %v419
    %v1899 = vunpack.c.l.b16 %v420
    %v1900 = vunpack.c.l.b16 %v421
    %v1901 = vunpack.c.l.b16 %v422
    %v1902 = vunpack.c.l.b16 %v423
    %v1903 = vunpack.c.l.b16 %v424
    %v1904 = vunpack.c.l.b16 %v425
    %v1905 = vunpack.c.l.b16 %v426
    %v1906 = vunpack.c.l.b16 %v427
    %v1907 = vunpack.c.l.b16 %v428
    %v1908 = vunpack.c.l.b16 %v429
    %v1909 = vunpack.c.l.b16 %v430
    %v1910 = vunpack.c.l.b16 %v431
    %v1911 = vunpack.c.l.b16 %v432
    %v1912 = vunpack.c.l.b16 %v433
    %v1913 = vunpack.c.l.b16 %v434
    %v1914 = vunpack.c.l.b16 %v435
    %v1915 = vunpack.c.l.b16 %v436
    %v1916 = vunpack.c.l.b16 %v437
    %v1917 = vunpack.c.l.b16 %v438
    %v1918 = vunpack.c.l.b16 %v439
    %v1919 = vunpack.c.l.b16 %v440
    %v1920 = vunpack.c.l.b16 %v441
    %v1921 = vunpack.c.l.b16 %v442
    %v1922 = vunpack.c.l.b16 %v443
    %v1923 = vunpack.c.l.b16 %v444
    %v1924 = vunpack.c.l.b16 %v445
    %v1925 = vunpack.c.l.b16 %v446
    %v1926 = vpack.c.b16 %v1719, %v1718
    %v1927 = vpack.c.b16 %v1721, %v1720
    %v1928 = vpack.c.b16 %v1723, %v1722
    %v1929 = vpack.c.b16 %v1725, %v1724
    %v1930 = vpack.c.b16 %v1727, %v1726
    %v1931 = vpack.c.b16 %v1729, %v1728
    %v1932 = vpack.c.b16 %v1731, %v1730
    %v1933 = vpack.c.b16 %v1733, %v1732
    %v1934 = vpack.c.b16 %v1735, %v1734
    %v1935 = vpack.c.b16 %v1737, %v1736
    %v1936 = vpack.c.b16 %v1739, %v1738
    %v1937 = vpack.c.b16 %v1741, %v1740
    %v1938 = vpack.c.b16 %v1743, %v1742
    %v1939 = vpack.c.b16 %v1745, %v1744
    %v1940 = vpack.c.b16 %v1747, %v1746
    %v1941 = vpack.c.b16 %v1749, %v1748
    %v1942 = vpack.c.b16 %v1751, %v1750
    %v1943 = vpack.c.b16 %v1753, %v1752
    %v1944 = vpack.c.b16 %v1755, %v1754
    %v1945 = vpack.c.b16 %v1757, %v1756
    %v1946 = vpack.c.b16 %v1759, %v1758
    %v1947 = vpack.c.b16 %v1761, %v1760
    %v1948 = vpack.c.b16 %v1763, %v1762
    %v1949 = vpack.c.b16 %v1765, %v1764
    %v1950 = vpack.c.b16 %v1767, %v1766
    %v1951 = vpack.c.b16 %v1769, %v1768
    %v1952 = vpack.c.b16 %v1771, %v1770
    %v1953 = vpack.c.b16 %v1773, %v1772
    %v1954 = vpack.c.b16 %v1775, %v1774
    %v1955 = vpack.c.b16 %v1777, %v1776
    %v1956 = vpack.c.b16 %v1779, %v1778
    %v1957 = vpack.c.b16 %v1781, %v1780
    %v1958 = vpack.c.b16 %v1783, %v1782
    %v1959 = vpack.c.b16 %v1785, %v1784
    %v1960 = vpack.c.b16 %v1787, %v1786
    %v1961 = vpack.c.b16 %v1789, %v1788
    %v1962 = vpack.c.b16 %v1791, %v1790
    %v1963 = vpack.c.b16 %v1793, %v1792
    %v1964 = vpack.c.b16 %v1795, %v1794
    %v1965 = vpack.c.b16 %v1797, %v1796
    %v1966 = vpack.c.b16 %v1799, %v1798
    %v1967 = vpack.c.b16 %v1801, %v1800
    %v1968 = vpack.c.b16 %v1803, %v1802
    %v1969 = vpack.c.b16 %v1805, %v1804
    %v1970 = vpack.c.b16 %v1807, %v1806
    %v1971 = vpack.c.b16 %v1809, %v1808
    %v1972 = vpack.c.b16 %v1811, %v1810
    %v1973 = vpack.c.b16 %v1813, %v1812
    %v1974 = vpack.c.b16 %v1815, %v1814
    %v1975 = vpack.c.b16 %v1817, %v1816
    %v1976 = vpack.c.b16 %v1819, %v1818
    %v1977 = vpack.c.b16 %v1821, %v1820
    %v1978 = vpack.c.b16 %v1823, %v1822
    %v1979 = vpack.c.b16 %v1825, %v1824
    %v1980 = vpack.c.b16 %v1827, %v1826
    %v1981 = vpack.c.b16 %v1829, %v1828
    %v1982 = vpack.c.b16 %v1831, %v1830
    %v1983 = vpack.c.b16 %v1833, %v1832
    %v1984 = vpack.c.b16 %v1835, %v1834
    %v1985 = vpack.c.b16 %v1837, %v1836
    %v1986 = vpack.c.b16 %v1839, %v1838
    %v1987 = vpack.c.b16 %v1841, %v1840
    %v1988 = vpack.c.b16 %v1843, %v1842
    %v1989 = vpack.c.b16 %v1845, %v1844
    %v1990 = vpack.c.b16 %v1847, %v1846
    %v1991 = vpack.c.b16 %v1849, %v1848
    %v1992 = vpack.c.b16 %v1851, %v1850
    %v1993 = vpack.c.b16 %v1853, %v1852
    %v1994 = vpack.c.b16 %v1855, %v1854
    %v1995 = vpack.c.b16 %v1857, %v1856
    %v1996 = vpack.c.b16 %v1859, %v1858
    %v1997 = vpack.c.b16 %v1861, %v1860
    %v1998 = vpack.c.b16 %v1863, %v1862
    %v1999 = vpack.c.b16 %v1865, %v1864
    %v2000 = vpack.c.b16 %v1867, %v1866
    %v2001 = vpack.c.b16 %v1869, %v1868
    %v2002 = vpack.c.b16 %v1871, %v1870
    %v2003 = vpack.c.b16 %v1873, %v1872
    %v2004 = vpack.c.b16 %v1875, %v1874
    %v2005 = vpack.c.b16 %v1877, %v1876
    %v2006 = vpack.c.b16 %v1879, %v1878
    %v2007 = vpack.c.b16 %v1881, %v1880
    %v2008 = vpack.c.b16 %v1883, %v1882
    %v2009 = vpack.c.b16 %v1885, %v1884
    %v2010 = vpack.c.b16 %v1887, %v1886
    %v2011 = vpack.c.b16 %v1889, %v1888
    %v2012 = vpack.c.b16 %v1891, %v1890
    %v2013 = vpack.c.b16 %v1893, %v1892
    %v2014 = vpack.c.b16 %v1895, %v1894
    %v2015 = vpack.c.b16 %v1897, %v1896
    %v2016 = vpack.c.b16 %v1899, %v1898
    %v2017 = vpack.c.b16 %v1901, %v1900
    %v2018 = vpack.c.b16 %v1903, %v1902
    %v2019 = vpack.c.b16 %v1905, %v1904
    %v2020 = vpack.c.b16 %v1907, %v1906
    %v2021 = vpack.c.b16 %v1909, %v1908
    %v2022 = vpack.c.b16 %v1911, %v1910
    %v2023 = vpack.c.b16 %v1913, %v1912
    %v2024 = vpack.c.b16 %v1915, %v1914
    %v2025 = vpack.c.b16 %v1917, %v1916
    %v2026 = vpack.c.b16 %v1919, %v1918
    %v2027 = vpack.c.b16 %v1921, %v1920
    %v2028 = vpack.c.b16 %v1923, %v1922
    %v2029 = vpack.c.b16 %v1925, %v1924
    %2134 = vmatprep.subr.bf16.mxu0 0
    %2135 = vmatpush1.bf16.msra.mxu0 %v1933
    %2136 = vmatprep.subr.bf16.mxu0 0
    %2137 = vmatpush1.bf16.msra.mxu0 %v1932
    %2138 = vmatprep.subr.bf16.mxu0 0
    %2139 = vmatpush1.bf16.msra.mxu0 %v1931
    %2140 = vmatprep.subr.bf16.mxu0 0
    %2141 = vmatpush1.bf16.msra.mxu0 %v1930
    %2142 = vmatprep.subr.bf16.mxu0 0
    %2143 = vmatpush1.bf16.msra.mxu0 %v1929
    %2144 = vmatprep.subr.bf16.mxu0 0
    %2145 = vmatpush1.bf16.msra.mxu0 %v1928
    %2146 = vmatprep.subr.bf16.mxu0 0
    %2147 = vmatpush1.bf16.msra.mxu0 %v1927
    %2148 = vmatprep.subr.bf16.mxu0 0
    %2149 = vmatpush1.bf16.msra.mxu0 %v1926
    %2150 = vmatprep.subr.bf16.mxu0 0
    %2151 = vmatpush2.bf16.msra.mxu0 %v1941
    %2152 = vmatprep.subr.bf16.mxu0 0
    %2153 = vmatpush2.bf16.msra.mxu0 %v1940
    %2154 = vmatprep.subr.bf16.mxu0 0
    %2155 = vmatpush2.bf16.msra.mxu0 %v1939
    %2156 = vmatprep.subr.bf16.mxu0 0
    %2157 = vmatpush2.bf16.msra.mxu0 %v1938
    %2158 = vmatprep.subr.bf16.mxu0 0
    %2159 = vmatpush2.bf16.msra.mxu0 %v1937
    %2160 = vmatprep.subr.bf16.mxu0 0
    %2161 = vmatpush2.bf16.msra.mxu0 %v1936
    %2162 = vmatprep.subr.bf16.mxu0 0
    %2163 = vmatpush2.bf16.msra.mxu0 %v1935
    %2164 = vmatprep.subr.bf16.mxu0 0
    %2165 = vmatpush2.bf16.msra.mxu0 %v1934
    %2166 = vmatprep.mubr.bf16.mxu0 %v1095
    %2167 = vmatmul.mubr.bf16.gmra.mxu0 %v1094
    %v2168 = vpop.f32.mrf.mxu0
    %v2169 = vadd.f32 %v452, %v2168
    %v2170 = vpop.f32.mrf.mxu0
    %v2171 = vpop.f32.mrf.mxu0
    %v2172 = vadd.f32 %v452, %v2171
    %v2173 = vpop.f32.mrf.mxu0
    %2174 = vmatprep.mubr.bf16.mxu0 %v1108
    %2175 = vmatmul.mubr.bf16.gmra.mxu0 %v1107
    %v2176 = vpop.f32.mrf.mxu0
    %v2177 = vadd.f32 %v452, %v2176
    %v2178 = vpop.f32.mrf.mxu0
    %v2179 = vpop.f32.mrf.mxu0
    %v2180 = vadd.f32 %v452, %v2179
    %v2181 = vpop.f32.mrf.mxu0
    %2182 = vmatprep.mubr.bf16.mxu0 %v1121
    %2183 = vmatmul.mubr.bf16.gmra.mxu0 %v1120
    %v2184 = vpop.f32.mrf.mxu0
    %v2185 = vadd.f32 %v452, %v2184
    %v2186 = vpop.f32.mrf.mxu0
    %v2187 = vpop.f32.mrf.mxu0
    %v2188 = vadd.f32 %v452, %v2187
    %v2189 = vpop.f32.mrf.mxu0
    %2190 = vmatprep.mubr.bf16.mxu0 %v1134
    %2191 = vmatmul.mubr.bf16.gmra.mxu0 %v1133
    %v2192 = vpop.f32.mrf.mxu0
    %v2193 = vadd.f32 %v452, %v2192
    %v2194 = vpop.f32.mrf.mxu0
    %v2195 = vpop.f32.mrf.mxu0
    %v2196 = vadd.f32 %v452, %v2195
    %v2197 = vpop.f32.mrf.mxu0
    %2198 = vmatprep.mubr.bf16.mxu0 %v1147
    %2199 = vmatmul.mubr.bf16.gmra.mxu0 %v1146
    %v2200 = vpop.f32.mrf.mxu0
    %v2201 = vadd.f32 %v452, %v2200
    %v2202 = vpop.f32.mrf.mxu0
    %v2203 = vpop.f32.mrf.mxu0
    %v2204 = vadd.f32 %v452, %v2203
    %v2205 = vpop.f32.mrf.mxu0
    %2206 = vmatprep.mubr.bf16.mxu0 %v1160
    %2207 = vmatmul.mubr.bf16.gmra.mxu0 %v1159
    %v2208 = vpop.f32.mrf.mxu0
    %v2209 = vadd.f32 %v452, %v2208
    %v2210 = vpop.f32.mrf.mxu0
    %v2211 = vpop.f32.mrf.mxu0
    %v2212 = vadd.f32 %v452, %v2211
    %v2213 = vpop.f32.mrf.mxu0
    %2214 = vmatprep.mubr.bf16.mxu0 %v1173
    %2215 = vmatmul.mubr.bf16.gmra.mxu0 %v1172
    %v2216 = vpop.f32.mrf.mxu0
    %v2217 = vadd.f32 %v452, %v2216
    %v2218 = vpop.f32.mrf.mxu0
    %v2219 = vpop.f32.mrf.mxu0
    %v2220 = vadd.f32 %v452, %v2219
    %v2221 = vpop.f32.mrf.mxu0
    %2222 = vmatprep.mubr.bf16.mxu0 %v1186
    %2223 = vmatmul.mubr.bf16.gmra.mxu0 %v1185
    %v2224 = vpop.f32.mrf.mxu0
    %v2225 = vadd.f32 %v452, %v2224
    %v2226 = vpop.f32.mrf.mxu0
    %v2227 = vpop.f32.mrf.mxu0
    %v2228 = vadd.f32 %v452, %v2227
    %v2229 = vpop.f32.mrf.mxu0
    %2230 = vmatprep.mubr.bf16.mxu0 %v1199
    %2231 = vmatmul.mubr.bf16.gmra.mxu0 %v1198
    %v2232 = vpop.f32.mrf.mxu0
    %v2233 = vadd.f32 %v452, %v2232
    %v2234 = vpop.f32.mrf.mxu0
    %v2235 = vpop.f32.mrf.mxu0
    %v2236 = vadd.f32 %v452, %v2235
    %v2237 = vpop.f32.mrf.mxu0
    %2238 = vmatprep.mubr.bf16.mxu0 %v1212
    %2239 = vmatmul.mubr.bf16.gmra.mxu0 %v1211
    %v2240 = vpop.f32.mrf.mxu0
    %v2241 = vadd.f32 %v452, %v2240
    %v2242 = vpop.f32.mrf.mxu0
    %v2243 = vpop.f32.mrf.mxu0
    %v2244 = vadd.f32 %v452, %v2243
    %v2245 = vpop.f32.mrf.mxu0
    %2246 = vmatprep.mubr.bf16.mxu0 %v1225
    %2247 = vmatmul.mubr.bf16.gmra.mxu0 %v1224
    %v2248 = vpop.f32.mrf.mxu0
    %v2249 = vadd.f32 %v452, %v2248
    %v2250 = vpop.f32.mrf.mxu0
    %v2251 = vpop.f32.mrf.mxu0
    %v2252 = vadd.f32 %v452, %v2251
    %v2253 = vpop.f32.mrf.mxu0
    %2254 = vmatprep.mubr.bf16.mxu0 %v1238
    %2255 = vmatmul.mubr.bf16.gmra.mxu0 %v1237
    %v2256 = vpop.f32.mrf.mxu0
    %v2257 = vadd.f32 %v452, %v2256
    %v2258 = vpop.f32.mrf.mxu0
    %v2259 = vpop.f32.mrf.mxu0
    %v2260 = vadd.f32 %v452, %v2259
    %v2261 = vpop.f32.mrf.mxu0
    %2262 = vmatprep.mubr.bf16.mxu0 %v1251
    %2263 = vmatmul.mubr.bf16.gmra.mxu0 %v1250
    %v2264 = vpop.f32.mrf.mxu0
    %v2265 = vadd.f32 %v452, %v2264
    %v2266 = vpop.f32.mrf.mxu0
    %v2267 = vpop.f32.mrf.mxu0
    %v2268 = vadd.f32 %v452, %v2267
    %v2269 = vpop.f32.mrf.mxu0
    %2270 = vmatprep.mubr.bf16.mxu0 %v1264
    %2271 = vmatmul.mubr.bf16.gmra.mxu0 %v1263
    %v2272 = vpop.f32.mrf.mxu0
    %v2273 = vadd.f32 %v452, %v2272
    %v2274 = vpop.f32.mrf.mxu0
    %v2275 = vpop.f32.mrf.mxu0
    %v2276 = vadd.f32 %v452, %v2275
    %v2277 = vpop.f32.mrf.mxu0
    %2278 = vmatprep.mubr.bf16.mxu0 %v1277
    %2279 = vmatmul.mubr.bf16.gmra.mxu0 %v1276
    %v2280 = vpop.f32.mrf.mxu0
    %v2281 = vadd.f32 %v452, %v2280
    %v2282 = vpop.f32.mrf.mxu0
    %v2283 = vpop.f32.mrf.mxu0
    %v2284 = vadd.f32 %v452, %v2283
    %v2285 = vpop.f32.mrf.mxu0
    %2286 = vmatprep.mubr.bf16.mxu0 %v1290
    %2287 = vmatmul.mubr.bf16.gmra.mxu0 %v1289
    %v2288 = vpop.f32.mrf.mxu0
    %v2289 = vadd.f32 %v452, %v2288
    %v2290 = vpop.f32.mrf.mxu0
    %v2291 = vpop.f32.mrf.mxu0
    %v2292 = vadd.f32 %v452, %v2291
    %v2293 = vpop.f32.mrf.mxu0
    %2294 = vdwg.mxu0
    %2295 = vmatprep.subr.bf16.mxu0 0
    %2296 = vmatpush1.bf16.msra.mxu0 %v1949
    %2297 = vmatprep.subr.bf16.mxu0 0
    %2298 = vmatpush1.bf16.msra.mxu0 %v1948
    %2299 = vmatprep.subr.bf16.mxu0 0
    %2300 = vmatpush1.bf16.msra.mxu0 %v1947
    %2301 = vmatprep.subr.bf16.mxu0 0
    %2302 = vmatpush1.bf16.msra.mxu0 %v1946
    %2303 = vmatprep.subr.bf16.mxu0 0
    %2304 = vmatpush1.bf16.msra.mxu0 %v1945
    %2305 = vmatprep.subr.bf16.mxu0 0
    %2306 = vmatpush1.bf16.msra.mxu0 %v1944
    %2307 = vmatprep.subr.bf16.mxu0 0
    %2308 = vmatpush1.bf16.msra.mxu0 %v1943
    %2309 = vmatprep.subr.bf16.mxu0 0
    %2310 = vmatpush1.bf16.msra.mxu0 %v1942
    %2311 = vmatprep.subr.bf16.mxu0 0
    %2312 = vmatpush2.bf16.msra.mxu0 %v1957
    %2313 = vmatprep.subr.bf16.mxu0 0
    %2314 = vmatpush2.bf16.msra.mxu0 %v1956
    %2315 = vmatprep.subr.bf16.mxu0 0
    %2316 = vmatpush2.bf16.msra.mxu0 %v1955
    %2317 = vmatprep.subr.bf16.mxu0 0
    %2318 = vmatpush2.bf16.msra.mxu0 %v1954
    %2319 = vmatprep.subr.bf16.mxu0 0
    %2320 = vmatpush2.bf16.msra.mxu0 %v1953
    %2321 = vmatprep.subr.bf16.mxu0 0
    %2322 = vmatpush2.bf16.msra.mxu0 %v1952
    %2323 = vmatprep.subr.bf16.mxu0 0
    %2324 = vmatpush2.bf16.msra.mxu0 %v1951
    %2325 = vmatprep.subr.bf16.mxu0 0
    %2326 = vmatpush2.bf16.msra.mxu0 %v1950
    %2327 = vmatprep.mubr.bf16.mxu0 %v1097
    %2328 = vmatmul.mubr.bf16.gmra.mxu0 %v1096
    %v2329 = vpop.f32.mrf.mxu0
    %v2330 = vadd.f32 %v2169, %v2329
    %v2331 = vpop.f32.mrf.mxu0
    %v2332 = vpop.f32.mrf.mxu0
    %v2333 = vadd.f32 %v2172, %v2332
    %v2334 = vpop.f32.mrf.mxu0
    %2335 = vmatprep.mubr.bf16.mxu0 %v1110
    %2336 = vmatmul.mubr.bf16.gmra.mxu0 %v1109
    %v2337 = vpop.f32.mrf.mxu0
    %v2338 = vadd.f32 %v2177, %v2337
    %v2339 = vpop.f32.mrf.mxu0
    %v2340 = vpop.f32.mrf.mxu0
    %v2341 = vadd.f32 %v2180, %v2340
    %v2342 = vpop.f32.mrf.mxu0
    %2343 = vmatprep.mubr.bf16.mxu0 %v1123
    %2344 = vmatmul.mubr.bf16.gmra.mxu0 %v1122
    %v2345 = vpop.f32.mrf.mxu0
    %v2346 = vadd.f32 %v2185, %v2345
    %v2347 = vpop.f32.mrf.mxu0
    %v2348 = vpop.f32.mrf.mxu0
    %v2349 = vadd.f32 %v2188, %v2348
    %v2350 = vpop.f32.mrf.mxu0
    %2351 = vmatprep.mubr.bf16.mxu0 %v1136
    %2352 = vmatmul.mubr.bf16.gmra.mxu0 %v1135
    %v2353 = vpop.f32.mrf.mxu0
    %v2354 = vadd.f32 %v2193, %v2353
    %v2355 = vpop.f32.mrf.mxu0
    %v2356 = vpop.f32.mrf.mxu0
    %v2357 = vadd.f32 %v2196, %v2356
    %v2358 = vpop.f32.mrf.mxu0
    %2359 = vmatprep.mubr.bf16.mxu0 %v1149
    %2360 = vmatmul.mubr.bf16.gmra.mxu0 %v1148
    %v2361 = vpop.f32.mrf.mxu0
    %v2362 = vadd.f32 %v2201, %v2361
    %v2363 = vpop.f32.mrf.mxu0
    %v2364 = vpop.f32.mrf.mxu0
    %v2365 = vadd.f32 %v2204, %v2364
    %v2366 = vpop.f32.mrf.mxu0
    %2367 = vmatprep.mubr.bf16.mxu0 %v1162
    %2368 = vmatmul.mubr.bf16.gmra.mxu0 %v1161
    %v2369 = vpop.f32.mrf.mxu0
    %v2370 = vadd.f32 %v2209, %v2369
    %v2371 = vpop.f32.mrf.mxu0
    %v2372 = vpop.f32.mrf.mxu0
    %v2373 = vadd.f32 %v2212, %v2372
    %v2374 = vpop.f32.mrf.mxu0
    %2375 = vmatprep.mubr.bf16.mxu0 %v1175
    %2376 = vmatmul.mubr.bf16.gmra.mxu0 %v1174
    %v2377 = vpop.f32.mrf.mxu0
    %v2378 = vadd.f32 %v2217, %v2377
    %v2379 = vpop.f32.mrf.mxu0
    %v2380 = vpop.f32.mrf.mxu0
    %v2381 = vadd.f32 %v2220, %v2380
    %v2382 = vpop.f32.mrf.mxu0
    %2383 = vmatprep.mubr.bf16.mxu0 %v1188
    %2384 = vmatmul.mubr.bf16.gmra.mxu0 %v1187
    %v2385 = vpop.f32.mrf.mxu0
    %v2386 = vadd.f32 %v2225, %v2385
    %v2387 = vpop.f32.mrf.mxu0
    %v2388 = vpop.f32.mrf.mxu0
    %v2389 = vadd.f32 %v2228, %v2388
    %v2390 = vpop.f32.mrf.mxu0
    %2391 = vmatprep.mubr.bf16.mxu0 %v1201
    %2392 = vmatmul.mubr.bf16.gmra.mxu0 %v1200
    %v2393 = vpop.f32.mrf.mxu0
    %v2394 = vadd.f32 %v2233, %v2393
    %v2395 = vpop.f32.mrf.mxu0
    %v2396 = vpop.f32.mrf.mxu0
    %v2397 = vadd.f32 %v2236, %v2396
    %v2398 = vpop.f32.mrf.mxu0
    %2399 = vmatprep.mubr.bf16.mxu0 %v1214
    %2400 = vmatmul.mubr.bf16.gmra.mxu0 %v1213
    %v2401 = vpop.f32.mrf.mxu0
    %v2402 = vadd.f32 %v2241, %v2401
    %v2403 = vpop.f32.mrf.mxu0
    %v2404 = vpop.f32.mrf.mxu0
    %v2405 = vadd.f32 %v2244, %v2404
    %v2406 = vpop.f32.mrf.mxu0
    %2407 = vmatprep.mubr.bf16.mxu0 %v1227
    %2408 = vmatmul.mubr.bf16.gmra.mxu0 %v1226
    %v2409 = vpop.f32.mrf.mxu0
    %v2410 = vadd.f32 %v2249, %v2409
    %v2411 = vpop.f32.mrf.mxu0
    %v2412 = vpop.f32.mrf.mxu0
    %v2413 = vadd.f32 %v2252, %v2412
    %v2414 = vpop.f32.mrf.mxu0
    %2415 = vmatprep.mubr.bf16.mxu0 %v1240
    %2416 = vmatmul.mubr.bf16.gmra.mxu0 %v1239
    %v2417 = vpop.f32.mrf.mxu0
    %v2418 = vadd.f32 %v2257, %v2417
    %v2419 = vpop.f32.mrf.mxu0
    %v2420 = vpop.f32.mrf.mxu0
    %v2421 = vadd.f32 %v2260, %v2420
    %v2422 = vpop.f32.mrf.mxu0
    %2423 = vmatprep.mubr.bf16.mxu0 %v1253
    %2424 = vmatmul.mubr.bf16.gmra.mxu0 %v1252
    %v2425 = vpop.f32.mrf.mxu0
    %v2426 = vadd.f32 %v2265, %v2425
    %v2427 = vpop.f32.mrf.mxu0
    %v2428 = vpop.f32.mrf.mxu0
    %v2429 = vadd.f32 %v2268, %v2428
    %v2430 = vpop.f32.mrf.mxu0
    %2431 = vmatprep.mubr.bf16.mxu0 %v1266
    %2432 = vmatmul.mubr.bf16.gmra.mxu0 %v1265
    %v2433 = vpop.f32.mrf.mxu0
    %v2434 = vadd.f32 %v2273, %v2433
    %v2435 = vpop.f32.mrf.mxu0
    %v2436 = vpop.f32.mrf.mxu0
    %v2437 = vadd.f32 %v2276, %v2436
    %v2438 = vpop.f32.mrf.mxu0
    %2439 = vmatprep.mubr.bf16.mxu0 %v1279
    %2440 = vmatmul.mubr.bf16.gmra.mxu0 %v1278
    %v2441 = vpop.f32.mrf.mxu0
    %v2442 = vadd.f32 %v2281, %v2441
    %v2443 = vpop.f32.mrf.mxu0
    %v2444 = vpop.f32.mrf.mxu0
    %v2445 = vadd.f32 %v2284, %v2444
    %v2446 = vpop.f32.mrf.mxu0
    %2447 = vmatprep.mubr.bf16.mxu0 %v1292
    %2448 = vmatmul.mubr.bf16.gmra.mxu0 %v1291
    %v2449 = vpop.f32.mrf.mxu0
    %v2450 = vadd.f32 %v2289, %v2449
    %v2451 = vpop.f32.mrf.mxu0
    %v2452 = vpop.f32.mrf.mxu0
    %v2453 = vadd.f32 %v2292, %v2452
    %v2454 = vpop.f32.mrf.mxu0
    %2455 = vdwg.mxu0
    %2456 = vmatprep.subr.bf16.mxu0 0
    %2457 = vmatpush1.bf16.msra.mxu0 %v1965
    %2458 = vmatprep.subr.bf16.mxu0 0
    %2459 = vmatpush1.bf16.msra.mxu0 %v1964
    %2460 = vmatprep.subr.bf16.mxu0 0
    %2461 = vmatpush1.bf16.msra.mxu0 %v1963
    %2462 = vmatprep.subr.bf16.mxu0 0
    %2463 = vmatpush1.bf16.msra.mxu0 %v1962
    %2464 = vmatprep.subr.bf16.mxu0 0
    %2465 = vmatpush1.bf16.msra.mxu0 %v1961
    %2466 = vmatprep.subr.bf16.mxu0 0
    %2467 = vmatpush1.bf16.msra.mxu0 %v1960
    %2468 = vmatprep.subr.bf16.mxu0 0
    %2469 = vmatpush1.bf16.msra.mxu0 %v1959
    %2470 = vmatprep.subr.bf16.mxu0 0
    %2471 = vmatpush1.bf16.msra.mxu0 %v1958
    %2472 = vmatprep.subr.bf16.mxu0 0
    %2473 = vmatpush2.bf16.msra.mxu0 %v1973
    %2474 = vmatprep.subr.bf16.mxu0 0
    %2475 = vmatpush2.bf16.msra.mxu0 %v1972
    %2476 = vmatprep.subr.bf16.mxu0 0
    %2477 = vmatpush2.bf16.msra.mxu0 %v1971
    %2478 = vmatprep.subr.bf16.mxu0 0
    %2479 = vmatpush2.bf16.msra.mxu0 %v1970
    %2480 = vmatprep.subr.bf16.mxu0 0
    %2481 = vmatpush2.bf16.msra.mxu0 %v1969
    %2482 = vmatprep.subr.bf16.mxu0 0
    %2483 = vmatpush2.bf16.msra.mxu0 %v1968
    %2484 = vmatprep.subr.bf16.mxu0 0
    %2485 = vmatpush2.bf16.msra.mxu0 %v1967
    %2486 = vmatprep.subr.bf16.mxu0 0
    %2487 = vmatpush2.bf16.msra.mxu0 %v1966
    %2488 = vmatprep.mubr.bf16.mxu0 %v1099
    %2489 = vmatmul.mubr.bf16.gmra.mxu0 %v1098
    %v2490 = vpop.f32.mrf.mxu0
    %v2491 = vadd.f32 %v2330, %v2490
    %v2492 = vpop.f32.mrf.mxu0
    %v2493 = vpop.f32.mrf.mxu0
    %v2494 = vadd.f32 %v2333, %v2493
    %v2495 = vpop.f32.mrf.mxu0
    %2496 = vmatprep.mubr.bf16.mxu0 %v1112
    %2497 = vmatmul.mubr.bf16.gmra.mxu0 %v1111
    %v2498 = vpop.f32.mrf.mxu0
    %v2499 = vadd.f32 %v2338, %v2498
    %v2500 = vpop.f32.mrf.mxu0
    %v2501 = vpop.f32.mrf.mxu0
    %v2502 = vadd.f32 %v2341, %v2501
    %v2503 = vpop.f32.mrf.mxu0
    %2504 = vmatprep.mubr.bf16.mxu0 %v1125
    %2505 = vmatmul.mubr.bf16.gmra.mxu0 %v1124
    %v2506 = vpop.f32.mrf.mxu0
    %v2507 = vadd.f32 %v2346, %v2506
    %v2508 = vpop.f32.mrf.mxu0
    %v2509 = vpop.f32.mrf.mxu0
    %v2510 = vadd.f32 %v2349, %v2509
    %v2511 = vpop.f32.mrf.mxu0
    %2512 = vmatprep.mubr.bf16.mxu0 %v1138
    %2513 = vmatmul.mubr.bf16.gmra.mxu0 %v1137
    %v2514 = vpop.f32.mrf.mxu0
    %v2515 = vadd.f32 %v2354, %v2514
    %v2516 = vpop.f32.mrf.mxu0
    %v2517 = vpop.f32.mrf.mxu0
    %v2518 = vadd.f32 %v2357, %v2517
    %v2519 = vpop.f32.mrf.mxu0
    %2520 = vmatprep.mubr.bf16.mxu0 %v1151
    %2521 = vmatmul.mubr.bf16.gmra.mxu0 %v1150
    %v2522 = vpop.f32.mrf.mxu0
    %v2523 = vadd.f32 %v2362, %v2522
    %v2524 = vpop.f32.mrf.mxu0
    %v2525 = vpop.f32.mrf.mxu0
    %v2526 = vadd.f32 %v2365, %v2525
    %v2527 = vpop.f32.mrf.mxu0
    %2528 = vmatprep.mubr.bf16.mxu0 %v1164
    %2529 = vmatmul.mubr.bf16.gmra.mxu0 %v1163
    %v2530 = vpop.f32.mrf.mxu0
    %v2531 = vadd.f32 %v2370, %v2530
    %v2532 = vpop.f32.mrf.mxu0
    %v2533 = vpop.f32.mrf.mxu0
    %v2534 = vadd.f32 %v2373, %v2533
    %v2535 = vpop.f32.mrf.mxu0
    %2536 = vmatprep.mubr.bf16.mxu0 %v1177
    %2537 = vmatmul.mubr.bf16.gmra.mxu0 %v1176
    %v2538 = vpop.f32.mrf.mxu0
    %v2539 = vadd.f32 %v2378, %v2538
    %v2540 = vpop.f32.mrf.mxu0
    %v2541 = vpop.f32.mrf.mxu0
    %v2542 = vadd.f32 %v2381, %v2541
    %v2543 = vpop.f32.mrf.mxu0
    %2544 = vmatprep.mubr.bf16.mxu0 %v1190
    %2545 = vmatmul.mubr.bf16.gmra.mxu0 %v1189
    %v2546 = vpop.f32.mrf.mxu0
    %v2547 = vadd.f32 %v2386, %v2546
    %v2548 = vpop.f32.mrf.mxu0
    %v2549 = vpop.f32.mrf.mxu0
    %v2550 = vadd.f32 %v2389, %v2549
    %v2551 = vpop.f32.mrf.mxu0
    %2552 = vmatprep.mubr.bf16.mxu0 %v1203
    %2553 = vmatmul.mubr.bf16.gmra.mxu0 %v1202
    %v2554 = vpop.f32.mrf.mxu0
    %v2555 = vadd.f32 %v2394, %v2554
    %v2556 = vpop.f32.mrf.mxu0
    %v2557 = vpop.f32.mrf.mxu0
    %v2558 = vadd.f32 %v2397, %v2557
    %v2559 = vpop.f32.mrf.mxu0
    %2560 = vmatprep.mubr.bf16.mxu0 %v1216
    %2561 = vmatmul.mubr.bf16.gmra.mxu0 %v1215
    %v2562 = vpop.f32.mrf.mxu0
    %v2563 = vadd.f32 %v2402, %v2562
    %v2564 = vpop.f32.mrf.mxu0
    %v2565 = vpop.f32.mrf.mxu0
    %v2566 = vadd.f32 %v2405, %v2565
    %v2567 = vpop.f32.mrf.mxu0
    %2568 = vmatprep.mubr.bf16.mxu0 %v1229
    %2569 = vmatmul.mubr.bf16.gmra.mxu0 %v1228
    %v2570 = vpop.f32.mrf.mxu0
    %v2571 = vadd.f32 %v2410, %v2570
    %v2572 = vpop.f32.mrf.mxu0
    %v2573 = vpop.f32.mrf.mxu0
    %v2574 = vadd.f32 %v2413, %v2573
    %v2575 = vpop.f32.mrf.mxu0
    %2576 = vmatprep.mubr.bf16.mxu0 %v1242
    %2577 = vmatmul.mubr.bf16.gmra.mxu0 %v1241
    %v2578 = vpop.f32.mrf.mxu0
    %v2579 = vadd.f32 %v2418, %v2578
    %v2580 = vpop.f32.mrf.mxu0
    %v2581 = vpop.f32.mrf.mxu0
    %v2582 = vadd.f32 %v2421, %v2581
    %v2583 = vpop.f32.mrf.mxu0
    %2584 = vmatprep.mubr.bf16.mxu0 %v1255
    %2585 = vmatmul.mubr.bf16.gmra.mxu0 %v1254
    %v2586 = vpop.f32.mrf.mxu0
    %v2587 = vadd.f32 %v2426, %v2586
    %v2588 = vpop.f32.mrf.mxu0
    %v2589 = vpop.f32.mrf.mxu0
    %v2590 = vadd.f32 %v2429, %v2589
    %v2591 = vpop.f32.mrf.mxu0
    %2592 = vmatprep.mubr.bf16.mxu0 %v1268
    %2593 = vmatmul.mubr.bf16.gmra.mxu0 %v1267
    %v2594 = vpop.f32.mrf.mxu0
    %v2595 = vadd.f32 %v2434, %v2594
    %v2596 = vpop.f32.mrf.mxu0
    %v2597 = vpop.f32.mrf.mxu0
    %v2598 = vadd.f32 %v2437, %v2597
    %v2599 = vpop.f32.mrf.mxu0
    %2600 = vmatprep.mubr.bf16.mxu0 %v1281
    %2601 = vmatmul.mubr.bf16.gmra.mxu0 %v1280
    %v2602 = vpop.f32.mrf.mxu0
    %v2603 = vadd.f32 %v2442, %v2602
    %v2604 = vpop.f32.mrf.mxu0
    %v2605 = vpop.f32.mrf.mxu0
    %v2606 = vadd.f32 %v2445, %v2605
    %v2607 = vpop.f32.mrf.mxu0
    %2608 = vmatprep.mubr.bf16.mxu0 %v1294
    %2609 = vmatmul.mubr.bf16.gmra.mxu0 %v1293
    %v2610 = vpop.f32.mrf.mxu0
    %v2611 = vadd.f32 %v2450, %v2610
    %v2612 = vpop.f32.mrf.mxu0
    %v2613 = vpop.f32.mrf.mxu0
    %v2614 = vadd.f32 %v2453, %v2613
    %v2615 = vpop.f32.mrf.mxu0
    %2616 = vdwg.mxu0
    %2617 = vmatprep.subr.bf16.mxu0 0
    %2618 = vmatpush1.bf16.msra.mxu0 %v1981
    %2619 = vmatprep.subr.bf16.mxu0 0
    %2620 = vmatpush1.bf16.msra.mxu0 %v1980
    %2621 = vmatprep.subr.bf16.mxu0 0
    %2622 = vmatpush1.bf16.msra.mxu0 %v1979
    %2623 = vmatprep.subr.bf16.mxu0 0
    %2624 = vmatpush1.bf16.msra.mxu0 %v1978
    %2625 = vmatprep.subr.bf16.mxu0 0
    %2626 = vmatpush1.bf16.msra.mxu0 %v1977
    %2627 = vmatprep.subr.bf16.mxu0 0
    %2628 = vmatpush1.bf16.msra.mxu0 %v1976
    %2629 = vmatprep.subr.bf16.mxu0 0
    %2630 = vmatpush1.bf16.msra.mxu0 %v1975
    %2631 = vmatprep.subr.bf16.mxu0 0
    %2632 = vmatpush1.bf16.msra.mxu0 %v1974
    %2633 = vmatprep.subr.bf16.mxu0 0
    %2634 = vmatpush2.bf16.msra.mxu0 %v1989
    %2635 = vmatprep.subr.bf16.mxu0 0
    %2636 = vmatpush2.bf16.msra.mxu0 %v1988
    %2637 = vmatprep.subr.bf16.mxu0 0
    %2638 = vmatpush2.bf16.msra.mxu0 %v1987
    %2639 = vmatprep.subr.bf16.mxu0 0
    %2640 = vmatpush2.bf16.msra.mxu0 %v1986
    %2641 = vmatprep.subr.bf16.mxu0 0
    %2642 = vmatpush2.bf16.msra.mxu0 %v1985
    %2643 = vmatprep.subr.bf16.mxu0 0
    %2644 = vmatpush2.bf16.msra.mxu0 %v1984
    %2645 = vmatprep.subr.bf16.mxu0 0
    %2646 = vmatpush2.bf16.msra.mxu0 %v1983
    %2647 = vmatprep.subr.bf16.mxu0 0
    %2648 = vmatpush2.bf16.msra.mxu0 %v1982
    %2649 = vmatprep.mubr.bf16.mxu0 %v1101
    %2650 = vmatmul.mubr.bf16.gmra.mxu0 %v1100
    %v2651 = vpop.f32.mrf.mxu0
    %v2652 = vadd.f32 %v2491, %v2651
    %v2653 = vpop.f32.mrf.mxu0
    %v2654 = vpop.f32.mrf.mxu0
    %v2655 = vadd.f32 %v2494, %v2654
    %v2656 = vpop.f32.mrf.mxu0
    %2657 = vmatprep.mubr.bf16.mxu0 %v1114
    %2658 = vmatmul.mubr.bf16.gmra.mxu0 %v1113
    %v2659 = vpop.f32.mrf.mxu0
    %v2660 = vadd.f32 %v2499, %v2659
    %v2661 = vpop.f32.mrf.mxu0
    %v2662 = vpop.f32.mrf.mxu0
    %v2663 = vadd.f32 %v2502, %v2662
    %v2664 = vpop.f32.mrf.mxu0
    %2665 = vmatprep.mubr.bf16.mxu0 %v1127
    %2666 = vmatmul.mubr.bf16.gmra.mxu0 %v1126
    %v2667 = vpop.f32.mrf.mxu0
    %v2668 = vadd.f32 %v2507, %v2667
    %v2669 = vpop.f32.mrf.mxu0
    %v2670 = vpop.f32.mrf.mxu0
    %v2671 = vadd.f32 %v2510, %v2670
    %v2672 = vpop.f32.mrf.mxu0
    %2673 = vmatprep.mubr.bf16.mxu0 %v1140
    %2674 = vmatmul.mubr.bf16.gmra.mxu0 %v1139
    %v2675 = vpop.f32.mrf.mxu0
    %v2676 = vadd.f32 %v2515, %v2675
    %v2677 = vpop.f32.mrf.mxu0
    %v2678 = vpop.f32.mrf.mxu0
    %v2679 = vadd.f32 %v2518, %v2678
    %v2680 = vpop.f32.mrf.mxu0
    %2681 = vmatprep.mubr.bf16.mxu0 %v1153
    %2682 = vmatmul.mubr.bf16.gmra.mxu0 %v1152
    %v2683 = vpop.f32.mrf.mxu0
    %v2684 = vadd.f32 %v2523, %v2683
    %v2685 = vpop.f32.mrf.mxu0
    %v2686 = vpop.f32.mrf.mxu0
    %v2687 = vadd.f32 %v2526, %v2686
    %v2688 = vpop.f32.mrf.mxu0
    %2689 = vmatprep.mubr.bf16.mxu0 %v1166
    %2690 = vmatmul.mubr.bf16.gmra.mxu0 %v1165
    %v2691 = vpop.f32.mrf.mxu0
    %v2692 = vadd.f32 %v2531, %v2691
    %v2693 = vpop.f32.mrf.mxu0
    %v2694 = vpop.f32.mrf.mxu0
    %v2695 = vadd.f32 %v2534, %v2694
    %v2696 = vpop.f32.mrf.mxu0
    %2697 = vmatprep.mubr.bf16.mxu0 %v1179
    %2698 = vmatmul.mubr.bf16.gmra.mxu0 %v1178
    %v2699 = vpop.f32.mrf.mxu0
    %v2700 = vadd.f32 %v2539, %v2699
    %v2701 = vpop.f32.mrf.mxu0
    %v2702 = vpop.f32.mrf.mxu0
    %v2703 = vadd.f32 %v2542, %v2702
    %v2704 = vpop.f32.mrf.mxu0
    %2705 = vmatprep.mubr.bf16.mxu0 %v1192
    %2706 = vmatmul.mubr.bf16.gmra.mxu0 %v1191
    %v2707 = vpop.f32.mrf.mxu0
    %v2708 = vadd.f32 %v2547, %v2707
    %v2709 = vpop.f32.mrf.mxu0
    %v2710 = vpop.f32.mrf.mxu0
    %v2711 = vadd.f32 %v2550, %v2710
    %v2712 = vpop.f32.mrf.mxu0
    %2713 = vmatprep.mubr.bf16.mxu0 %v1205
    %2714 = vmatmul.mubr.bf16.gmra.mxu0 %v1204
    %v2715 = vpop.f32.mrf.mxu0
    %v2716 = vadd.f32 %v2555, %v2715
    %v2717 = vpop.f32.mrf.mxu0
    %v2718 = vpop.f32.mrf.mxu0
    %v2719 = vadd.f32 %v2558, %v2718
    %v2720 = vpop.f32.mrf.mxu0
    %2721 = vmatprep.mubr.bf16.mxu0 %v1218
    %2722 = vmatmul.mubr.bf16.gmra.mxu0 %v1217
    %v2723 = vpop.f32.mrf.mxu0
    %v2724 = vadd.f32 %v2563, %v2723
    %v2725 = vpop.f32.mrf.mxu0
    %v2726 = vpop.f32.mrf.mxu0
    %v2727 = vadd.f32 %v2566, %v2726
    %v2728 = vpop.f32.mrf.mxu0
    %2729 = vmatprep.mubr.bf16.mxu0 %v1231
    %2730 = vmatmul.mubr.bf16.gmra.mxu0 %v1230
    %v2731 = vpop.f32.mrf.mxu0
    %v2732 = vadd.f32 %v2571, %v2731
    %v2733 = vpop.f32.mrf.mxu0
    %v2734 = vpop.f32.mrf.mxu0
    %v2735 = vadd.f32 %v2574, %v2734
    %v2736 = vpop.f32.mrf.mxu0
    %2737 = vmatprep.mubr.bf16.mxu0 %v1244
    %2738 = vmatmul.mubr.bf16.gmra.mxu0 %v1243
    %v2739 = vpop.f32.mrf.mxu0
    %v2740 = vadd.f32 %v2579, %v2739
    %v2741 = vpop.f32.mrf.mxu0
    %v2742 = vpop.f32.mrf.mxu0
    %v2743 = vadd.f32 %v2582, %v2742
    %v2744 = vpop.f32.mrf.mxu0
    %2745 = vmatprep.mubr.bf16.mxu0 %v1257
    %2746 = vmatmul.mubr.bf16.gmra.mxu0 %v1256
    %v2747 = vpop.f32.mrf.mxu0
    %v2748 = vadd.f32 %v2587, %v2747
    %v2749 = vpop.f32.mrf.mxu0
    %v2750 = vpop.f32.mrf.mxu0
    %v2751 = vadd.f32 %v2590, %v2750
    %v2752 = vpop.f32.mrf.mxu0
    %2753 = vmatprep.mubr.bf16.mxu0 %v1270
    %2754 = vmatmul.mubr.bf16.gmra.mxu0 %v1269
    %v2755 = vpop.f32.mrf.mxu0
    %v2756 = vadd.f32 %v2595, %v2755
    %v2757 = vpop.f32.mrf.mxu0
    %v2758 = vpop.f32.mrf.mxu0
    %v2759 = vadd.f32 %v2598, %v2758
    %v2760 = vpop.f32.mrf.mxu0
    %2761 = vmatprep.mubr.bf16.mxu0 %v1283
    %2762 = vmatmul.mubr.bf16.gmra.mxu0 %v1282
    %v2763 = vpop.f32.mrf.mxu0
    %v2764 = vadd.f32 %v2603, %v2763
    %v2765 = vpop.f32.mrf.mxu0
    %v2766 = vpop.f32.mrf.mxu0
    %v2767 = vadd.f32 %v2606, %v2766
    %v2768 = vpop.f32.mrf.mxu0
    %2769 = vmatprep.mubr.bf16.mxu0 %v1296
    %2770 = vmatmul.mubr.bf16.gmra.mxu0 %v1295
    %v2771 = vpop.f32.mrf.mxu0
    %v2772 = vadd.f32 %v2611, %v2771
    %v2773 = vpop.f32.mrf.mxu0
    %v2774 = vpop.f32.mrf.mxu0
    %v2775 = vadd.f32 %v2614, %v2774
    %v2776 = vpop.f32.mrf.mxu0
    %2777 = vdwg.mxu0
    %2778 = vmatprep.subr.bf16.mxu0 0
    %2779 = vmatpush1.bf16.msra.mxu0 %v1997
    %2780 = vmatprep.subr.bf16.mxu0 0
    %2781 = vmatpush1.bf16.msra.mxu0 %v1996
    %2782 = vmatprep.subr.bf16.mxu0 0
    %2783 = vmatpush1.bf16.msra.mxu0 %v1995
    %2784 = vmatprep.subr.bf16.mxu0 0
    %2785 = vmatpush1.bf16.msra.mxu0 %v1994
    %2786 = vmatprep.subr.bf16.mxu0 0
    %2787 = vmatpush1.bf16.msra.mxu0 %v1993
    %2788 = vmatprep.subr.bf16.mxu0 0
    %2789 = vmatpush1.bf16.msra.mxu0 %v1992
    %2790 = vmatprep.subr.bf16.mxu0 0
    %2791 = vmatpush1.bf16.msra.mxu0 %v1991
    %2792 = vmatprep.subr.bf16.mxu0 0
    %2793 = vmatpush1.bf16.msra.mxu0 %v1990
    %2794 = vmatprep.subr.bf16.mxu0 0
    %2795 = vmatpush2.bf16.msra.mxu0 %v2005
    %2796 = vmatprep.subr.bf16.mxu0 0
    %2797 = vmatpush2.bf16.msra.mxu0 %v2004
    %2798 = vmatprep.subr.bf16.mxu0 0
    %2799 = vmatpush2.bf16.msra.mxu0 %v2003
    %2800 = vmatprep.subr.bf16.mxu0 0
    %2801 = vmatpush2.bf16.msra.mxu0 %v2002
    %2802 = vmatprep.subr.bf16.mxu0 0
    %2803 = vmatpush2.bf16.msra.mxu0 %v2001
    %2804 = vmatprep.subr.bf16.mxu0 0
    %2805 = vmatpush2.bf16.msra.mxu0 %v2000
    %2806 = vmatprep.subr.bf16.mxu0 0
    %2807 = vmatpush2.bf16.msra.mxu0 %v1999
    %2808 = vmatprep.subr.bf16.mxu0 0
    %2809 = vmatpush2.bf16.msra.mxu0 %v1998
    %2810 = vmatprep.mubr.bf16.mxu0 %v1103
    %2811 = vmatmul.mubr.bf16.gmra.mxu0 %v1102
    %v2812 = vpop.f32.mrf.mxu0
    %v2813 = vadd.f32 %v2652, %v2812
    %v2814 = vpop.f32.mrf.mxu0
    %v2815 = vpop.f32.mrf.mxu0
    %v2816 = vadd.f32 %v2655, %v2815
    %v2817 = vpop.f32.mrf.mxu0
    %2818 = vmatprep.mubr.bf16.mxu0 %v1116
    %2819 = vmatmul.mubr.bf16.gmra.mxu0 %v1115
    %v2820 = vpop.f32.mrf.mxu0
    %v2821 = vadd.f32 %v2660, %v2820
    %v2822 = vpop.f32.mrf.mxu0
    %v2823 = vpop.f32.mrf.mxu0
    %v2824 = vadd.f32 %v2663, %v2823
    %v2825 = vpop.f32.mrf.mxu0
    %2826 = vmatprep.mubr.bf16.mxu0 %v1129
    %2827 = vmatmul.mubr.bf16.gmra.mxu0 %v1128
    %v2828 = vpop.f32.mrf.mxu0
    %v2829 = vadd.f32 %v2668, %v2828
    %v2830 = vpop.f32.mrf.mxu0
    %v2831 = vpop.f32.mrf.mxu0
    %v2832 = vadd.f32 %v2671, %v2831
    %v2833 = vpop.f32.mrf.mxu0
    %2834 = vmatprep.mubr.bf16.mxu0 %v1142
    %2835 = vmatmul.mubr.bf16.gmra.mxu0 %v1141
    %v2836 = vpop.f32.mrf.mxu0
    %v2837 = vadd.f32 %v2676, %v2836
    %v2838 = vpop.f32.mrf.mxu0
    %v2839 = vpop.f32.mrf.mxu0
    %v2840 = vadd.f32 %v2679, %v2839
    %v2841 = vpop.f32.mrf.mxu0
    %2842 = vmatprep.mubr.bf16.mxu0 %v1155
    %2843 = vmatmul.mubr.bf16.gmra.mxu0 %v1154
    %v2844 = vpop.f32.mrf.mxu0
    %v2845 = vadd.f32 %v2684, %v2844
    %v2846 = vpop.f32.mrf.mxu0
    %v2847 = vpop.f32.mrf.mxu0
    %v2848 = vadd.f32 %v2687, %v2847
    %v2849 = vpop.f32.mrf.mxu0
    %2850 = vmatprep.mubr.bf16.mxu0 %v1168
    %2851 = vmatmul.mubr.bf16.gmra.mxu0 %v1167
    %v2852 = vpop.f32.mrf.mxu0
    %v2853 = vadd.f32 %v2692, %v2852
    %v2854 = vpop.f32.mrf.mxu0
    %v2855 = vpop.f32.mrf.mxu0
    %v2856 = vadd.f32 %v2695, %v2855
    %v2857 = vpop.f32.mrf.mxu0
    %2858 = vmatprep.mubr.bf16.mxu0 %v1181
    %2859 = vmatmul.mubr.bf16.gmra.mxu0 %v1180
    %v2860 = vpop.f32.mrf.mxu0
    %v2861 = vadd.f32 %v2700, %v2860
    %v2862 = vpop.f32.mrf.mxu0
    %v2863 = vpop.f32.mrf.mxu0
    %v2864 = vadd.f32 %v2703, %v2863
    %v2865 = vpop.f32.mrf.mxu0
    %2866 = vmatprep.mubr.bf16.mxu0 %v1194
    %2867 = vmatmul.mubr.bf16.gmra.mxu0 %v1193
    %v2868 = vpop.f32.mrf.mxu0
    %v2869 = vadd.f32 %v2708, %v2868
    %v2870 = vpop.f32.mrf.mxu0
    %v2871 = vpop.f32.mrf.mxu0
    %v2872 = vadd.f32 %v2711, %v2871
    %v2873 = vpop.f32.mrf.mxu0
    %2874 = vmatprep.mubr.bf16.mxu0 %v1207
    %2875 = vmatmul.mubr.bf16.gmra.mxu0 %v1206
    %v2876 = vpop.f32.mrf.mxu0
    %v2877 = vadd.f32 %v2716, %v2876
    %v2878 = vpop.f32.mrf.mxu0
    %v2879 = vpop.f32.mrf.mxu0
    %v2880 = vadd.f32 %v2719, %v2879
    %v2881 = vpop.f32.mrf.mxu0
    %2882 = vmatprep.mubr.bf16.mxu0 %v1220
    %2883 = vmatmul.mubr.bf16.gmra.mxu0 %v1219
    %v2884 = vpop.f32.mrf.mxu0
    %v2885 = vadd.f32 %v2724, %v2884
    %v2886 = vpop.f32.mrf.mxu0
    %v2887 = vpop.f32.mrf.mxu0
    %v2888 = vadd.f32 %v2727, %v2887
    %v2889 = vpop.f32.mrf.mxu0
    %2890 = vmatprep.mubr.bf16.mxu0 %v1233
    %2891 = vmatmul.mubr.bf16.gmra.mxu0 %v1232
    %v2892 = vpop.f32.mrf.mxu0
    %v2893 = vadd.f32 %v2732, %v2892
    %v2894 = vpop.f32.mrf.mxu0
    %v2895 = vpop.f32.mrf.mxu0
    %v2896 = vadd.f32 %v2735, %v2895
    %v2897 = vpop.f32.mrf.mxu0
    %2898 = vmatprep.mubr.bf16.mxu0 %v1246
    %2899 = vmatmul.mubr.bf16.gmra.mxu0 %v1245
    %v2900 = vpop.f32.mrf.mxu0
    %v2901 = vadd.f32 %v2740, %v2900
    %v2902 = vpop.f32.mrf.mxu0
    %v2903 = vpop.f32.mrf.mxu0
    %v2904 = vadd.f32 %v2743, %v2903
    %v2905 = vpop.f32.mrf.mxu0
    %2906 = vmatprep.mubr.bf16.mxu0 %v1259
    %2907 = vmatmul.mubr.bf16.gmra.mxu0 %v1258
    %v2908 = vpop.f32.mrf.mxu0
    %v2909 = vadd.f32 %v2748, %v2908
    %v2910 = vpop.f32.mrf.mxu0
    %v2911 = vpop.f32.mrf.mxu0
    %v2912 = vadd.f32 %v2751, %v2911
    %v2913 = vpop.f32.mrf.mxu0
    %2914 = vmatprep.mubr.bf16.mxu0 %v1272
    %2915 = vmatmul.mubr.bf16.gmra.mxu0 %v1271
    %v2916 = vpop.f32.mrf.mxu0
    %v2917 = vadd.f32 %v2756, %v2916
    %v2918 = vpop.f32.mrf.mxu0
    %v2919 = vpop.f32.mrf.mxu0
    %v2920 = vadd.f32 %v2759, %v2919
    %v2921 = vpop.f32.mrf.mxu0
    %2922 = vmatprep.mubr.bf16.mxu0 %v1285
    %2923 = vmatmul.mubr.bf16.gmra.mxu0 %v1284
    %v2924 = vpop.f32.mrf.mxu0
    %v2925 = vadd.f32 %v2764, %v2924
    %v2926 = vpop.f32.mrf.mxu0
    %v2927 = vpop.f32.mrf.mxu0
    %v2928 = vadd.f32 %v2767, %v2927
    %v2929 = vpop.f32.mrf.mxu0
    %2930 = vmatprep.mubr.bf16.mxu0 %v1298
    %2931 = vmatmul.mubr.bf16.gmra.mxu0 %v1297
    %v2932 = vpop.f32.mrf.mxu0
    %v2933 = vadd.f32 %v2772, %v2932
    %v2934 = vpop.f32.mrf.mxu0
    %v2935 = vpop.f32.mrf.mxu0
    %v2936 = vadd.f32 %v2775, %v2935
    %v2937 = vpop.f32.mrf.mxu0
    %2938 = vdwg.mxu0
    %2939 = vmatprep.subr.bf16.mxu0 0
    %2940 = vmatpush1.bf16.msra.mxu0 %v2013
    %2941 = vmatprep.subr.bf16.mxu0 0
    %2942 = vmatpush1.bf16.msra.mxu0 %v2012
    %2943 = vmatprep.subr.bf16.mxu0 0
    %2944 = vmatpush1.bf16.msra.mxu0 %v2011
    %2945 = vmatprep.subr.bf16.mxu0 0
    %2946 = vmatpush1.bf16.msra.mxu0 %v2010
    %2947 = vmatprep.subr.bf16.mxu0 0
    %2948 = vmatpush1.bf16.msra.mxu0 %v2009
    %2949 = vmatprep.subr.bf16.mxu0 0
    %2950 = vmatpush1.bf16.msra.mxu0 %v2008
    %2951 = vmatprep.subr.bf16.mxu0 0
    %2952 = vmatpush1.bf16.msra.mxu0 %v2007
    %2953 = vmatprep.subr.bf16.mxu0 0
    %2954 = vmatpush1.bf16.msra.mxu0 %v2006
    %2955 = vmatprep.subr.bf16.mxu0 0
    %2956 = vmatpush2.bf16.msra.mxu0 %v2021
    %2957 = vmatprep.subr.bf16.mxu0 0
    %2958 = vmatpush2.bf16.msra.mxu0 %v2020
    %2959 = vmatprep.subr.bf16.mxu0 0
    %2960 = vmatpush2.bf16.msra.mxu0 %v2019
    %2961 = vmatprep.subr.bf16.mxu0 0
    %2962 = vmatpush2.bf16.msra.mxu0 %v2018
    %2963 = vmatprep.subr.bf16.mxu0 0
    %2964 = vmatpush2.bf16.msra.mxu0 %v2017
    %2965 = vmatprep.subr.bf16.mxu0 0
    %2966 = vmatpush2.bf16.msra.mxu0 %v2016
    %2967 = vmatprep.subr.bf16.mxu0 0
    %2968 = vmatpush2.bf16.msra.mxu0 %v2015
    %2969 = vmatprep.subr.bf16.mxu0 0
    %2970 = vmatpush2.bf16.msra.mxu0 %v2014
    %2971 = vmatprep.mubr.bf16.mxu0 %v1105
    %2972 = vmatmul.mubr.bf16.gmra.mxu0 %v1104
    %v2973 = vpop.f32.mrf.mxu0
    %v2974 = vadd.f32 %v2813, %v2973
    %v2975 = vpop.f32.mrf.mxu0
    %v2976 = vpop.f32.mrf.mxu0
    %v2977 = vadd.f32 %v2816, %v2976
    %v2978 = vpop.f32.mrf.mxu0
    %2979 = vmatprep.mubr.bf16.mxu0 %v1118
    %2980 = vmatmul.mubr.bf16.gmra.mxu0 %v1117
    %v2981 = vpop.f32.mrf.mxu0
    %v2982 = vadd.f32 %v2821, %v2981
    %v2983 = vpop.f32.mrf.mxu0
    %v2984 = vpop.f32.mrf.mxu0
    %v2985 = vadd.f32 %v2824, %v2984
    %v2986 = vpop.f32.mrf.mxu0
    %2987 = vmatprep.mubr.bf16.mxu0 %v1131
    %2988 = vmatmul.mubr.bf16.gmra.mxu0 %v1130
    %v2989 = vpop.f32.mrf.mxu0
    %v2990 = vadd.f32 %v2829, %v2989
    %v2991 = vpop.f32.mrf.mxu0
    %v2992 = vpop.f32.mrf.mxu0
    %v2993 = vadd.f32 %v2832, %v2992
    %v2994 = vpop.f32.mrf.mxu0
    %2995 = vmatprep.mubr.bf16.mxu0 %v1144
    %2996 = vmatmul.mubr.bf16.gmra.mxu0 %v1143
    %v2997 = vpop.f32.mrf.mxu0
    %v2998 = vadd.f32 %v2837, %v2997
    %v2999 = vpop.f32.mrf.mxu0
    %v3000 = vpop.f32.mrf.mxu0
    %v3001 = vadd.f32 %v2840, %v3000
    %v3002 = vpop.f32.mrf.mxu0
    %3003 = vmatprep.mubr.bf16.mxu0 %v1157
    %3004 = vmatmul.mubr.bf16.gmra.mxu0 %v1156
    %v3005 = vpop.f32.mrf.mxu0
    %v3006 = vadd.f32 %v2845, %v3005
    %v3007 = vpop.f32.mrf.mxu0
    %v3008 = vpop.f32.mrf.mxu0
    %v3009 = vadd.f32 %v2848, %v3008
    %v3010 = vpop.f32.mrf.mxu0
    %3011 = vmatprep.mubr.bf16.mxu0 %v1170
    %3012 = vmatmul.mubr.bf16.gmra.mxu0 %v1169
    %v3013 = vpop.f32.mrf.mxu0
    %v3014 = vadd.f32 %v2853, %v3013
    %v3015 = vpop.f32.mrf.mxu0
    %v3016 = vpop.f32.mrf.mxu0
    %v3017 = vadd.f32 %v2856, %v3016
    %v3018 = vpop.f32.mrf.mxu0
    %3019 = vmatprep.mubr.bf16.mxu0 %v1183
    %3020 = vmatmul.mubr.bf16.gmra.mxu0 %v1182
    %v3021 = vpop.f32.mrf.mxu0
    %v3022 = vadd.f32 %v2861, %v3021
    %v3023 = vpop.f32.mrf.mxu0
    %v3024 = vpop.f32.mrf.mxu0
    %v3025 = vadd.f32 %v2864, %v3024
    %v3026 = vpop.f32.mrf.mxu0
    %3027 = vmatprep.mubr.bf16.mxu0 %v1196
    %3028 = vmatmul.mubr.bf16.gmra.mxu0 %v1195
    %v3029 = vpop.f32.mrf.mxu0
    %v3030 = vadd.f32 %v2869, %v3029
    %v3031 = vpop.f32.mrf.mxu0
    %v3032 = vpop.f32.mrf.mxu0
    %v3033 = vadd.f32 %v2872, %v3032
    %v3034 = vpop.f32.mrf.mxu0
    %3035 = vmatprep.mubr.bf16.mxu0 %v1209
    %3036 = vmatmul.mubr.bf16.gmra.mxu0 %v1208
    %v3037 = vpop.f32.mrf.mxu0
    %v3038 = vadd.f32 %v2877, %v3037
    %v3039 = vpop.f32.mrf.mxu0
    %v3040 = vpop.f32.mrf.mxu0
    %v3041 = vadd.f32 %v2880, %v3040
    %v3042 = vpop.f32.mrf.mxu0
    %3043 = vmatprep.mubr.bf16.mxu0 %v1222
    %3044 = vmatmul.mubr.bf16.gmra.mxu0 %v1221
    %v3045 = vpop.f32.mrf.mxu0
    %v3046 = vadd.f32 %v2885, %v3045
    %v3047 = vpop.f32.mrf.mxu0
    %v3048 = vpop.f32.mrf.mxu0
    %v3049 = vadd.f32 %v2888, %v3048
    %v3050 = vpop.f32.mrf.mxu0
    %3051 = vmatprep.mubr.bf16.mxu0 %v1235
    %3052 = vmatmul.mubr.bf16.gmra.mxu0 %v1234
    %v3053 = vpop.f32.mrf.mxu0
    %v3054 = vadd.f32 %v2893, %v3053
    %v3055 = vpop.f32.mrf.mxu0
    %v3056 = vpop.f32.mrf.mxu0
    %v3057 = vadd.f32 %v2896, %v3056
    %v3058 = vpop.f32.mrf.mxu0
    %3059 = vmatprep.mubr.bf16.mxu0 %v1248
    %3060 = vmatmul.mubr.bf16.gmra.mxu0 %v1247
    %v3061 = vpop.f32.mrf.mxu0
    %v3062 = vadd.f32 %v2901, %v3061
    %v3063 = vpop.f32.mrf.mxu0
    %v3064 = vpop.f32.mrf.mxu0
    %v3065 = vadd.f32 %v2904, %v3064
    %v3066 = vpop.f32.mrf.mxu0
    %3067 = vmatprep.mubr.bf16.mxu0 %v1261
    %3068 = vmatmul.mubr.bf16.gmra.mxu0 %v1260
    %v3069 = vpop.f32.mrf.mxu0
    %v3070 = vadd.f32 %v2909, %v3069
    %v3071 = vpop.f32.mrf.mxu0
    %v3072 = vpop.f32.mrf.mxu0
    %v3073 = vadd.f32 %v2912, %v3072
    %v3074 = vpop.f32.mrf.mxu0
    %3075 = vmatprep.mubr.bf16.mxu0 %v1274
    %3076 = vmatmul.mubr.bf16.gmra.mxu0 %v1273
    %v3077 = vpop.f32.mrf.mxu0
    %v3078 = vadd.f32 %v2917, %v3077
    %v3079 = vpop.f32.mrf.mxu0
    %v3080 = vpop.f32.mrf.mxu0
    %v3081 = vadd.f32 %v2920, %v3080
    %v3082 = vpop.f32.mrf.mxu0
    %3083 = vmatprep.mubr.bf16.mxu0 %v1287
    %3084 = vmatmul.mubr.bf16.gmra.mxu0 %v1286
    %v3085 = vpop.f32.mrf.mxu0
    %v3086 = vadd.f32 %v2925, %v3085
    %v3087 = vpop.f32.mrf.mxu0
    %v3088 = vpop.f32.mrf.mxu0
    %v3089 = vadd.f32 %v2928, %v3088
    %v3090 = vpop.f32.mrf.mxu0
    %3091 = vmatprep.mubr.bf16.mxu0 %v1300
    %3092 = vmatmul.mubr.bf16.gmra.mxu0 %v1299
    %v3093 = vpop.f32.mrf.mxu0
    %v3094 = vadd.f32 %v2933, %v3093
    %v3095 = vpop.f32.mrf.mxu0
    %v3096 = vpop.f32.mrf.mxu0
    %v3097 = vadd.f32 %v2936, %v3096
    %v3098 = vpop.f32.mrf.mxu0
    %3099 = vdwg.mxu0
    %3100 = vmatprep.subr.bf16.mxu0 0
    %3101 = vmatpush1.bf16.msra.mxu0 %v2029
    %3102 = vmatprep.subr.bf16.mxu0 0
    %3103 = vmatpush1.bf16.msra.mxu0 %v2028
    %3104 = vmatprep.subr.bf16.mxu0 0
    %3105 = vmatpush1.bf16.msra.mxu0 %v2027
    %3106 = vmatprep.subr.bf16.mxu0 0
    %3107 = vmatpush1.bf16.msra.mxu0 %v2026
    %3108 = vmatprep.subr.bf16.mxu0 0
    %3109 = vmatpush1.bf16.msra.mxu0 %v2025
    %3110 = vmatprep.subr.bf16.mxu0 0
    %3111 = vmatpush1.bf16.msra.mxu0 %v2024
    %3112 = vmatprep.subr.bf16.mxu0 0
    %3113 = vmatpush1.bf16.msra.mxu0 %v2023
    %3114 = vmatprep.subr.bf16.mxu0 0
    %3115 = vmatpush1.bf16.msra.mxu0 %v2022
    %3116 = vmatprep.subr.bf16.mxu0 0
    %3117 = vmatpush2.bf16.msra.mxu0 0
    %3118 = vmatprep.subr.bf16.mxu0 0
    %3119 = vmatpush2.bf16.msra.mxu0 0
    %3120 = vmatprep.subr.bf16.mxu0 0
    %3121 = vmatpush2.bf16.msra.mxu0 0
    %3122 = vmatprep.subr.bf16.mxu0 0
    %3123 = vmatpush2.bf16.msra.mxu0 0
    %3124 = vmatprep.subr.bf16.mxu0 0
    %3125 = vmatpush2.bf16.msra.mxu0 0
    %3126 = vmatprep.subr.bf16.mxu0 0
    %3127 = vmatpush2.bf16.msra.mxu0 0
    %3128 = vmatprep.subr.bf16.mxu0 0
    %3129 = vmatpush2.bf16.msra.mxu0 0
    %3130 = vmatprep.subr.bf16.mxu0 0
    %3131 = vmatpush2.bf16.msra.mxu0 0
    %3132 = vmatprep.mubr.bf16.mxu0 0
    %3133 = vmatmul.mubr.bf16.gmra.mxu0 %v1106
    %v3134 = vpop.f32.mrf.mxu0
    %v3135 = vadd.f32 %v2974, %v3134
    %v3136 = vpop.f32.mrf.mxu0
    %v3137 = vpop.f32.mrf.mxu0
    %v3138 = vadd.f32 %v2977, %v3137
    %v3139 = vpop.f32.mrf.mxu0
    %3140 = vmatprep.mubr.bf16.mxu0 0
    %3141 = vmatmul.mubr.bf16.gmra.mxu0 %v1119
    %v3142 = vpop.f32.mrf.mxu0
    %v3143 = vadd.f32 %v2982, %v3142
    %v3144 = vpop.f32.mrf.mxu0
    %v3145 = vpop.f32.mrf.mxu0
    %v3146 = vadd.f32 %v2985, %v3145
    %v3147 = vpop.f32.mrf.mxu0
    %3148 = vmatprep.mubr.bf16.mxu0 0
    %3149 = vmatmul.mubr.bf16.gmra.mxu0 %v1132
    %v3150 = vpop.f32.mrf.mxu0
    %v3151 = vadd.f32 %v2990, %v3150
    %v3152 = vpop.f32.mrf.mxu0
    %v3153 = vpop.f32.mrf.mxu0
    %v3154 = vadd.f32 %v2993, %v3153
    %v3155 = vpop.f32.mrf.mxu0
    %3156 = vmatprep.mubr.bf16.mxu0 0
    %3157 = vmatmul.mubr.bf16.gmra.mxu0 %v1145
    %v3158 = vpop.f32.mrf.mxu0
    %v3159 = vadd.f32 %v2998, %v3158
    %v3160 = vpop.f32.mrf.mxu0
    %v3161 = vpop.f32.mrf.mxu0
    %v3162 = vadd.f32 %v3001, %v3161
    %v3163 = vpop.f32.mrf.mxu0
    %3164 = vmatprep.mubr.bf16.mxu0 0
    %3165 = vmatmul.mubr.bf16.gmra.mxu0 %v1158
    %v3166 = vpop.f32.mrf.mxu0
    %v3167 = vadd.f32 %v3006, %v3166
    %v3168 = vpop.f32.mrf.mxu0
    %v3169 = vpop.f32.mrf.mxu0
    %v3170 = vadd.f32 %v3009, %v3169
    %v3171 = vpop.f32.mrf.mxu0
    %3172 = vmatprep.mubr.bf16.mxu0 0
    %3173 = vmatmul.mubr.bf16.gmra.mxu0 %v1171
    %v3174 = vpop.f32.mrf.mxu0
    %v3175 = vadd.f32 %v3014, %v3174
    %v3176 = vpop.f32.mrf.mxu0
    %v3177 = vpop.f32.mrf.mxu0
    %v3178 = vadd.f32 %v3017, %v3177
    %v3179 = vpop.f32.mrf.mxu0
    %3180 = vmatprep.mubr.bf16.mxu0 0
    %3181 = vmatmul.mubr.bf16.gmra.mxu0 %v1184
    %v3182 = vpop.f32.mrf.mxu0
    %v3183 = vadd.f32 %v3022, %v3182
    %v3184 = vpop.f32.mrf.mxu0
    %v3185 = vpop.f32.mrf.mxu0
    %v3186 = vadd.f32 %v3025, %v3185
    %v3187 = vpop.f32.mrf.mxu0
    %3188 = vmatprep.mubr.bf16.mxu0 0
    %3189 = vmatmul.mubr.bf16.gmra.mxu0 %v1197
    %v3190 = vpop.f32.mrf.mxu0
    %v3191 = vadd.f32 %v3030, %v3190
    %v3192 = vpop.f32.mrf.mxu0
    %v3193 = vpop.f32.mrf.mxu0
    %v3194 = vadd.f32 %v3033, %v3193
    %v3195 = vpop.f32.mrf.mxu0
    %3196 = vmatprep.mubr.bf16.mxu0 0
    %3197 = vmatmul.mubr.bf16.gmra.mxu0 %v1210
    %v3198 = vpop.f32.mrf.mxu0
    %v3199 = vadd.f32 %v3038, %v3198
    %v3200 = vpop.f32.mrf.mxu0
    %v3201 = vpop.f32.mrf.mxu0
    %v3202 = vadd.f32 %v3041, %v3201
    %v3203 = vpop.f32.mrf.mxu0
    %3204 = vmatprep.mubr.bf16.mxu0 0
    %3205 = vmatmul.mubr.bf16.gmra.mxu0 %v1223
    %v3206 = vpop.f32.mrf.mxu0
    %v3207 = vadd.f32 %v3046, %v3206
    %v3208 = vpop.f32.mrf.mxu0
    %v3209 = vpop.f32.mrf.mxu0
    %v3210 = vadd.f32 %v3049, %v3209
    %v3211 = vpop.f32.mrf.mxu0
    %3212 = vmatprep.mubr.bf16.mxu0 0
    %3213 = vmatmul.mubr.bf16.gmra.mxu0 %v1236
    %v3214 = vpop.f32.mrf.mxu0
    %v3215 = vadd.f32 %v3054, %v3214
    %v3216 = vpop.f32.mrf.mxu0
    %v3217 = vpop.f32.mrf.mxu0
    %v3218 = vadd.f32 %v3057, %v3217
    %v3219 = vpop.f32.mrf.mxu0
    %3220 = vmatprep.mubr.bf16.mxu0 0
    %3221 = vmatmul.mubr.bf16.gmra.mxu0 %v1249
    %v3222 = vpop.f32.mrf.mxu0
    %v3223 = vadd.f32 %v3062, %v3222
    %v3224 = vpop.f32.mrf.mxu0
    %v3225 = vpop.f32.mrf.mxu0
    %v3226 = vadd.f32 %v3065, %v3225
    %v3227 = vpop.f32.mrf.mxu0
    %3228 = vmatprep.mubr.bf16.mxu0 0
    %3229 = vmatmul.mubr.bf16.gmra.mxu0 %v1262
    %v3230 = vpop.f32.mrf.mxu0
    %v3231 = vadd.f32 %v3070, %v3230
    %v3232 = vpop.f32.mrf.mxu0
    %v3233 = vpop.f32.mrf.mxu0
    %v3234 = vadd.f32 %v3073, %v3233
    %v3235 = vpop.f32.mrf.mxu0
    %3236 = vmatprep.mubr.bf16.mxu0 0
    %3237 = vmatmul.mubr.bf16.gmra.mxu0 %v1275
    %v3238 = vpop.f32.mrf.mxu0
    %v3239 = vadd.f32 %v3078, %v3238
    %v3240 = vpop.f32.mrf.mxu0
    %v3241 = vpop.f32.mrf.mxu0
    %v3242 = vadd.f32 %v3081, %v3241
    %v3243 = vpop.f32.mrf.mxu0
    %3244 = vmatprep.mubr.bf16.mxu0 0
    %3245 = vmatmul.mubr.bf16.gmra.mxu0 %v1288
    %v3246 = vpop.f32.mrf.mxu0
    %v3247 = vadd.f32 %v3086, %v3246
    %v3248 = vpop.f32.mrf.mxu0
    %v3249 = vpop.f32.mrf.mxu0
    %v3250 = vadd.f32 %v3089, %v3249
    %v3251 = vpop.f32.mrf.mxu0
    %3252 = vmatprep.mubr.bf16.mxu0 0
    %3253 = vmatmul.mubr.bf16.gmra.mxu0 %v1301
    %v3254 = vpop.f32.mrf.mxu0
    %v3255 = vadd.f32 %v3094, %v3254
    %v3256 = vpop.f32.mrf.mxu0
    %v3257 = vpop.f32.mrf.mxu0
    %v3258 = vadd.f32 %v3097, %v3257
    %v3259 = vpop.f32.mrf.mxu0
    %3260 = vdwg.mxu0
    %v3261 = vmax.f32 %v3135, 0.0
    %v3262 = vmax.f32 %v3138, 0.0
    %v3263 = vmax.f32 %v3143, 0.0
    %v3264 = vmax.f32 %v3146, 0.0
    %v3265 = vmax.f32 %v3151, 0.0
    %v3266 = vmax.f32 %v3154, 0.0
    %v3267 = vmax.f32 %v3159, 0.0
    %v3268 = vmax.f32 %v3162, 0.0
    %v3269 = vmax.f32 %v3167, 0.0
    %v3270 = vmax.f32 %v3170, 0.0
    %v3271 = vmax.f32 %v3175, 0.0
    %v3272 = vmax.f32 %v3178, 0.0
    %v3273 = vmax.f32 %v3183, 0.0
    %v3274 = vmax.f32 %v3186, 0.0
    %v3275 = vmax.f32 %v3191, 0.0
    %v3276 = vmax.f32 %v3194, 0.0
    %v3277 = vmax.f32 %v3199, 0.0
    %v3278 = vmax.f32 %v3202, 0.0
    %v3279 = vmax.f32 %v3207, 0.0
    %v3280 = vmax.f32 %v3210, 0.0
    %v3281 = vmax.f32 %v3215, 0.0
    %v3282 = vmax.f32 %v3218, 0.0
    %v3283 = vmax.f32 %v3223, 0.0
    %v3284 = vmax.f32 %v3226, 0.0
    %v3285 = vmax.f32 %v3231, 0.0
    %v3286 = vmax.f32 %v3234, 0.0
    %v3287 = vmax.f32 %v3239, 0.0
    %v3288 = vmax.f32 %v3242, 0.0
    %v3289 = vmax.f32 %v3247, 0.0
    %v3290 = vmax.f32 %v3250, 0.0
    %v3291 = vmax.f32 %v3255, 0.0
    %v3292 = vmax.f32 %v3258, 0.0
    %v3293 = vpack.c.bf16 %v3262, %v3261
    %v3294 = vpack.c.bf16 %v3264, %v3263
    %v3295 = vpack.c.bf16 %v3266, %v3265
    %v3296 = vpack.c.bf16 %v3268, %v3267
    %v3297 = vpack.c.bf16 %v3270, %v3269
    %v3298 = vpack.c.bf16 %v3272, %v3271
    %v3299 = vpack.c.bf16 %v3274, %v3273
    %v3300 = vpack.c.bf16 %v3276, %v3275
    %v3301 = vpack.c.bf16 %v3278, %v3277
    %v3302 = vpack.c.bf16 %v3280, %v3279
    %v3303 = vpack.c.bf16 %v3282, %v3281
    %v3304 = vpack.c.bf16 %v3284, %v3283
    %v3305 = vpack.c.bf16 %v3286, %v3285
    %v3306 = vpack.c.bf16 %v3288, %v3287
    %v3307 = vpack.c.bf16 %v3290, %v3289
    %v3308 = vpack.c.bf16 %v3292, %v3291
    %v3325 = vunpack.c.l.b16 %v3293
    %v3326 = vunpack.c.h.b16 %v3293
    %v3327 = vunpack.c.l.b16 %v3294
    %v3328 = vunpack.c.h.b16 %v3294
    %v3329 = vunpack.c.l.b16 %v3295
    %v3330 = vunpack.c.h.b16 %v3295
    %v3331 = vunpack.c.l.b16 %v3296
    %v3332 = vunpack.c.h.b16 %v3296
    %v3333 = vunpack.c.l.b16 %v3297
    %v3334 = vunpack.c.h.b16 %v3297
    %v3335 = vunpack.c.l.b16 %v3298
    %v3336 = vunpack.c.h.b16 %v3298
    %v3337 = vunpack.c.l.b16 %v3299
    %v3338 = vunpack.c.h.b16 %v3299
    %v3339 = vunpack.c.l.b16 %v3300
    %v3340 = vunpack.c.h.b16 %v3300
    %v3341 = vunpack.c.l.b16 %v3301
    %v3342 = vunpack.c.h.b16 %v3301
    %v3343 = vunpack.c.l.b16 %v3302
    %v3344 = vunpack.c.h.b16 %v3302
    %v3345 = vunpack.c.l.b16 %v3303
    %v3346 = vunpack.c.h.b16 %v3303
    %v3347 = vunpack.c.l.b16 %v3304
    %v3348 = vunpack.c.h.b16 %v3304
    %v3349 = vunpack.c.l.b16 %v3305
    %v3350 = vunpack.c.h.b16 %v3305
    %v3351 = vunpack.c.l.b16 %v3306
    %v3352 = vunpack.c.h.b16 %v3306
    %v3353 = vunpack.c.l.b16 %v3307
    %v3354 = vunpack.c.h.b16 %v3307
    %v3355 = vunpack.c.l.b16 %v3308
    %v3356 = vunpack.c.h.b16 %v3308
    %v3357 = vpack.c.b16 %v3325, %v3325
    %v3358 = vpack.c.b16 %v3326, %v3326
    %v3359 = vpack.c.b16 %v3327, %v3327
    %v3360 = vpack.c.b16 %v3328, %v3328
    %v3361 = vpack.c.b16 %v3329, %v3329
    %v3362 = vpack.c.b16 %v3330, %v3330
    %v3363 = vpack.c.b16 %v3331, %v3331
    %v3364 = vpack.c.b16 %v3332, %v3332
    %v3365 = vpack.c.b16 %v3333, %v3333
    %v3366 = vpack.c.b16 %v3334, %v3334
    %v3367 = vpack.c.b16 %v3335, %v3335
    %v3368 = vpack.c.b16 %v3336, %v3336
    %v3369 = vpack.c.b16 %v3337, %v3337
    %v3370 = vpack.c.b16 %v3338, %v3338
    %v3371 = vpack.c.b16 %v3339, %v3339
    %v3372 = vpack.c.b16 %v3340, %v3340
    %v3373 = vpack.c.b16 %v3341, %v3341
    %v3374 = vpack.c.b16 %v3342, %v3342
    %v3375 = vpack.c.b16 %v3343, %v3343
    %v3376 = vpack.c.b16 %v3344, %v3344
    %v3377 = vpack.c.b16 %v3345, %v3345
    %v3378 = vpack.c.b16 %v3346, %v3346
    %v3379 = vpack.c.b16 %v3347, %v3347
    %v3380 = vpack.c.b16 %v3348, %v3348
    %v3381 = vpack.c.b16 %v3349, %v3349
    %v3382 = vpack.c.b16 %v3350, %v3350
    %v3383 = vpack.c.b16 %v3351, %v3351
    %v3384 = vpack.c.b16 %v3352, %v3352
    %v3385 = vpack.c.b16 %v3353, %v3353
    %v3386 = vpack.c.b16 %v3354, %v3354
    %v3387 = vpack.c.b16 %v3355, %v3355
    %v3388 = vpack.c.b16 %v3356, %v3356
    %vm3421 = vcmask 519168
    %3422 = vst.msk [vmem:[#allocation2] sm:$0xf] %vm3421, %v3357
    %3423 = vst.msk [vmem:[#allocation2 + $0x4] sm:$0xf] %vm3421, %v3358
    %3424 = vst.msk [vmem:[#allocation2 + $0x8] sm:$0xf] %vm3421, %v3359
    %3425 = vst.msk [vmem:[#allocation2 + $0xc] sm:$0xf] %vm3421, %v3360
    %3426 = vst.msk [vmem:[#allocation2 + $0x10] sm:$0xf] %vm3421, %v3361
    %3427 = vst.msk [vmem:[#allocation2 + $0x14] sm:$0xf] %vm3421, %v3362
    %3428 = vst.msk [vmem:[#allocation2 + $0x18] sm:$0xf] %vm3421, %v3363
    %3429 = vst.msk [vmem:[#allocation2 + $0x1c] sm:$0xf] %vm3421, %v3364
    %3430 = vst.msk [vmem:[#allocation2 + $0x20] sm:$0xf] %vm3421, %v3365
    %3431 = vst.msk [vmem:[#allocation2 + $0x24] sm:$0xf] %vm3421, %v3366
    %3432 = vst.msk [vmem:[#allocation2 + $0x28] sm:$0xf] %vm3421, %v3367
    %3433 = vst.msk [vmem:[#allocation2 + $0x2c] sm:$0xf] %vm3421, %v3368
    %3434 = vst.msk [vmem:[#allocation2 + $0x30] sm:$0xf] %vm3421, %v3369
    %3435 = vst.msk [vmem:[#allocation2 + $0x34] sm:$0xf] %vm3421, %v3370
    %3436 = vst.msk [vmem:[#allocation2 + $0x38] sm:$0xf] %vm3421, %v3371
    %3437 = vst.msk [vmem:[#allocation2 + $0x3c] sm:$0xf] %vm3421, %v3372
    %3438 = vst.msk [vmem:[#allocation2 + $0x40] sm:$0xf] %vm3421, %v3373
    %3439 = vst.msk [vmem:[#allocation2 + $0x44] sm:$0xf] %vm3421, %v3374
    %3440 = vst.msk [vmem:[#allocation2 + $0x48] sm:$0xf] %vm3421, %v3375
    %3441 = vst.msk [vmem:[#allocation2 + $0x4c] sm:$0xf] %vm3421, %v3376
    %3442 = vst.msk [vmem:[#allocation2 + $0x50] sm:$0xf] %vm3421, %v3377
    %3443 = vst.msk [vmem:[#allocation2 + $0x54] sm:$0xf] %vm3421, %v3378
    %3444 = vst.msk [vmem:[#allocation2 + $0x58] sm:$0xf] %vm3421, %v3379
    %3445 = vst.msk [vmem:[#allocation2 + $0x5c] sm:$0xf] %vm3421, %v3380
    %3446 = vst.msk [vmem:[#allocation2 + $0x60] sm:$0xf] %vm3421, %v3381
    %3447 = vst.msk [vmem:[#allocation2 + $0x64] sm:$0xf] %vm3421, %v3382
    %3448 = vst.msk [vmem:[#allocation2 + $0x68] sm:$0xf] %vm3421, %v3383
    %3449 = vst.msk [vmem:[#allocation2 + $0x6c] sm:$0xf] %vm3421, %v3384
    %3450 = vst.msk [vmem:[#allocation2 + $0x70] sm:$0xf] %vm3421, %v3385
    %3451 = vst.msk [vmem:[#allocation2 + $0x74] sm:$0xf] %vm3421, %v3386
    %3452 = vst.msk [vmem:[#allocation2 + $0x78] sm:$0xf] %vm3421, %v3387
    %3453 = vst.msk [vmem:[#allocation2 + $0x7c] sm:$0xf] %vm3421, %v3388
    // Predicated region
    $region14: #{dann_forward.4} parent=1 // pred_check
      _
    $region15: #{dann_forward.4} parent=1 // pred_check_branch
      %3455 = sbr.rel (0) target = $region17
    $region16: #{dann_forward.4} parent=1 // pred_region
      // Predicated region
      $region18: #{dann_forward.4} parent=16 // pred_check
        _
      $region19: #{dann_forward.4} parent=16 // pred_check_branch
        %3457 = sbr.rel (0) target = $region21
      $region20: #{dann_forward.4} parent=16 // pred_region
        // Predicated region
        $region22: #{dann_forward.4} parent=20 // pred_check
          _
        $region23: #{dann_forward.4} parent=20 // pred_check_branch
          %3459 = sbr.rel target = $region25
        $region24: #{dann_forward.4} parent=20 // pred_region
          // Predicated region
          $region37: #{dann_forward.4} parent=24 // pred_check
            _
          $region38: #{dann_forward.4} parent=24 // pred_check_branch
            %3535 = sbr.rel (0) target = $region40
          $region39: #{dann_forward.4} parent=24 // pred_region
            loop: start=0, step=1, limit=1
            $region41: #{dann_forward.4} parent=39 // loop_pre_header
              _
            $region42: #{dann_forward.4} parent=39 // loop_header
              %s3537 = sphi 0, %s3541
              %p3538 = scmp.ge.s32.totalorder %s3537, 1
              %s3542 = sphi [#allocation2], [#allocation2]
              %s3543 = sphi %s3, %s3
            $region43: #{dann_forward.4} parent=39 // loop_header_branch
              %3540 = sbr.rel (%p3538) target = $region47
            $region44: #{dann_forward.4} parent=39 // loop_body
              _
            $region45: #{dann_forward.4} parent=39 // loop_footer
              %s3541 = sadd.s32 1, %s3537
            $region46: #{dann_forward.4} parent=39 // loop_footer_branch
              %3536 = sbr.rel target = $region42
            $region47: #{dann_forward.4} parent=39 // loop_exit
              _
            %s3545 = ssub.s32 16, 1
            loop: start=0, step=1, limit=1
            $region48: #{dann_forward.4} parent=39 // loop_pre_header
              _
            $region49: #{dann_forward.4} parent=39 // loop_header
              %s3547 = sphi 0, %s3551
              %p3548 = scmp.ge.s32.totalorder %s3547, 1
              %s3552 = sphi [#allocation2], [#allocation2]
              %s3553 = sphi %s3, %s3
            $region50: #{dann_forward.4} parent=39 // loop_header_branch
              %3550 = sbr.rel (%p3548) target = $region54
            $region51: #{dann_forward.4} parent=39 // loop_body
              %v3554 = vld [vmem:[%s3552] sm:%s3545]
              %3555 = vst [vmem:[%s3553] sm:%s3545] %v3554
              %v3556 = vld [vmem:[%s3552 + $0x4] sm:%s3545]
              %3557 = vst [vmem:[%s3553 + $0x4] sm:%s3545] %v3556
              %v3558 = vld [vmem:[%s3552 + $0x8] sm:%s3545]
              %3559 = vst [vmem:[%s3553 + $0x8] sm:%s3545] %v3558
              %v3560 = vld [vmem:[%s3552 + $0xc] sm:%s3545]
              %3561 = vst [vmem:[%s3553 + $0xc] sm:%s3545] %v3560
              %v3562 = vld [vmem:[%s3552 + $0x10] sm:%s3545]
              %3563 = vst [vmem:[%s3553 + $0x10] sm:%s3545] %v3562
              %v3564 = vld [vmem:[%s3552 + $0x14] sm:%s3545]
              %3565 = vst [vmem:[%s3553 + $0x14] sm:%s3545] %v3564
              %v3566 = vld [vmem:[%s3552 + $0x18] sm:%s3545]
              %3567 = vst [vmem:[%s3553 + $0x18] sm:%s3545] %v3566
              %v3568 = vld [vmem:[%s3552 + $0x1c] sm:%s3545]
              %3569 = vst [vmem:[%s3553 + $0x1c] sm:%s3545] %v3568
              %v3570 = vld [vmem:[%s3552 + $0x20] sm:%s3545]
              %3571 = vst [vmem:[%s3553 + $0x20] sm:%s3545] %v3570
              %v3572 = vld [vmem:[%s3552 + $0x24] sm:%s3545]
              %3573 = vst [vmem:[%s3553 + $0x24] sm:%s3545] %v3572
              %v3574 = vld [vmem:[%s3552 + $0x28] sm:%s3545]
              %3575 = vst [vmem:[%s3553 + $0x28] sm:%s3545] %v3574
              %v3576 = vld [vmem:[%s3552 + $0x2c] sm:%s3545]
              %3577 = vst [vmem:[%s3553 + $0x2c] sm:%s3545] %v3576
              %v3578 = vld [vmem:[%s3552 + $0x30] sm:%s3545]
              %3579 = vst [vmem:[%s3553 + $0x30] sm:%s3545] %v3578
              %v3580 = vld [vmem:[%s3552 + $0x34] sm:%s3545]
              %3581 = vst [vmem:[%s3553 + $0x34] sm:%s3545] %v3580
              %v3582 = vld [vmem:[%s3552 + $0x38] sm:%s3545]
              %3583 = vst [vmem:[%s3553 + $0x38] sm:%s3545] %v3582
              %v3584 = vld [vmem:[%s3552 + $0x3c] sm:%s3545]
              %3585 = vst [vmem:[%s3553 + $0x3c] sm:%s3545] %v3584
              %v3586 = vld [vmem:[%s3552 + $0x40] sm:%s3545]
              %3587 = vst [vmem:[%s3553 + $0x40] sm:%s3545] %v3586
              %v3588 = vld [vmem:[%s3552 + $0x44] sm:%s3545]
              %3589 = vst [vmem:[%s3553 + $0x44] sm:%s3545] %v3588
              %v3590 = vld [vmem:[%s3552 + $0x48] sm:%s3545]
              %3591 = vst [vmem:[%s3553 + $0x48] sm:%s3545] %v3590
              %v3592 = vld [vmem:[%s3552 + $0x4c] sm:%s3545]
              %3593 = vst [vmem:[%s3553 + $0x4c] sm:%s3545] %v3592
              %v3594 = vld [vmem:[%s3552 + $0x50] sm:%s3545]
              %3595 = vst [vmem:[%s3553 + $0x50] sm:%s3545] %v3594
              %v3596 = vld [vmem:[%s3552 + $0x54] sm:%s3545]
              %3597 = vst [vmem:[%s3553 + $0x54] sm:%s3545] %v3596
              %v3598 = vld [vmem:[%s3552 + $0x58] sm:%s3545]
              %3599 = vst [vmem:[%s3553 + $0x58] sm:%s3545] %v3598
              %v3600 = vld [vmem:[%s3552 + $0x5c] sm:%s3545]
              %3601 = vst [vmem:[%s3553 + $0x5c] sm:%s3545] %v3600
              %v3602 = vld [vmem:[%s3552 + $0x60] sm:%s3545]
              %3603 = vst [vmem:[%s3553 + $0x60] sm:%s3545] %v3602
              %v3604 = vld [vmem:[%s3552 + $0x64] sm:%s3545]
              %3605 = vst [vmem:[%s3553 + $0x64] sm:%s3545] %v3604
              %v3606 = vld [vmem:[%s3552 + $0x68] sm:%s3545]
              %3607 = vst [vmem:[%s3553 + $0x68] sm:%s3545] %v3606
              %v3608 = vld [vmem:[%s3552 + $0x6c] sm:%s3545]
              %3609 = vst [vmem:[%s3553 + $0x6c] sm:%s3545] %v3608
              %v3610 = vld [vmem:[%s3552 + $0x70] sm:%s3545]
              %3611 = vst [vmem:[%s3553 + $0x70] sm:%s3545] %v3610
              %v3612 = vld [vmem:[%s3552 + $0x74] sm:%s3545]
              %3613 = vst [vmem:[%s3553 + $0x74] sm:%s3545] %v3612
              %v3614 = vld [vmem:[%s3552 + $0x78] sm:%s3545]
              %3615 = vst [vmem:[%s3553 + $0x78] sm:%s3545] %v3614
            $region52: #{dann_forward.4} parent=39 // loop_footer
              %s3551 = sadd.s32 1, %s3547
            $region53: #{dann_forward.4} parent=39 // loop_footer_branch
              %3546 = sbr.rel target = $region49
            $region54: #{dann_forward.4} parent=39 // loop_exit
              _
          $region40: #{dann_forward.4} parent=24 // pred_fallthru
            _
        $region25: #{dann_forward.4} parent=20 // pred_fallthru
          _
        // Predicated region
        $region26: #{dann_forward.4} parent=20 // pred_check
          _
        $region27: #{dann_forward.4} parent=20 // pred_check_branch
          %3461 = sbr.rel (0) target = $region29
        $region28: #{dann_forward.4} parent=20 // pred_region
          %s3463 = ssub.s32 16, 1
          loop: start=0, step=1, limit=1
          $region30: #{dann_forward.4} parent=28 // loop_pre_header
            _
          $region31: #{dann_forward.4} parent=28 // loop_header
            %s3465 = sphi 0, %s3469
            %p3466 = scmp.ge.s32.totalorder %s3465, 1
            %s3470 = sphi [#allocation2], [#allocation2]
            %s3471 = sphi %s3, %s3
          $region32: #{dann_forward.4} parent=28 // loop_header_branch
            %3468 = sbr.rel (%p3466) target = $region36
          $region33: #{dann_forward.4} parent=28 // loop_body
            %v3472 = vld [vmem:[%s3470] sm:%s3463]
            %3473 = vst [vmem:[%s3471] sm:%s3463] %v3472
            %v3474 = vld [vmem:[%s3470 + $0x4] sm:%s3463]
            %3475 = vst [vmem:[%s3471 + $0x4] sm:%s3463] %v3474
            %v3476 = vld [vmem:[%s3470 + $0x8] sm:%s3463]
            %3477 = vst [vmem:[%s3471 + $0x8] sm:%s3463] %v3476
            %v3478 = vld [vmem:[%s3470 + $0xc] sm:%s3463]
            %3479 = vst [vmem:[%s3471 + $0xc] sm:%s3463] %v3478
            %v3480 = vld [vmem:[%s3470 + $0x10] sm:%s3463]
            %3481 = vst [vmem:[%s3471 + $0x10] sm:%s3463] %v3480
            %v3482 = vld [vmem:[%s3470 + $0x14] sm:%s3463]
            %3483 = vst [vmem:[%s3471 + $0x14] sm:%s3463] %v3482
            %v3484 = vld [vmem:[%s3470 + $0x18] sm:%s3463]
            %3485 = vst [vmem:[%s3471 + $0x18] sm:%s3463] %v3484
            %v3486 = vld [vmem:[%s3470 + $0x1c] sm:%s3463]
            %3487 = vst [vmem:[%s3471 + $0x1c] sm:%s3463] %v3486
            %v3488 = vld [vmem:[%s3470 + $0x20] sm:%s3463]
            %3489 = vst [vmem:[%s3471 + $0x20] sm:%s3463] %v3488
            %v3490 = vld [vmem:[%s3470 + $0x24] sm:%s3463]
            %3491 = vst [vmem:[%s3471 + $0x24] sm:%s3463] %v3490
            %v3492 = vld [vmem:[%s3470 + $0x28] sm:%s3463]
            %3493 = vst [vmem:[%s3471 + $0x28] sm:%s3463] %v3492
            %v3494 = vld [vmem:[%s3470 + $0x2c] sm:%s3463]
            %3495 = vst [vmem:[%s3471 + $0x2c] sm:%s3463] %v3494
            %v3496 = vld [vmem:[%s3470 + $0x30] sm:%s3463]
            %3497 = vst [vmem:[%s3471 + $0x30] sm:%s3463] %v3496
            %v3498 = vld [vmem:[%s3470 + $0x34] sm:%s3463]
            %3499 = vst [vmem:[%s3471 + $0x34] sm:%s3463] %v3498
            %v3500 = vld [vmem:[%s3470 + $0x38] sm:%s3463]
            %3501 = vst [vmem:[%s3471 + $0x38] sm:%s3463] %v3500
            %v3502 = vld [vmem:[%s3470 + $0x3c] sm:%s3463]
            %3503 = vst [vmem:[%s3471 + $0x3c] sm:%s3463] %v3502
            %v3504 = vld [vmem:[%s3470 + $0x40] sm:%s3463]
            %3505 = vst [vmem:[%s3471 + $0x40] sm:%s3463] %v3504
            %v3506 = vld [vmem:[%s3470 + $0x44] sm:%s3463]
            %3507 = vst [vmem:[%s3471 + $0x44] sm:%s3463] %v3506
            %v3508 = vld [vmem:[%s3470 + $0x48] sm:%s3463]
            %3509 = vst [vmem:[%s3471 + $0x48] sm:%s3463] %v3508
            %v3510 = vld [vmem:[%s3470 + $0x4c] sm:%s3463]
            %3511 = vst [vmem:[%s3471 + $0x4c] sm:%s3463] %v3510
            %v3512 = vld [vmem:[%s3470 + $0x50] sm:%s3463]
            %3513 = vst [vmem:[%s3471 + $0x50] sm:%s3463] %v3512
            %v3514 = vld [vmem:[%s3470 + $0x54] sm:%s3463]
            %3515 = vst [vmem:[%s3471 + $0x54] sm:%s3463] %v3514
            %v3516 = vld [vmem:[%s3470 + $0x58] sm:%s3463]
            %3517 = vst [vmem:[%s3471 + $0x58] sm:%s3463] %v3516
            %v3518 = vld [vmem:[%s3470 + $0x5c] sm:%s3463]
            %3519 = vst [vmem:[%s3471 + $0x5c] sm:%s3463] %v3518
            %v3520 = vld [vmem:[%s3470 + $0x60] sm:%s3463]
            %3521 = vst [vmem:[%s3471 + $0x60] sm:%s3463] %v3520
            %v3522 = vld [vmem:[%s3470 + $0x64] sm:%s3463]
            %3523 = vst [vmem:[%s3471 + $0x64] sm:%s3463] %v3522
            %v3524 = vld [vmem:[%s3470 + $0x68] sm:%s3463]
            %3525 = vst [vmem:[%s3471 + $0x68] sm:%s3463] %v3524
            %v3526 = vld [vmem:[%s3470 + $0x6c] sm:%s3463]
            %3527 = vst [vmem:[%s3471 + $0x6c] sm:%s3463] %v3526
            %v3528 = vld [vmem:[%s3470 + $0x70] sm:%s3463]
            %3529 = vst [vmem:[%s3471 + $0x70] sm:%s3463] %v3528
            %v3530 = vld [vmem:[%s3470 + $0x74] sm:%s3463]
            %3531 = vst [vmem:[%s3471 + $0x74] sm:%s3463] %v3530
            %v3532 = vld [vmem:[%s3470 + $0x78] sm:%s3463]
            %3533 = vst [vmem:[%s3471 + $0x78] sm:%s3463] %v3532
          $region34: #{dann_forward.4} parent=28 // loop_footer
            %s3469 = sadd.s32 1, %s3465
          $region35: #{dann_forward.4} parent=28 // loop_footer_branch
            %3464 = sbr.rel target = $region31
          $region36: #{dann_forward.4} parent=28 // loop_exit
            _
        $region29: #{dann_forward.4} parent=20 // pred_fallthru
          _
      $region21: #{dann_forward.4} parent=16 // pred_fallthru
        _
      %3616 = vnop
    $region17: #{dann_forward.4} parent=1 // pred_fallthru
      _
    // Predicated region
    $region55: #{dann_forward.4} parent=1 // pred_check
      _
    $region56: #{dann_forward.4} parent=1 // pred_check_branch
      %3618 = sbr.rel (0) target = $region58
    $region57: #{dann_forward.4} parent=1 // pred_region
      _
    $region58: #{dann_forward.4} parent=1 // pred_fallthru
      _

// kernel: dann_forward.5
$region0: #{dann_forward.5}
  #allocation0 [shape = 'u32[]', space=smem, size = 0x4, offset = 0x4, fixed_abs, tag = 'smem constant byte address 0x4 - core index']
  #allocation1 [shape = 'u32[144,128]{1,0:T(1,128)}', space=vmem, size = 0x12000, scoped, tag = 'internal scratch']
  #allocation2 [shape = 'bf16[2,128]{1,0:T(2,128)(2,1)}', space=vmem, size = 0x200, scoped, tag = 'scratch operand']
  %s0 = inlined_call_operand.vmem [shape: bf16[2,1600], index: 0, kind: input, shape index: {}]
  %s1 = inlined_call_operand.vmem [shape: bf16[1600,128], index: 1, kind: input, shape index: {}]
  %s2 = inlined_call_operand.vmem [shape: f32[1,128], index: 2, kind: input, shape index: {}]
  %s3 = inlined_call_operand.vmem [shape: bf16[2,128,1024], index: 3, kind: input, shape index: {}]
  %s4 = inlined_call_operand.vmem [shape: f32[2,1,1024], index: 4, kind: input, shape index: {}]
  %s5 = inlined_call_operand.vmem [shape: f32[2,1,1024], index: 5, kind: input, shape index: {}]
  %s6 = inlined_call_operand.vmem [shape: f32[2,1,1024], index: 6, kind: input, shape index: {}]
  %s7 = inlined_call_operand.vmem [shape: bf16[2,1024,256], index: 7, kind: input, shape index: {}]
  %s8 = inlined_call_operand.vmem [shape: f32[2,1,256], index: 8, kind: input, shape index: {}]
  %s9 = inlined_call_operand.vmem [shape: f32[2,1,256], index: 9, kind: input, shape index: {}]
  %s10 = inlined_call_operand.vmem [shape: f32[2,1,256], index: 10, kind: input, shape index: {}]
  %s11 = inlined_call_operand.vmem [shape: bf16[2,256,128], index: 11, kind: input, shape index: {}]
  %s12 = inlined_call_operand.vmem [shape: f32[2,1,128], index: 12, kind: input, shape index: {}]
  %s13 = inlined_call_operand.vmem [shape: f32[2,2,128], index: 13, kind: output, shape index: {}]
  %s14 = sld [smem:[#allocation0]]
  $region89: #{dann_forward.5} parent=0
    _
  %s16 = ssub.s32 1, %s14
  %s17 = scalar_select 0, %s16, %s14
  loop: start=0, step=1, limit=4
  $region2: #{dann_forward.5} parent=0 // loop_pre_header
    _
  $region3: #{dann_forward.5} parent=0 // loop_header
    %s19 = sphi 0, %s23
    %p20 = scmp.ge.s32.totalorder %s19, 4
    %s27 = sphi 0, %s27
    %s29 = sphi 0, %s27
    %s30 = sphi 0, %s29
    %s44 = sphi 0, %s30
    %s48 = sphi 0, %s48
    %s50 = sphi 0, %s48
    %s51 = sphi 0, %s50
    %s65 = sphi 0, %s51
    %s69 = sphi 0, %s69
    %s71 = sphi 0, %s69
    %s72 = sphi 0, %s71
    %s86 = sphi 0, %s72
    %s92 = sphi 0, %s94
    %s95 = sphi 0, %s92
    %s96 = sphi 0, %s95
    %s112 = sphi 0, %s96
    %s118 = sphi 0, %s120
    %s121 = sphi 0, %s118
    %s122 = sphi 0, %s121
    %s138 = sphi 0, %s122
    %s144 = sphi 0, %s146
    %s147 = sphi 0, %s144
    %s148 = sphi 0, %s147
    %s164 = sphi 0, %s148
    %s170 = sphi 0, %s172
    %s173 = sphi 0, %s170
    %s174 = sphi 0, %s173
    %s190 = sphi 0, %s174
    %s196 = sphi 0, %s198
    %s199 = sphi 0, %s196
    %s200 = sphi 0, %s199
    %s216 = sphi 0, %s200
    %s222 = sphi 0, %s224
    %s225 = sphi 0, %s222
    %s226 = sphi 0, %s225
    %s242 = sphi 0, %s226
    %s248 = sphi 0, %s250
    %s251 = sphi 0, %s248
    %s252 = sphi 0, %s251
    %s268 = sphi 0, %s252
    %s274 = sphi 0, %s276
    %s277 = sphi 0, %s274
    %s278 = sphi 0, %s277
    %s294 = sphi 0, %s278
    %s300 = sphi 0, %s302
    %s303 = sphi 0, %s300
    %s304 = sphi 0, %s303
    %s320 = sphi 0, %s304
    %s326 = sphi 0, %s328
    %s329 = sphi 0, %s326
    %s330 = sphi 0, %s329
    %s346 = sphi 0, %s330
    %s352 = sphi 0, %s354
    %s355 = sphi 0, %s352
    %s356 = sphi 0, %s355
    %s372 = sphi 0, %s356
  $region4: #{dann_forward.5} parent=0 // loop_header_branch
    %22 = sbr.rel (%p20) target = $region8
  $region5: #{dann_forward.5} parent=0 // loop_body
    %s24 = ssub.s32 %s19, 1
    %s25 = ssub.s32 %s19, 2
    %s26 = sadd.s32 %s19, 1
    %s28 = sadd.s32 %s27, 1
    %p31 = scmp.eq.s32.totalorder %s19, 1
    %p32 = scmp.ne.s32.totalorder %s27, %s29
    %p33 = scmp.eq.s32.totalorder %s19, 0
    %p34 = por %p32, %p33
    %p35 = scmp.ne.s32.totalorder %s27, %s29
    %p36 = scmp.eq.s32.totalorder %s24, 1
    %p37 = por %p35, %p36
    %p38 = scmp.ne.s32.totalorder %s29, %s30
    %p39 = scmp.eq.s32.totalorder %s24, 0
    %p40 = por %p38, %p39
    %p41 = scmp.ne.s32.totalorder %s29, %s30
    %p42 = scmp.eq.s32.totalorder %s25, 1
    %p43 = por %p41, %p42
    %p45 = scmp.ne.s32.totalorder %s30, %s44
    %p46 = scmp.eq.s32.totalorder %s25, 0
    %p47 = por %p45, %p46
    %s49 = sadd.s32 %s48, 1
    %p52 = scmp.eq.s32.totalorder %s19, 1
    %p53 = scmp.ne.s32.totalorder %s48, %s50
    %p54 = scmp.eq.s32.totalorder %s19, 0
    %p55 = por %p53, %p54
    %p56 = scmp.ne.s32.totalorder %s48, %s50
    %p57 = scmp.eq.s32.totalorder %s24, 1
    %p58 = por %p56, %p57
    %p59 = scmp.ne.s32.totalorder %s50, %s51
    %p60 = scmp.eq.s32.totalorder %s24, 0
    %p61 = por %p59, %p60
    %p62 = scmp.ne.s32.totalorder %s50, %s51
    %p63 = scmp.eq.s32.totalorder %s25, 1
    %p64 = por %p62, %p63
    %p66 = scmp.ne.s32.totalorder %s51, %s65
    %p67 = scmp.eq.s32.totalorder %s25, 0
    %p68 = por %p66, %p67
    %s70 = sadd.s32 %s69, 1
    %p73 = scmp.eq.s32.totalorder %s19, 1
    %p74 = scmp.ne.s32.totalorder %s69, %s71
    %p75 = scmp.eq.s32.totalorder %s19, 0
    %p76 = por %p74, %p75
    %p77 = scmp.ne.s32.totalorder %s69, %s71
    %p78 = scmp.eq.s32.totalorder %s24, 1
    %p79 = por %p77, %p78
    %p80 = scmp.ne.s32.totalorder %s71, %s72
    %p81 = scmp.eq.s32.totalorder %s24, 0
    %p82 = por %p80, %p81
    %p83 = scmp.ne.s32.totalorder %s71, %s72
    %p84 = scmp.eq.s32.totalorder %s25, 1
    %p85 = por %p83, %p84
    %p87 = scmp.ne.s32.totalorder %s72, %s86
    %p88 = scmp.eq.s32.totalorder %s25, 0
    %p89 = por %p87, %p88
    %s90 = ssub.s32 %s19, %s26
    %p91 = scmp.eq.s32.totalorder %s90, 0
    %s93 = sadd.s32 %s92, 1
    %s94 = scalar_select %p91, %s92, %s93
    %p97 = pneg %p91
    %p98 = scmp.eq.s32.totalorder %s19, 1
    %p99 = por %p97, %p98
    %p100 = scmp.ne.s32.totalorder %s92, %s95
    %p101 = scmp.eq.s32.totalorder %s19, 0
    %p102 = por %p100, %p101
    %p103 = scmp.ne.s32.totalorder %s92, %s95
    %p104 = scmp.eq.s32.totalorder %s24, 1
    %p105 = por %p103, %p104
    %p106 = scmp.ne.s32.totalorder %s95, %s96
    %p107 = scmp.eq.s32.totalorder %s24, 0
    %p108 = por %p106, %p107
    %p109 = scmp.ne.s32.totalorder %s95, %s96
    %p110 = scmp.eq.s32.totalorder %s25, 1
    %p111 = por %p109, %p110
    %p113 = scmp.ne.s32.totalorder %s96, %s112
    %p114 = scmp.eq.s32.totalorder %s25, 0
    %p115 = por %p113, %p114
    %s116 = ssub.s32 %s19, %s26
    %p117 = scmp.eq.s32.totalorder %s116, 0
    %s119 = sadd.s32 %s118, 1
    %s120 = scalar_select %p117, %s118, %s119
    %p123 = pneg %p117
    %p124 = scmp.eq.s32.totalorder %s19, 1
    %p125 = por %p123, %p124
    %p126 = scmp.ne.s32.totalorder %s118, %s121
    %p127 = scmp.eq.s32.totalorder %s19, 0
    %p128 = por %p126, %p127
    %p129 = scmp.ne.s32.totalorder %s118, %s121
    %p130 = scmp.eq.s32.totalorder %s24, 1
    %p131 = por %p129, %p130
    %p132 = scmp.ne.s32.totalorder %s121, %s122
    %p133 = scmp.eq.s32.totalorder %s24, 0
    %p134 = por %p132, %p133
    %p135 = scmp.ne.s32.totalorder %s121, %s122
    %p136 = scmp.eq.s32.totalorder %s25, 1
    %p137 = por %p135, %p136
    %p139 = scmp.ne.s32.totalorder %s122, %s138
    %p140 = scmp.eq.s32.totalorder %s25, 0
    %p141 = por %p139, %p140
    %s142 = ssub.s32 %s19, %s26
    %p143 = scmp.eq.s32.totalorder %s142, 0
    %s145 = sadd.s32 %s144, 1
    %s146 = scalar_select %p143, %s144, %s145
    %p149 = pneg %p143
    %p150 = scmp.eq.s32.totalorder %s19, 1
    %p151 = por %p149, %p150
    %p152 = scmp.ne.s32.totalorder %s144, %s147
    %p153 = scmp.eq.s32.totalorder %s19, 0
    %p154 = por %p152, %p153
    %p155 = scmp.ne.s32.totalorder %s144, %s147
    %p156 = scmp.eq.s32.totalorder %s24, 1
    %p157 = por %p155, %p156
    %p158 = scmp.ne.s32.totalorder %s147, %s148
    %p159 = scmp.eq.s32.totalorder %s24, 0
    %p160 = por %p158, %p159
    %p161 = scmp.ne.s32.totalorder %s147, %s148
    %p162 = scmp.eq.s32.totalorder %s25, 1
    %p163 = por %p161, %p162
    %p165 = scmp.ne.s32.totalorder %s148, %s164
    %p166 = scmp.eq.s32.totalorder %s25, 0
    %p167 = por %p165, %p166
    %s168 = ssub.s32 %s19, %s26
    %p169 = scmp.eq.s32.totalorder %s168, 0
    %s171 = sadd.s32 %s170, 1
    %s172 = scalar_select %p169, %s170, %s171
    %p175 = pneg %p169
    %p176 = scmp.eq.s32.totalorder %s19, 1
    %p177 = por %p175, %p176
    %p178 = scmp.ne.s32.totalorder %s170, %s173
    %p179 = scmp.eq.s32.totalorder %s19, 0
    %p180 = por %p178, %p179
    %p181 = scmp.ne.s32.totalorder %s170, %s173
    %p182 = scmp.eq.s32.totalorder %s24, 1
    %p183 = por %p181, %p182
    %p184 = scmp.ne.s32.totalorder %s173, %s174
    %p185 = scmp.eq.s32.totalorder %s24, 0
    %p186 = por %p184, %p185
    %p187 = scmp.ne.s32.totalorder %s173, %s174
    %p188 = scmp.eq.s32.totalorder %s25, 1
    %p189 = por %p187, %p188
    %p191 = scmp.ne.s32.totalorder %s174, %s190
    %p192 = scmp.eq.s32.totalorder %s25, 0
    %p193 = por %p191, %p192
    %s194 = ssub.s32 %s19, %s26
    %p195 = scmp.eq.s32.totalorder %s194, 0
    %s197 = sadd.s32 %s196, 1
    %s198 = scalar_select %p195, %s196, %s197
    %p201 = pneg %p195
    %p202 = scmp.eq.s32.totalorder %s19, 1
    %p203 = por %p201, %p202
    %p204 = scmp.ne.s32.totalorder %s196, %s199
    %p205 = scmp.eq.s32.totalorder %s19, 0
    %p206 = por %p204, %p205
    %p207 = scmp.ne.s32.totalorder %s196, %s199
    %p208 = scmp.eq.s32.totalorder %s24, 1
    %p209 = por %p207, %p208
    %p210 = scmp.ne.s32.totalorder %s199, %s200
    %p211 = scmp.eq.s32.totalorder %s24, 0
    %p212 = por %p210, %p211
    %p213 = scmp.ne.s32.totalorder %s199, %s200
    %p214 = scmp.eq.s32.totalorder %s25, 1
    %p215 = por %p213, %p214
    %p217 = scmp.ne.s32.totalorder %s200, %s216
    %p218 = scmp.eq.s32.totalorder %s25, 0
    %p219 = por %p217, %p218
    %s220 = ssub.s32 %s19, %s26
    %p221 = scmp.eq.s32.totalorder %s220, 0
    %s223 = sadd.s32 %s222, 1
    %s224 = scalar_select %p221, %s222, %s223
    %p227 = pneg %p221
    %p228 = scmp.eq.s32.totalorder %s19, 1
    %p229 = por %p227, %p228
    %p230 = scmp.ne.s32.totalorder %s222, %s225
    %p231 = scmp.eq.s32.totalorder %s19, 0
    %p232 = por %p230, %p231
    %p233 = scmp.ne.s32.totalorder %s222, %s225
    %p234 = scmp.eq.s32.totalorder %s24, 1
    %p235 = por %p233, %p234
    %p236 = scmp.ne.s32.totalorder %s225, %s226
    %p237 = scmp.eq.s32.totalorder %s24, 0
    %p238 = por %p236, %p237
    %p239 = scmp.ne.s32.totalorder %s225, %s226
    %p240 = scmp.eq.s32.totalorder %s25, 1
    %p241 = por %p239, %p240
    %p243 = scmp.ne.s32.totalorder %s226, %s242
    %p244 = scmp.eq.s32.totalorder %s25, 0
    %p245 = por %p243, %p244
    %s246 = ssub.s32 %s19, %s26
    %p247 = scmp.eq.s32.totalorder %s246, 0
    %s249 = sadd.s32 %s248, 1
    %s250 = scalar_select %p247, %s248, %s249
    %p253 = pneg %p247
    %p254 = scmp.eq.s32.totalorder %s19, 1
    %p255 = por %p253, %p254
    %p256 = scmp.ne.s32.totalorder %s248, %s251
    %p257 = scmp.eq.s32.totalorder %s19, 0
    %p258 = por %p256, %p257
    %p259 = scmp.ne.s32.totalorder %s248, %s251
    %p260 = scmp.eq.s32.totalorder %s24, 1
    %p261 = por %p259, %p260
    %p262 = scmp.ne.s32.totalorder %s251, %s252
    %p263 = scmp.eq.s32.totalorder %s24, 0
    %p264 = por %p262, %p263
    %p265 = scmp.ne.s32.totalorder %s251, %s252
    %p266 = scmp.eq.s32.totalorder %s25, 1
    %p267 = por %p265, %p266
    %p269 = scmp.ne.s32.totalorder %s252, %s268
    %p270 = scmp.eq.s32.totalorder %s25, 0
    %p271 = por %p269, %p270
    %s272 = ssub.s32 %s19, %s26
    %p273 = scmp.eq.s32.totalorder %s272, 0
    %s275 = sadd.s32 %s274, 1
    %s276 = scalar_select %p273, %s274, %s275
    %p279 = pneg %p273
    %p280 = scmp.eq.s32.totalorder %s19, 1
    %p281 = por %p279, %p280
    %p282 = scmp.ne.s32.totalorder %s274, %s277
    %p283 = scmp.eq.s32.totalorder %s19, 0
    %p284 = por %p282, %p283
    %p285 = scmp.ne.s32.totalorder %s274, %s277
    %p286 = scmp.eq.s32.totalorder %s24, 1
    %p287 = por %p285, %p286
    %p288 = scmp.ne.s32.totalorder %s277, %s278
    %p289 = scmp.eq.s32.totalorder %s24, 0
    %p290 = por %p288, %p289
    %p291 = scmp.ne.s32.totalorder %s277, %s278
    %p292 = scmp.eq.s32.totalorder %s25, 1
    %p293 = por %p291, %p292
    %p295 = scmp.ne.s32.totalorder %s278, %s294
    %p296 = scmp.eq.s32.totalorder %s25, 0
    %p297 = por %p295, %p296
    %s298 = ssub.s32 %s19, %s26
    %p299 = scmp.eq.s32.totalorder %s298, 0
    %s301 = sadd.s32 %s300, 1
    %s302 = scalar_select %p299, %s300, %s301
    %p305 = pneg %p299
    %p306 = scmp.eq.s32.totalorder %s19, 1
    %p307 = por %p305, %p306
    %p308 = scmp.ne.s32.totalorder %s300, %s303
    %p309 = scmp.eq.s32.totalorder %s19, 0
    %p310 = por %p308, %p309
    %p311 = scmp.ne.s32.totalorder %s300, %s303
    %p312 = scmp.eq.s32.totalorder %s24, 1
    %p313 = por %p311, %p312
    %p314 = scmp.ne.s32.totalorder %s303, %s304
    %p315 = scmp.eq.s32.totalorder %s24, 0
    %p316 = por %p314, %p315
    %p317 = scmp.ne.s32.totalorder %s303, %s304
    %p318 = scmp.eq.s32.totalorder %s25, 1
    %p319 = por %p317, %p318
    %p321 = scmp.ne.s32.totalorder %s304, %s320
    %p322 = scmp.eq.s32.totalorder %s25, 0
    %p323 = por %p321, %p322
    %s324 = ssub.s32 %s19, %s26
    %p325 = scmp.eq.s32.totalorder %s324, 0
    %s327 = sadd.s32 %s326, 1
    %s328 = scalar_select %p325, %s326, %s327
    %p331 = pneg %p325
    %p332 = scmp.eq.s32.totalorder %s19, 1
    %p333 = por %p331, %p332
    %p334 = scmp.ne.s32.totalorder %s326, %s329
    %p335 = scmp.eq.s32.totalorder %s19, 0
    %p336 = por %p334, %p335
    %p337 = scmp.ne.s32.totalorder %s326, %s329
    %p338 = scmp.eq.s32.totalorder %s24, 1
    %p339 = por %p337, %p338
    %p340 = scmp.ne.s32.totalorder %s329, %s330
    %p341 = scmp.eq.s32.totalorder %s24, 0
    %p342 = por %p340, %p341
    %p343 = scmp.ne.s32.totalorder %s329, %s330
    %p344 = scmp.eq.s32.totalorder %s25, 1
    %p345 = por %p343, %p344
    %p347 = scmp.ne.s32.totalorder %s330, %s346
    %p348 = scmp.eq.s32.totalorder %s25, 0
    %p349 = por %p347, %p348
    %s350 = ssub.s32 %s19, %s26
    %p351 = scmp.eq.s32.totalorder %s350, 0
    %s353 = sadd.s32 %s352, 1
    %s354 = scalar_select %p351, %s352, %s353
    %p357 = pneg %p351
    %p358 = scmp.eq.s32.totalorder %s19, 1
    %p359 = por %p357, %p358
    %p360 = scmp.ne.s32.totalorder %s352, %s355
    %p361 = scmp.eq.s32.totalorder %s19, 0
    %p362 = por %p360, %p361
    %p363 = scmp.ne.s32.totalorder %s352, %s355
    %p364 = scmp.eq.s32.totalorder %s24, 1
    %p365 = por %p363, %p364
    %p366 = scmp.ne.s32.totalorder %s355, %s356
    %p367 = scmp.eq.s32.totalorder %s24, 0
    %p368 = por %p366, %p367
    %p369 = scmp.ne.s32.totalorder %s355, %s356
    %p370 = scmp.eq.s32.totalorder %s25, 1
    %p371 = por %p369, %p370
    %p373 = scmp.ne.s32.totalorder %s356, %s372
    %p374 = scmp.eq.s32.totalorder %s25, 0
    %p375 = por %p373, %p374
    %p376 = scmp.le.s32.totalorder 1, %s19
    %p377 = scmp.lt.s32.totalorder %s19, 3
    %p378 = pnand %p376, %p377
    %p379 = pneg %p378
    // Predicated region
    $region9: #{dann_forward.5} parent=5 // pred_check
      _
    $region10: #{dann_forward.5} parent=5 // pred_check_branch
      %381 = sbr.rel (%p378) target = $region12
    $region11: #{dann_forward.5} parent=5 // pred_region
      %s382 = ssub.s32 %s19, 1
      // Predicated region
      $region13: #{dann_forward.5} parent=11 // pred_check
        %p383 = pneg %p40
      $region14: #{dann_forward.5} parent=11 // pred_check_branch
        %385 = sbr.rel (%p383) target = $region16
      $region15: #{dann_forward.5} parent=11 // pred_region
        _
      $region16: #{dann_forward.5} parent=11 // pred_fallthru
        _
      // Predicated region
      $region17: #{dann_forward.5} parent=11 // pred_check
        %p386 = pneg %p61
      $region18: #{dann_forward.5} parent=11 // pred_check_branch
        %388 = sbr.rel (%p386) target = $region20
      $region19: #{dann_forward.5} parent=11 // pred_region
        _
      $region20: #{dann_forward.5} parent=11 // pred_fallthru
        _
      // Predicated region
      $region21: #{dann_forward.5} parent=11 // pred_check
        %p389 = pneg %p82
      $region22: #{dann_forward.5} parent=11 // pred_check_branch
        %391 = sbr.rel (%p389) target = $region24
      $region23: #{dann_forward.5} parent=11 // pred_region
        _
      $region24: #{dann_forward.5} parent=11 // pred_fallthru
        _
    $region12: #{dann_forward.5} parent=5 // pred_fallthru
      _
    %p392 = scmp.lt.s32.totalorder %s19, 2
    // Predicated region
    $region25: #{dann_forward.5} parent=5 // pred_check
      %p393 = pneg %p392
    $region26: #{dann_forward.5} parent=5 // pred_check_branch
      %395 = sbr.rel (%p393) target = $region28
    $region27: #{dann_forward.5} parent=5 // pred_region
      // Predicated region
      $region29: #{dann_forward.5} parent=27 // pred_check
        %p396 = pneg %p102
      $region30: #{dann_forward.5} parent=27 // pred_check_branch
        %398 = sbr.rel (%p396) target = $region32
      $region31: #{dann_forward.5} parent=27 // pred_region
        %p399 = scmp.lt.s32.totalorder %s19, 1
        %s400 = scalar_select %p399, %s19, 1
        %s401 = smul.addr %s400, 128
        %s402 = smul.addr %s401, 4
        %s403 = scalar_lea.vmem %s3, %s402
      $region32: #{dann_forward.5} parent=27 // pred_fallthru
        _
      // Predicated region
      $region33: #{dann_forward.5} parent=27 // pred_check
        %p404 = pneg %p128
      $region34: #{dann_forward.5} parent=27 // pred_check_branch
        %406 = sbr.rel (%p404) target = $region36
      $region35: #{dann_forward.5} parent=27 // pred_region
        %p407 = scmp.lt.s32.totalorder %s19, 1
        %s408 = scalar_select %p407, %s19, 1
        %s409 = smul.addr %s408, 8
        %s410 = scalar_lea.vmem %s4, %s409
      $region36: #{dann_forward.5} parent=27 // pred_fallthru
        _
      // Predicated region
      $region37: #{dann_forward.5} parent=27 // pred_check
        %p411 = pneg %p154
      $region38: #{dann_forward.5} parent=27 // pred_check_branch
        %413 = sbr.rel (%p411) target = $region40
      $region39: #{dann_forward.5} parent=27 // pred_region
        %p414 = scmp.lt.s32.totalorder %s19, 1
        %s415 = scalar_select %p414, %s19, 1
        %s416 = smul.addr %s415, 8
        %s417 = scalar_lea.vmem %s5, %s416
      $region40: #{dann_forward.5} parent=27 // pred_fallthru
        _
      // Predicated region
      $region41: #{dann_forward.5} parent=27 // pred_check
        %p418 = pneg %p180
      $region42: #{dann_forward.5} parent=27 // pred_check_branch
        %420 = sbr.rel (%p418) target = $region44
      $region43: #{dann_forward.5} parent=27 // pred_region
        %p421 = scmp.lt.s32.totalorder %s19, 1
        %s422 = scalar_select %p421, %s19, 1
        %s423 = smul.addr %s422, 8
        %s424 = scalar_lea.vmem %s6, %s423
      $region44: #{dann_forward.5} parent=27 // pred_fallthru
        _
      // Predicated region
      $region45: #{dann_forward.5} parent=27 // pred_check
        %p425 = pneg %p206
      $region46: #{dann_forward.5} parent=27 // pred_check_branch
        %427 = sbr.rel (%p425) target = $region48
      $region47: #{dann_forward.5} parent=27 // pred_region
        %p428 = scmp.lt.s32.totalorder %s19, 1
        %s429 = scalar_select %p428, %s19, 1
        %s430 = smul.addr %s429, 256
        %s431 = smul.addr %s430, 4
        %s432 = scalar_lea.vmem %s7, %s431
      $region48: #{dann_forward.5} parent=27 // pred_fallthru
        _
      // Predicated region
      $region49: #{dann_forward.5} parent=27 // pred_check
        %p433 = pneg %p232
      $region50: #{dann_forward.5} parent=27 // pred_check_branch
        %435 = sbr.rel (%p433) target = $region52
      $region51: #{dann_forward.5} parent=27 // pred_region
        %p436 = scmp.lt.s32.totalorder %s19, 1
        %s437 = scalar_select %p436, %s19, 1
        %s438 = smul.addr %s437, 2
        %s439 = scalar_lea.vmem %s8, %s438
      $region52: #{dann_forward.5} parent=27 // pred_fallthru
        _
      // Predicated region
      $region53: #{dann_forward.5} parent=27 // pred_check
        %p440 = pneg %p258
      $region54: #{dann_forward.5} parent=27 // pred_check_branch
        %442 = sbr.rel (%p440) target = $region56
      $region55: #{dann_forward.5} parent=27 // pred_region
        %p443 = scmp.lt.s32.totalorder %s19, 1
        %s444 = scalar_select %p443, %s19, 1
        %s445 = smul.addr %s444, 2
        %s446 = scalar_lea.vmem %s9, %s445
      $region56: #{dann_forward.5} parent=27 // pred_fallthru
        _
      // Predicated region
      $region57: #{dann_forward.5} parent=27 // pred_check
        %p447 = pneg %p284
      $region58: #{dann_forward.5} parent=27 // pred_check_branch
        %449 = sbr.rel (%p447) target = $region60
      $region59: #{dann_forward.5} parent=27 // pred_region
        %p450 = scmp.lt.s32.totalorder %s19, 1
        %s451 = scalar_select %p450, %s19, 1
        %s452 = smul.addr %s451, 2
        %s453 = scalar_lea.vmem %s10, %s452
      $region60: #{dann_forward.5} parent=27 // pred_fallthru
        _
      // Predicated region
      $region61: #{dann_forward.5} parent=27 // pred_check
        %p454 = pneg %p310
      $region62: #{dann_forward.5} parent=27 // pred_check_branch
        %456 = sbr.rel (%p454) target = $region64
      $region63: #{dann_forward.5} parent=27 // pred_region
        %p457 = scmp.lt.s32.totalorder %s19, 1
        %s458 = scalar_select %p457, %s19, 1
        %s459 = smul.addr %s458, 32
        %s460 = smul.addr %s459, 4
        %s461 = scalar_lea.vmem %s11, %s460
      $region64: #{dann_forward.5} parent=27 // pred_fallthru
        _
      // Predicated region
      $region65: #{dann_forward.5} parent=27 // pred_check
        %p462 = pneg %p336
      $region66: #{dann_forward.5} parent=27 // pred_check_branch
        %464 = sbr.rel (%p462) target = $region68
      $region67: #{dann_forward.5} parent=27 // pred_region
        %p465 = scmp.lt.s32.totalorder %s19, 1
        %s466 = scalar_select %p465, %s19, 1
        %s467 = scalar_lea.vmem %s12, %s466
      $region68: #{dann_forward.5} parent=27 // pred_fallthru
        _
    $region28: #{dann_forward.5} parent=5 // pred_fallthru
      _
    %p468 = scmp.le.s32.totalorder 1, %s19
    %p469 = scmp.lt.s32.totalorder %s19, 3
    %p470 = pnand %p468, %p469
    %p471 = pneg %p470
    // Predicated region
    $region69: #{dann_forward.5} parent=5 // pred_check
      _
    $region70: #{dann_forward.5} parent=5 // pred_check_branch
      %473 = sbr.rel (%p470) target = $region72
    $region71: #{dann_forward.5} parent=5 // pred_region
      %s474 = ssub.s32 %s19, 1
      %p475 = pneg %p40
      %p476 = pneg %p37
      %p477 = pneg %p61
      %p478 = pneg %p58
      %p479 = pneg %p82
      %p480 = pneg %p79
      %p481 = scmp.lt.s32.totalorder %s24, 1
      %s482 = scalar_select %p481, %s24, 1
      %s483 = smul.addr %s482, 128
      %s484 = smul.addr %s483, 4
      %s485 = scalar_lea.vmem %s3, %s484
      %p486 = pneg %p108
      %p487 = pneg %p105
      %p488 = scmp.lt.s32.totalorder %s24, 1
      %s489 = scalar_select %p488, %s24, 1
      %s490 = smul.addr %s489, 8
      %s491 = scalar_lea.vmem %s4, %s490
      %p492 = pneg %p134
      %p493 = pneg %p131
      %p494 = scmp.lt.s32.totalorder %s24, 1
      %s495 = scalar_select %p494, %s24, 1
      %s496 = smul.addr %s495, 8
      %s497 = scalar_lea.vmem %s5, %s496
      %p498 = pneg %p160
      %p499 = pneg %p157
      %p500 = scmp.lt.s32.totalorder %s24, 1
      %s501 = scalar_select %p500, %s24, 1
      %s502 = smul.addr %s501, 8
      %s503 = scalar_lea.vmem %s6, %s502
      %p504 = pneg %p186
      %p505 = pneg %p183
      %p506 = scmp.lt.s32.totalorder %s24, 1
      %s507 = scalar_select %p506, %s24, 1
      %s508 = smul.addr %s507, 256
      %s509 = smul.addr %s508, 4
      %s510 = scalar_lea.vmem %s7, %s509
      %p511 = pneg %p212
      %p512 = pneg %p209
      %p513 = scmp.lt.s32.totalorder %s24, 1
      %s514 = scalar_select %p513, %s24, 1
      %s515 = smul.addr %s514, 2
      %s516 = scalar_lea.vmem %s8, %s515
      %p517 = pneg %p238
      %p518 = pneg %p235
      %p519 = scmp.lt.s32.totalorder %s24, 1
      %s520 = scalar_select %p519, %s24, 1
      %s521 = smul.addr %s520, 2
      %s522 = scalar_lea.vmem %s9, %s521
      %p523 = pneg %p264
      %p524 = pneg %p261
      %p525 = scmp.lt.s32.totalorder %s24, 1
      %s526 = scalar_select %p525, %s24, 1
      %s527 = smul.addr %s526, 2
      %s528 = scalar_lea.vmem %s10, %s527
      %p529 = pneg %p290
      %p530 = pneg %p287
      %p531 = scmp.lt.s32.totalorder %s24, 1
      %s532 = scalar_select %p531, %s24, 1
      %s533 = smul.addr %s532, 32
      %s534 = smul.addr %s533, 4
      %s535 = scalar_lea.vmem %s11, %s534
      %p536 = pneg %p316
      %p537 = pneg %p313
      %p538 = scmp.lt.s32.totalorder %s24, 1
      %s539 = scalar_select %p538, %s24, 1
      %s540 = scalar_lea.vmem %s12, %s539
      %p541 = pneg %p342
      %p542 = pneg %p339
      %p543 = pneg %p368
      %p544 = pneg %p365
      %p545 = scmp.lt.s32.totalorder %s24, 1
      %s546 = scalar_select %p545, %s24, 1
      %s547 = smul.addr %s546, 2
      %s548 = scalar_lea.vmem %s13, %s547
      %p549 = scmp.lt.s32.totalorder %s24, 1
      %s550 = scalar_select %p549, %s24, 1
      %s551 = smul.addr %s550, 128
      %s552 = smul.addr %s551, 4
      %s553 = scalar_lea.vmem %s3, %s552
      %p554 = scmp.lt.s32.totalorder %s24, 1
      %s555 = scalar_select %p554, %s24, 1
      %s556 = smul.addr %s555, 8
      %s557 = scalar_lea.vmem %s4, %s556
      %p558 = scmp.lt.s32.totalorder %s24, 1
      %s559 = scalar_select %p558, %s24, 1
      %s560 = smul.addr %s559, 8
      %s561 = scalar_lea.vmem %s5, %s560
      %p562 = scmp.lt.s32.totalorder %s24, 1
      %s563 = scalar_select %p562, %s24, 1
      %s564 = smul.addr %s563, 8
      %s565 = scalar_lea.vmem %s6, %s564
      %p566 = scmp.lt.s32.totalorder %s24, 1
      %s567 = scalar_select %p566, %s24, 1
      %s568 = smul.addr %s567, 256
      %s569 = smul.addr %s568, 4
      %s570 = scalar_lea.vmem %s7, %s569
      %p571 = scmp.lt.s32.totalorder %s24, 1
      %s572 = scalar_select %p571, %s24, 1
      %s573 = smul.addr %s572, 2
      %s574 = scalar_lea.vmem %s8, %s573
      %p575 = scmp.lt.s32.totalorder %s24, 1
      %s576 = scalar_select %p575, %s24, 1
      %s577 = smul.addr %s576, 2
      %s578 = scalar_lea.vmem %s9, %s577
      %p579 = scmp.lt.s32.totalorder %s24, 1
      %s580 = scalar_select %p579, %s24, 1
      %s581 = smul.addr %s580, 2
      %s582 = scalar_lea.vmem %s10, %s581
      %p583 = scmp.lt.s32.totalorder %s24, 1
      %s584 = scalar_select %p583, %s24, 1
      %s585 = smul.addr %s584, 32
      %s586 = smul.addr %s585, 4
      %s587 = scalar_lea.vmem %s11, %s586
      %p588 = scmp.lt.s32.totalorder %s24, 1
      %s589 = scalar_select %p588, %s24, 1
      %s590 = scalar_lea.vmem %s12, %s589
      %p591 = scmp.lt.s32.totalorder %s24, 1
      %s592 = scalar_select %p591, %s24, 1
      %s593 = smul.addr %s592, 2
      %s594 = scalar_lea.vmem %s13, %s593
      %p596 = scmp.eq.s32.totalorder %s24, 0
      // Predicated region
      $region73: #{dann_forward.5} parent=71 // pred_check
        %p597 = pneg %p596
      $region74: #{dann_forward.5} parent=71 // pred_check_branch
        %599 = sbr.rel (%p597) target = $region76
      $region75: #{dann_forward.5} parent=71 // pred_region
        %v600 = vld [vmem:[%s0] sm:$0xff]
        %v601 = vld [vmem:[%s0 + $0x8] sm:$0x1f]
        %v602 = vld [vmem:[%s1] sm:$0xf]
        %v603 = vld [vmem:[%s1 + $0x4] sm:$0xf]
        %v604 = vld [vmem:[%s1 + $0x8] sm:$0xf]
        %v605 = vld [vmem:[%s1 + $0xc] sm:$0xf]
        %v606 = vld [vmem:[%s1 + $0x10] sm:$0xf]
        %v607 = vld [vmem:[%s1 + $0x14] sm:$0xf]
        %v608 = vld [vmem:[%s1 + $0x18] sm:$0xf]
        %v609 = vld [vmem:[%s1 + $0x1c] sm:$0xf]
        %v610 = vld [vmem:[%s1 + $0x20] sm:$0xf]
        %v611 = vld [vmem:[%s1 + $0x24] sm:$0xf]
        %v612 = vld [vmem:[%s1 + $0x28] sm:$0xf]
        %v613 = vld [vmem:[%s1 + $0x2c] sm:$0xf]
        %v614 = vld [vmem:[%s1 + $0x30] sm:$0xf]
        %v615 = vld [vmem:[%s1 + $0x34] sm:$0xf]
        %v616 = vld [vmem:[%s1 + $0x38] sm:$0xf]
        %v617 = vld [vmem:[%s1 + $0x3c] sm:$0xf]
        %v618 = vld [vmem:[%s1 + $0x40] sm:$0xf]
        %v619 = vld [vmem:[%s1 + $0x44] sm:$0xf]
        %v620 = vld [vmem:[%s1 + $0x48] sm:$0xf]
        %v621 = vld [vmem:[%s1 + $0x4c] sm:$0xf]
        %v622 = vld [vmem:[%s1 + $0x50] sm:$0xf]
        %v623 = vld [vmem:[%s1 + $0x54] sm:$0xf]
        %v624 = vld [vmem:[%s1 + $0x58] sm:$0xf]
        %v625 = vld [vmem:[%s1 + $0x5c] sm:$0xf]
        %v626 = vld [vmem:[%s1 + $0x60] sm:$0xf]
        %v627 = vld [vmem:[%s1 + $0x64] sm:$0xf]
        %v628 = vld [vmem:[%s1 + $0x68] sm:$0xf]
        %v629 = vld [vmem:[%s1 + $0x6c] sm:$0xf]
        %v630 = vld [vmem:[%s1 + $0x70] sm:$0xf]
        %v631 = vld [vmem:[%s1 + $0x74] sm:$0xf]
        %v632 = vld [vmem:[%s1 + $0x78] sm:$0xf]
        %v633 = vld [vmem:[%s1 + $0x7c] sm:$0xf]
        %v634 = vld [vmem:[%s1 + $0x80] sm:$0xf]
        %v635 = vld [vmem:[%s1 + $0x84] sm:$0xf]
        %v636 = vld [vmem:[%s1 + $0x88] sm:$0xf]
        %v637 = vld [vmem:[%s1 + $0x8c] sm:$0xf]
        %v638 = vld [vmem:[%s1 + $0x90] sm:$0xf]
        %v639 = vld [vmem:[%s1 + $0x94] sm:$0xf]
        %v640 = vld [vmem:[%s1 + $0x98] sm:$0xf]
        %v641 = vld [vmem:[%s1 + $0x9c] sm:$0xf]
        %v642 = vld [vmem:[%s1 + $0xa0] sm:$0xf]
        %v643 = vld [vmem:[%s1 + $0xa4] sm:$0xf]
        %v644 = vld [vmem:[%s1 + $0xa8] sm:$0xf]
        %v645 = vld [vmem:[%s1 + $0xac] sm:$0xf]
        %v646 = vld [vmem:[%s1 + $0xb0] sm:$0xf]
        %v647 = vld [vmem:[%s1 + $0xb4] sm:$0xf]
        %v648 = vld [vmem:[%s1 + $0xb8] sm:$0xf]
        %v649 = vld [vmem:[%s1 + $0xbc] sm:$0xf]
        %v650 = vld [vmem:[%s1 + $0xc0] sm:$0xf]
        %v651 = vld [vmem:[%s1 + $0xc4] sm:$0xf]
        %v652 = vld [vmem:[%s1 + $0xc8] sm:$0xf]
        %v653 = vld [vmem:[%s1 + $0xcc] sm:$0xf]
        %v654 = vld [vmem:[%s1 + $0xd0] sm:$0xf]
        %v655 = vld [vmem:[%s1 + $0xd4] sm:$0xf]
        %v656 = vld [vmem:[%s1 + $0xd8] sm:$0xf]
        %v657 = vld [vmem:[%s1 + $0xdc] sm:$0xf]
        %v658 = vld [vmem:[%s1 + $0xe0] sm:$0xf]
        %v659 = vld [vmem:[%s1 + $0xe4] sm:$0xf]
        %v660 = vld [vmem:[%s1 + $0xe8] sm:$0xf]
        %v661 = vld [vmem:[%s1 + $0xec] sm:$0xf]
        %v662 = vld [vmem:[%s1 + $0xf0] sm:$0xf]
        %v663 = vld [vmem:[%s1 + $0xf4] sm:$0xf]
        %v664 = vld [vmem:[%s1 + $0xf8] sm:$0xf]
        %v665 = vld [vmem:[%s1 + $0xfc] sm:$0xf]
        %v666 = vld [vmem:[%s1 + $0x100] sm:$0xf]
        %v667 = vld [vmem:[%s1 + $0x104] sm:$0xf]
        %v668 = vld [vmem:[%s1 + $0x108] sm:$0xf]
        %v669 = vld [vmem:[%s1 + $0x10c] sm:$0xf]
        %v670 = vld [vmem:[%s1 + $0x110] sm:$0xf]
        %v671 = vld [vmem:[%s1 + $0x114] sm:$0xf]
        %v672 = vld [vmem:[%s1 + $0x118] sm:$0xf]
        %v673 = vld [vmem:[%s1 + $0x11c] sm:$0xf]
        %v674 = vld [vmem:[%s1 + $0x120] sm:$0xf]
        %v675 = vld [vmem:[%s1 + $0x124] sm:$0xf]
        %v676 = vld [vmem:[%s1 + $0x128] sm:$0xf]
        %v677 = vld [vmem:[%s1 + $0x12c] sm:$0xf]
        %v678 = vld [vmem:[%s1 + $0x130] sm:$0xf]
        %v679 = vld [vmem:[%s1 + $0x134] sm:$0xf]
        %v680 = vld [vmem:[%s1 + $0x138] sm:$0xf]
        %v681 = vld [vmem:[%s1 + $0x13c] sm:$0xf]
        %v682 = vld [vmem:[%s1 + $0x140] sm:$0xf]
        %v683 = vld [vmem:[%s1 + $0x144] sm:$0xf]
        %v684 = vld [vmem:[%s1 + $0x148] sm:$0xf]
        %v685 = vld [vmem:[%s1 + $0x14c] sm:$0xf]
        %v686 = vld [vmem:[%s1 + $0x150] sm:$0xf]
        %v687 = vld [vmem:[%s1 + $0x154] sm:$0xf]
        %v688 = vld [vmem:[%s1 + $0x158] sm:$0xf]
        %v689 = vld [vmem:[%s1 + $0x15c] sm:$0xf]
        %v690 = vld [vmem:[%s1 + $0x160] sm:$0xf]
        %v691 = vld [vmem:[%s1 + $0x164] sm:$0xf]
        %v692 = vld [vmem:[%s1 + $0x168] sm:$0xf]
        %v693 = vld [vmem:[%s1 + $0x16c] sm:$0xf]
        %v694 = vld [vmem:[%s1 + $0x170] sm:$0xf]
        %v695 = vld [vmem:[%s1 + $0x174] sm:$0xf]
        %v696 = vld [vmem:[%s1 + $0x178] sm:$0xf]
        %v697 = vld [vmem:[%s1 + $0x17c] sm:$0xf]
        %v698 = vld [vmem:[%s1 + $0x180] sm:$0xf]
        %v699 = vld [vmem:[%s1 + $0x184] sm:$0xf]
        %v700 = vld [vmem:[%s1 + $0x188] sm:$0xf]
        %v701 = vld [vmem:[%s1 + $0x18c] sm:$0xf]
        %v702 = vld [vmem:[%s1 + $0x190] sm:$0xf]
        %v703 = vld [vmem:[%s1 + $0x194] sm:$0xf]
        %v704 = vld [vmem:[%s1 + $0x198] sm:$0xf]
        %v705 = vld [vmem:[%s1 + $0x19c] sm:$0xf]
        %v706 = vld [vmem:[%s1 + $0x1a0] sm:$0xf]
        %v707 = vld [vmem:[%s1 + $0x1a4] sm:$0xf]
        %v708 = vld [vmem:[%s1 + $0x1a8] sm:$0xf]
        %v709 = vld [vmem:[%s1 + $0x1ac] sm:$0xf]
        %v710 = vld [vmem:[%s1 + $0x1b0] sm:$0xf]
        %v711 = vld [vmem:[%s1 + $0x1b4] sm:$0xf]
        %v712 = vld [vmem:[%s1 + $0x1b8] sm:$0xf]
        %v713 = vld [vmem:[%s1 + $0x1bc] sm:$0xf]
        %v714 = vld [vmem:[%s1 + $0x1c0] sm:$0xf]
        %v715 = vld [vmem:[%s1 + $0x1c4] sm:$0xf]
        %v716 = vld [vmem:[%s1 + $0x1c8] sm:$0xf]
        %v717 = vld [vmem:[%s1 + $0x1cc] sm:$0xf]
        %v718 = vld [vmem:[%s1 + $0x1d0] sm:$0xf]
        %v719 = vld [vmem:[%s1 + $0x1d4] sm:$0xf]
        %v720 = vld [vmem:[%s1 + $0x1d8] sm:$0xf]
        %v721 = vld [vmem:[%s1 + $0x1dc] sm:$0xf]
        %v722 = vld [vmem:[%s1 + $0x1e0] sm:$0xf]
        %v723 = vld [vmem:[%s1 + $0x1e4] sm:$0xf]
        %v724 = vld [vmem:[%s1 + $0x1e8] sm:$0xf]
        %v725 = vld [vmem:[%s1 + $0x1ec] sm:$0xf]
        %v726 = vld [vmem:[%s1 + $0x1f0] sm:$0xf]
        %v727 = vld [vmem:[%s1 + $0x1f4] sm:$0xf]
        %v728 = vld [vmem:[%s1 + $0x1f8] sm:$0xf]
        %v729 = vld [vmem:[%s1 + $0x1fc] sm:$0xf]
        %v730 = vld [vmem:[%s1 + $0x200] sm:$0xf]
        %v731 = vld [vmem:[%s1 + $0x204] sm:$0xf]
        %v732 = vld [vmem:[%s1 + $0x208] sm:$0xf]
        %v733 = vld [vmem:[%s1 + $0x20c] sm:$0xf]
        %v734 = vld [vmem:[%s1 + $0x210] sm:$0xf]
        %v735 = vld [vmem:[%s1 + $0x214] sm:$0xf]
        %v736 = vld [vmem:[%s1 + $0x218] sm:$0xf]
        %v737 = vld [vmem:[%s1 + $0x21c] sm:$0xf]
        %v738 = vld [vmem:[%s1 + $0x220] sm:$0xf]
        %v739 = vld [vmem:[%s1 + $0x224] sm:$0xf]
        %v740 = vld [vmem:[%s1 + $0x228] sm:$0xf]
        %v741 = vld [vmem:[%s1 + $0x22c] sm:$0xf]
        %v742 = vld [vmem:[%s1 + $0x230] sm:$0xf]
        %v743 = vld [vmem:[%s1 + $0x234] sm:$0xf]
        %v744 = vld [vmem:[%s1 + $0x238] sm:$0xf]
        %v745 = vld [vmem:[%s1 + $0x23c] sm:$0xf]
        %v746 = vld [vmem:[%s1 + $0x240] sm:$0xf]
        %v747 = vld [vmem:[%s1 + $0x244] sm:$0xf]
        %v748 = vld [vmem:[%s1 + $0x248] sm:$0xf]
        %v749 = vld [vmem:[%s1 + $0x24c] sm:$0xf]
        %v750 = vld [vmem:[%s1 + $0x250] sm:$0xf]
        %v751 = vld [vmem:[%s1 + $0x254] sm:$0xf]
        %v752 = vld [vmem:[%s1 + $0x258] sm:$0xf]
        %v753 = vld [vmem:[%s1 + $0x25c] sm:$0xf]
        %v754 = vld [vmem:[%s1 + $0x260] sm:$0xf]
        %v755 = vld [vmem:[%s1 + $0x264] sm:$0xf]
        %v756 = vld [vmem:[%s1 + $0x268] sm:$0xf]
        %v757 = vld [vmem:[%s1 + $0x26c] sm:$0xf]
        %v758 = vld [vmem:[%s1 + $0x270] sm:$0xf]
        %v759 = vld [vmem:[%s1 + $0x274] sm:$0xf]
        %v760 = vld [vmem:[%s1 + $0x278] sm:$0xf]
        %v761 = vld [vmem:[%s1 + $0x27c] sm:$0xf]
        %v762 = vld [vmem:[%s1 + $0x280] sm:$0xf]
        %v763 = vld [vmem:[%s1 + $0x284] sm:$0xf]
        %v764 = vld [vmem:[%s1 + $0x288] sm:$0xf]
        %v765 = vld [vmem:[%s1 + $0x28c] sm:$0xf]
        %v766 = vld [vmem:[%s1 + $0x290] sm:$0xf]
        %v767 = vld [vmem:[%s1 + $0x294] sm:$0xf]
        %v768 = vld [vmem:[%s1 + $0x298] sm:$0xf]
        %v769 = vld [vmem:[%s1 + $0x29c] sm:$0xf]
        %v770 = vld [vmem:[%s1 + $0x2a0] sm:$0xf]
        %v771 = vld [vmem:[%s1 + $0x2a4] sm:$0xf]
        %v772 = vld [vmem:[%s1 + $0x2a8] sm:$0xf]
        %v773 = vld [vmem:[%s1 + $0x2ac] sm:$0xf]
        %v774 = vld [vmem:[%s1 + $0x2b0] sm:$0xf]
        %v775 = vld [vmem:[%s1 + $0x2b4] sm:$0xf]
        %v776 = vld [vmem:[%s1 + $0x2b8] sm:$0xf]
        %v777 = vld [vmem:[%s1 + $0x2bc] sm:$0xf]
        %v778 = vld [vmem:[%s1 + $0x2c0] sm:$0xf]
        %v779 = vld [vmem:[%s1 + $0x2c4] sm:$0xf]
        %v780 = vld [vmem:[%s1 + $0x2c8] sm:$0xf]
        %v781 = vld [vmem:[%s1 + $0x2cc] sm:$0xf]
        %v782 = vld [vmem:[%s1 + $0x2d0] sm:$0xf]
        %v783 = vld [vmem:[%s1 + $0x2d4] sm:$0xf]
        %v784 = vld [vmem:[%s1 + $0x2d8] sm:$0xf]
        %v785 = vld [vmem:[%s1 + $0x2dc] sm:$0xf]
        %v786 = vld [vmem:[%s1 + $0x2e0] sm:$0xf]
        %v787 = vld [vmem:[%s1 + $0x2e4] sm:$0xf]
        %v788 = vld [vmem:[%s1 + $0x2e8] sm:$0xf]
        %v789 = vld [vmem:[%s1 + $0x2ec] sm:$0xf]
        %v790 = vld [vmem:[%s1 + $0x2f0] sm:$0xf]
        %v791 = vld [vmem:[%s1 + $0x2f4] sm:$0xf]
        %v792 = vld [vmem:[%s1 + $0x2f8] sm:$0xf]
        %v793 = vld [vmem:[%s1 + $0x2fc] sm:$0xf]
        %v794 = vld [vmem:[%s1 + $0x300] sm:$0xf]
        %v795 = vld [vmem:[%s1 + $0x304] sm:$0xf]
        %v796 = vld [vmem:[%s1 + $0x308] sm:$0xf]
        %v797 = vld [vmem:[%s1 + $0x30c] sm:$0xf]
        %v798 = vld [vmem:[%s1 + $0x310] sm:$0xf]
        %v799 = vld [vmem:[%s1 + $0x314] sm:$0xf]
        %v800 = vld [vmem:[%s1 + $0x318] sm:$0xf]
        %v801 = vld [vmem:[%s1 + $0x31c] sm:$0xf]
        %v802 = vld [vmem:[%s2] sm:$0x1]
        %v804 = vlaneseq
        %v805 = vshrl.u32 %v804, 7
        %v806 = vsub.s32 0, %v805
        %v807 = vrot.slane %v802, %v806
        %v811 = vcombine.high %v600, %v600
        %v813 = vunpack.c.l.s4 1966171168
        %v814 = vunpack.c.0.s8 %v813
        %v815 = vlaneseq
        %v816 = vshrl.u32 %v815, 7
        %v817 = vsub.s32 %v814, %v816
        %v818 = vrot.slane %v600, %v817
        %v820 = vunpack.c.l.s4 1966171168
        %v821 = vunpack.c.0.s8 %v820
        %v822 = vlaneseq
        %v823 = vshrl.u32 %v822, 7
        %v824 = vsub.s32 %v821, %v823
        %v825 = vrot.slane %v811, %v824
        %v826 = vcombine.high %v818, %v818
        %v827 = vcombine.high %v825, %v825
        %v829 = vunpack.c.l.s4 1966171168
        %v830 = vunpack.c.0.s8 %v829
        %v831 = vlaneseq
        %v832 = vshrl.u32 %v831, 7
        %v833 = vsub.s32 %v830, %v832
        %v834 = vrot.slane %v818, %v833
        %v836 = vunpack.c.l.s4 1966171168
        %v837 = vunpack.c.0.s8 %v836
        %v838 = vlaneseq
        %v839 = vshrl.u32 %v838, 7
        %v840 = vsub.s32 %v837, %v839
        %v841 = vrot.slane %v825, %v840
        %v843 = vunpack.c.l.s4 1966171168
        %v844 = vunpack.c.0.s8 %v843
        %v845 = vlaneseq
        %v846 = vshrl.u32 %v845, 7
        %v847 = vsub.s32 %v844, %v846
        %v848 = vrot.slane %v826, %v847
        %v850 = vunpack.c.l.s4 1966171168
        %v851 = vunpack.c.0.s8 %v850
        %v852 = vlaneseq
        %v853 = vshrl.u32 %v852, 7
        %v854 = vsub.s32 %v851, %v853
        %v855 = vrot.slane %v827, %v854
        %v856 = vcombine.high %v834, %v834
        %v857 = vcombine.high %v841, %v841
        %v858 = vcombine.high %v848, %v848
        %v859 = vcombine.high %v855, %v855
        %v860 = vcombine.high %v601, %v601
        %v862 = vunpack.c.l.s4 1966171168
        %v863 = vunpack.c.0.s8 %v862
        %v864 = vlaneseq
        %v865 = vshrl.u32 %v864, 7
        %v866 = vsub.s32 %v863, %v865
        %v867 = vrot.slane %v601, %v866
        %v869 = vunpack.c.l.s4 1966171168
        %v870 = vunpack.c.0.s8 %v869
        %v871 = vlaneseq
        %v872 = vshrl.u32 %v871, 7
        %v873 = vsub.s32 %v870, %v872
        %v874 = vrot.slane %v860, %v873
        %v875 = vcombine.high %v867, %v867
        %v877 = vunpack.c.l.s4 1966171168
        %v878 = vunpack.c.0.s8 %v877
        %v879 = vlaneseq
        %v880 = vshrl.u32 %v879, 7
        %v881 = vsub.s32 %v878, %v880
        %v882 = vrot.slane %v867, %v881
        %v884 = vunpack.c.l.s4 1966171168
        %v885 = vunpack.c.0.s8 %v884
        %v886 = vlaneseq
        %v887 = vshrl.u32 %v886, 7
        %v888 = vsub.s32 %v885, %v887
        %v889 = vrot.slane %v874, %v888
        %v891 = vunpack.c.l.s4 1966171168
        %v892 = vunpack.c.0.s8 %v891
        %v893 = vlaneseq
        %v894 = vshrl.u32 %v893, 7
        %v895 = vsub.s32 %v892, %v894
        %v896 = vrot.slane %v875, %v895
        %v897 = vcombine.high %v882, %v882
        %v898 = vcombine.high %v896, %v896
        %v1111 = vunpack.c.l.b16 %v602
        %v1112 = vunpack.c.l.b16 %v603
        %v1113 = vunpack.c.l.b16 %v604
        %v1114 = vunpack.c.l.b16 %v605
        %v1115 = vunpack.c.l.b16 %v606
        %v1116 = vunpack.c.l.b16 %v607
        %v1117 = vunpack.c.l.b16 %v608
        %v1118 = vunpack.c.l.b16 %v609
        %v1119 = vunpack.c.l.b16 %v610
        %v1120 = vunpack.c.l.b16 %v611
        %v1121 = vunpack.c.l.b16 %v612
        %v1122 = vunpack.c.l.b16 %v613
        %v1123 = vunpack.c.l.b16 %v614
        %v1124 = vunpack.c.l.b16 %v615
        %v1125 = vunpack.c.l.b16 %v616
        %v1126 = vunpack.c.l.b16 %v617
        %v1127 = vunpack.c.l.b16 %v618
        %v1128 = vunpack.c.l.b16 %v619
        %v1129 = vunpack.c.l.b16 %v620
        %v1130 = vunpack.c.l.b16 %v621
        %v1131 = vunpack.c.l.b16 %v622
        %v1132 = vunpack.c.l.b16 %v623
        %v1133 = vunpack.c.l.b16 %v624
        %v1134 = vunpack.c.l.b16 %v625
        %v1135 = vunpack.c.l.b16 %v626
        %v1136 = vunpack.c.l.b16 %v627
        %v1137 = vunpack.c.l.b16 %v628
        %v1138 = vunpack.c.l.b16 %v629
        %v1139 = vunpack.c.l.b16 %v630
        %v1140 = vunpack.c.l.b16 %v631
        %v1141 = vunpack.c.l.b16 %v632
        %v1142 = vunpack.c.l.b16 %v633
        %v1143 = vunpack.c.l.b16 %v634
        %v1144 = vunpack.c.l.b16 %v635
        %v1145 = vunpack.c.l.b16 %v636
        %v1146 = vunpack.c.l.b16 %v637
        %v1147 = vunpack.c.l.b16 %v638
        %v1148 = vunpack.c.l.b16 %v639
        %v1149 = vunpack.c.l.b16 %v640
        %v1150 = vunpack.c.l.b16 %v641
        %v1151 = vunpack.c.l.b16 %v642
        %v1152 = vunpack.c.l.b16 %v643
        %v1153 = vunpack.c.l.b16 %v644
        %v1154 = vunpack.c.l.b16 %v645
        %v1155 = vunpack.c.l.b16 %v646
        %v1156 = vunpack.c.l.b16 %v647
        %v1157 = vunpack.c.l.b16 %v648
        %v1158 = vunpack.c.l.b16 %v649
        %v1159 = vunpack.c.l.b16 %v650
        %v1160 = vunpack.c.l.b16 %v651
        %v1161 = vunpack.c.l.b16 %v652
        %v1162 = vunpack.c.l.b16 %v653
        %v1163 = vunpack.c.l.b16 %v654
        %v1164 = vunpack.c.l.b16 %v655
        %v1165 = vunpack.c.l.b16 %v656
        %v1166 = vunpack.c.l.b16 %v657
        %v1167 = vunpack.c.l.b16 %v658
        %v1168 = vunpack.c.l.b16 %v659
        %v1169 = vunpack.c.l.b16 %v660
        %v1170 = vunpack.c.l.b16 %v661
        %v1171 = vunpack.c.l.b16 %v662
        %v1172 = vunpack.c.l.b16 %v663
        %v1173 = vunpack.c.l.b16 %v664
        %v1174 = vunpack.c.l.b16 %v665
        %v1175 = vunpack.c.l.b16 %v666
        %v1176 = vunpack.c.l.b16 %v667
        %v1177 = vunpack.c.l.b16 %v668
        %v1178 = vunpack.c.l.b16 %v669
        %v1179 = vunpack.c.l.b16 %v670
        %v1180 = vunpack.c.l.b16 %v671
        %v1181 = vunpack.c.l.b16 %v672
        %v1182 = vunpack.c.l.b16 %v673
        %v1183 = vunpack.c.l.b16 %v674
        %v1184 = vunpack.c.l.b16 %v675
        %v1185 = vunpack.c.l.b16 %v676
        %v1186 = vunpack.c.l.b16 %v677
        %v1187 = vunpack.c.l.b16 %v678
        %v1188 = vunpack.c.l.b16 %v679
        %v1189 = vunpack.c.l.b16 %v680
        %v1190 = vunpack.c.l.b16 %v681
        %v1191 = vunpack.c.l.b16 %v682
        %v1192 = vunpack.c.l.b16 %v683
        %v1193 = vunpack.c.l.b16 %v684
        %v1194 = vunpack.c.l.b16 %v685
        %v1195 = vunpack.c.l.b16 %v686
        %v1196 = vunpack.c.l.b16 %v687
        %v1197 = vunpack.c.l.b16 %v688
        %v1198 = vunpack.c.l.b16 %v689
        %v1199 = vunpack.c.l.b16 %v690
        %v1200 = vunpack.c.l.b16 %v691
        %v1201 = vunpack.c.l.b16 %v692
        %v1202 = vunpack.c.l.b16 %v693
        %v1203 = vunpack.c.l.b16 %v694
        %v1204 = vunpack.c.l.b16 %v695
        %v1205 = vunpack.c.l.b16 %v696
        %v1206 = vunpack.c.l.b16 %v697
        %v1207 = vunpack.c.l.b16 %v698
        %v1208 = vunpack.c.l.b16 %v699
        %v1209 = vunpack.c.l.b16 %v700
        %v1210 = vunpack.c.l.b16 %v701
        %v1211 = vunpack.c.l.b16 %v702
        %v1212 = vunpack.c.l.b16 %v703
        %v1213 = vunpack.c.l.b16 %v704
        %v1214 = vunpack.c.l.b16 %v705
        %v1215 = vunpack.c.l.b16 %v706
        %v1216 = vunpack.c.l.b16 %v707
        %v1217 = vunpack.c.l.b16 %v708
        %v1218 = vunpack.c.l.b16 %v709
        %v1219 = vunpack.c.l.b16 %v710
        %v1220 = vunpack.c.l.b16 %v711
        %v1221 = vunpack.c.l.b16 %v712
        %v1222 = vunpack.c.l.b16 %v713
        %v1223 = vunpack.c.l.b16 %v714
        %v1224 = vunpack.c.l.b16 %v715
        %v1225 = vunpack.c.l.b16 %v716
        %v1226 = vunpack.c.l.b16 %v717
        %v1227 = vunpack.c.l.b16 %v718
        %v1228 = vunpack.c.l.b16 %v719
        %v1229 = vunpack.c.l.b16 %v720
        %v1230 = vunpack.c.l.b16 %v721
        %v1231 = vunpack.c.l.b16 %v722
        %v1232 = vunpack.c.l.b16 %v723
        %v1233 = vunpack.c.l.b16 %v724
        %v1234 = vunpack.c.l.b16 %v725
        %v1235 = vunpack.c.l.b16 %v726
        %v1236 = vunpack.c.l.b16 %v727
        %v1237 = vunpack.c.l.b16 %v728
        %v1238 = vunpack.c.l.b16 %v729
        %v1239 = vunpack.c.l.b16 %v730
        %v1240 = vunpack.c.l.b16 %v731
        %v1241 = vunpack.c.l.b16 %v732
        %v1242 = vunpack.c.l.b16 %v733
        %v1243 = vunpack.c.l.b16 %v734
        %v1244 = vunpack.c.l.b16 %v735
        %v1245 = vunpack.c.l.b16 %v736
        %v1246 = vunpack.c.l.b16 %v737
        %v1247 = vunpack.c.l.b16 %v738
        %v1248 = vunpack.c.l.b16 %v739
        %v1249 = vunpack.c.l.b16 %v740
        %v1250 = vunpack.c.l.b16 %v741
        %v1251 = vunpack.c.l.b16 %v742
        %v1252 = vunpack.c.l.b16 %v743
        %v1253 = vunpack.c.l.b16 %v744
        %v1254 = vunpack.c.l.b16 %v745
        %v1255 = vunpack.c.l.b16 %v746
        %v1256 = vunpack.c.l.b16 %v747
        %v1257 = vunpack.c.l.b16 %v748
        %v1258 = vunpack.c.l.b16 %v749
        %v1259 = vunpack.c.l.b16 %v750
        %v1260 = vunpack.c.l.b16 %v751
        %v1261 = vunpack.c.l.b16 %v752
        %v1262 = vunpack.c.l.b16 %v753
        %v1263 = vunpack.c.l.b16 %v754
        %v1264 = vunpack.c.l.b16 %v755
        %v1265 = vunpack.c.l.b16 %v756
        %v1266 = vunpack.c.l.b16 %v757
        %v1267 = vunpack.c.l.b16 %v758
        %v1268 = vunpack.c.l.b16 %v759
        %v1269 = vunpack.c.l.b16 %v760
        %v1270 = vunpack.c.l.b16 %v761
        %v1271 = vunpack.c.l.b16 %v762
        %v1272 = vunpack.c.l.b16 %v763
        %v1273 = vunpack.c.l.b16 %v764
        %v1274 = vunpack.c.l.b16 %v765
        %v1275 = vunpack.c.l.b16 %v766
        %v1276 = vunpack.c.l.b16 %v767
        %v1277 = vunpack.c.l.b16 %v768
        %v1278 = vunpack.c.l.b16 %v769
        %v1279 = vunpack.c.l.b16 %v770
        %v1280 = vunpack.c.l.b16 %v771
        %v1281 = vunpack.c.l.b16 %v772
        %v1282 = vunpack.c.l.b16 %v773
        %v1283 = vunpack.c.l.b16 %v774
        %v1284 = vunpack.c.l.b16 %v775
        %v1285 = vunpack.c.l.b16 %v776
        %v1286 = vunpack.c.l.b16 %v777
        %v1287 = vunpack.c.l.b16 %v778
        %v1288 = vunpack.c.l.b16 %v779
        %v1289 = vunpack.c.l.b16 %v780
        %v1290 = vunpack.c.l.b16 %v781
        %v1291 = vunpack.c.l.b16 %v782
        %v1292 = vunpack.c.l.b16 %v783
        %v1293 = vunpack.c.l.b16 %v784
        %v1294 = vunpack.c.l.b16 %v785
        %v1295 = vunpack.c.l.b16 %v786
        %v1296 = vunpack.c.l.b16 %v787
        %v1297 = vunpack.c.l.b16 %v788
        %v1298 = vunpack.c.l.b16 %v789
        %v1299 = vunpack.c.l.b16 %v790
        %v1300 = vunpack.c.l.b16 %v791
        %v1301 = vunpack.c.l.b16 %v792
        %v1302 = vunpack.c.l.b16 %v793
        %v1303 = vunpack.c.l.b16 %v794
        %v1304 = vunpack.c.l.b16 %v795
        %v1305 = vunpack.c.l.b16 %v796
        %v1306 = vunpack.c.l.b16 %v797
        %v1307 = vunpack.c.l.b16 %v798
        %v1308 = vunpack.c.l.b16 %v799
        %v1309 = vunpack.c.l.b16 %v800
        %v1310 = vunpack.c.l.b16 %v801
        %v1311 = vpack.c.b16 %v1112, %v1111
        %v1312 = vpack.c.b16 %v1114, %v1113
        %v1313 = vpack.c.b16 %v1116, %v1115
        %v1314 = vpack.c.b16 %v1118, %v1117
        %v1315 = vpack.c.b16 %v1120, %v1119
        %v1316 = vpack.c.b16 %v1122, %v1121
        %v1317 = vpack.c.b16 %v1124, %v1123
        %v1318 = vpack.c.b16 %v1126, %v1125
        %v1319 = vpack.c.b16 %v1128, %v1127
        %v1320 = vpack.c.b16 %v1130, %v1129
        %v1321 = vpack.c.b16 %v1132, %v1131
        %v1322 = vpack.c.b16 %v1134, %v1133
        %v1323 = vpack.c.b16 %v1136, %v1135
        %v1324 = vpack.c.b16 %v1138, %v1137
        %v1325 = vpack.c.b16 %v1140, %v1139
        %v1326 = vpack.c.b16 %v1142, %v1141
        %v1327 = vpack.c.b16 %v1144, %v1143
        %v1328 = vpack.c.b16 %v1146, %v1145
        %v1329 = vpack.c.b16 %v1148, %v1147
        %v1330 = vpack.c.b16 %v1150, %v1149
        %v1331 = vpack.c.b16 %v1152, %v1151
        %v1332 = vpack.c.b16 %v1154, %v1153
        %v1333 = vpack.c.b16 %v1156, %v1155
        %v1334 = vpack.c.b16 %v1158, %v1157
        %v1335 = vpack.c.b16 %v1160, %v1159
        %v1336 = vpack.c.b16 %v1162, %v1161
        %v1337 = vpack.c.b16 %v1164, %v1163
        %v1338 = vpack.c.b16 %v1166, %v1165
        %v1339 = vpack.c.b16 %v1168, %v1167
        %v1340 = vpack.c.b16 %v1170, %v1169
        %v1341 = vpack.c.b16 %v1172, %v1171
        %v1342 = vpack.c.b16 %v1174, %v1173
        %v1343 = vpack.c.b16 %v1176, %v1175
        %v1344 = vpack.c.b16 %v1178, %v1177
        %v1345 = vpack.c.b16 %v1180, %v1179
        %v1346 = vpack.c.b16 %v1182, %v1181
        %v1347 = vpack.c.b16 %v1184, %v1183
        %v1348 = vpack.c.b16 %v1186, %v1185
        %v1349 = vpack.c.b16 %v1188, %v1187
        %v1350 = vpack.c.b16 %v1190, %v1189
        %v1351 = vpack.c.b16 %v1192, %v1191
        %v1352 = vpack.c.b16 %v1194, %v1193
        %v1353 = vpack.c.b16 %v1196, %v1195
        %v1354 = vpack.c.b16 %v1198, %v1197
        %v1355 = vpack.c.b16 %v1200, %v1199
        %v1356 = vpack.c.b16 %v1202, %v1201
        %v1357 = vpack.c.b16 %v1204, %v1203
        %v1358 = vpack.c.b16 %v1206, %v1205
        %v1359 = vpack.c.b16 %v1208, %v1207
        %v1360 = vpack.c.b16 %v1210, %v1209
        %v1361 = vpack.c.b16 %v1212, %v1211
        %v1362 = vpack.c.b16 %v1214, %v1213
        %v1363 = vpack.c.b16 %v1216, %v1215
        %v1364 = vpack.c.b16 %v1218, %v1217
        %v1365 = vpack.c.b16 %v1220, %v1219
        %v1366 = vpack.c.b16 %v1222, %v1221
        %v1367 = vpack.c.b16 %v1224, %v1223
        %v1368 = vpack.c.b16 %v1226, %v1225
        %v1369 = vpack.c.b16 %v1228, %v1227
        %v1370 = vpack.c.b16 %v1230, %v1229
        %v1371 = vpack.c.b16 %v1232, %v1231
        %v1372 = vpack.c.b16 %v1234, %v1233
        %v1373 = vpack.c.b16 %v1236, %v1235
        %v1374 = vpack.c.b16 %v1238, %v1237
        %v1375 = vpack.c.b16 %v1240, %v1239
        %v1376 = vpack.c.b16 %v1242, %v1241
        %v1377 = vpack.c.b16 %v1244, %v1243
        %v1378 = vpack.c.b16 %v1246, %v1245
        %v1379 = vpack.c.b16 %v1248, %v1247
        %v1380 = vpack.c.b16 %v1250, %v1249
        %v1381 = vpack.c.b16 %v1252, %v1251
        %v1382 = vpack.c.b16 %v1254, %v1253
        %v1383 = vpack.c.b16 %v1256, %v1255
        %v1384 = vpack.c.b16 %v1258, %v1257
        %v1385 = vpack.c.b16 %v1260, %v1259
        %v1386 = vpack.c.b16 %v1262, %v1261
        %v1387 = vpack.c.b16 %v1264, %v1263
        %v1388 = vpack.c.b16 %v1266, %v1265
        %v1389 = vpack.c.b16 %v1268, %v1267
        %v1390 = vpack.c.b16 %v1270, %v1269
        %v1391 = vpack.c.b16 %v1272, %v1271
        %v1392 = vpack.c.b16 %v1274, %v1273
        %v1393 = vpack.c.b16 %v1276, %v1275
        %v1394 = vpack.c.b16 %v1278, %v1277
        %v1395 = vpack.c.b16 %v1280, %v1279
        %v1396 = vpack.c.b16 %v1282, %v1281
        %v1397 = vpack.c.b16 %v1284, %v1283
        %v1398 = vpack.c.b16 %v1286, %v1285
        %v1399 = vpack.c.b16 %v1288, %v1287
        %v1400 = vpack.c.b16 %v1290, %v1289
        %v1401 = vpack.c.b16 %v1292, %v1291
        %v1402 = vpack.c.b16 %v1294, %v1293
        %v1403 = vpack.c.b16 %v1296, %v1295
        %v1404 = vpack.c.b16 %v1298, %v1297
        %v1405 = vpack.c.b16 %v1300, %v1299
        %v1406 = vpack.c.b16 %v1302, %v1301
        %v1407 = vpack.c.b16 %v1304, %v1303
        %v1408 = vpack.c.b16 %v1306, %v1305
        %v1409 = vpack.c.b16 %v1308, %v1307
        %v1410 = vpack.c.b16 %v1310, %v1309
        %vm1511 = vcmask 523264
        %v1513 = vsel %vm1511, %v889, 0
        %1515 = vmatprep.subr.bf16.mxu0 0
        %1516 = vmatpush1.bf16.msra.mxu0 %v1318
        %1517 = vmatprep.subr.bf16.mxu0 0
        %1518 = vmatpush1.bf16.msra.mxu0 %v1317
        %1519 = vmatprep.subr.bf16.mxu0 0
        %1520 = vmatpush1.bf16.msra.mxu0 %v1316
        %1521 = vmatprep.subr.bf16.mxu0 0
        %1522 = vmatpush1.bf16.msra.mxu0 %v1315
        %1523 = vmatprep.subr.bf16.mxu0 0
        %1524 = vmatpush1.bf16.msra.mxu0 %v1314
        %1525 = vmatprep.subr.bf16.mxu0 0
        %1526 = vmatpush1.bf16.msra.mxu0 %v1313
        %1527 = vmatprep.subr.bf16.mxu0 0
        %1528 = vmatpush1.bf16.msra.mxu0 %v1312
        %1529 = vmatprep.subr.bf16.mxu0 0
        %1530 = vmatpush1.bf16.msra.mxu0 %v1311
        %1531 = vmatprep.subr.bf16.mxu0 0
        %1532 = vmatpush2.bf16.msra.mxu0 %v1326
        %1533 = vmatprep.subr.bf16.mxu0 0
        %1534 = vmatpush2.bf16.msra.mxu0 %v1325
        %1535 = vmatprep.subr.bf16.mxu0 0
        %1536 = vmatpush2.bf16.msra.mxu0 %v1324
        %1537 = vmatprep.subr.bf16.mxu0 0
        %1538 = vmatpush2.bf16.msra.mxu0 %v1323
        %1539 = vmatprep.subr.bf16.mxu0 0
        %1540 = vmatpush2.bf16.msra.mxu0 %v1322
        %1541 = vmatprep.subr.bf16.mxu0 0
        %1542 = vmatpush2.bf16.msra.mxu0 %v1321
        %1543 = vmatprep.subr.bf16.mxu0 0
        %1544 = vmatpush2.bf16.msra.mxu0 %v1320
        %1545 = vmatprep.subr.bf16.mxu0 0
        %1546 = vmatpush2.bf16.msra.mxu0 %v1319
        %1547 = vmatprep.mubr.bf16.mxu0 %v848
        %1548 = vmatmul.mubr.bf16.gmra.mxu0 %v834
        %v1549 = vpop.f32.mrf.mxu0
        %v1550 = vadd.f32 %v807, %v1549
        %v1551 = vpop.f32.mrf.mxu0
        %v1552 = vpop.f32.mrf.mxu0
        %v1553 = vpop.f32.mrf.mxu0
        %1554 = vdwg.mxu0
        %1555 = vmatprep.subr.bf16.mxu0 0
        %1556 = vmatpush1.bf16.msra.mxu0 %v1334
        %1557 = vmatprep.subr.bf16.mxu0 0
        %1558 = vmatpush1.bf16.msra.mxu0 %v1333
        %1559 = vmatprep.subr.bf16.mxu0 0
        %1560 = vmatpush1.bf16.msra.mxu0 %v1332
        %1561 = vmatprep.subr.bf16.mxu0 0
        %1562 = vmatpush1.bf16.msra.mxu0 %v1331
        %1563 = vmatprep.subr.bf16.mxu0 0
        %1564 = vmatpush1.bf16.msra.mxu0 %v1330
        %1565 = vmatprep.subr.bf16.mxu0 0
        %1566 = vmatpush1.bf16.msra.mxu0 %v1329
        %1567 = vmatprep.subr.bf16.mxu0 0
        %1568 = vmatpush1.bf16.msra.mxu0 %v1328
        %1569 = vmatprep.subr.bf16.mxu0 0
        %1570 = vmatpush1.bf16.msra.mxu0 %v1327
        %1571 = vmatprep.subr.bf16.mxu0 0
        %1572 = vmatpush2.bf16.msra.mxu0 %v1342
        %1573 = vmatprep.subr.bf16.mxu0 0
        %1574 = vmatpush2.bf16.msra.mxu0 %v1341
        %1575 = vmatprep.subr.bf16.mxu0 0
        %1576 = vmatpush2.bf16.msra.mxu0 %v1340
        %1577 = vmatprep.subr.bf16.mxu0 0
        %1578 = vmatpush2.bf16.msra.mxu0 %v1339
        %1579 = vmatprep.subr.bf16.mxu0 0
        %1580 = vmatpush2.bf16.msra.mxu0 %v1338
        %1581 = vmatprep.subr.bf16.mxu0 0
        %1582 = vmatpush2.bf16.msra.mxu0 %v1337
        %1583 = vmatprep.subr.bf16.mxu0 0
        %1584 = vmatpush2.bf16.msra.mxu0 %v1336
        %1585 = vmatprep.subr.bf16.mxu0 0
        %1586 = vmatpush2.bf16.msra.mxu0 %v1335
        %1587 = vmatprep.mubr.bf16.mxu0 %v858
        %1588 = vmatmul.mubr.bf16.gmra.mxu0 %v856
        %v1589 = vpop.f32.mrf.mxu0
        %v1590 = vadd.f32 %v1550, %v1589
        %v1591 = vpop.f32.mrf.mxu0
        %v1592 = vpop.f32.mrf.mxu0
        %v1593 = vpop.f32.mrf.mxu0
        %1594 = vdwg.mxu0
        %1595 = vmatprep.subr.bf16.mxu0 0
        %1596 = vmatpush1.bf16.msra.mxu0 %v1350
        %1597 = vmatprep.subr.bf16.mxu0 0
        %1598 = vmatpush1.bf16.msra.mxu0 %v1349
        %1599 = vmatprep.subr.bf16.mxu0 0
        %1600 = vmatpush1.bf16.msra.mxu0 %v1348
        %1601 = vmatprep.subr.bf16.mxu0 0
        %1602 = vmatpush1.bf16.msra.mxu0 %v1347
        %1603 = vmatprep.subr.bf16.mxu0 0
        %1604 = vmatpush1.bf16.msra.mxu0 %v1346
        %1605 = vmatprep.subr.bf16.mxu0 0
        %1606 = vmatpush1.bf16.msra.mxu0 %v1345
        %1607 = vmatprep.subr.bf16.mxu0 0
        %1608 = vmatpush1.bf16.msra.mxu0 %v1344
        %1609 = vmatprep.subr.bf16.mxu0 0
        %1610 = vmatpush1.bf16.msra.mxu0 %v1343
        %1611 = vmatprep.subr.bf16.mxu0 0
        %1612 = vmatpush2.bf16.msra.mxu0 %v1358
        %1613 = vmatprep.subr.bf16.mxu0 0
        %1614 = vmatpush2.bf16.msra.mxu0 %v1357
        %1615 = vmatprep.subr.bf16.mxu0 0
        %1616 = vmatpush2.bf16.msra.mxu0 %v1356
        %1617 = vmatprep.subr.bf16.mxu0 0
        %1618 = vmatpush2.bf16.msra.mxu0 %v1355
        %1619 = vmatprep.subr.bf16.mxu0 0
        %1620 = vmatpush2.bf16.msra.mxu0 %v1354
        %1621 = vmatprep.subr.bf16.mxu0 0
        %1622 = vmatpush2.bf16.msra.mxu0 %v1353
        %1623 = vmatprep.subr.bf16.mxu0 0
        %1624 = vmatpush2.bf16.msra.mxu0 %v1352
        %1625 = vmatprep.subr.bf16.mxu0 0
        %1626 = vmatpush2.bf16.msra.mxu0 %v1351
        %1627 = vmatprep.mubr.bf16.mxu0 %v855
        %1628 = vmatmul.mubr.bf16.gmra.mxu0 %v841
        %v1629 = vpop.f32.mrf.mxu0
        %v1630 = vadd.f32 %v1590, %v1629
        %v1631 = vpop.f32.mrf.mxu0
        %v1632 = vpop.f32.mrf.mxu0
        %v1633 = vpop.f32.mrf.mxu0
        %1634 = vdwg.mxu0
        %1635 = vmatprep.subr.bf16.mxu0 0
        %1636 = vmatpush1.bf16.msra.mxu0 %v1366
        %1637 = vmatprep.subr.bf16.mxu0 0
        %1638 = vmatpush1.bf16.msra.mxu0 %v1365
        %1639 = vmatprep.subr.bf16.mxu0 0
        %1640 = vmatpush1.bf16.msra.mxu0 %v1364
        %1641 = vmatprep.subr.bf16.mxu0 0
        %1642 = vmatpush1.bf16.msra.mxu0 %v1363
        %1643 = vmatprep.subr.bf16.mxu0 0
        %1644 = vmatpush1.bf16.msra.mxu0 %v1362
        %1645 = vmatprep.subr.bf16.mxu0 0
        %1646 = vmatpush1.bf16.msra.mxu0 %v1361
        %1647 = vmatprep.subr.bf16.mxu0 0
        %1648 = vmatpush1.bf16.msra.mxu0 %v1360
        %1649 = vmatprep.subr.bf16.mxu0 0
        %1650 = vmatpush1.bf16.msra.mxu0 %v1359
        %1651 = vmatprep.subr.bf16.mxu0 0
        %1652 = vmatpush2.bf16.msra.mxu0 %v1374
        %1653 = vmatprep.subr.bf16.mxu0 0
        %1654 = vmatpush2.bf16.msra.mxu0 %v1373
        %1655 = vmatprep.subr.bf16.mxu0 0
        %1656 = vmatpush2.bf16.msra.mxu0 %v1372
        %1657 = vmatprep.subr.bf16.mxu0 0
        %1658 = vmatpush2.bf16.msra.mxu0 %v1371
        %1659 = vmatprep.subr.bf16.mxu0 0
        %1660 = vmatpush2.bf16.msra.mxu0 %v1370
        %1661 = vmatprep.subr.bf16.mxu0 0
        %1662 = vmatpush2.bf16.msra.mxu0 %v1369
        %1663 = vmatprep.subr.bf16.mxu0 0
        %1664 = vmatpush2.bf16.msra.mxu0 %v1368
        %1665 = vmatprep.subr.bf16.mxu0 0
        %1666 = vmatpush2.bf16.msra.mxu0 %v1367
        %1667 = vmatprep.mubr.bf16.mxu0 %v859
        %1668 = vmatmul.mubr.bf16.gmra.mxu0 %v857
        %v1669 = vpop.f32.mrf.mxu0
        %v1670 = vadd.f32 %v1630, %v1669
        %v1671 = vpop.f32.mrf.mxu0
        %v1672 = vpop.f32.mrf.mxu0
        %v1673 = vpop.f32.mrf.mxu0
        %1674 = vdwg.mxu0
        %1675 = vmatprep.subr.bf16.mxu0 0
        %1676 = vmatpush1.bf16.msra.mxu0 %v1382
        %1677 = vmatprep.subr.bf16.mxu0 0
        %1678 = vmatpush1.bf16.msra.mxu0 %v1381
        %1679 = vmatprep.subr.bf16.mxu0 0
        %1680 = vmatpush1.bf16.msra.mxu0 %v1380
        %1681 = vmatprep.subr.bf16.mxu0 0
        %1682 = vmatpush1.bf16.msra.mxu0 %v1379
        %1683 = vmatprep.subr.bf16.mxu0 0
        %1684 = vmatpush1.bf16.msra.mxu0 %v1378
        %1685 = vmatprep.subr.bf16.mxu0 0
        %1686 = vmatpush1.bf16.msra.mxu0 %v1377
        %1687 = vmatprep.subr.bf16.mxu0 0
        %1688 = vmatpush1.bf16.msra.mxu0 %v1376
        %1689 = vmatprep.subr.bf16.mxu0 0
        %1690 = vmatpush1.bf16.msra.mxu0 %v1375
        %1691 = vmatprep.subr.bf16.mxu0 0
        %1692 = vmatpush2.bf16.msra.mxu0 %v1390
        %1693 = vmatprep.subr.bf16.mxu0 0
        %1694 = vmatpush2.bf16.msra.mxu0 %v1389
        %1695 = vmatprep.subr.bf16.mxu0 0
        %1696 = vmatpush2.bf16.msra.mxu0 %v1388
        %1697 = vmatprep.subr.bf16.mxu0 0
        %1698 = vmatpush2.bf16.msra.mxu0 %v1387
        %1699 = vmatprep.subr.bf16.mxu0 0
        %1700 = vmatpush2.bf16.msra.mxu0 %v1386
        %1701 = vmatprep.subr.bf16.mxu0 0
        %1702 = vmatpush2.bf16.msra.mxu0 %v1385
        %1703 = vmatprep.subr.bf16.mxu0 0
        %1704 = vmatpush2.bf16.msra.mxu0 %v1384
        %1705 = vmatprep.subr.bf16.mxu0 0
        %1706 = vmatpush2.bf16.msra.mxu0 %v1383
        %1707 = vmatprep.mubr.bf16.mxu0 %v896
        %1708 = vmatmul.mubr.bf16.gmra.mxu0 %v882
        %v1709 = vpop.f32.mrf.mxu0
        %v1710 = vadd.f32 %v1670, %v1709
        %v1711 = vpop.f32.mrf.mxu0
        %v1712 = vpop.f32.mrf.mxu0
        %v1713 = vpop.f32.mrf.mxu0
        %1714 = vdwg.mxu0
        %1715 = vmatprep.subr.bf16.mxu0 0
        %1716 = vmatpush1.bf16.msra.mxu0 %v1398
        %1717 = vmatprep.subr.bf16.mxu0 0
        %1718 = vmatpush1.bf16.msra.mxu0 %v1397
        %1719 = vmatprep.subr.bf16.mxu0 0
        %1720 = vmatpush1.bf16.msra.mxu0 %v1396
        %1721 = vmatprep.subr.bf16.mxu0 0
        %1722 = vmatpush1.bf16.msra.mxu0 %v1395
        %1723 = vmatprep.subr.bf16.mxu0 0
        %1724 = vmatpush1.bf16.msra.mxu0 %v1394
        %1725 = vmatprep.subr.bf16.mxu0 0
        %1726 = vmatpush1.bf16.msra.mxu0 %v1393
        %1727 = vmatprep.subr.bf16.mxu0 0
        %1728 = vmatpush1.bf16.msra.mxu0 %v1392
        %1729 = vmatprep.subr.bf16.mxu0 0
        %1730 = vmatpush1.bf16.msra.mxu0 %v1391
        %1731 = vmatprep.subr.bf16.mxu0 0
        %1732 = vmatpush2.bf16.msra.mxu0 %v1406
        %1733 = vmatprep.subr.bf16.mxu0 0
        %1734 = vmatpush2.bf16.msra.mxu0 %v1405
        %1735 = vmatprep.subr.bf16.mxu0 0
        %1736 = vmatpush2.bf16.msra.mxu0 %v1404
        %1737 = vmatprep.subr.bf16.mxu0 0
        %1738 = vmatpush2.bf16.msra.mxu0 %v1403
        %1739 = vmatprep.subr.bf16.mxu0 0
        %1740 = vmatpush2.bf16.msra.mxu0 %v1402
        %1741 = vmatprep.subr.bf16.mxu0 0
        %1742 = vmatpush2.bf16.msra.mxu0 %v1401
        %1743 = vmatprep.subr.bf16.mxu0 0
        %1744 = vmatpush2.bf16.msra.mxu0 %v1400
        %1745 = vmatprep.subr.bf16.mxu0 0
        %1746 = vmatpush2.bf16.msra.mxu0 %v1399
        %1747 = vmatprep.mubr.bf16.mxu0 %v898
        %1748 = vmatmul.mubr.bf16.gmra.mxu0 %v897
        %v1749 = vpop.f32.mrf.mxu0
        %v1750 = vadd.f32 %v1710, %v1749
        %v1751 = vpop.f32.mrf.mxu0
        %v1752 = vpop.f32.mrf.mxu0
        %v1753 = vpop.f32.mrf.mxu0
        %1754 = vdwg.mxu0
        %1755 = vmatprep.subr.bf16.mxu0 0
        %1756 = vmatpush1.bf16.msra.mxu0 0
        %1757 = vmatprep.subr.bf16.mxu0 0
        %1758 = vmatpush1.bf16.msra.mxu0 0
        %1759 = vmatprep.subr.bf16.mxu0 0
        %1760 = vmatpush1.bf16.msra.mxu0 0
        %1761 = vmatprep.subr.bf16.mxu0 0
        %1762 = vmatpush1.bf16.msra.mxu0 0
        %1763 = vmatprep.subr.bf16.mxu0 0
        %1764 = vmatpush1.bf16.msra.mxu0 %v1410
        %1765 = vmatprep.subr.bf16.mxu0 0
        %1766 = vmatpush1.bf16.msra.mxu0 %v1409
        %1767 = vmatprep.subr.bf16.mxu0 0
        %1768 = vmatpush1.bf16.msra.mxu0 %v1408
        %1769 = vmatprep.subr.bf16.mxu0 0
        %1770 = vmatpush1.bf16.msra.mxu0 %v1407
        %1771 = vmatprep.subr.bf16.mxu0 0
        %1772 = vmatpush2.bf16.msra.mxu0 0
        %1773 = vmatprep.subr.bf16.mxu0 0
        %1774 = vmatpush2.bf16.msra.mxu0 0
        %1775 = vmatprep.subr.bf16.mxu0 0
        %1776 = vmatpush2.bf16.msra.mxu0 0
        %1777 = vmatprep.subr.bf16.mxu0 0
        %1778 = vmatpush2.bf16.msra.mxu0 0
        %1779 = vmatprep.subr.bf16.mxu0 0
        %1780 = vmatpush2.bf16.msra.mxu0 0
        %1781 = vmatprep.subr.bf16.mxu0 0
        %1782 = vmatpush2.bf16.msra.mxu0 0
        %1783 = vmatprep.subr.bf16.mxu0 0
        %1784 = vmatpush2.bf16.msra.mxu0 0
        %1785 = vmatprep.subr.bf16.mxu0 0
        %1786 = vmatpush2.bf16.msra.mxu0 0
        %1787 = vmatprep.mubr.bf16.mxu0 0
        %1788 = vmatmul.mubr.bf16.gmra.mxu0 %v1513
        %v1789 = vpop.f32.mrf.mxu0
        %v1790 = vadd.f32 %v1750, %v1789
        %v1791 = vpop.f32.mrf.mxu0
        %v1792 = vpop.f32.mrf.mxu0
        %v1793 = vpop.f32.mrf.mxu0
        %1794 = vdwg.mxu0
        %v1795 = vmax.f32 %v1790, 0.0
        %v1796 = vpack.c.bf16 %v1795, %v1795
        %1797 = vst [vmem:[#allocation2] sm:$0x1] %v1796
      $region76: #{dann_forward.5} parent=71 // pred_fallthru
        _
      %v1798 = vld [vmem:[#allocation2] sm:$0x1]
      %v1799 = vld [vmem:[%s553] sm:$0xff]
      %v1800 = vld [vmem:[%s553 + $0x8] sm:$0xff]
      %v1801 = vld [vmem:[%s553 + $0x10] sm:$0xff]
      %v1802 = vld [vmem:[%s553 + $0x18] sm:$0xff]
      %v1803 = vld [vmem:[%s553 + $0x20] sm:$0xff]
      %v1804 = vld [vmem:[%s553 + $0x28] sm:$0xff]
      %v1805 = vld [vmem:[%s553 + $0x30] sm:$0xff]
      %v1806 = vld [vmem:[%s553 + $0x38] sm:$0xff]
      %v1807 = vld [vmem:[%s553 + $0x40] sm:$0xff]
      %v1808 = vld [vmem:[%s553 + $0x48] sm:$0xff]
      %v1809 = vld [vmem:[%s553 + $0x50] sm:$0xff]
      %v1810 = vld [vmem:[%s553 + $0x58] sm:$0xff]
      %v1811 = vld [vmem:[%s553 + $0x60] sm:$0xff]
      %v1812 = vld [vmem:[%s553 + $0x68] sm:$0xff]
      %v1813 = vld [vmem:[%s553 + $0x70] sm:$0xff]
      %v1814 = vld [vmem:[%s553 + $0x78] sm:$0xff]
      %v1815 = vld [vmem:[%s553 + $0x80] sm:$0xff]
      %v1816 = vld [vmem:[%s553 + $0x88] sm:$0xff]
      %v1817 = vld [vmem:[%s553 + $0x90] sm:$0xff]
      %v1818 = vld [vmem:[%s553 + $0x98] sm:$0xff]
      %v1819 = vld [vmem:[%s553 + $0xa0] sm:$0xff]
      %v1820 = vld [vmem:[%s553 + $0xa8] sm:$0xff]
      %v1821 = vld [vmem:[%s553 + $0xb0] sm:$0xff]
      %v1822 = vld [vmem:[%s553 + $0xb8] sm:$0xff]
      %v1823 = vld [vmem:[%s553 + $0xc0] sm:$0xff]
      %v1824 = vld [vmem:[%s553 + $0xc8] sm:$0xff]
      %v1825 = vld [vmem:[%s553 + $0xd0] sm:$0xff]
      %v1826 = vld [vmem:[%s553 + $0xd8] sm:$0xff]
      %v1827 = vld [vmem:[%s553 + $0xe0] sm:$0xff]
      %v1828 = vld [vmem:[%s553 + $0xe8] sm:$0xff]
      %v1829 = vld [vmem:[%s553 + $0xf0] sm:$0xff]
      %v1830 = vld [vmem:[%s553 + $0xf8] sm:$0xff]
      %v1831 = vld [vmem:[%s553 + $0x100] sm:$0xff]
      %v1832 = vld [vmem:[%s553 + $0x108] sm:$0xff]
      %v1833 = vld [vmem:[%s553 + $0x110] sm:$0xff]
      %v1834 = vld [vmem:[%s553 + $0x118] sm:$0xff]
      %v1835 = vld [vmem:[%s553 + $0x120] sm:$0xff]
      %v1836 = vld [vmem:[%s553 + $0x128] sm:$0xff]
      %v1837 = vld [vmem:[%s553 + $0x130] sm:$0xff]
      %v1838 = vld [vmem:[%s553 + $0x138] sm:$0xff]
      %v1839 = vld [vmem:[%s553 + $0x140] sm:$0xff]
      %v1840 = vld [vmem:[%s553 + $0x148] sm:$0xff]
      %v1841 = vld [vmem:[%s553 + $0x150] sm:$0xff]
      %v1842 = vld [vmem:[%s553 + $0x158] sm:$0xff]
      %v1843 = vld [vmem:[%s553 + $0x160] sm:$0xff]
      %v1844 = vld [vmem:[%s553 + $0x168] sm:$0xff]
      %v1845 = vld [vmem:[%s553 + $0x170] sm:$0xff]
      %v1846 = vld [vmem:[%s553 + $0x178] sm:$0xff]
      %v1847 = vld [vmem:[%s553 + $0x180] sm:$0xff]
      %v1848 = vld [vmem:[%s553 + $0x188] sm:$0xff]
      %v1849 = vld [vmem:[%s553 + $0x190] sm:$0xff]
      %v1850 = vld [vmem:[%s553 + $0x198] sm:$0xff]
      %v1851 = vld [vmem:[%s553 + $0x1a0] sm:$0xff]
      %v1852 = vld [vmem:[%s553 + $0x1a8] sm:$0xff]
      %v1853 = vld [vmem:[%s553 + $0x1b0] sm:$0xff]
      %v1854 = vld [vmem:[%s553 + $0x1b8] sm:$0xff]
      %v1855 = vld [vmem:[%s553 + $0x1c0] sm:$0xff]
      %v1856 = vld [vmem:[%s553 + $0x1c8] sm:$0xff]
      %v1857 = vld [vmem:[%s553 + $0x1d0] sm:$0xff]
      %v1858 = vld [vmem:[%s553 + $0x1d8] sm:$0xff]
      %v1859 = vld [vmem:[%s553 + $0x1e0] sm:$0xff]
      %v1860 = vld [vmem:[%s553 + $0x1e8] sm:$0xff]
      %v1861 = vld [vmem:[%s553 + $0x1f0] sm:$0xff]
      %v1862 = vld [vmem:[%s553 + $0x1f8] sm:$0xff]
      %v1863 = vld [vmem:[%s557] sm:$0xff]
      %v1864 = vld [vmem:[%s561] sm:$0xff]
      %v1865 = vld [vmem:[%s565] sm:$0xff]
      %v1867 = vlaneseq
      %v1868 = vshrl.u32 %v1867, 7
      %v1869 = vsub.s32 0, %v1868
      %v1870 = vrot.slane %v1863, %v1869
      %v1871 = vlaneseq
      %v1872 = vshrl.u32 %v1871, 7
      %v1873 = vsub.s32 1, %v1872
      %v1874 = vrot.slane %v1863, %v1873
      %v1875 = vlaneseq
      %v1876 = vshrl.u32 %v1875, 7
      %v1877 = vsub.s32 2, %v1876
      %v1878 = vrot.slane %v1863, %v1877
      %v1879 = vlaneseq
      %v1880 = vshrl.u32 %v1879, 7
      %v1881 = vsub.s32 3, %v1880
      %v1882 = vrot.slane %v1863, %v1881
      %v1883 = vlaneseq
      %v1884 = vshrl.u32 %v1883, 7
      %v1885 = vsub.s32 4, %v1884
      %v1886 = vrot.slane %v1863, %v1885
      %v1887 = vlaneseq
      %v1888 = vshrl.u32 %v1887, 7
      %v1889 = vsub.s32 5, %v1888
      %v1890 = vrot.slane %v1863, %v1889
      %v1891 = vlaneseq
      %v1892 = vshrl.u32 %v1891, 7
      %v1893 = vsub.s32 6, %v1892
      %v1894 = vrot.slane %v1863, %v1893
      %v1895 = vlaneseq
      %v1896 = vshrl.u32 %v1895, 7
      %v1897 = vsub.s32 7, %v1896
      %v1898 = vrot.slane %v1863, %v1897
      %v1971 = vunpack.c.l.b16 %v1799
      %v1972 = vunpack.c.h.b16 %v1799
      %v1973 = vunpack.c.l.b16 %v1800
      %v1974 = vunpack.c.h.b16 %v1800
      %v1975 = vunpack.c.l.b16 %v1801
      %v1976 = vunpack.c.h.b16 %v1801
      %v1977 = vunpack.c.l.b16 %v1802
      %v1978 = vunpack.c.h.b16 %v1802
      %v1979 = vunpack.c.l.b16 %v1803
      %v1980 = vunpack.c.h.b16 %v1803
      %v1981 = vunpack.c.l.b16 %v1804
      %v1982 = vunpack.c.h.b16 %v1804
      %v1983 = vunpack.c.l.b16 %v1805
      %v1984 = vunpack.c.h.b16 %v1805
      %v1985 = vunpack.c.l.b16 %v1806
      %v1986 = vunpack.c.h.b16 %v1806
      %v1987 = vunpack.c.l.b16 %v1807
      %v1988 = vunpack.c.h.b16 %v1807
      %v1989 = vunpack.c.l.b16 %v1808
      %v1990 = vunpack.c.h.b16 %v1808
      %v1991 = vunpack.c.l.b16 %v1809
      %v1992 = vunpack.c.h.b16 %v1809
      %v1993 = vunpack.c.l.b16 %v1810
      %v1994 = vunpack.c.h.b16 %v1810
      %v1995 = vunpack.c.l.b16 %v1811
      %v1996 = vunpack.c.h.b16 %v1811
      %v1997 = vunpack.c.l.b16 %v1812
      %v1998 = vunpack.c.h.b16 %v1812
      %v1999 = vunpack.c.l.b16 %v1813
      %v2000 = vunpack.c.h.b16 %v1813
      %v2001 = vunpack.c.l.b16 %v1814
      %v2002 = vunpack.c.h.b16 %v1814
      %v2003 = vunpack.c.l.b16 %v1815
      %v2004 = vunpack.c.h.b16 %v1815
      %v2005 = vunpack.c.l.b16 %v1816
      %v2006 = vunpack.c.h.b16 %v1816
      %v2007 = vunpack.c.l.b16 %v1817
      %v2008 = vunpack.c.h.b16 %v1817
      %v2009 = vunpack.c.l.b16 %v1818
      %v2010 = vunpack.c.h.b16 %v1818
      %v2011 = vunpack.c.l.b16 %v1819
      %v2012 = vunpack.c.h.b16 %v1819
      %v2013 = vunpack.c.l.b16 %v1820
      %v2014 = vunpack.c.h.b16 %v1820
      %v2015 = vunpack.c.l.b16 %v1821
      %v2016 = vunpack.c.h.b16 %v1821
      %v2017 = vunpack.c.l.b16 %v1822
      %v2018 = vunpack.c.h.b16 %v1822
      %v2019 = vunpack.c.l.b16 %v1823
      %v2020 = vunpack.c.h.b16 %v1823
      %v2021 = vunpack.c.l.b16 %v1824
      %v2022 = vunpack.c.h.b16 %v1824
      %v2023 = vunpack.c.l.b16 %v1825
      %v2024 = vunpack.c.h.b16 %v1825
      %v2025 = vunpack.c.l.b16 %v1826
      %v2026 = vunpack.c.h.b16 %v1826
      %v2027 = vunpack.c.l.b16 %v1827
      %v2028 = vunpack.c.h.b16 %v1827
      %v2029 = vunpack.c.l.b16 %v1828
      %v2030 = vunpack.c.h.b16 %v1828
      %v2031 = vunpack.c.l.b16 %v1829
      %v2032 = vunpack.c.h.b16 %v1829
      %v2033 = vunpack.c.l.b16 %v1830
      %v2034 = vunpack.c.h.b16 %v1830
      %v2035 = vunpack.c.l.b16 %v1831
      %v2036 = vunpack.c.h.b16 %v1831
      %v2037 = vunpack.c.l.b16 %v1832
      %v2038 = vunpack.c.h.b16 %v1832
      %v2039 = vunpack.c.l.b16 %v1833
      %v2040 = vunpack.c.h.b16 %v1833
      %v2041 = vunpack.c.l.b16 %v1834
      %v2042 = vunpack.c.h.b16 %v1834
      %v2043 = vunpack.c.l.b16 %v1835
      %v2044 = vunpack.c.h.b16 %v1835
      %v2045 = vunpack.c.l.b16 %v1836
      %v2046 = vunpack.c.h.b16 %v1836
      %v2047 = vunpack.c.l.b16 %v1837
      %v2048 = vunpack.c.h.b16 %v1837
      %v2049 = vunpack.c.l.b16 %v1838
      %v2050 = vunpack.c.h.b16 %v1838
      %v2051 = vunpack.c.l.b16 %v1839
      %v2052 = vunpack.c.h.b16 %v1839
      %v2053 = vunpack.c.l.b16 %v1840
      %v2054 = vunpack.c.h.b16 %v1840
      %v2055 = vunpack.c.l.b16 %v1841
      %v2056 = vunpack.c.h.b16 %v1841
      %v2057 = vunpack.c.l.b16 %v1842
      %v2058 = vunpack.c.h.b16 %v1842
      %v2059 = vunpack.c.l.b16 %v1843
      %v2060 = vunpack.c.h.b16 %v1843
      %v2061 = vunpack.c.l.b16 %v1844
      %v2062 = vunpack.c.h.b16 %v1844
      %v2063 = vunpack.c.l.b16 %v1845
      %v2064 = vunpack.c.h.b16 %v1845
      %v2065 = vunpack.c.l.b16 %v1846
      %v2066 = vunpack.c.h.b16 %v1846
      %v2067 = vunpack.c.l.b16 %v1847
      %v2068 = vunpack.c.h.b16 %v1847
      %v2069 = vunpack.c.l.b16 %v1848
      %v2070 = vunpack.c.h.b16 %v1848
      %v2071 = vunpack.c.l.b16 %v1849
      %v2072 = vunpack.c.h.b16 %v1849
      %v2073 = vunpack.c.l.b16 %v1850
      %v2074 = vunpack.c.h.b16 %v1850
      %v2075 = vunpack.c.l.b16 %v1851
      %v2076 = vunpack.c.h.b16 %v1851
      %v2077 = vunpack.c.l.b16 %v1852
      %v2078 = vunpack.c.h.b16 %v1852
      %v2079 = vunpack.c.l.b16 %v1853
      %v2080 = vunpack.c.h.b16 %v1853
      %v2081 = vunpack.c.l.b16 %v1854
      %v2082 = vunpack.c.h.b16 %v1854
      %v2083 = vunpack.c.l.b16 %v1855
      %v2084 = vunpack.c.h.b16 %v1855
      %v2085 = vunpack.c.l.b16 %v1856
      %v2086 = vunpack.c.h.b16 %v1856
      %v2087 = vunpack.c.l.b16 %v1857
      %v2088 = vunpack.c.h.b16 %v1857
      %v2089 = vunpack.c.l.b16 %v1858
      %v2090 = vunpack.c.h.b16 %v1858
      %v2091 = vunpack.c.l.b16 %v1859
      %v2092 = vunpack.c.h.b16 %v1859
      %v2093 = vunpack.c.l.b16 %v1860
      %v2094 = vunpack.c.h.b16 %v1860
      %v2095 = vunpack.c.l.b16 %v1861
      %v2096 = vunpack.c.h.b16 %v1861
      %v2097 = vunpack.c.l.b16 %v1862
      %v2098 = vunpack.c.h.b16 %v1862
      %v2099 = vpack.c.b16 %v1979, %v1971
      %v2100 = vpack.c.b16 %v1980, %v1972
      %v2101 = vpack.c.b16 %v1981, %v1973
      %v2102 = vpack.c.b16 %v1982, %v1974
      %v2103 = vpack.c.b16 %v1983, %v1975
      %v2104 = vpack.c.b16 %v1984, %v1976
      %v2105 = vpack.c.b16 %v1985, %v1977
      %v2106 = vpack.c.b16 %v1986, %v1978
      %v2107 = vpack.c.b16 %v1995, %v1987
      %v2108 = vpack.c.b16 %v1996, %v1988
      %v2109 = vpack.c.b16 %v1997, %v1989
      %v2110 = vpack.c.b16 %v1998, %v1990
      %v2111 = vpack.c.b16 %v1999, %v1991
      %v2112 = vpack.c.b16 %v2000, %v1992
      %v2113 = vpack.c.b16 %v2001, %v1993
      %v2114 = vpack.c.b16 %v2002, %v1994
      %v2115 = vpack.c.b16 %v2011, %v2003
      %v2116 = vpack.c.b16 %v2012, %v2004
      %v2117 = vpack.c.b16 %v2013, %v2005
      %v2118 = vpack.c.b16 %v2014, %v2006
      %v2119 = vpack.c.b16 %v2015, %v2007
      %v2120 = vpack.c.b16 %v2016, %v2008
      %v2121 = vpack.c.b16 %v2017, %v2009
      %v2122 = vpack.c.b16 %v2018, %v2010
      %v2123 = vpack.c.b16 %v2027, %v2019
      %v2124 = vpack.c.b16 %v2028, %v2020
      %v2125 = vpack.c.b16 %v2029, %v2021
      %v2126 = vpack.c.b16 %v2030, %v2022
      %v2127 = vpack.c.b16 %v2031, %v2023
      %v2128 = vpack.c.b16 %v2032, %v2024
      %v2129 = vpack.c.b16 %v2033, %v2025
      %v2130 = vpack.c.b16 %v2034, %v2026
      %v2131 = vpack.c.b16 %v2043, %v2035
      %v2132 = vpack.c.b16 %v2044, %v2036
      %v2133 = vpack.c.b16 %v2045, %v2037
      %v2134 = vpack.c.b16 %v2046, %v2038
      %v2135 = vpack.c.b16 %v2047, %v2039
      %v2136 = vpack.c.b16 %v2048, %v2040
      %v2137 = vpack.c.b16 %v2049, %v2041
      %v2138 = vpack.c.b16 %v2050, %v2042
      %v2139 = vpack.c.b16 %v2059, %v2051
      %v2140 = vpack.c.b16 %v2060, %v2052
      %v2141 = vpack.c.b16 %v2061, %v2053
      %v2142 = vpack.c.b16 %v2062, %v2054
      %v2143 = vpack.c.b16 %v2063, %v2055
      %v2144 = vpack.c.b16 %v2064, %v2056
      %v2145 = vpack.c.b16 %v2065, %v2057
      %v2146 = vpack.c.b16 %v2066, %v2058
      %v2147 = vpack.c.b16 %v2075, %v2067
      %v2148 = vpack.c.b16 %v2076, %v2068
      %v2149 = vpack.c.b16 %v2077, %v2069
      %v2150 = vpack.c.b16 %v2078, %v2070
      %v2151 = vpack.c.b16 %v2079, %v2071
      %v2152 = vpack.c.b16 %v2080, %v2072
      %v2153 = vpack.c.b16 %v2081, %v2073
      %v2154 = vpack.c.b16 %v2082, %v2074
      %v2155 = vpack.c.b16 %v2091, %v2083
      %v2156 = vpack.c.b16 %v2092, %v2084
      %v2157 = vpack.c.b16 %v2093, %v2085
      %v2158 = vpack.c.b16 %v2094, %v2086
      %v2159 = vpack.c.b16 %v2095, %v2087
      %v2160 = vpack.c.b16 %v2096, %v2088
      %v2161 = vpack.c.b16 %v2097, %v2089
      %v2162 = vpack.c.b16 %v2098, %v2090
      %2227 = vmatprep.subr.bf16.mxu0 %v2156
      %2228 = vmatpush1.bf16.msra.mxu0 %v2155
      %2229 = vmatprep.subr.bf16.mxu0 %v2148
      %2230 = vmatpush1.bf16.msra.mxu0 %v2147
      %2231 = vmatprep.subr.bf16.mxu0 %v2140
      %2232 = vmatpush1.bf16.msra.mxu0 %v2139
      %2233 = vmatprep.subr.bf16.mxu0 %v2132
      %2234 = vmatpush1.bf16.msra.mxu0 %v2131
      %2235 = vmatprep.subr.bf16.mxu0 %v2124
      %2236 = vmatpush1.bf16.msra.mxu0 %v2123
      %2237 = vmatprep.subr.bf16.mxu0 %v2116
      %2238 = vmatpush1.bf16.msra.mxu0 %v2115
      %2239 = vmatprep.subr.bf16.mxu0 %v2108
      %2240 = vmatpush1.bf16.msra.mxu0 %v2107
      %2241 = vmatprep.subr.bf16.mxu0 %v2100
      %2242 = vmatpush1.bf16.msra.mxu0 %v2099
      %2243 = vmatprep.subr.bf16.mxu0 0
      %2244 = vmatpush2.bf16.msra.mxu0 0
      %2245 = vmatprep.subr.bf16.mxu0 0
      %2246 = vmatpush2.bf16.msra.mxu0 0
      %2247 = vmatprep.subr.bf16.mxu0 0
      %2248 = vmatpush2.bf16.msra.mxu0 0
      %2249 = vmatprep.subr.bf16.mxu0 0
      %2250 = vmatpush2.bf16.msra.mxu0 0
      %2251 = vmatprep.subr.bf16.mxu0 0
      %2252 = vmatpush2.bf16.msra.mxu0 0
      %2253 = vmatprep.subr.bf16.mxu0 0
      %2254 = vmatpush2.bf16.msra.mxu0 0
      %2255 = vmatprep.subr.bf16.mxu0 0
      %2256 = vmatpush2.bf16.msra.mxu0 0
      %2257 = vmatprep.subr.bf16.mxu0 0
      %2258 = vmatpush2.bf16.msra.mxu0 0
      %2259 = vmatprep.mubr.bf16.mxu0 0
      %2260 = vmatmul.mubr.bf16.gmra.mxu0 %v1798
      %v2261 = vpop.f32.mrf.mxu0
      %v2262 = vadd.f32 %v1870, %v2261
      %v2263 = vpop.f32.mrf.mxu0
      %v2264 = vadd.f32 %v1874, %v2263
      %v2265 = vpop.f32.mrf.mxu0
      %v2266 = vpop.f32.mrf.mxu0
      %2267 = vdwg.mxu0
      %2268 = vmatprep.subr.bf16.mxu0 %v2158
      %2269 = vmatpush1.bf16.msra.mxu0 %v2157
      %2270 = vmatprep.subr.bf16.mxu0 %v2150
      %2271 = vmatpush1.bf16.msra.mxu0 %v2149
      %2272 = vmatprep.subr.bf16.mxu0 %v2142
      %2273 = vmatpush1.bf16.msra.mxu0 %v2141
      %2274 = vmatprep.subr.bf16.mxu0 %v2134
      %2275 = vmatpush1.bf16.msra.mxu0 %v2133
      %2276 = vmatprep.subr.bf16.mxu0 %v2126
      %2277 = vmatpush1.bf16.msra.mxu0 %v2125
      %2278 = vmatprep.subr.bf16.mxu0 %v2118
      %2279 = vmatpush1.bf16.msra.mxu0 %v2117
      %2280 = vmatprep.subr.bf16.mxu0 %v2110
      %2281 = vmatpush1.bf16.msra.mxu0 %v2109
      %2282 = vmatprep.subr.bf16.mxu0 %v2102
      %2283 = vmatpush1.bf16.msra.mxu0 %v2101
      %2284 = vmatprep.subr.bf16.mxu0 0
      %2285 = vmatpush2.bf16.msra.mxu0 0
      %2286 = vmatprep.subr.bf16.mxu0 0
      %2287 = vmatpush2.bf16.msra.mxu0 0
      %2288 = vmatprep.subr.bf16.mxu0 0
      %2289 = vmatpush2.bf16.msra.mxu0 0
      %2290 = vmatprep.subr.bf16.mxu0 0
      %2291 = vmatpush2.bf16.msra.mxu0 0
      %2292 = vmatprep.subr.bf16.mxu0 0
      %2293 = vmatpush2.bf16.msra.mxu0 0
      %2294 = vmatprep.subr.bf16.mxu0 0
      %2295 = vmatpush2.bf16.msra.mxu0 0
      %2296 = vmatprep.subr.bf16.mxu0 0
      %2297 = vmatpush2.bf16.msra.mxu0 0
      %2298 = vmatprep.subr.bf16.mxu0 0
      %2299 = vmatpush2.bf16.msra.mxu0 0
      %2300 = vmatprep.mubr.bf16.mxu0 0
      %2301 = vmatmul.mubr.bf16.gmra.mxu0 %v1798
      %v2302 = vpop.f32.mrf.mxu0
      %v2303 = vadd.f32 %v1878, %v2302
      %v2304 = vpop.f32.mrf.mxu0
      %v2305 = vadd.f32 %v1882, %v2304
      %v2306 = vpop.f32.mrf.mxu0
      %v2307 = vpop.f32.mrf.mxu0
      %2308 = vdwg.mxu0
      %2309 = vmatprep.subr.bf16.mxu0 %v2160
      %2310 = vmatpush1.bf16.msra.mxu0 %v2159
      %2311 = vmatprep.subr.bf16.mxu0 %v2152
      %2312 = vmatpush1.bf16.msra.mxu0 %v2151
      %2313 = vmatprep.subr.bf16.mxu0 %v2144
      %2314 = vmatpush1.bf16.msra.mxu0 %v2143
      %2315 = vmatprep.subr.bf16.mxu0 %v2136
      %2316 = vmatpush1.bf16.msra.mxu0 %v2135
      %2317 = vmatprep.subr.bf16.mxu0 %v2128
      %2318 = vmatpush1.bf16.msra.mxu0 %v2127
      %2319 = vmatprep.subr.bf16.mxu0 %v2120
      %2320 = vmatpush1.bf16.msra.mxu0 %v2119
      %2321 = vmatprep.subr.bf16.mxu0 %v2112
      %2322 = vmatpush1.bf16.msra.mxu0 %v2111
      %2323 = vmatprep.subr.bf16.mxu0 %v2104
      %2324 = vmatpush1.bf16.msra.mxu0 %v2103
      %2325 = vmatprep.subr.bf16.mxu0 0
      %2326 = vmatpush2.bf16.msra.mxu0 0
      %2327 = vmatprep.subr.bf16.mxu0 0
      %2328 = vmatpush2.bf16.msra.mxu0 0
      %2329 = vmatprep.subr.bf16.mxu0 0
      %2330 = vmatpush2.bf16.msra.mxu0 0
      %2331 = vmatprep.subr.bf16.mxu0 0
      %2332 = vmatpush2.bf16.msra.mxu0 0
      %2333 = vmatprep.subr.bf16.mxu0 0
      %2334 = vmatpush2.bf16.msra.mxu0 0
      %2335 = vmatprep.subr.bf16.mxu0 0
      %2336 = vmatpush2.bf16.msra.mxu0 0
      %2337 = vmatprep.subr.bf16.mxu0 0
      %2338 = vmatpush2.bf16.msra.mxu0 0
      %2339 = vmatprep.subr.bf16.mxu0 0
      %2340 = vmatpush2.bf16.msra.mxu0 0
      %2341 = vmatprep.mubr.bf16.mxu0 0
      %2342 = vmatmul.mubr.bf16.gmra.mxu0 %v1798
      %v2343 = vpop.f32.mrf.mxu0
      %v2344 = vadd.f32 %v1886, %v2343
      %v2345 = vpop.f32.mrf.mxu0
      %v2346 = vadd.f32 %v1890, %v2345
      %v2347 = vpop.f32.mrf.mxu0
      %v2348 = vpop.f32.mrf.mxu0
      %2349 = vdwg.mxu0
      %2350 = vmatprep.subr.bf16.mxu0 %v2162
      %2351 = vmatpush1.bf16.msra.mxu0 %v2161
      %2352 = vmatprep.subr.bf16.mxu0 %v2154
      %2353 = vmatpush1.bf16.msra.mxu0 %v2153
      %2354 = vmatprep.subr.bf16.mxu0 %v2146
      %2355 = vmatpush1.bf16.msra.mxu0 %v2145
      %2356 = vmatprep.subr.bf16.mxu0 %v2138
      %2357 = vmatpush1.bf16.msra.mxu0 %v2137
      %2358 = vmatprep.subr.bf16.mxu0 %v2130
      %2359 = vmatpush1.bf16.msra.mxu0 %v2129
      %2360 = vmatprep.subr.bf16.mxu0 %v2122
      %2361 = vmatpush1.bf16.msra.mxu0 %v2121
      %2362 = vmatprep.subr.bf16.mxu0 %v2114
      %2363 = vmatpush1.bf16.msra.mxu0 %v2113
      %2364 = vmatprep.subr.bf16.mxu0 %v2106
      %2365 = vmatpush1.bf16.msra.mxu0 %v2105
      %2366 = vmatprep.subr.bf16.mxu0 0
      %2367 = vmatpush2.bf16.msra.mxu0 0
      %2368 = vmatprep.subr.bf16.mxu0 0
      %2369 = vmatpush2.bf16.msra.mxu0 0
      %2370 = vmatprep.subr.bf16.mxu0 0
      %2371 = vmatpush2.bf16.msra.mxu0 0
      %2372 = vmatprep.subr.bf16.mxu0 0
      %2373 = vmatpush2.bf16.msra.mxu0 0
      %2374 = vmatprep.subr.bf16.mxu0 0
      %2375 = vmatpush2.bf16.msra.mxu0 0
      %2376 = vmatprep.subr.bf16.mxu0 0
      %2377 = vmatpush2.bf16.msra.mxu0 0
      %2378 = vmatprep.subr.bf16.mxu0 0
      %2379 = vmatpush2.bf16.msra.mxu0 0
      %2380 = vmatprep.subr.bf16.mxu0 0
      %2381 = vmatpush2.bf16.msra.mxu0 0
      %2382 = vmatprep.mubr.bf16.mxu0 0
      %2383 = vmatmul.mubr.bf16.gmra.mxu0 %v1798
      %v2384 = vpop.f32.mrf.mxu0
      %v2385 = vadd.f32 %v1894, %v2384
      %v2386 = vpop.f32.mrf.mxu0
      %v2387 = vadd.f32 %v1898, %v2386
      %v2388 = vpop.f32.mrf.mxu0
      %v2389 = vpop.f32.mrf.mxu0
      %2390 = vdwg.mxu0
      %vm2391 = vcmask 1041408
      %v2392 = vsel %vm2391, %v2262, 0.0
      %v2393 = vrot.slane %v2392, 4
      %v2394 = vadd.f32 %v2392, %v2393
      %v2395 = vrot.slane %v2394, 2
      %v2396 = vadd.f32 %v2394, %v2395
      %v2397 = vrot.slane %v2396, 1
      %v2398 = vadd.f32 %v2396, %v2397
      %v2399 = vsel %vm2391, %v2264, 0.0
      %v2400 = vrot.slane %v2399, 4
      %v2401 = vadd.f32 %v2399, %v2400
      %v2402 = vrot.slane %v2401, 2
      %v2403 = vadd.f32 %v2401, %v2402
      %v2404 = vrot.slane %v2403, 1
      %v2405 = vadd.f32 %v2403, %v2404
      %v2406 = vsel %vm2391, %v2303, 0.0
      %v2407 = vrot.slane %v2406, 4
      %v2408 = vadd.f32 %v2406, %v2407
      %v2409 = vrot.slane %v2408, 2
      %v2410 = vadd.f32 %v2408, %v2409
      %v2411 = vrot.slane %v2410, 1
      %v2412 = vadd.f32 %v2410, %v2411
      %v2413 = vsel %vm2391, %v2305, 0.0
      %v2414 = vrot.slane %v2413, 4
      %v2415 = vadd.f32 %v2413, %v2414
      %v2416 = vrot.slane %v2415, 2
      %v2417 = vadd.f32 %v2415, %v2416
      %v2418 = vrot.slane %v2417, 1
      %v2419 = vadd.f32 %v2417, %v2418
      %v2420 = vsel %vm2391, %v2344, 0.0
      %v2421 = vrot.slane %v2420, 4
      %v2422 = vadd.f32 %v2420, %v2421
      %v2423 = vrot.slane %v2422, 2
      %v2424 = vadd.f32 %v2422, %v2423
      %v2425 = vrot.slane %v2424, 1
      %v2426 = vadd.f32 %v2424, %v2425
      %v2427 = vsel %vm2391, %v2346, 0.0
      %v2428 = vrot.slane %v2427, 4
      %v2429 = vadd.f32 %v2427, %v2428
      %v2430 = vrot.slane %v2429, 2
      %v2431 = vadd.f32 %v2429, %v2430
      %v2432 = vrot.slane %v2431, 1
      %v2433 = vadd.f32 %v2431, %v2432
      %v2434 = vsel %vm2391, %v2385, 0.0
      %v2435 = vrot.slane %v2434, 4
      %v2436 = vadd.f32 %v2434, %v2435
      %v2437 = vrot.slane %v2436, 2
      %v2438 = vadd.f32 %v2436, %v2437
      %v2439 = vrot.slane %v2438, 1
      %v2440 = vadd.f32 %v2438, %v2439
      %v2441 = vsel %vm2391, %v2387, 0.0
      %v2442 = vrot.slane %v2441, 4
      %v2443 = vadd.f32 %v2441, %v2442
      %v2444 = vrot.slane %v2443, 2
      %v2445 = vadd.f32 %v2443, %v2444
      %v2446 = vrot.slane %v2445, 1
      %v2447 = vadd.f32 %v2445, %v2446
      %v2448 = vrcp.pop 2.0
      %v2449 = vmul.f32 %v2398, %v2448
      %v2450 = vmul.f32 %v2405, %v2448
      %v2451 = vmul.f32 %v2412, %v2448
      %v2452 = vmul.f32 %v2419, %v2448
      %v2453 = vmul.f32 %v2426, %v2448
      %v2454 = vmul.f32 %v2433, %v2448
      %v2455 = vmul.f32 %v2440, %v2448
      %v2456 = vmul.f32 %v2447, %v2448
      %v2457 = vsub.f32 %v2262, %v2449
      %v2458 = vsub.f32 %v2264, %v2450
      %v2459 = vsub.f32 %v2303, %v2451
      %v2460 = vsub.f32 %v2305, %v2452
      %v2461 = vsub.f32 %v2344, %v2453
      %v2462 = vsub.f32 %v2346, %v2454
      %v2463 = vsub.f32 %v2385, %v2455
      %v2464 = vsub.f32 %v2387, %v2456
      %v2465 = vmul.f32 %v2457, %v2457
      %v2466 = vmul.f32 %v2458, %v2458
      %v2467 = vmul.f32 %v2459, %v2459
      %v2468 = vmul.f32 %v2460, %v2460
      %v2469 = vmul.f32 %v2461, %v2461
      %v2470 = vmul.f32 %v2462, %v2462
      %v2471 = vmul.f32 %v2463, %v2463
      %v2472 = vmul.f32 %v2464, %v2464
      %v2473 = vsel %vm2391, %v2465, 0.0
      %v2474 = vrot.slane %v2473, 4
      %v2475 = vadd.f32 %v2473, %v2474
      %v2476 = vrot.slane %v2475, 2
      %v2477 = vadd.f32 %v2475, %v2476
      %v2478 = vrot.slane %v2477, 1
      %v2479 = vadd.f32 %v2477, %v2478
      %v2480 = vsel %vm2391, %v2466, 0.0
      %v2481 = vrot.slane %v2480, 4
      %v2482 = vadd.f32 %v2480, %v2481
      %v2483 = vrot.slane %v2482, 2
      %v2484 = vadd.f32 %v2482, %v2483
      %v2485 = vrot.slane %v2484, 1
      %v2486 = vadd.f32 %v2484, %v2485
      %v2487 = vsel %vm2391, %v2467, 0.0
      %v2488 = vrot.slane %v2487, 4
      %v2489 = vadd.f32 %v2487, %v2488
      %v2490 = vrot.slane %v2489, 2
      %v2491 = vadd.f32 %v2489, %v2490
      %v2492 = vrot.slane %v2491, 1
      %v2493 = vadd.f32 %v2491, %v2492
      %v2494 = vsel %vm2391, %v2468, 0.0
      %v2495 = vrot.slane %v2494, 4
      %v2496 = vadd.f32 %v2494, %v2495
      %v2497 = vrot.slane %v2496, 2
      %v2498 = vadd.f32 %v2496, %v2497
      %v2499 = vrot.slane %v2498, 1
      %v2500 = vadd.f32 %v2498, %v2499
      %v2501 = vsel %vm2391, %v2469, 0.0
      %v2502 = vrot.slane %v2501, 4
      %v2503 = vadd.f32 %v2501, %v2502
      %v2504 = vrot.slane %v2503, 2
      %v2505 = vadd.f32 %v2503, %v2504
      %v2506 = vrot.slane %v2505, 1
      %v2507 = vadd.f32 %v2505, %v2506
      %v2508 = vsel %vm2391, %v2470, 0.0
      %v2509 = vrot.slane %v2508, 4
      %v2510 = vadd.f32 %v2508, %v2509
      %v2511 = vrot.slane %v2510, 2
      %v2512 = vadd.f32 %v2510, %v2511
      %v2513 = vrot.slane %v2512, 1
      %v2514 = vadd.f32 %v2512, %v2513
      %v2515 = vsel %vm2391, %v2471, 0.0
      %v2516 = vrot.slane %v2515, 4
      %v2517 = vadd.f32 %v2515, %v2516
      %v2518 = vrot.slane %v2517, 2
      %v2519 = vadd.f32 %v2517, %v2518
      %v2520 = vrot.slane %v2519, 1
      %v2521 = vadd.f32 %v2519, %v2520
      %v2522 = vsel %vm2391, %v2472, 0.0
      %v2523 = vrot.slane %v2522, 4
      %v2524 = vadd.f32 %v2522, %v2523
      %v2525 = vrot.slane %v2524, 2
      %v2526 = vadd.f32 %v2524, %v2525
      %v2527 = vrot.slane %v2526, 1
      %v2528 = vadd.f32 %v2526, %v2527
      %v2529 = vmul.f32 %v2479, %v2448
      %v2530 = vmul.f32 %v2486, %v2448
      %v2531 = vmul.f32 %v2493, %v2448
      %v2532 = vmul.f32 %v2500, %v2448
      %v2533 = vmul.f32 %v2507, %v2448
      %v2534 = vmul.f32 %v2514, %v2448
      %v2535 = vmul.f32 %v2521, %v2448
      %v2536 = vmul.f32 %v2528, %v2448
      %v2537 = vadd.f32 %v2529, 1e-05
      %v2538 = vadd.f32 %v2530, 1e-05
      %v2539 = vadd.f32 %v2531, 1e-05
      %v2540 = vadd.f32 %v2532, 1e-05
      %v2541 = vadd.f32 %v2533, 1e-05
      %v2542 = vadd.f32 %v2534, 1e-05
      %v2543 = vadd.f32 %v2535, 1e-05
      %v2544 = vadd.f32 %v2536, 1e-05
      %v2545 = vrsqrt.pop %v2537
      %v2546 = vrsqrt.pop %v2538
      %v2547 = vrsqrt.pop %v2539
      %v2548 = vrsqrt.pop %v2540
      %v2549 = vrsqrt.pop %v2541
      %v2550 = vrsqrt.pop %v2542
      %v2551 = vrsqrt.pop %v2543
      %v2552 = vrsqrt.pop %v2544
      %v2553 = vmul.f32 %v2457, %v2545
      %v2554 = vmul.f32 %v2458, %v2546
      %v2555 = vmul.f32 %v2459, %v2547
      %v2556 = vmul.f32 %v2460, %v2548
      %v2557 = vmul.f32 %v2461, %v2549
      %v2558 = vmul.f32 %v2462, %v2550
      %v2559 = vmul.f32 %v2463, %v2551
      %v2560 = vmul.f32 %v2464, %v2552
      %v2562 = vlaneseq
      %v2563 = vshrl.u32 %v2562, 7
      %v2564 = vsub.s32 0, %v2563
      %v2565 = vrot.slane %v1864, %v2564
      %v2566 = vlaneseq
      %v2567 = vshrl.u32 %v2566, 7
      %v2568 = vsub.s32 1, %v2567
      %v2569 = vrot.slane %v1864, %v2568
      %v2570 = vlaneseq
      %v2571 = vshrl.u32 %v2570, 7
      %v2572 = vsub.s32 2, %v2571
      %v2573 = vrot.slane %v1864, %v2572
      %v2574 = vlaneseq
      %v2575 = vshrl.u32 %v2574, 7
      %v2576 = vsub.s32 3, %v2575
      %v2577 = vrot.slane %v1864, %v2576
      %v2578 = vlaneseq
      %v2579 = vshrl.u32 %v2578, 7
      %v2580 = vsub.s32 4, %v2579
      %v2581 = vrot.slane %v1864, %v2580
      %v2582 = vlaneseq
      %v2583 = vshrl.u32 %v2582, 7
      %v2584 = vsub.s32 5, %v2583
      %v2585 = vrot.slane %v1864, %v2584
      %v2586 = vlaneseq
      %v2587 = vshrl.u32 %v2586, 7
      %v2588 = vsub.s32 6, %v2587
      %v2589 = vrot.slane %v1864, %v2588
      %v2590 = vlaneseq
      %v2591 = vshrl.u32 %v2590, 7
      %v2592 = vsub.s32 7, %v2591
      %v2593 = vrot.slane %v1864, %v2592
      %v2602 = vmul.f32 %v2553, %v2565
      %v2603 = vmul.f32 %v2554, %v2569
      %v2604 = vmul.f32 %v2555, %v2573
      %v2605 = vmul.f32 %v2556, %v2577
      %v2606 = vmul.f32 %v2557, %v2581
      %v2607 = vmul.f32 %v2558, %v2585
      %v2608 = vmul.f32 %v2559, %v2589
      %v2609 = vmul.f32 %v2560, %v2593
      %v2611 = vlaneseq
      %v2612 = vshrl.u32 %v2611, 7
      %v2613 = vsub.s32 0, %v2612
      %v2614 = vrot.slane %v1865, %v2613
      %v2615 = vlaneseq
      %v2616 = vshrl.u32 %v2615, 7
      %v2617 = vsub.s32 1, %v2616
      %v2618 = vrot.slane %v1865, %v2617
      %v2619 = vlaneseq
      %v2620 = vshrl.u32 %v2619, 7
      %v2621 = vsub.s32 2, %v2620
      %v2622 = vrot.slane %v1865, %v2621
      %v2623 = vlaneseq
      %v2624 = vshrl.u32 %v2623, 7
      %v2625 = vsub.s32 3, %v2624
      %v2626 = vrot.slane %v1865, %v2625
      %v2627 = vlaneseq
      %v2628 = vshrl.u32 %v2627, 7
      %v2629 = vsub.s32 4, %v2628
      %v2630 = vrot.slane %v1865, %v2629
      %v2631 = vlaneseq
      %v2632 = vshrl.u32 %v2631, 7
      %v2633 = vsub.s32 5, %v2632
      %v2634 = vrot.slane %v1865, %v2633
      %v2635 = vlaneseq
      %v2636 = vshrl.u32 %v2635, 7
      %v2637 = vsub.s32 6, %v2636
      %v2638 = vrot.slane %v1865, %v2637
      %v2639 = vlaneseq
      %v2640 = vshrl.u32 %v2639, 7
      %v2641 = vsub.s32 7, %v2640
      %v2642 = vrot.slane %v1865, %v2641
      %v2651 = vadd.f32 %v2602, %v2614
      %v2652 = vadd.f32 %v2603, %v2618
      %v2653 = vadd.f32 %v2604, %v2622
      %v2654 = vadd.f32 %v2605, %v2626
      %v2655 = vadd.f32 %v2606, %v2630
      %v2656 = vadd.f32 %v2607, %v2634
      %v2657 = vadd.f32 %v2608, %v2638
      %v2658 = vadd.f32 %v2609, %v2642
      %v2659 = vmax.f32 %v2651, 0.0
      %v2660 = vmax.f32 %v2652, 0.0
      %v2661 = vmax.f32 %v2653, 0.0
      %v2662 = vmax.f32 %v2654, 0.0
      %v2663 = vmax.f32 %v2655, 0.0
      %v2664 = vmax.f32 %v2656, 0.0
      %v2665 = vmax.f32 %v2657, 0.0
      %v2666 = vmax.f32 %v2658, 0.0
      %v2667 = vpack.c.bf16 %v2659, %v2659
      %v2668 = vpack.c.bf16 %v2660, %v2660
      %v2669 = vpack.c.bf16 %v2661, %v2661
      %v2670 = vpack.c.bf16 %v2662, %v2662
      %v2671 = vpack.c.bf16 %v2663, %v2663
      %v2672 = vpack.c.bf16 %v2664, %v2664
      %v2673 = vpack.c.bf16 %v2665, %v2665
      %v2674 = vpack.c.bf16 %v2666, %v2666
      %v2675 = vld [vmem:[%s570] sm:$0xff]
      %v2676 = vld [vmem:[%s570 + $0x8] sm:$0xff]
      %v2677 = vld [vmem:[%s570 + $0x10] sm:$0xff]
      %v2678 = vld [vmem:[%s570 + $0x18] sm:$0xff]
      %v2679 = vld [vmem:[%s570 + $0x20] sm:$0xff]
      %v2680 = vld [vmem:[%s570 + $0x28] sm:$0xff]
      %v2681 = vld [vmem:[%s570 + $0x30] sm:$0xff]
      %v2682 = vld [vmem:[%s570 + $0x38] sm:$0xff]
      %v2683 = vld [vmem:[%s570 + $0x40] sm:$0xff]
      %v2684 = vld [vmem:[%s570 + $0x48] sm:$0xff]
      %v2685 = vld [vmem:[%s570 + $0x50] sm:$0xff]
      %v2686 = vld [vmem:[%s570 + $0x58] sm:$0xff]
      %v2687 = vld [vmem:[%s570 + $0x60] sm:$0xff]
      %v2688 = vld [vmem:[%s570 + $0x68] sm:$0xff]
      %v2689 = vld [vmem:[%s570 + $0x70] sm:$0xff]
      %v2690 = vld [vmem:[%s570 + $0x78] sm:$0xff]
      %v2691 = vld [vmem:[%s570 + $0x80] sm:$0xff]
      %v2692 = vld [vmem:[%s570 + $0x88] sm:$0xff]
      %v2693 = vld [vmem:[%s570 + $0x90] sm:$0xff]
      %v2694 = vld [vmem:[%s570 + $0x98] sm:$0xff]
      %v2695 = vld [vmem:[%s570 + $0xa0] sm:$0xff]
      %v2696 = vld [vmem:[%s570 + $0xa8] sm:$0xff]
      %v2697 = vld [vmem:[%s570 + $0xb0] sm:$0xff]
      %v2698 = vld [vmem:[%s570 + $0xb8] sm:$0xff]
      %v2699 = vld [vmem:[%s570 + $0xc0] sm:$0xff]
      %v2700 = vld [vmem:[%s570 + $0xc8] sm:$0xff]
      %v2701 = vld [vmem:[%s570 + $0xd0] sm:$0xff]
      %v2702 = vld [vmem:[%s570 + $0xd8] sm:$0xff]
      %v2703 = vld [vmem:[%s570 + $0xe0] sm:$0xff]
      %v2704 = vld [vmem:[%s570 + $0xe8] sm:$0xff]
      %v2705 = vld [vmem:[%s570 + $0xf0] sm:$0xff]
      %v2706 = vld [vmem:[%s570 + $0xf8] sm:$0xff]
      %v2707 = vld [vmem:[%s570 + $0x100] sm:$0xff]
      %v2708 = vld [vmem:[%s570 + $0x108] sm:$0xff]
      %v2709 = vld [vmem:[%s570 + $0x110] sm:$0xff]
      %v2710 = vld [vmem:[%s570 + $0x118] sm:$0xff]
      %v2711 = vld [vmem:[%s570 + $0x120] sm:$0xff]
      %v2712 = vld [vmem:[%s570 + $0x128] sm:$0xff]
      %v2713 = vld [vmem:[%s570 + $0x130] sm:$0xff]
      %v2714 = vld [vmem:[%s570 + $0x138] sm:$0xff]
      %v2715 = vld [vmem:[%s570 + $0x140] sm:$0xff]
      %v2716 = vld [vmem:[%s570 + $0x148] sm:$0xff]
      %v2717 = vld [vmem:[%s570 + $0x150] sm:$0xff]
      %v2718 = vld [vmem:[%s570 + $0x158] sm:$0xff]
      %v2719 = vld [vmem:[%s570 + $0x160] sm:$0xff]
      %v2720 = vld [vmem:[%s570 + $0x168] sm:$0xff]
      %v2721 = vld [vmem:[%s570 + $0x170] sm:$0xff]
      %v2722 = vld [vmem:[%s570 + $0x178] sm:$0xff]
      %v2723 = vld [vmem:[%s570 + $0x180] sm:$0xff]
      %v2724 = vld [vmem:[%s570 + $0x188] sm:$0xff]
      %v2725 = vld [vmem:[%s570 + $0x190] sm:$0xff]
      %v2726 = vld [vmem:[%s570 + $0x198] sm:$0xff]
      %v2727 = vld [vmem:[%s570 + $0x1a0] sm:$0xff]
      %v2728 = vld [vmem:[%s570 + $0x1a8] sm:$0xff]
      %v2729 = vld [vmem:[%s570 + $0x1b0] sm:$0xff]
      %v2730 = vld [vmem:[%s570 + $0x1b8] sm:$0xff]
      %v2731 = vld [vmem:[%s570 + $0x1c0] sm:$0xff]
      %v2732 = vld [vmem:[%s570 + $0x1c8] sm:$0xff]
      %v2733 = vld [vmem:[%s570 + $0x1d0] sm:$0xff]
      %v2734 = vld [vmem:[%s570 + $0x1d8] sm:$0xff]
      %v2735 = vld [vmem:[%s570 + $0x1e0] sm:$0xff]
      %v2736 = vld [vmem:[%s570 + $0x1e8] sm:$0xff]
      %v2737 = vld [vmem:[%s570 + $0x1f0] sm:$0xff]
      %v2738 = vld [vmem:[%s570 + $0x1f8] sm:$0xff]
      %v2739 = vld [vmem:[%s570 + $0x200] sm:$0xff]
      %v2740 = vld [vmem:[%s570 + $0x208] sm:$0xff]
      %v2741 = vld [vmem:[%s570 + $0x210] sm:$0xff]
      %v2742 = vld [vmem:[%s570 + $0x218] sm:$0xff]
      %v2743 = vld [vmem:[%s570 + $0x220] sm:$0xff]
      %v2744 = vld [vmem:[%s570 + $0x228] sm:$0xff]
      %v2745 = vld [vmem:[%s570 + $0x230] sm:$0xff]
      %v2746 = vld [vmem:[%s570 + $0x238] sm:$0xff]
      %v2747 = vld [vmem:[%s570 + $0x240] sm:$0xff]
      %v2748 = vld [vmem:[%s570 + $0x248] sm:$0xff]
      %v2749 = vld [vmem:[%s570 + $0x250] sm:$0xff]
      %v2750 = vld [vmem:[%s570 + $0x258] sm:$0xff]
      %v2751 = vld [vmem:[%s570 + $0x260] sm:$0xff]
      %v2752 = vld [vmem:[%s570 + $0x268] sm:$0xff]
      %v2753 = vld [vmem:[%s570 + $0x270] sm:$0xff]
      %v2754 = vld [vmem:[%s570 + $0x278] sm:$0xff]
      %v2755 = vld [vmem:[%s570 + $0x280] sm:$0xff]
      %v2756 = vld [vmem:[%s570 + $0x288] sm:$0xff]
      %v2757 = vld [vmem:[%s570 + $0x290] sm:$0xff]
      %v2758 = vld [vmem:[%s570 + $0x298] sm:$0xff]
      %v2759 = vld [vmem:[%s570 + $0x2a0] sm:$0xff]
      %v2760 = vld [vmem:[%s570 + $0x2a8] sm:$0xff]
      %v2761 = vld [vmem:[%s570 + $0x2b0] sm:$0xff]
      %v2762 = vld [vmem:[%s570 + $0x2b8] sm:$0xff]
      %v2763 = vld [vmem:[%s570 + $0x2c0] sm:$0xff]
      %v2764 = vld [vmem:[%s570 + $0x2c8] sm:$0xff]
      %v2765 = vld [vmem:[%s570 + $0x2d0] sm:$0xff]
      %v2766 = vld [vmem:[%s570 + $0x2d8] sm:$0xff]
      %v2767 = vld [vmem:[%s570 + $0x2e0] sm:$0xff]
      %v2768 = vld [vmem:[%s570 + $0x2e8] sm:$0xff]
      %v2769 = vld [vmem:[%s570 + $0x2f0] sm:$0xff]
      %v2770 = vld [vmem:[%s570 + $0x2f8] sm:$0xff]
      %v2771 = vld [vmem:[%s570 + $0x300] sm:$0xff]
      %v2772 = vld [vmem:[%s570 + $0x308] sm:$0xff]
      %v2773 = vld [vmem:[%s570 + $0x310] sm:$0xff]
      %v2774 = vld [vmem:[%s570 + $0x318] sm:$0xff]
      %v2775 = vld [vmem:[%s570 + $0x320] sm:$0xff]
      %v2776 = vld [vmem:[%s570 + $0x328] sm:$0xff]
      %v2777 = vld [vmem:[%s570 + $0x330] sm:$0xff]
      %v2778 = vld [vmem:[%s570 + $0x338] sm:$0xff]
      %v2779 = vld [vmem:[%s570 + $0x340] sm:$0xff]
      %v2780 = vld [vmem:[%s570 + $0x348] sm:$0xff]
      %v2781 = vld [vmem:[%s570 + $0x350] sm:$0xff]
      %v2782 = vld [vmem:[%s570 + $0x358] sm:$0xff]
      %v2783 = vld [vmem:[%s570 + $0x360] sm:$0xff]
      %v2784 = vld [vmem:[%s570 + $0x368] sm:$0xff]
      %v2785 = vld [vmem:[%s570 + $0x370] sm:$0xff]
      %v2786 = vld [vmem:[%s570 + $0x378] sm:$0xff]
      %v2787 = vld [vmem:[%s570 + $0x380] sm:$0xff]
      %v2788 = vld [vmem:[%s570 + $0x388] sm:$0xff]
      %v2789 = vld [vmem:[%s570 + $0x390] sm:$0xff]
      %v2790 = vld [vmem:[%s570 + $0x398] sm:$0xff]
      %v2791 = vld [vmem:[%s570 + $0x3a0] sm:$0xff]
      %v2792 = vld [vmem:[%s570 + $0x3a8] sm:$0xff]
      %v2793 = vld [vmem:[%s570 + $0x3b0] sm:$0xff]
      %v2794 = vld [vmem:[%s570 + $0x3b8] sm:$0xff]
      %v2795 = vld [vmem:[%s570 + $0x3c0] sm:$0xff]
      %v2796 = vld [vmem:[%s570 + $0x3c8] sm:$0xff]
      %v2797 = vld [vmem:[%s570 + $0x3d0] sm:$0xff]
      %v2798 = vld [vmem:[%s570 + $0x3d8] sm:$0xff]
      %v2799 = vld [vmem:[%s570 + $0x3e0] sm:$0xff]
      %v2800 = vld [vmem:[%s570 + $0x3e8] sm:$0xff]
      %v2801 = vld [vmem:[%s570 + $0x3f0] sm:$0xff]
      %v2802 = vld [vmem:[%s570 + $0x3f8] sm:$0xff]
      %v2803 = vld [vmem:[%s574] sm:$0x3]
      %v2804 = vld [vmem:[%s578] sm:$0x3]
      %v2805 = vld [vmem:[%s582] sm:$0x3]
      %v2807 = vlaneseq
      %v2808 = vshrl.u32 %v2807, 7
      %v2809 = vsub.s32 0, %v2808
      %v2810 = vrot.slane %v2803, %v2809
      %v2811 = vlaneseq
      %v2812 = vshrl.u32 %v2811, 7
      %v2813 = vsub.s32 1, %v2812
      %v2814 = vrot.slane %v2803, %v2813
      %v2945 = vunpack.c.l.b16 %v2675
      %v2946 = vunpack.c.h.b16 %v2675
      %v2947 = vunpack.c.l.b16 %v2676
      %v2948 = vunpack.c.h.b16 %v2676
      %v2949 = vunpack.c.l.b16 %v2677
      %v2950 = vunpack.c.h.b16 %v2677
      %v2951 = vunpack.c.l.b16 %v2678
      %v2952 = vunpack.c.h.b16 %v2678
      %v2953 = vunpack.c.l.b16 %v2679
      %v2954 = vunpack.c.h.b16 %v2679
      %v2955 = vunpack.c.l.b16 %v2680
      %v2956 = vunpack.c.h.b16 %v2680
      %v2957 = vunpack.c.l.b16 %v2681
      %v2958 = vunpack.c.h.b16 %v2681
      %v2959 = vunpack.c.l.b16 %v2682
      %v2960 = vunpack.c.h.b16 %v2682
      %v2961 = vunpack.c.l.b16 %v2683
      %v2962 = vunpack.c.h.b16 %v2683
      %v2963 = vunpack.c.l.b16 %v2684
      %v2964 = vunpack.c.h.b16 %v2684
      %v2965 = vunpack.c.l.b16 %v2685
      %v2966 = vunpack.c.h.b16 %v2685
      %v2967 = vunpack.c.l.b16 %v2686
      %v2968 = vunpack.c.h.b16 %v2686
      %v2969 = vunpack.c.l.b16 %v2687
      %v2970 = vunpack.c.h.b16 %v2687
      %v2971 = vunpack.c.l.b16 %v2688
      %v2972 = vunpack.c.h.b16 %v2688
      %v2973 = vunpack.c.l.b16 %v2689
      %v2974 = vunpack.c.h.b16 %v2689
      %v2975 = vunpack.c.l.b16 %v2690
      %v2976 = vunpack.c.h.b16 %v2690
      %v2977 = vunpack.c.l.b16 %v2691
      %v2978 = vunpack.c.h.b16 %v2691
      %v2979 = vunpack.c.l.b16 %v2692
      %v2980 = vunpack.c.h.b16 %v2692
      %v2981 = vunpack.c.l.b16 %v2693
      %v2982 = vunpack.c.h.b16 %v2693
      %v2983 = vunpack.c.l.b16 %v2694
      %v2984 = vunpack.c.h.b16 %v2694
      %v2985 = vunpack.c.l.b16 %v2695
      %v2986 = vunpack.c.h.b16 %v2695
      %v2987 = vunpack.c.l.b16 %v2696
      %v2988 = vunpack.c.h.b16 %v2696
      %v2989 = vunpack.c.l.b16 %v2697
      %v2990 = vunpack.c.h.b16 %v2697
      %v2991 = vunpack.c.l.b16 %v2698
      %v2992 = vunpack.c.h.b16 %v2698
      %v2993 = vunpack.c.l.b16 %v2699
      %v2994 = vunpack.c.h.b16 %v2699
      %v2995 = vunpack.c.l.b16 %v2700
      %v2996 = vunpack.c.h.b16 %v2700
      %v2997 = vunpack.c.l.b16 %v2701
      %v2998 = vunpack.c.h.b16 %v2701
      %v2999 = vunpack.c.l.b16 %v2702
      %v3000 = vunpack.c.h.b16 %v2702
      %v3001 = vunpack.c.l.b16 %v2703
      %v3002 = vunpack.c.h.b16 %v2703
      %v3003 = vunpack.c.l.b16 %v2704
      %v3004 = vunpack.c.h.b16 %v2704
      %v3005 = vunpack.c.l.b16 %v2705
      %v3006 = vunpack.c.h.b16 %v2705
      %v3007 = vunpack.c.l.b16 %v2706
      %v3008 = vunpack.c.h.b16 %v2706
      %v3009 = vunpack.c.l.b16 %v2707
      %v3010 = vunpack.c.h.b16 %v2707
      %v3011 = vunpack.c.l.b16 %v2708
      %v3012 = vunpack.c.h.b16 %v2708
      %v3013 = vunpack.c.l.b16 %v2709
      %v3014 = vunpack.c.h.b16 %v2709
      %v3015 = vunpack.c.l.b16 %v2710
      %v3016 = vunpack.c.h.b16 %v2710
      %v3017 = vunpack.c.l.b16 %v2711
      %v3018 = vunpack.c.h.b16 %v2711
      %v3019 = vunpack.c.l.b16 %v2712
      %v3020 = vunpack.c.h.b16 %v2712
      %v3021 = vunpack.c.l.b16 %v2713
      %v3022 = vunpack.c.h.b16 %v2713
      %v3023 = vunpack.c.l.b16 %v2714
      %v3024 = vunpack.c.h.b16 %v2714
      %v3025 = vunpack.c.l.b16 %v2715
      %v3026 = vunpack.c.h.b16 %v2715
      %v3027 = vunpack.c.l.b16 %v2716
      %v3028 = vunpack.c.h.b16 %v2716
      %v3029 = vunpack.c.l.b16 %v2717
      %v3030 = vunpack.c.h.b16 %v2717
      %v3031 = vunpack.c.l.b16 %v2718
      %v3032 = vunpack.c.h.b16 %v2718
      %v3033 = vunpack.c.l.b16 %v2719
      %v3034 = vunpack.c.h.b16 %v2719
      %v3035 = vunpack.c.l.b16 %v2720
      %v3036 = vunpack.c.h.b16 %v2720
      %v3037 = vunpack.c.l.b16 %v2721
      %v3038 = vunpack.c.h.b16 %v2721
      %v3039 = vunpack.c.l.b16 %v2722
      %v3040 = vunpack.c.h.b16 %v2722
      %v3041 = vunpack.c.l.b16 %v2723
      %v3042 = vunpack.c.h.b16 %v2723
      %v3043 = vunpack.c.l.b16 %v2724
      %v3044 = vunpack.c.h.b16 %v2724
      %v3045 = vunpack.c.l.b16 %v2725
      %v3046 = vunpack.c.h.b16 %v2725
      %v3047 = vunpack.c.l.b16 %v2726
      %v3048 = vunpack.c.h.b16 %v2726
      %v3049 = vunpack.c.l.b16 %v2727
      %v3050 = vunpack.c.h.b16 %v2727
      %v3051 = vunpack.c.l.b16 %v2728
      %v3052 = vunpack.c.h.b16 %v2728
      %v3053 = vunpack.c.l.b16 %v2729
      %v3054 = vunpack.c.h.b16 %v2729
      %v3055 = vunpack.c.l.b16 %v2730
      %v3056 = vunpack.c.h.b16 %v2730
      %v3057 = vunpack.c.l.b16 %v2731
      %v3058 = vunpack.c.h.b16 %v2731
      %v3059 = vunpack.c.l.b16 %v2732
      %v3060 = vunpack.c.h.b16 %v2732
      %v3061 = vunpack.c.l.b16 %v2733
      %v3062 = vunpack.c.h.b16 %v2733
      %v3063 = vunpack.c.l.b16 %v2734
      %v3064 = vunpack.c.h.b16 %v2734
      %v3065 = vunpack.c.l.b16 %v2735
      %v3066 = vunpack.c.h.b16 %v2735
      %v3067 = vunpack.c.l.b16 %v2736
      %v3068 = vunpack.c.h.b16 %v2736
      %v3069 = vunpack.c.l.b16 %v2737
      %v3070 = vunpack.c.h.b16 %v2737
      %v3071 = vunpack.c.l.b16 %v2738
      %v3072 = vunpack.c.h.b16 %v2738
      %v3073 = vunpack.c.l.b16 %v2739
      %v3074 = vunpack.c.h.b16 %v2739
      %v3075 = vunpack.c.l.b16 %v2740
      %v3076 = vunpack.c.h.b16 %v2740
      %v3077 = vunpack.c.l.b16 %v2741
      %v3078 = vunpack.c.h.b16 %v2741
      %v3079 = vunpack.c.l.b16 %v2742
      %v3080 = vunpack.c.h.b16 %v2742
      %v3081 = vunpack.c.l.b16 %v2743
      %v3082 = vunpack.c.h.b16 %v2743
      %v3083 = vunpack.c.l.b16 %v2744
      %v3084 = vunpack.c.h.b16 %v2744
      %v3085 = vunpack.c.l.b16 %v2745
      %v3086 = vunpack.c.h.b16 %v2745
      %v3087 = vunpack.c.l.b16 %v2746
      %v3088 = vunpack.c.h.b16 %v2746
      %v3089 = vunpack.c.l.b16 %v2747
      %v3090 = vunpack.c.h.b16 %v2747
      %v3091 = vunpack.c.l.b16 %v2748
      %v3092 = vunpack.c.h.b16 %v2748
      %v3093 = vunpack.c.l.b16 %v2749
      %v3094 = vunpack.c.h.b16 %v2749
      %v3095 = vunpack.c.l.b16 %v2750
      %v3096 = vunpack.c.h.b16 %v2750
      %v3097 = vunpack.c.l.b16 %v2751
      %v3098 = vunpack.c.h.b16 %v2751
      %v3099 = vunpack.c.l.b16 %v2752
      %v3100 = vunpack.c.h.b16 %v2752
      %v3101 = vunpack.c.l.b16 %v2753
      %v3102 = vunpack.c.h.b16 %v2753
      %v3103 = vunpack.c.l.b16 %v2754
      %v3104 = vunpack.c.h.b16 %v2754
      %v3105 = vunpack.c.l.b16 %v2755
      %v3106 = vunpack.c.h.b16 %v2755
      %v3107 = vunpack.c.l.b16 %v2756
      %v3108 = vunpack.c.h.b16 %v2756
      %v3109 = vunpack.c.l.b16 %v2757
      %v3110 = vunpack.c.h.b16 %v2757
      %v3111 = vunpack.c.l.b16 %v2758
      %v3112 = vunpack.c.h.b16 %v2758
      %v3113 = vunpack.c.l.b16 %v2759
      %v3114 = vunpack.c.h.b16 %v2759
      %v3115 = vunpack.c.l.b16 %v2760
      %v3116 = vunpack.c.h.b16 %v2760
      %v3117 = vunpack.c.l.b16 %v2761
      %v3118 = vunpack.c.h.b16 %v2761
      %v3119 = vunpack.c.l.b16 %v2762
      %v3120 = vunpack.c.h.b16 %v2762
      %v3121 = vunpack.c.l.b16 %v2763
      %v3122 = vunpack.c.h.b16 %v2763
      %v3123 = vunpack.c.l.b16 %v2764
      %v3124 = vunpack.c.h.b16 %v2764
      %v3125 = vunpack.c.l.b16 %v2765
      %v3126 = vunpack.c.h.b16 %v2765
      %v3127 = vunpack.c.l.b16 %v2766
      %v3128 = vunpack.c.h.b16 %v2766
      %v3129 = vunpack.c.l.b16 %v2767
      %v3130 = vunpack.c.h.b16 %v2767
      %v3131 = vunpack.c.l.b16 %v2768
      %v3132 = vunpack.c.h.b16 %v2768
      %v3133 = vunpack.c.l.b16 %v2769
      %v3134 = vunpack.c.h.b16 %v2769
      %v3135 = vunpack.c.l.b16 %v2770
      %v3136 = vunpack.c.h.b16 %v2770
      %v3137 = vunpack.c.l.b16 %v2771
      %v3138 = vunpack.c.h.b16 %v2771
      %v3139 = vunpack.c.l.b16 %v2772
      %v3140 = vunpack.c.h.b16 %v2772
      %v3141 = vunpack.c.l.b16 %v2773
      %v3142 = vunpack.c.h.b16 %v2773
      %v3143 = vunpack.c.l.b16 %v2774
      %v3144 = vunpack.c.h.b16 %v2774
      %v3145 = vunpack.c.l.b16 %v2775
      %v3146 = vunpack.c.h.b16 %v2775
      %v3147 = vunpack.c.l.b16 %v2776
      %v3148 = vunpack.c.h.b16 %v2776
      %v3149 = vunpack.c.l.b16 %v2777
      %v3150 = vunpack.c.h.b16 %v2777
      %v3151 = vunpack.c.l.b16 %v2778
      %v3152 = vunpack.c.h.b16 %v2778
      %v3153 = vunpack.c.l.b16 %v2779
      %v3154 = vunpack.c.h.b16 %v2779
      %v3155 = vunpack.c.l.b16 %v2780
      %v3156 = vunpack.c.h.b16 %v2780
      %v3157 = vunpack.c.l.b16 %v2781
      %v3158 = vunpack.c.h.b16 %v2781
      %v3159 = vunpack.c.l.b16 %v2782
      %v3160 = vunpack.c.h.b16 %v2782
      %v3161 = vunpack.c.l.b16 %v2783
      %v3162 = vunpack.c.h.b16 %v2783
      %v3163 = vunpack.c.l.b16 %v2784
      %v3164 = vunpack.c.h.b16 %v2784
      %v3165 = vunpack.c.l.b16 %v2785
      %v3166 = vunpack.c.h.b16 %v2785
      %v3167 = vunpack.c.l.b16 %v2786
      %v3168 = vunpack.c.h.b16 %v2786
      %v3169 = vunpack.c.l.b16 %v2787
      %v3170 = vunpack.c.h.b16 %v2787
      %v3171 = vunpack.c.l.b16 %v2788
      %v3172 = vunpack.c.h.b16 %v2788
      %v3173 = vunpack.c.l.b16 %v2789
      %v3174 = vunpack.c.h.b16 %v2789
      %v3175 = vunpack.c.l.b16 %v2790
      %v3176 = vunpack.c.h.b16 %v2790
      %v3177 = vunpack.c.l.b16 %v2791
      %v3178 = vunpack.c.h.b16 %v2791
      %v3179 = vunpack.c.l.b16 %v2792
      %v3180 = vunpack.c.h.b16 %v2792
      %v3181 = vunpack.c.l.b16 %v2793
      %v3182 = vunpack.c.h.b16 %v2793
      %v3183 = vunpack.c.l.b16 %v2794
      %v3184 = vunpack.c.h.b16 %v2794
      %v3185 = vunpack.c.l.b16 %v2795
      %v3186 = vunpack.c.h.b16 %v2795
      %v3187 = vunpack.c.l.b16 %v2796
      %v3188 = vunpack.c.h.b16 %v2796
      %v3189 = vunpack.c.l.b16 %v2797
      %v3190 = vunpack.c.h.b16 %v2797
      %v3191 = vunpack.c.l.b16 %v2798
      %v3192 = vunpack.c.h.b16 %v2798
      %v3193 = vunpack.c.l.b16 %v2799
      %v3194 = vunpack.c.h.b16 %v2799
      %v3195 = vunpack.c.l.b16 %v2800
      %v3196 = vunpack.c.h.b16 %v2800
      %v3197 = vunpack.c.l.b16 %v2801
      %v3198 = vunpack.c.h.b16 %v2801
      %v3199 = vunpack.c.l.b16 %v2802
      %v3200 = vunpack.c.h.b16 %v2802
      %v3201 = vpack.c.b16 %v2947, %v2945
      %v3202 = vpack.c.b16 %v2948, %v2946
      %v3203 = vpack.c.b16 %v2951, %v2949
      %v3204 = vpack.c.b16 %v2952, %v2950
      %v3205 = vpack.c.b16 %v2955, %v2953
      %v3206 = vpack.c.b16 %v2956, %v2954
      %v3207 = vpack.c.b16 %v2959, %v2957
      %v3208 = vpack.c.b16 %v2960, %v2958
      %v3209 = vpack.c.b16 %v2963, %v2961
      %v3210 = vpack.c.b16 %v2964, %v2962
      %v3211 = vpack.c.b16 %v2967, %v2965
      %v3212 = vpack.c.b16 %v2968, %v2966
      %v3213 = vpack.c.b16 %v2971, %v2969
      %v3214 = vpack.c.b16 %v2972, %v2970
      %v3215 = vpack.c.b16 %v2975, %v2973
      %v3216 = vpack.c.b16 %v2976, %v2974
      %v3217 = vpack.c.b16 %v2979, %v2977
      %v3218 = vpack.c.b16 %v2980, %v2978
      %v3219 = vpack.c.b16 %v2983, %v2981
      %v3220 = vpack.c.b16 %v2984, %v2982
      %v3221 = vpack.c.b16 %v2987, %v2985
      %v3222 = vpack.c.b16 %v2988, %v2986
      %v3223 = vpack.c.b16 %v2991, %v2989
      %v3224 = vpack.c.b16 %v2992, %v2990
      %v3225 = vpack.c.b16 %v2995, %v2993
      %v3226 = vpack.c.b16 %v2996, %v2994
      %v3227 = vpack.c.b16 %v2999, %v2997
      %v3228 = vpack.c.b16 %v3000, %v2998
      %v3229 = vpack.c.b16 %v3003, %v3001
      %v3230 = vpack.c.b16 %v3004, %v3002
      %v3231 = vpack.c.b16 %v3007, %v3005
      %v3232 = vpack.c.b16 %v3008, %v3006
      %v3233 = vpack.c.b16 %v3011, %v3009
      %v3234 = vpack.c.b16 %v3012, %v3010
      %v3235 = vpack.c.b16 %v3015, %v3013
      %v3236 = vpack.c.b16 %v3016, %v3014
      %v3237 = vpack.c.b16 %v3019, %v3017
      %v3238 = vpack.c.b16 %v3020, %v3018
      %v3239 = vpack.c.b16 %v3023, %v3021
      %v3240 = vpack.c.b16 %v3024, %v3022
      %v3241 = vpack.c.b16 %v3027, %v3025
      %v3242 = vpack.c.b16 %v3028, %v3026
      %v3243 = vpack.c.b16 %v3031, %v3029
      %v3244 = vpack.c.b16 %v3032, %v3030
      %v3245 = vpack.c.b16 %v3035, %v3033
      %v3246 = vpack.c.b16 %v3036, %v3034
      %v3247 = vpack.c.b16 %v3039, %v3037
      %v3248 = vpack.c.b16 %v3040, %v3038
      %v3249 = vpack.c.b16 %v3043, %v3041
      %v3250 = vpack.c.b16 %v3044, %v3042
      %v3251 = vpack.c.b16 %v3047, %v3045
      %v3252 = vpack.c.b16 %v3048, %v3046
      %v3253 = vpack.c.b16 %v3051, %v3049
      %v3254 = vpack.c.b16 %v3052, %v3050
      %v3255 = vpack.c.b16 %v3055, %v3053
      %v3256 = vpack.c.b16 %v3056, %v3054
      %v3257 = vpack.c.b16 %v3059, %v3057
      %v3258 = vpack.c.b16 %v3060, %v3058
      %v3259 = vpack.c.b16 %v3063, %v3061
      %v3260 = vpack.c.b16 %v3064, %v3062
      %v3261 = vpack.c.b16 %v3067, %v3065
      %v3262 = vpack.c.b16 %v3068, %v3066
      %v3263 = vpack.c.b16 %v3071, %v3069
      %v3264 = vpack.c.b16 %v3072, %v3070
      %v3265 = vpack.c.b16 %v3075, %v3073
      %v3266 = vpack.c.b16 %v3076, %v3074
      %v3267 = vpack.c.b16 %v3079, %v3077
      %v3268 = vpack.c.b16 %v3080, %v3078
      %v3269 = vpack.c.b16 %v3083, %v3081
      %v3270 = vpack.c.b16 %v3084, %v3082
      %v3271 = vpack.c.b16 %v3087, %v3085
      %v3272 = vpack.c.b16 %v3088, %v3086
      %v3273 = vpack.c.b16 %v3091, %v3089
      %v3274 = vpack.c.b16 %v3092, %v3090
      %v3275 = vpack.c.b16 %v3095, %v3093
      %v3276 = vpack.c.b16 %v3096, %v3094
      %v3277 = vpack.c.b16 %v3099, %v3097
      %v3278 = vpack.c.b16 %v3100, %v3098
      %v3279 = vpack.c.b16 %v3103, %v3101
      %v3280 = vpack.c.b16 %v3104, %v3102
      %v3281 = vpack.c.b16 %v3107, %v3105
      %v3282 = vpack.c.b16 %v3108, %v3106
      %v3283 = vpack.c.b16 %v3111, %v3109
      %v3284 = vpack.c.b16 %v3112, %v3110
      %v3285 = vpack.c.b16 %v3115, %v3113
      %v3286 = vpack.c.b16 %v3116, %v3114
      %v3287 = vpack.c.b16 %v3119, %v3117
      %v3288 = vpack.c.b16 %v3120, %v3118
      %v3289 = vpack.c.b16 %v3123, %v3121
      %v3290 = vpack.c.b16 %v3124, %v3122
      %v3291 = vpack.c.b16 %v3127, %v3125
      %v3292 = vpack.c.b16 %v3128, %v3126
      %v3293 = vpack.c.b16 %v3131, %v3129
      %v3294 = vpack.c.b16 %v3132, %v3130
      %v3295 = vpack.c.b16 %v3135, %v3133
      %v3296 = vpack.c.b16 %v3136, %v3134
      %v3297 = vpack.c.b16 %v3139, %v3137
      %v3298 = vpack.c.b16 %v3140, %v3138
      %v3299 = vpack.c.b16 %v3143, %v3141
      %v3300 = vpack.c.b16 %v3144, %v3142
      %v3301 = vpack.c.b16 %v3147, %v3145
      %v3302 = vpack.c.b16 %v3148, %v3146
      %v3303 = vpack.c.b16 %v3151, %v3149
      %v3304 = vpack.c.b16 %v3152, %v3150
      %v3305 = vpack.c.b16 %v3155, %v3153
      %v3306 = vpack.c.b16 %v3156, %v3154
      %v3307 = vpack.c.b16 %v3159, %v3157
      %v3308 = vpack.c.b16 %v3160, %v3158
      %v3309 = vpack.c.b16 %v3163, %v3161
      %v3310 = vpack.c.b16 %v3164, %v3162
      %v3311 = vpack.c.b16 %v3167, %v3165
      %v3312 = vpack.c.b16 %v3168, %v3166
      %v3313 = vpack.c.b16 %v3171, %v3169
      %v3314 = vpack.c.b16 %v3172, %v3170
      %v3315 = vpack.c.b16 %v3175, %v3173
      %v3316 = vpack.c.b16 %v3176, %v3174
      %v3317 = vpack.c.b16 %v3179, %v3177
      %v3318 = vpack.c.b16 %v3180, %v3178
      %v3319 = vpack.c.b16 %v3183, %v3181
      %v3320 = vpack.c.b16 %v3184, %v3182
      %v3321 = vpack.c.b16 %v3187, %v3185
      %v3322 = vpack.c.b16 %v3188, %v3186
      %v3323 = vpack.c.b16 %v3191, %v3189
      %v3324 = vpack.c.b16 %v3192, %v3190
      %v3325 = vpack.c.b16 %v3195, %v3193
      %v3326 = vpack.c.b16 %v3196, %v3194
      %v3327 = vpack.c.b16 %v3199, %v3197
      %v3328 = vpack.c.b16 %v3200, %v3198
      %3457 = vmatprep.subr.bf16.mxu0 %v3216
      %3458 = vmatpush1.bf16.msra.mxu0 %v3215
      %3459 = vmatprep.subr.bf16.mxu0 %v3214
      %3460 = vmatpush1.bf16.msra.mxu0 %v3213
      %3461 = vmatprep.subr.bf16.mxu0 %v3212
      %3462 = vmatpush1.bf16.msra.mxu0 %v3211
      %3463 = vmatprep.subr.bf16.mxu0 %v3210
      %3464 = vmatpush1.bf16.msra.mxu0 %v3209
      %3465 = vmatprep.subr.bf16.mxu0 %v3208
      %3466 = vmatpush1.bf16.msra.mxu0 %v3207
      %3467 = vmatprep.subr.bf16.mxu0 %v3206
      %3468 = vmatpush1.bf16.msra.mxu0 %v3205
      %3469 = vmatprep.subr.bf16.mxu0 %v3204
      %3470 = vmatpush1.bf16.msra.mxu0 %v3203
      %3471 = vmatprep.subr.bf16.mxu0 %v3202
      %3472 = vmatpush1.bf16.msra.mxu0 %v3201
      %3473 = vmatprep.subr.bf16.mxu0 %v3232
      %3474 = vmatpush2.bf16.msra.mxu0 %v3231
      %3475 = vmatprep.subr.bf16.mxu0 %v3230
      %3476 = vmatpush2.bf16.msra.mxu0 %v3229
      %3477 = vmatprep.subr.bf16.mxu0 %v3228
      %3478 = vmatpush2.bf16.msra.mxu0 %v3227
      %3479 = vmatprep.subr.bf16.mxu0 %v3226
      %3480 = vmatpush2.bf16.msra.mxu0 %v3225
      %3481 = vmatprep.subr.bf16.mxu0 %v3224
      %3482 = vmatpush2.bf16.msra.mxu0 %v3223
      %3483 = vmatprep.subr.bf16.mxu0 %v3222
      %3484 = vmatpush2.bf16.msra.mxu0 %v3221
      %3485 = vmatprep.subr.bf16.mxu0 %v3220
      %3486 = vmatpush2.bf16.msra.mxu0 %v3219
      %3487 = vmatprep.subr.bf16.mxu0 %v3218
      %3488 = vmatpush2.bf16.msra.mxu0 %v3217
      %3489 = vmatprep.mubr.bf16.mxu0 %v2668
      %3490 = vmatmul.mubr.bf16.gmra.mxu0 %v2667
      %v3491 = vpop.f32.mrf.mxu0
      %v3492 = vadd.f32 %v2810, %v3491
      %v3493 = vpop.f32.mrf.mxu0
      %v3494 = vadd.f32 %v2814, %v3493
      %v3495 = vpop.f32.mrf.mxu0
      %v3496 = vpop.f32.mrf.mxu0
      %3497 = vdwg.mxu0
      %3498 = vmatprep.subr.bf16.mxu0 %v3248
      %3499 = vmatpush1.bf16.msra.mxu0 %v3247
      %3500 = vmatprep.subr.bf16.mxu0 %v3246
      %3501 = vmatpush1.bf16.msra.mxu0 %v3245
      %3502 = vmatprep.subr.bf16.mxu0 %v3244
      %3503 = vmatpush1.bf16.msra.mxu0 %v3243
      %3504 = vmatprep.subr.bf16.mxu0 %v3242
      %3505 = vmatpush1.bf16.msra.mxu0 %v3241
      %3506 = vmatprep.subr.bf16.mxu0 %v3240
      %3507 = vmatpush1.bf16.msra.mxu0 %v3239
      %3508 = vmatprep.subr.bf16.mxu0 %v3238
      %3509 = vmatpush1.bf16.msra.mxu0 %v3237
      %3510 = vmatprep.subr.bf16.mxu0 %v3236
      %3511 = vmatpush1.bf16.msra.mxu0 %v3235
      %3512 = vmatprep.subr.bf16.mxu0 %v3234
      %3513 = vmatpush1.bf16.msra.mxu0 %v3233
      %3514 = vmatprep.subr.bf16.mxu0 %v3264
      %3515 = vmatpush2.bf16.msra.mxu0 %v3263
      %3516 = vmatprep.subr.bf16.mxu0 %v3262
      %3517 = vmatpush2.bf16.msra.mxu0 %v3261
      %3518 = vmatprep.subr.bf16.mxu0 %v3260
      %3519 = vmatpush2.bf16.msra.mxu0 %v3259
      %3520 = vmatprep.subr.bf16.mxu0 %v3258
      %3521 = vmatpush2.bf16.msra.mxu0 %v3257
      %3522 = vmatprep.subr.bf16.mxu0 %v3256
      %3523 = vmatpush2.bf16.msra.mxu0 %v3255
      %3524 = vmatprep.subr.bf16.mxu0 %v3254
      %3525 = vmatpush2.bf16.msra.mxu0 %v3253
      %3526 = vmatprep.subr.bf16.mxu0 %v3252
      %3527 = vmatpush2.bf16.msra.mxu0 %v3251
      %3528 = vmatprep.subr.bf16.mxu0 %v3250
      %3529 = vmatpush2.bf16.msra.mxu0 %v3249
      %3530 = vmatprep.mubr.bf16.mxu0 %v2670
      %3531 = vmatmul.mubr.bf16.gmra.mxu0 %v2669
      %v3532 = vpop.f32.mrf.mxu0
      %v3533 = vadd.f32 %v3492, %v3532
      %v3534 = vpop.f32.mrf.mxu0
      %v3535 = vadd.f32 %v3494, %v3534
      %v3536 = vpop.f32.mrf.mxu0
      %v3537 = vpop.f32.mrf.mxu0
      %3538 = vdwg.mxu0
      %3539 = vmatprep.subr.bf16.mxu0 %v3280
      %3540 = vmatpush1.bf16.msra.mxu0 %v3279
      %3541 = vmatprep.subr.bf16.mxu0 %v3278
      %3542 = vmatpush1.bf16.msra.mxu0 %v3277
      %3543 = vmatprep.subr.bf16.mxu0 %v3276
      %3544 = vmatpush1.bf16.msra.mxu0 %v3275
      %3545 = vmatprep.subr.bf16.mxu0 %v3274
      %3546 = vmatpush1.bf16.msra.mxu0 %v3273
      %3547 = vmatprep.subr.bf16.mxu0 %v3272
      %3548 = vmatpush1.bf16.msra.mxu0 %v3271
      %3549 = vmatprep.subr.bf16.mxu0 %v3270
      %3550 = vmatpush1.bf16.msra.mxu0 %v3269
      %3551 = vmatprep.subr.bf16.mxu0 %v3268
      %3552 = vmatpush1.bf16.msra.mxu0 %v3267
      %3553 = vmatprep.subr.bf16.mxu0 %v3266
      %3554 = vmatpush1.bf16.msra.mxu0 %v3265
      %3555 = vmatprep.subr.bf16.mxu0 %v3296
      %3556 = vmatpush2.bf16.msra.mxu0 %v3295
      %3557 = vmatprep.subr.bf16.mxu0 %v3294
      %3558 = vmatpush2.bf16.msra.mxu0 %v3293
      %3559 = vmatprep.subr.bf16.mxu0 %v3292
      %3560 = vmatpush2.bf16.msra.mxu0 %v3291
      %3561 = vmatprep.subr.bf16.mxu0 %v3290
      %3562 = vmatpush2.bf16.msra.mxu0 %v3289
      %3563 = vmatprep.subr.bf16.mxu0 %v3288
      %3564 = vmatpush2.bf16.msra.mxu0 %v3287
      %3565 = vmatprep.subr.bf16.mxu0 %v3286
      %3566 = vmatpush2.bf16.msra.mxu0 %v3285
      %3567 = vmatprep.subr.bf16.mxu0 %v3284
      %3568 = vmatpush2.bf16.msra.mxu0 %v3283
      %3569 = vmatprep.subr.bf16.mxu0 %v3282
      %3570 = vmatpush2.bf16.msra.mxu0 %v3281
      %3571 = vmatprep.mubr.bf16.mxu0 %v2672
      %3572 = vmatmul.mubr.bf16.gmra.mxu0 %v2671
      %v3573 = vpop.f32.mrf.mxu0
      %v3574 = vadd.f32 %v3533, %v3573
      %v3575 = vpop.f32.mrf.mxu0
      %v3576 = vadd.f32 %v3535, %v3575
      %v3577 = vpop.f32.mrf.mxu0
      %v3578 = vpop.f32.mrf.mxu0
      %3579 = vdwg.mxu0
      %3580 = vmatprep.subr.bf16.mxu0 %v3312
      %3581 = vmatpush1.bf16.msra.mxu0 %v3311
      %3582 = vmatprep.subr.bf16.mxu0 %v3310
      %3583 = vmatpush1.bf16.msra.mxu0 %v3309
      %3584 = vmatprep.subr.bf16.mxu0 %v3308
      %3585 = vmatpush1.bf16.msra.mxu0 %v3307
      %3586 = vmatprep.subr.bf16.mxu0 %v3306
      %3587 = vmatpush1.bf16.msra.mxu0 %v3305
      %3588 = vmatprep.subr.bf16.mxu0 %v3304
      %3589 = vmatpush1.bf16.msra.mxu0 %v3303
      %3590 = vmatprep.subr.bf16.mxu0 %v3302
      %3591 = vmatpush1.bf16.msra.mxu0 %v3301
      %3592 = vmatprep.subr.bf16.mxu0 %v3300
      %3593 = vmatpush1.bf16.msra.mxu0 %v3299
      %3594 = vmatprep.subr.bf16.mxu0 %v3298
      %3595 = vmatpush1.bf16.msra.mxu0 %v3297
      %3596 = vmatprep.subr.bf16.mxu0 %v3328
      %3597 = vmatpush2.bf16.msra.mxu0 %v3327
      %3598 = vmatprep.subr.bf16.mxu0 %v3326
      %3599 = vmatpush2.bf16.msra.mxu0 %v3325
      %3600 = vmatprep.subr.bf16.mxu0 %v3324
      %3601 = vmatpush2.bf16.msra.mxu0 %v3323
      %3602 = vmatprep.subr.bf16.mxu0 %v3322
      %3603 = vmatpush2.bf16.msra.mxu0 %v3321
      %3604 = vmatprep.subr.bf16.mxu0 %v3320
      %3605 = vmatpush2.bf16.msra.mxu0 %v3319
      %3606 = vmatprep.subr.bf16.mxu0 %v3318
      %3607 = vmatpush2.bf16.msra.mxu0 %v3317
      %3608 = vmatprep.subr.bf16.mxu0 %v3316
      %3609 = vmatpush2.bf16.msra.mxu0 %v3315
      %3610 = vmatprep.subr.bf16.mxu0 %v3314
      %3611 = vmatpush2.bf16.msra.mxu0 %v3313
      %3612 = vmatprep.mubr.bf16.mxu0 %v2674
      %3613 = vmatmul.mubr.bf16.gmra.mxu0 %v2673
      %v3614 = vpop.f32.mrf.mxu0
      %v3615 = vadd.f32 %v3574, %v3614
      %v3616 = vpop.f32.mrf.mxu0
      %v3617 = vadd.f32 %v3576, %v3616
      %v3618 = vpop.f32.mrf.mxu0
      %v3619 = vpop.f32.mrf.mxu0
      %3620 = vdwg.mxu0
      %v3621 = vsel %vm2391, %v3615, 0.0
      %v3622 = vrot.slane %v3621, 4
      %v3623 = vadd.f32 %v3621, %v3622
      %v3624 = vrot.slane %v3623, 2
      %v3625 = vadd.f32 %v3623, %v3624
      %v3626 = vrot.slane %v3625, 1
      %v3627 = vadd.f32 %v3625, %v3626
      %v3628 = vsel %vm2391, %v3617, 0.0
      %v3629 = vrot.slane %v3628, 4
      %v3630 = vadd.f32 %v3628, %v3629
      %v3631 = vrot.slane %v3630, 2
      %v3632 = vadd.f32 %v3630, %v3631
      %v3633 = vrot.slane %v3632, 1
      %v3634 = vadd.f32 %v3632, %v3633
      %v3635 = vmul.f32 %v3627, %v2448
      %v3636 = vmul.f32 %v3634, %v2448
      %v3637 = vsub.f32 %v3615, %v3635
      %v3638 = vsub.f32 %v3617, %v3636
      %v3639 = vmul.f32 %v3637, %v3637
      %v3640 = vmul.f32 %v3638, %v3638
      %v3641 = vsel %vm2391, %v3639, 0.0
      %v3642 = vrot.slane %v3641, 4
      %v3643 = vadd.f32 %v3641, %v3642
      %v3644 = vrot.slane %v3643, 2
      %v3645 = vadd.f32 %v3643, %v3644
      %v3646 = vrot.slane %v3645, 1
      %v3647 = vadd.f32 %v3645, %v3646
      %v3648 = vsel %vm2391, %v3640, 0.0
      %v3649 = vrot.slane %v3648, 4
      %v3650 = vadd.f32 %v3648, %v3649
      %v3651 = vrot.slane %v3650, 2
      %v3652 = vadd.f32 %v3650, %v3651
      %v3653 = vrot.slane %v3652, 1
      %v3654 = vadd.f32 %v3652, %v3653
      %v3655 = vmul.f32 %v3647, %v2448
      %v3656 = vmul.f32 %v3654, %v2448
      %v3657 = vadd.f32 %v3655, 1e-05
      %v3658 = vadd.f32 %v3656, 1e-05
      %v3659 = vrsqrt.pop %v3657
      %v3660 = vrsqrt.pop %v3658
      %v3661 = vmul.f32 %v3637, %v3659
      %v3662 = vmul.f32 %v3638, %v3660
      %v3664 = vlaneseq
      %v3665 = vshrl.u32 %v3664, 7
      %v3666 = vsub.s32 0, %v3665
      %v3667 = vrot.slane %v2804, %v3666
      %v3668 = vlaneseq
      %v3669 = vshrl.u32 %v3668, 7
      %v3670 = vsub.s32 1, %v3669
      %v3671 = vrot.slane %v2804, %v3670
      %v3674 = vmul.f32 %v3661, %v3667
      %v3675 = vmul.f32 %v3662, %v3671
      %v3677 = vlaneseq
      %v3678 = vshrl.u32 %v3677, 7
      %v3679 = vsub.s32 0, %v3678
      %v3680 = vrot.slane %v2805, %v3679
      %v3681 = vlaneseq
      %v3682 = vshrl.u32 %v3681, 7
      %v3683 = vsub.s32 1, %v3682
      %v3684 = vrot.slane %v2805, %v3683
      %v3687 = vadd.f32 %v3674, %v3680
      %v3688 = vadd.f32 %v3675, %v3684
      %v3689 = vmax.f32 %v3687, 0.0
      %v3690 = vmax.f32 %v3688, 0.0
      %v3691 = vpack.c.bf16 %v3689, %v3689
      %v3692 = vpack.c.bf16 %v3690, %v3690
      %v3693 = vld [vmem:[%s587] sm:$0xf]
      %v3694 = vld [vmem:[%s587 + $0x4] sm:$0xf]
      %v3695 = vld [vmem:[%s587 + $0x8] sm:$0xf]
      %v3696 = vld [vmem:[%s587 + $0xc] sm:$0xf]
      %v3697 = vld [vmem:[%s587 + $0x10] sm:$0xf]
      %v3698 = vld [vmem:[%s587 + $0x14] sm:$0xf]
      %v3699 = vld [vmem:[%s587 + $0x18] sm:$0xf]
      %v3700 = vld [vmem:[%s587 + $0x1c] sm:$0xf]
      %v3701 = vld [vmem:[%s587 + $0x20] sm:$0xf]
      %v3702 = vld [vmem:[%s587 + $0x24] sm:$0xf]
      %v3703 = vld [vmem:[%s587 + $0x28] sm:$0xf]
      %v3704 = vld [vmem:[%s587 + $0x2c] sm:$0xf]
      %v3705 = vld [vmem:[%s587 + $0x30] sm:$0xf]
      %v3706 = vld [vmem:[%s587 + $0x34] sm:$0xf]
      %v3707 = vld [vmem:[%s587 + $0x38] sm:$0xf]
      %v3708 = vld [vmem:[%s587 + $0x3c] sm:$0xf]
      %v3709 = vld [vmem:[%s587 + $0x40] sm:$0xf]
      %v3710 = vld [vmem:[%s587 + $0x44] sm:$0xf]
      %v3711 = vld [vmem:[%s587 + $0x48] sm:$0xf]
      %v3712 = vld [vmem:[%s587 + $0x4c] sm:$0xf]
      %v3713 = vld [vmem:[%s587 + $0x50] sm:$0xf]
      %v3714 = vld [vmem:[%s587 + $0x54] sm:$0xf]
      %v3715 = vld [vmem:[%s587 + $0x58] sm:$0xf]
      %v3716 = vld [vmem:[%s587 + $0x5c] sm:$0xf]
      %v3717 = vld [vmem:[%s587 + $0x60] sm:$0xf]
      %v3718 = vld [vmem:[%s587 + $0x64] sm:$0xf]
      %v3719 = vld [vmem:[%s587 + $0x68] sm:$0xf]
      %v3720 = vld [vmem:[%s587 + $0x6c] sm:$0xf]
      %v3721 = vld [vmem:[%s587 + $0x70] sm:$0xf]
      %v3722 = vld [vmem:[%s587 + $0x74] sm:$0xf]
      %v3723 = vld [vmem:[%s587 + $0x78] sm:$0xf]
      %v3724 = vld [vmem:[%s587 + $0x7c] sm:$0xf]
      %v3725 = vld [vmem:[%s590] sm:$0x1]
      %v3727 = vlaneseq
      %v3728 = vshrl.u32 %v3727, 7
      %v3729 = vsub.s32 0, %v3728
      %v3730 = vrot.slane %v3725, %v3729
      %v3764 = vunpack.c.l.b16 %v3693
      %v3765 = vunpack.c.l.b16 %v3694
      %v3766 = vunpack.c.l.b16 %v3695
      %v3767 = vunpack.c.l.b16 %v3696
      %v3768 = vunpack.c.l.b16 %v3697
      %v3769 = vunpack.c.l.b16 %v3698
      %v3770 = vunpack.c.l.b16 %v3699
      %v3771 = vunpack.c.l.b16 %v3700
      %v3772 = vunpack.c.l.b16 %v3701
      %v3773 = vunpack.c.l.b16 %v3702
      %v3774 = vunpack.c.l.b16 %v3703
      %v3775 = vunpack.c.l.b16 %v3704
      %v3776 = vunpack.c.l.b16 %v3705
      %v3777 = vunpack.c.l.b16 %v3706
      %v3778 = vunpack.c.l.b16 %v3707
      %v3779 = vunpack.c.l.b16 %v3708
      %v3780 = vunpack.c.l.b16 %v3709
      %v3781 = vunpack.c.l.b16 %v3710
      %v3782 = vunpack.c.l.b16 %v3711
      %v3783 = vunpack.c.l.b16 %v3712
      %v3784 = vunpack.c.l.b16 %v3713
      %v3785 = vunpack.c.l.b16 %v3714
      %v3786 = vunpack.c.l.b16 %v3715
      %v3787 = vunpack.c.l.b16 %v3716
      %v3788 = vunpack.c.l.b16 %v3717
      %v3789 = vunpack.c.l.b16 %v3718
      %v3790 = vunpack.c.l.b16 %v3719
      %v3791 = vunpack.c.l.b16 %v3720
      %v3792 = vunpack.c.l.b16 %v3721
      %v3793 = vunpack.c.l.b16 %v3722
      %v3794 = vunpack.c.l.b16 %v3723
      %v3795 = vunpack.c.l.b16 %v3724
      %v3796 = vpack.c.b16 %v3765, %v3764
      %v3797 = vpack.c.b16 %v3767, %v3766
      %v3798 = vpack.c.b16 %v3769, %v3768
      %v3799 = vpack.c.b16 %v3771, %v3770
      %v3800 = vpack.c.b16 %v3773, %v3772
      %v3801 = vpack.c.b16 %v3775, %v3774
      %v3802 = vpack.c.b16 %v3777, %v3776
      %v3803 = vpack.c.b16 %v3779, %v3778
      %v3804 = vpack.c.b16 %v3781, %v3780
      %v3805 = vpack.c.b16 %v3783, %v3782
      %v3806 = vpack.c.b16 %v3785, %v3784
      %v3807 = vpack.c.b16 %v3787, %v3786
      %v3808 = vpack.c.b16 %v3789, %v3788
      %v3809 = vpack.c.b16 %v3791, %v3790
      %v3810 = vpack.c.b16 %v3793, %v3792
      %v3811 = vpack.c.b16 %v3795, %v3794
      %3828 = vmatprep.subr.bf16.mxu0 0
      %3829 = vmatpush1.bf16.msra.mxu0 %v3803
      %3830 = vmatprep.subr.bf16.mxu0 0
      %3831 = vmatpush1.bf16.msra.mxu0 %v3802
      %3832 = vmatprep.subr.bf16.mxu0 0
      %3833 = vmatpush1.bf16.msra.mxu0 %v3801
      %3834 = vmatprep.subr.bf16.mxu0 0
      %3835 = vmatpush1.bf16.msra.mxu0 %v3800
      %3836 = vmatprep.subr.bf16.mxu0 0
      %3837 = vmatpush1.bf16.msra.mxu0 %v3799
      %3838 = vmatprep.subr.bf16.mxu0 0
      %3839 = vmatpush1.bf16.msra.mxu0 %v3798
      %3840 = vmatprep.subr.bf16.mxu0 0
      %3841 = vmatpush1.bf16.msra.mxu0 %v3797
      %3842 = vmatprep.subr.bf16.mxu0 0
      %3843 = vmatpush1.bf16.msra.mxu0 %v3796
      %3844 = vmatprep.subr.bf16.mxu0 0
      %3845 = vmatpush2.bf16.msra.mxu0 %v3811
      %3846 = vmatprep.subr.bf16.mxu0 0
      %3847 = vmatpush2.bf16.msra.mxu0 %v3810
      %3848 = vmatprep.subr.bf16.mxu0 0
      %3849 = vmatpush2.bf16.msra.mxu0 %v3809
      %3850 = vmatprep.subr.bf16.mxu0 0
      %3851 = vmatpush2.bf16.msra.mxu0 %v3808
      %3852 = vmatprep.subr.bf16.mxu0 0
      %3853 = vmatpush2.bf16.msra.mxu0 %v3807
      %3854 = vmatprep.subr.bf16.mxu0 0
      %3855 = vmatpush2.bf16.msra.mxu0 %v3806
      %3856 = vmatprep.subr.bf16.mxu0 0
      %3857 = vmatpush2.bf16.msra.mxu0 %v3805
      %3858 = vmatprep.subr.bf16.mxu0 0
      %3859 = vmatpush2.bf16.msra.mxu0 %v3804
      %3860 = vmatprep.mubr.bf16.mxu0 %v3692
      %3861 = vmatmul.mubr.bf16.gmra.mxu0 %v3691
      %v3862 = vpop.f32.mrf.mxu0
      %v3863 = vadd.f32 %v3730, %v3862
      %v3864 = vpop.f32.mrf.mxu0
      %v3865 = vpop.f32.mrf.mxu0
      %v3866 = vpop.f32.mrf.mxu0
      %3867 = vdwg.mxu0
      %3868 = vst [vmem:[%s594] sm:$0x3] %v3863
      %p3869 = scmp.lt.s32.totalorder %s24, 1
      %s3870 = scalar_select %p3869, %s24, 1
      %s3871 = smul.addr %s3870, 2
      %s3872 = scalar_lea.vmem %s13, %s3871
      // Predicated region
      $region77: #{dann_forward.5} parent=71 // pred_check
        %p3873 = pneg %p365
      $region78: #{dann_forward.5} parent=71 // pred_check_branch
        %3875 = sbr.rel (%p3873) target = $region80
      $region79: #{dann_forward.5} parent=71 // pred_region
        _
      $region80: #{dann_forward.5} parent=71 // pred_fallthru
        _
    $region72: #{dann_forward.5} parent=5 // pred_fallthru
      _
    %p3876 = scmp.le.s32.totalorder 2, %s19
    // Predicated region
    $region81: #{dann_forward.5} parent=5 // pred_check
      %p3877 = pneg %p3876
    $region82: #{dann_forward.5} parent=5 // pred_check_branch
      %3879 = sbr.rel (%p3877) target = $region84
    $region83: #{dann_forward.5} parent=5 // pred_region
      %s3880 = ssub.s32 %s19, 2
      // Predicated region
      $region85: #{dann_forward.5} parent=83 // pred_check
        %p3881 = pneg %p371
      $region86: #{dann_forward.5} parent=83 // pred_check_branch
        %3883 = sbr.rel (%p3881) target = $region88
      $region87: #{dann_forward.5} parent=83 // pred_region
        %p3884 = scmp.lt.s32.totalorder %s25, 1
        %s3885 = scalar_select %p3884, %s25, 1
        %s3886 = smul.addr %s3885, 2
        %s3887 = scalar_lea.vmem %s13, %s3886
      $region88: #{dann_forward.5} parent=83 // pred_fallthru
        _
    $region84: #{dann_forward.5} parent=5 // pred_fallthru
      _
  $region6: #{dann_forward.5} parent=0 // loop_footer
    %s23 = sadd.s32 1, %s19
  $region7: #{dann_forward.5} parent=0 // loop_footer_branch
    %18 = sbr.rel target = $region3
  $region8: #{dann_forward.5} parent=0 // loop_exit
    _

</llo_original>
